<compile_context>
chip_gen: v5e
topology: v5e:2x2
jax: 0.10.0
libtpu: 0.0.40
codegen_flags: <defaults>
</compile_context>

<pallas_src>
import jax
import jax.numpy as jnp
import numpy as np
from jax.experimental import pallas as pl
from jax.experimental.pallas import tpu as pltpu


def _resblock_kernel(x_ref, w1_ref, b1_ref, w2_ref, b2_ref, out_ref,
                     s0_ref, s1_ref, s2_ref):
    """Fused conv3x3 -> ReLU -> conv3x3 -> residual add for a tile of Bt images.

    x_ref        : (Bt, H, W, C)    f32  NHWC input block (also the identity path)
    w1_ref/w2_ref: (3, 3, C, C)     bf16 weights, (ky, kx, Cin, Cout)
    b1_ref/b2_ref: (1, C)           f32  biases
    out_ref      : (Bt, H, W, C)    f32
    s{0,1,2}_ref : (Bt, H+2, W, C)  bf16 scratch: kx = 0/1/2 W-shifted views of
                   the zero-padded conv input.  Re-filled per conv so every tap
                   (ky, kx) is a sublane-aligned H-major slice of s{kx}.
    """
    Bt, H, W, C = x_ref.shape
    Hp = H + 2

    zrow = jnp.zeros((Bt, 1, W, C), jnp.bfloat16)
    zcol = jnp.zeros((Bt, H, 1, C), jnp.bfloat16)

    # Zero only the top/bottom halo rows; the interior and the shifted zero
    # columns are written by `stage` below.  Done every step so the kernel stays
    # correct under v7x megacore sharding (no cross-step scratch assumptions).
    for s in (s0_ref, s1_ref, s2_ref):
        s[:, 0:1, :, :] = zrow
        s[:, Hp - 1:Hp, :, :] = zrow

    def stage(v):
        # v: (Bt, H, W, C) bf16.  Build the three W-shifted padded views so the
        # 9 taps need no sublane-misaligned slicing (2 misaligned copy passes
        # here instead of 6 misaligned full-tile relayouts per conv).
        # TODO(synk): the +/-1 W shift could also run on the XLU via pltpu.roll
        # + edge mask; the slice form is kept because its lowering is proven.
        s1_ref[:, 1:H + 1, :, :] = v                        # kx = 1 (aligned)
        s0_ref[:, 1:H + 1, 0:1, :] = zcol                   # kx = 0: left zero pad
        s0_ref[:, 1:H + 1, 1:W, :] = v[:, :, 0:W - 1, :]
        s2_ref[:, 1:H + 1, W - 1:W, :] = zcol               # kx = 2: right zero pad
        s2_ref[:, 1:H + 1, 0:W - 1, :] = v[:, :, 1:W, :]

    def conv3x3(w_ref, b_ref):
        # 3x3 conv as 9 MXU matmuls; bf16 operands, f32 accumulation.
        # TODO(synk): im2col K-packing (K=3C per ky / K=9C) would raise MXU
        # utilization further but needs a lane-dense relayout -- see file header.
        bufs = (s0_ref, s1_ref, s2_ref)
        acc = None
        for ky in range(3):
            for kx in range(3):
                patch = bufs[kx][:, ky:ky + H, :, :].reshape(Bt * H * W, C)
                t = jnp.dot(patch, w_ref[ky, kx],
                            preferred_element_type=jnp.float32)
                acc = t if acc is None else acc + t
        return acc + b_ref[...]

    # conv1 -> bias -> ReLU (f32 math on the MXU accumulator).
    stage(x_ref[...].astype(jnp.bfloat16))
    h1 = jnp.maximum(conv3x3(w1_ref, b1_ref), 0.0)           # (Bt*H*W, C) f32

    # conv2 -> bias; h1 goes straight into the pre-shifted buffers.
    stage(h1.astype(jnp.bfloat16).reshape(Bt, H, W, C))
    h2 = conv3x3(w2_ref, b2_ref)                             # (Bt*H*W, C) f32

    # Residual add in exact f32 against the untouched identity path.
    # NOTE: only the conv branch sees bf16; with real-scale activations/weights,
    # re-verify the comparison tolerance for the conv contribution.
    out_ref[...] = (x_ref[...] + h2.reshape(Bt, H, W, C)).astype(out_ref.dtype)


def _vmem_limit_bytes():
    """Per-generation scoped-VMEM limit: v5e/v6e (128 MiB physical) -> 64 MiB,
    v7x (64 MiB physical per TC) -> 32 MiB, with a safe fallback."""
    try:
        cap = int(pltpu.get_tpu_info().vmem_capacity_bytes)
    except Exception:
        cap = 64 * 1024 * 1024
    return min(max(cap // 2, 32 * 1024 * 1024), 64 * 1024 * 1024)


def _pick_batch_tile(n, h, w, c, budget):
    """Largest batch tile dividing N that (a) fits the VMEM budget with headroom
    and (b) keeps the grid length >= 2 so v7x's second TensorCore gets work."""
    def est(bt):
        return (2 * 2 * bt * h * w * c * 4          # x + out blocks, double-buffered f32
                + 3 * bt * (h + 2) * w * c * 2      # 3 bf16 shifted scratch buffers
                + 4 * bt * h * w * c * 4)           # live f32 temporaries (acc/h1/h2/out)
    divisors = [d for d in range(1, n + 1) if n % d == 0]
    fit = [d for d in divisors if est(d) <= budget]
    two_core = [d for d in fit if n // d >= 2]
    if two_core:
        return max(two_core)
    if fit:
        return max(fit)
    return 1


def _residual_block_nhwc_core(x_nhwc, w1_k, b1_r, w2_k, b2_r):
    N, H, W, C = x_nhwc.shape
    vmem_limit = _vmem_limit_bytes()
    bt = _pick_batch_tile(N, H, W, C, budget=vmem_limit // 2)

    return pl.pallas_call(
        _resblock_kernel,
        out_shape=jax.ShapeDtypeStruct((N, H, W, C), x_nhwc.dtype),
        grid_spec=pltpu.PrefetchScalarGridSpec(
            num_scalar_prefetch=0,
            grid=(N // bt,),
            in_specs=[
                pl.BlockSpec((bt, H, W, C), lambda n: (n, 0, 0, 0)),
                pl.BlockSpec((3, 3, C, C), lambda n: (0, 0, 0, 0)),
                pl.BlockSpec((1, C), lambda n: (0, 0)),
                pl.BlockSpec((3, 3, C, C), lambda n: (0, 0, 0, 0)),
                pl.BlockSpec((1, C), lambda n: (0, 0)),
            ],
            out_specs=pl.BlockSpec((bt, H, W, C), lambda n: (n, 0, 0, 0)),
            scratch_shapes=[pltpu.VMEM((bt, H + 2, W, C), jnp.bfloat16)] * 3,
        ),
        compiler_params=pltpu.CompilerParams(
            # Batch tiles are independent -> shard across both TCs on v7x.
            dimension_semantics=("parallel",),
            vmem_limit_bytes=vmem_limit),
    )(x_nhwc, w1_k, b1_r, w2_k, b2_r)


@jax.jit
def residual_block_forward_nhwc(x_nhwc, w1, b1, w2, b2):
    """NHWC fast path (no activation-layout transposes).  Use this when the
    surrounding network keeps activations NHWC.  w*: (Cout, Cin, 3, 3); b*: (C,)."""
    C = x_nhwc.shape[-1]
    w1_k = jnp.transpose(w1, (2, 3, 1, 0)).astype(jnp.bfloat16)  # (ky,kx,Cin,Cout)
    w2_k = jnp.transpose(w2, (2, 3, 1, 0)).astype(jnp.bfloat16)
    b1_r = b1.reshape(1, C).astype(jnp.float32)
    b2_r = b2.reshape(1, C).astype(jnp.float32)
    return _residual_block_nhwc_core(x_nhwc, w1_k, b1_r, w2_k, b2_r)


@jax.jit
def residual_block_forward(x_nchw, w1, b1, w2, b2):
    """PyTorch-compatible NCHW API.  The NCHW<->NHWC transposes are HBM-level
    relayouts; prefer residual_block_forward_nhwc inside a network.
    TODO(synk): fold the layout change into the kernel (XLU transpose of NCHW
    blocks in VMEM) once Mosaic's 3D minor-dim transpose lowering is confirmed."""
    out_nhwc = residual_block_forward_nhwc(
        jnp.transpose(x_nchw, (0, 2, 3, 1)), w1, b1, w2, b2)
    return jnp.transpose(out_nhwc, (0, 3, 1, 2))


def _reference_forward(x_nchw, w1, b1, w2, b2):
    """Plain-JAX f32 reference (lax conv, NCHW) for correctness checking."""
    dn = jax.lax.conv_dimension_numbers(x_nchw.shape, w1.shape,
                                        ("NCHW", "OIHW", "NCHW"))
    c1 = jax.lax.conv_general_dilated(x_nchw, w1, (1, 1), ((1, 1), (1, 1)),
                                      dimension_numbers=dn)
    c1 = jnp.maximum(c1 + b1[None, :, None, None], 0.0)
    c2 = jax.lax.conv_general_dilated(c1, w2, (1, 1), ((1, 1), (1, 1)),
                                      dimension_numbers=dn)
    c2 = c2 + b2[None, :, None, None]
    return x_nchw + c2


if __name__ == "__main__":
    N, C, H, W = 2, 8, 16, 16  # small nf for the demo (module default nf=64)

    key = jax.random.PRNGKey(0)
    kx_, k1, k2 = jax.random.split(key, 3)

    x = jax.random.normal(kx_, (N, C, H, W), dtype=jnp.float32)

    # Kaiming normal (fan_in, a=0): std = sqrt(2 / fan_in), then scale by 0.1; bias = 0
    fan_in = C * 3 * 3
    std = float(np.sqrt(2.0 / fan_in))
    w1 = jax.random.normal(k1, (C, C, 3, 3), dtype=jnp.float32) * std * 0.1
    w2 = jax.random.normal(k2, (C, C, 3, 3), dtype=jnp.float32) * std * 0.1
    b1 = jnp.zeros((C,), jnp.float32)
    b2 = jnp.zeros((C,), jnp.float32)

    out = residual_block_forward(x, w1, b1, w2, b2)
    out = jax.block_until_ready(out)

    ref = jax.block_until_ready(_reference_forward(x, w1, b1, w2, b2))
    # Tolerance reflects bf16 MXU inputs (weights scaled by 0.1 keep the conv
    # branch small, so absolute error stays well below 1e-3; identity is exact f32).
    np.testing.assert_allclose(np.asarray(out), np.asarray(ref),
                               rtol=1e-2, atol=5e-3)

    print("KERNEL_OK")
</pallas_src>

<mosaic_0001>
module attributes {stable_mosaic.version = 11 : i64} {
  func.func @_resblock_kernel(%arg0: i32, %arg1: memref<1x16x16x8xf32, #tpu.memory_space<vmem>>, %arg2: memref<3x3x8x8xbf16, #tpu.memory_space<vmem>>, %arg3: memref<1x8xf32, #tpu.memory_space<vmem>>, %arg4: memref<3x3x8x8xbf16, #tpu.memory_space<vmem>>, %arg5: memref<1x8xf32, #tpu.memory_space<vmem>>, %arg6: memref<1x16x16x8xf32, #tpu.memory_space<vmem>>, %arg7: memref<1x18x16x8xbf16, #tpu.memory_space<vmem>>, %arg8: memref<1x18x16x8xbf16, #tpu.memory_space<vmem>>, %arg9: memref<1x18x16x8xbf16, #tpu.memory_space<vmem>>) attributes {dimension_semantics = [#tpu.dimension_semantics<parallel>], iteration_bounds = array<i64: 2>, scalar_prefetch = 0 : i64, scratch_operands = 3 : i64, tpu.core_type = #tpu.core_type<tc>, window_params = [{transform_indices = @transform_0, window_bounds = array<i64: 1, 16, 16, 8>}, {pipeline_mode = #tpu.pipeline_mode<synchronous>, transform_indices = @transform_1, window_bounds = array<i64: 3, 3, 8, 8>}, {pipeline_mode = #tpu.pipeline_mode<synchronous>, transform_indices = @transform_2, window_bounds = array<i64: 1, 8>}, {pipeline_mode = #tpu.pipeline_mode<synchronous>, transform_indices = @transform_3, window_bounds = array<i64: 3, 3, 8, 8>}, {pipeline_mode = #tpu.pipeline_mode<synchronous>, transform_indices = @transform_4, window_bounds = array<i64: 1, 8>}, {transform_indices = @transform_5, window_bounds = array<i64: 1, 16, 16, 8>}]} {
    %cst = arith.constant 0.000000e+00 : bf16
    %0 = vector.broadcast %cst : bf16 to vector<1x1x16x8xbf16>
    %cst_0 = arith.constant 0.000000e+00 : bf16
    %1 = vector.broadcast %cst_0 : bf16 to vector<1x16x1x8xbf16>
    %c0 = arith.constant 0 : index
    %c0_1 = arith.constant 0 : index
    %c0_2 = arith.constant 0 : index
    %c0_3 = arith.constant 0 : index
    %2 = vector.load %arg7[%c0, %c0_1, %c0_2, %c0_3] : memref<1x18x16x8xbf16, #tpu.memory_space<vmem>>, vector<1x1x16x8xbf16>
    tpu.vector_store %arg7[%c0, %c0_1, %c0_2, %c0_3], %0 {strides = array<i32>} : memref<1x18x16x8xbf16, #tpu.memory_space<vmem>>, vector<1x1x16x8xbf16>,
    %c0_4 = arith.constant 0 : index
    %c17 = arith.constant 17 : index
    %c0_5 = arith.constant 0 : index
    %c0_6 = arith.constant 0 : index
    %3 = vector.load %arg7[%c0_4, %c17, %c0_5, %c0_6] : memref<1x18x16x8xbf16, #tpu.memory_space<vmem>>, vector<1x1x16x8xbf16>
    tpu.vector_store %arg7[%c0_4, %c17, %c0_5, %c0_6], %0 {strides = array<i32>} : memref<1x18x16x8xbf16, #tpu.memory_space<vmem>>, vector<1x1x16x8xbf16>,
    %c0_7 = arith.constant 0 : index
    %c0_8 = arith.constant 0 : index
    %c0_9 = arith.constant 0 : index
    %c0_10 = arith.constant 0 : index
    %4 = vector.load %arg8[%c0_7, %c0_8, %c0_9, %c0_10] : memref<1x18x16x8xbf16, #tpu.memory_space<vmem>>, vector<1x1x16x8xbf16>
    tpu.vector_store %arg8[%c0_7, %c0_8, %c0_9, %c0_10], %0 {strides = array<i32>} : memref<1x18x16x8xbf16, #tpu.memory_space<vmem>>, vector<1x1x16x8xbf16>,
    %c0_11 = arith.constant 0 : index
    %c17_12 = arith.constant 17 : index
    %c0_13 = arith.constant 0 : index
    %c0_14 = arith.constant 0 : index
    %5 = vector.load %arg8[%c0_11, %c17_12, %c0_13, %c0_14] : memref<1x18x16x8xbf16, #tpu.memory_space<vmem>>, vector<1x1x16x8xbf16>
    tpu.vector_store %arg8[%c0_11, %c17_12, %c0_13, %c0_14], %0 {strides = array<i32>} : memref<1x18x16x8xbf16, #tpu.memory_space<vmem>>, vector<1x1x16x8xbf16>,
    %c0_15 = arith.constant 0 : index
    %c0_16 = arith.constant 0 : index
    %c0_17 = arith.constant 0 : index
    %c0_18 = arith.constant 0 : index
    %6 = vector.load %arg9[%c0_15, %c0_16, %c0_17, %c0_18] : memref<1x18x16x8xbf16, #tpu.memory_space<vmem>>, vector<1x1x16x8xbf16>
    tpu.vector_store %arg9[%c0_15, %c0_16, %c0_17, %c0_18], %0 {strides = array<i32>} : memref<1x18x16x8xbf16, #tpu.memory_space<vmem>>, vector<1x1x16x8xbf16>,
    %c0_19 = arith.constant 0 : index
    %c17_20 = arith.constant 17 : index
    %c0_21 = arith.constant 0 : index
    %c0_22 = arith.constant 0 : index
    %7 = vector.load %arg9[%c0_19, %c17_20, %c0_21, %c0_22] : memref<1x18x16x8xbf16, #tpu.memory_space<vmem>>, vector<1x1x16x8xbf16>
    tpu.vector_store %arg9[%c0_19, %c17_20, %c0_21, %c0_22], %0 {strides = array<i32>} : memref<1x18x16x8xbf16, #tpu.memory_space<vmem>>, vector<1x1x16x8xbf16>,
    %c0_23 = arith.constant 0 : index
    %c0_24 = arith.constant 0 : index
    %c0_25 = arith.constant 0 : index
    %c0_26 = arith.constant 0 : index
    %8 = vector.load %arg1[%c0_23, %c0_24, %c0_25, %c0_26] : memref<1x16x16x8xf32, #tpu.memory_space<vmem>>, vector<1x16x16x8xf32>
    %9 = arith.truncf %8 : vector<1x16x16x8xf32> to vector<1x16x16x8xbf16>
    %c0_27 = arith.constant 0 : index
    %c1 = arith.constant 1 : index
    %c0_28 = arith.constant 0 : index
    %c0_29 = arith.constant 0 : index
    %10 = vector.load %arg8[%c0_27, %c1, %c0_28, %c0_29] : memref<1x18x16x8xbf16, #tpu.memory_space<vmem>>, vector<1x16x16x8xbf16>
    tpu.vector_store %arg8[%c0_27, %c1, %c0_28, %c0_29], %9 {strides = array<i32>} : memref<1x18x16x8xbf16, #tpu.memory_space<vmem>>, vector<1x16x16x8xbf16>,
    %c0_30 = arith.constant 0 : index
    %c1_31 = arith.constant 1 : index
    %c0_32 = arith.constant 0 : index
    %c0_33 = arith.constant 0 : index
    %11 = vector.load %arg7[%c0_30, %c1_31, %c0_32, %c0_33] : memref<1x18x16x8xbf16, #tpu.memory_space<vmem>>, vector<1x16x1x8xbf16>
    tpu.vector_store %arg7[%c0_30, %c1_31, %c0_32, %c0_33], %1 {strides = array<i32>} : memref<1x18x16x8xbf16, #tpu.memory_space<vmem>>, vector<1x16x1x8xbf16>,
    %12 = vector.extract_strided_slice %9 {offsets = [0, 0, 0, 0], sizes = [1, 16, 15, 8], strides = [1, 1, 1, 1]} : vector<1x16x16x8xbf16> to vector<1x16x15x8xbf16>
    %c0_34 = arith.constant 0 : index
    %c1_35 = arith.constant 1 : index
    %c1_36 = arith.constant 1 : index
    %c0_37 = arith.constant 0 : index
    %13 = vector.load %arg7[%c0_34, %c1_35, %c1_36, %c0_37] : memref<1x18x16x8xbf16, #tpu.memory_space<vmem>>, vector<1x16x15x8xbf16>
    tpu.vector_store %arg7[%c0_34, %c1_35, %c1_36, %c0_37], %12 {strides = array<i32>} : memref<1x18x16x8xbf16, #tpu.memory_space<vmem>>, vector<1x16x15x8xbf16>,
    %c0_38 = arith.constant 0 : index
    %c1_39 = arith.constant 1 : index
    %c15 = arith.constant 15 : index
    %c0_40 = arith.constant 0 : index
    %14 = vector.load %arg9[%c0_38, %c1_39, %c15, %c0_40] : memref<1x18x16x8xbf16, #tpu.memory_space<vmem>>, vector<1x16x1x8xbf16>
    tpu.vector_store %arg9[%c0_38, %c1_39, %c15, %c0_40], %1 {strides = array<i32>} : memref<1x18x16x8xbf16, #tpu.memory_space<vmem>>, vector<1x16x1x8xbf16>,
    %15 = vector.extract_strided_slice %9 {offsets = [0, 0, 1, 0], sizes = [1, 16, 15, 8], strides = [1, 1, 1, 1]} : vector<1x16x16x8xbf16> to vector<1x16x15x8xbf16>
    %c0_41 = arith.constant 0 : index
    %c1_42 = arith.constant 1 : index
    %c0_43 = arith.constant 0 : index
    %c0_44 = arith.constant 0 : index
    %16 = vector.load %arg9[%c0_41, %c1_42, %c0_43, %c0_44] : memref<1x18x16x8xbf16, #tpu.memory_space<vmem>>, vector<1x16x15x8xbf16>
    tpu.vector_store %arg9[%c0_41, %c1_42, %c0_43, %c0_44], %15 {strides = array<i32>} : memref<1x18x16x8xbf16, #tpu.memory_space<vmem>>, vector<1x16x15x8xbf16>,
    %c0_45 = arith.constant 0 : index
    %c0_46 = arith.constant 0 : index
    %c0_47 = arith.constant 0 : index
    %c0_48 = arith.constant 0 : index
    %17 = vector.load %arg7[%c0_45, %c0_46, %c0_47, %c0_48] : memref<1x18x16x8xbf16, #tpu.memory_space<vmem>>, vector<1x16x16x8xbf16>
    %18 = vector.shape_cast %17 : vector<1x16x16x8xbf16> to vector<256x8xbf16>
    %c0_49 = arith.constant 0 : index
    %c0_50 = arith.constant 0 : index
    %c0_51 = arith.constant 0 : index
    %c0_52 = arith.constant 0 : index
    %19 = vector.load %arg2[%c0_49, %c0_50, %c0_51, %c0_52] : memref<3x3x8x8xbf16, #tpu.memory_space<vmem>>, vector<1x1x8x8xbf16>
    %20 = vector.shape_cast %19 : vector<1x1x8x8xbf16> to vector<8x8xbf16>
    %cst_53 = arith.constant dense<0.000000e+00> : vector<256x8xf32>
    %21 = tpu.matmul %18, %20, %cst_53 {dimension_numbers = #tpu.dot_dimension_numbers<[1], [0], [0], [1], [0, 0, 1, 1], [], []>} : vector<256x8xbf16>, vector<8x8xbf16>, vector<256x8xf32> -> vector<256x8xf32>
    %c0_54 = arith.constant 0 : index
    %c0_55 = arith.constant 0 : index
    %c0_56 = arith.constant 0 : index
    %c0_57 = arith.constant 0 : index
    %22 = vector.load %arg8[%c0_54, %c0_55, %c0_56, %c0_57] : memref<1x18x16x8xbf16, #tpu.memory_space<vmem>>, vector<1x16x16x8xbf16>
    %23 = vector.shape_cast %22 : vector<1x16x16x8xbf16> to vector<256x8xbf16>
    %c0_58 = arith.constant 0 : index
    %c1_59 = arith.constant 1 : index
    %c0_60 = arith.constant 0 : index
    %c0_61 = arith.constant 0 : index
    %24 = vector.load %arg2[%c0_58, %c1_59, %c0_60, %c0_61] : memref<3x3x8x8xbf16, #tpu.memory_space<vmem>>, vector<1x1x8x8xbf16>
    %25 = vector.shape_cast %24 : vector<1x1x8x8xbf16> to vector<8x8xbf16>
    %cst_62 = arith.constant dense<0.000000e+00> : vector<256x8xf32>
    %26 = tpu.matmul %23, %25, %cst_62 {dimension_numbers = #tpu.dot_dimension_numbers<[1], [0], [0], [1], [0, 0, 1, 1], [], []>} : vector<256x8xbf16>, vector<8x8xbf16>, vector<256x8xf32> -> vector<256x8xf32>
    %27 = arith.addf %21, %26 : vector<256x8xf32>
    %c0_63 = arith.constant 0 : index
    %c0_64 = arith.constant 0 : index
    %c0_65 = arith.constant 0 : index
    %c0_66 = arith.constant 0 : index
    %28 = vector.load %arg9[%c0_63, %c0_64, %c0_65, %c0_66] : memref<1x18x16x8xbf16, #tpu.memory_space<vmem>>, vector<1x16x16x8xbf16>
    %29 = vector.shape_cast %28 : vector<1x16x16x8xbf16> to vector<256x8xbf16>
    %c0_67 = arith.constant 0 : index
    %c2 = arith.constant 2 : index
    %c0_68 = arith.constant 0 : index
    %c0_69 = arith.constant 0 : index
    %30 = vector.load %arg2[%c0_67, %c2, %c0_68, %c0_69] : memref<3x3x8x8xbf16, #tpu.memory_space<vmem>>, vector<1x1x8x8xbf16>
    %31 = vector.shape_cast %30 : vector<1x1x8x8xbf16> to vector<8x8xbf16>
    %cst_70 = arith.constant dense<0.000000e+00> : vector<256x8xf32>
    %32 = tpu.matmul %29, %31, %cst_70 {dimension_numbers = #tpu.dot_dimension_numbers<[1], [0], [0], [1], [0, 0, 1, 1], [], []>} : vector<256x8xbf16>, vector<8x8xbf16>, vector<256x8xf32> -> vector<256x8xf32>
    %33 = arith.addf %27, %32 : vector<256x8xf32>
    %c0_71 = arith.constant 0 : index
    %c1_72 = arith.constant 1 : index
    %c0_73 = arith.constant 0 : index
    %c0_74 = arith.constant 0 : index
    %34 = vector.load %arg7[%c0_71, %c1_72, %c0_73, %c0_74] : memref<1x18x16x8xbf16, #tpu.memory_space<vmem>>, vector<1x16x16x8xbf16>
    %35 = vector.shape_cast %34 : vector<1x16x16x8xbf16> to vector<256x8xbf16>
    %c1_75 = arith.constant 1 : index
    %c0_76 = arith.constant 0 : index
    %c0_77 = arith.constant 0 : index
    %c0_78 = arith.constant 0 : index
    %36 = vector.load %arg2[%c1_75, %c0_76, %c0_77, %c0_78] : memref<3x3x8x8xbf16, #tpu.memory_space<vmem>>, vector<1x1x8x8xbf16>
    %37 = vector.shape_cast %36 : vector<1x1x8x8xbf16> to vector<8x8xbf16>
    %cst_79 = arith.constant dense<0.000000e+00> : vector<256x8xf32>
    %38 = tpu.matmul %35, %37, %cst_79 {dimension_numbers = #tpu.dot_dimension_numbers<[1], [0], [0], [1], [0, 0, 1, 1], [], []>} : vector<256x8xbf16>, vector<8x8xbf16>, vector<256x8xf32> -> vector<256x8xf32>
    %39 = arith.addf %33, %38 : vector<256x8xf32>
    %c0_80 = arith.constant 0 : index
    %c1_81 = arith.constant 1 : index
    %c0_82 = arith.constant 0 : index
    %c0_83 = arith.constant 0 : index
    %40 = vector.load %arg8[%c0_80, %c1_81, %c0_82, %c0_83] : memref<1x18x16x8xbf16, #tpu.memory_space<vmem>>, vector<1x16x16x8xbf16>
    %41 = vector.shape_cast %40 : vector<1x16x16x8xbf16> to vector<256x8xbf16>
    %c1_84 = arith.constant 1 : index
    %c1_85 = arith.constant 1 : index
    %c0_86 = arith.constant 0 : index
    %c0_87 = arith.constant 0 : index
    %42 = vector.load %arg2[%c1_84, %c1_85, %c0_86, %c0_87] : memref<3x3x8x8xbf16, #tpu.memory_space<vmem>>, vector<1x1x8x8xbf16>
    %43 = vector.shape_cast %42 : vector<1x1x8x8xbf16> to vector<8x8xbf16>
    %cst_88 = arith.constant dense<0.000000e+00> : vector<256x8xf32>
    %44 = tpu.matmul %41, %43, %cst_88 {dimension_numbers = #tpu.dot_dimension_numbers<[1], [0], [0], [1], [0, 0, 1, 1], [], []>} : vector<256x8xbf16>, vector<8x8xbf16>, vector<256x8xf32> -> vector<256x8xf32>
    %45 = arith.addf %39, %44 : vector<256x8xf32>
    %c0_89 = arith.constant 0 : index
    %c1_90 = arith.constant 1 : index
    %c0_91 = arith.constant 0 : index
    %c0_92 = arith.constant 0 : index
    %46 = vector.load %arg9[%c0_89, %c1_90, %c0_91, %c0_92] : memref<1x18x16x8xbf16, #tpu.memory_space<vmem>>, vector<1x16x16x8xbf16>
    %47 = vector.shape_cast %46 : vector<1x16x16x8xbf16> to vector<256x8xbf16>
    %c1_93 = arith.constant 1 : index
    %c2_94 = arith.constant 2 : index
    %c0_95 = arith.constant 0 : index
    %c0_96 = arith.constant 0 : index
    %48 = vector.load %arg2[%c1_93, %c2_94, %c0_95, %c0_96] : memref<3x3x8x8xbf16, #tpu.memory_space<vmem>>, vector<1x1x8x8xbf16>
    %49 = vector.shape_cast %48 : vector<1x1x8x8xbf16> to vector<8x8xbf16>
    %cst_97 = arith.constant dense<0.000000e+00> : vector<256x8xf32>
    %50 = tpu.matmul %47, %49, %cst_97 {dimension_numbers = #tpu.dot_dimension_numbers<[1], [0], [0], [1], [0, 0, 1, 1], [], []>} : vector<256x8xbf16>, vector<8x8xbf16>, vector<256x8xf32> -> vector<256x8xf32>
    %51 = arith.addf %45, %50 : vector<256x8xf32>
    %c0_98 = arith.constant 0 : index
    %c2_99 = arith.constant 2 : index
    %c0_100 = arith.constant 0 : index
    %c0_101 = arith.constant 0 : index
    %52 = vector.load %arg7[%c0_98, %c2_99, %c0_100, %c0_101] : memref<1x18x16x8xbf16, #tpu.memory_space<vmem>>, vector<1x16x16x8xbf16>
    %53 = vector.shape_cast %52 : vector<1x16x16x8xbf16> to vector<256x8xbf16>
    %c2_102 = arith.constant 2 : index
    %c0_103 = arith.constant 0 : index
    %c0_104 = arith.constant 0 : index
    %c0_105 = arith.constant 0 : index
    %54 = vector.load %arg2[%c2_102, %c0_103, %c0_104, %c0_105] : memref<3x3x8x8xbf16, #tpu.memory_space<vmem>>, vector<1x1x8x8xbf16>
    %55 = vector.shape_cast %54 : vector<1x1x8x8xbf16> to vector<8x8xbf16>
    %cst_106 = arith.constant dense<0.000000e+00> : vector<256x8xf32>
    %56 = tpu.matmul %53, %55, %cst_106 {dimension_numbers = #tpu.dot_dimension_numbers<[1], [0], [0], [1], [0, 0, 1, 1], [], []>} : vector<256x8xbf16>, vector<8x8xbf16>, vector<256x8xf32> -> vector<256x8xf32>
    %57 = arith.addf %51, %56 : vector<256x8xf32>
    %c0_107 = arith.constant 0 : index
    %c2_108 = arith.constant 2 : index
    %c0_109 = arith.constant 0 : index
    %c0_110 = arith.constant 0 : index
    %58 = vector.load %arg8[%c0_107, %c2_108, %c0_109, %c0_110] : memref<1x18x16x8xbf16, #tpu.memory_space<vmem>>, vector<1x16x16x8xbf16>
    %59 = vector.shape_cast %58 : vector<1x16x16x8xbf16> to vector<256x8xbf16>
    %c2_111 = arith.constant 2 : index
    %c1_112 = arith.constant 1 : index
    %c0_113 = arith.constant 0 : index
    %c0_114 = arith.constant 0 : index
    %60 = vector.load %arg2[%c2_111, %c1_112, %c0_113, %c0_114] : memref<3x3x8x8xbf16, #tpu.memory_space<vmem>>, vector<1x1x8x8xbf16>
    %61 = vector.shape_cast %60 : vector<1x1x8x8xbf16> to vector<8x8xbf16>
    %cst_115 = arith.constant dense<0.000000e+00> : vector<256x8xf32>
    %62 = tpu.matmul %59, %61, %cst_115 {dimension_numbers = #tpu.dot_dimension_numbers<[1], [0], [0], [1], [0, 0, 1, 1], [], []>} : vector<256x8xbf16>, vector<8x8xbf16>, vector<256x8xf32> -> vector<256x8xf32>
    %63 = arith.addf %57, %62 : vector<256x8xf32>
    %c0_116 = arith.constant 0 : index
    %c2_117 = arith.constant 2 : index
    %c0_118 = arith.constant 0 : index
    %c0_119 = arith.constant 0 : index
    %64 = vector.load %arg9[%c0_116, %c2_117, %c0_118, %c0_119] : memref<1x18x16x8xbf16, #tpu.memory_space<vmem>>, vector<1x16x16x8xbf16>
    %65 = vector.shape_cast %64 : vector<1x16x16x8xbf16> to vector<256x8xbf16>
    %c2_120 = arith.constant 2 : index
    %c2_121 = arith.constant 2 : index
    %c0_122 = arith.constant 0 : index
    %c0_123 = arith.constant 0 : index
    %66 = vector.load %arg2[%c2_120, %c2_121, %c0_122, %c0_123] : memref<3x3x8x8xbf16, #tpu.memory_space<vmem>>, vector<1x1x8x8xbf16>
    %67 = vector.shape_cast %66 : vector<1x1x8x8xbf16> to vector<8x8xbf16>
    %cst_124 = arith.constant dense<0.000000e+00> : vector<256x8xf32>
    %68 = tpu.matmul %65, %67, %cst_124 {dimension_numbers = #tpu.dot_dimension_numbers<[1], [0], [0], [1], [0, 0, 1, 1], [], []>} : vector<256x8xbf16>, vector<8x8xbf16>, vector<256x8xf32> -> vector<256x8xf32>
    %69 = arith.addf %63, %68 : vector<256x8xf32>
    %c0_125 = arith.constant 0 : index
    %c0_126 = arith.constant 0 : index
    %70 = vector.load %arg3[%c0_125, %c0_126] : memref<1x8xf32, #tpu.memory_space<vmem>>, vector<1x8xf32>
    %71 = vector.broadcast %70 : vector<1x8xf32> to vector<256x8xf32>
    %72 = arith.addf %69, %71 : vector<256x8xf32>
    %cst_127 = arith.constant 0.000000e+00 : f32
    %73 = vector.broadcast %cst_127 : f32 to vector<256x8xf32>
    %74 = arith.maximumf %72, %73 : vector<256x8xf32>
    %75 = arith.truncf %74 : vector<256x8xf32> to vector<256x8xbf16>
    %76 = vector.shape_cast %75 : vector<256x8xbf16> to vector<1x16x16x8xbf16>
    %c0_128 = arith.constant 0 : index
    %c1_129 = arith.constant 1 : index
    %c0_130 = arith.constant 0 : index
    %c0_131 = arith.constant 0 : index
    %77 = vector.load %arg8[%c0_128, %c1_129, %c0_130, %c0_131] : memref<1x18x16x8xbf16, #tpu.memory_space<vmem>>, vector<1x16x16x8xbf16>
    tpu.vector_store %arg8[%c0_128, %c1_129, %c0_130, %c0_131], %76 {strides = array<i32>} : memref<1x18x16x8xbf16, #tpu.memory_space<vmem>>, vector<1x16x16x8xbf16>,
    %c0_132 = arith.constant 0 : index
    %c1_133 = arith.constant 1 : index
    %c0_134 = arith.constant 0 : index
    %c0_135 = arith.constant 0 : index
    %78 = vector.load %arg7[%c0_132, %c1_133, %c0_134, %c0_135] : memref<1x18x16x8xbf16, #tpu.memory_space<vmem>>, vector<1x16x1x8xbf16>
    tpu.vector_store %arg7[%c0_132, %c1_133, %c0_134, %c0_135], %1 {strides = array<i32>} : memref<1x18x16x8xbf16, #tpu.memory_space<vmem>>, vector<1x16x1x8xbf16>,
    %79 = vector.extract_strided_slice %76 {offsets = [0, 0, 0, 0], sizes = [1, 16, 15, 8], strides = [1, 1, 1, 1]} : vector<1x16x16x8xbf16> to vector<1x16x15x8xbf16>
    %c0_136 = arith.constant 0 : index
    %c1_137 = arith.constant 1 : index
    %c1_138 = arith.constant 1 : index
    %c0_139 = arith.constant 0 : index
    %80 = vector.load %arg7[%c0_136, %c1_137, %c1_138, %c0_139] : memref<1x18x16x8xbf16, #tpu.memory_space<vmem>>, vector<1x16x15x8xbf16>
    tpu.vector_store %arg7[%c0_136, %c1_137, %c1_138, %c0_139], %79 {strides = array<i32>} : memref<1x18x16x8xbf16, #tpu.memory_space<vmem>>, vector<1x16x15x8xbf16>,
    %c0_140 = arith.constant 0 : index
    %c1_141 = arith.constant 1 : index
    %c15_142 = arith.constant 15 : index
    %c0_143 = arith.constant 0 : index
    %81 = vector.load %arg9[%c0_140, %c1_141, %c15_142, %c0_143] : memref<1x18x16x8xbf16, #tpu.memory_space<vmem>>, vector<1x16x1x8xbf16>
    tpu.vector_store %arg9[%c0_140, %c1_141, %c15_142, %c0_143], %1 {strides = array<i32>} : memref<1x18x16x8xbf16, #tpu.memory_space<vmem>>, vector<1x16x1x8xbf16>,
    %82 = vector.extract_strided_slice %76 {offsets = [0, 0, 1, 0], sizes = [1, 16, 15, 8], strides = [1, 1, 1, 1]} : vector<1x16x16x8xbf16> to vector<1x16x15x8xbf16>
    %c0_144 = arith.constant 0 : index
    %c1_145 = arith.constant 1 : index
    %c0_146 = arith.constant 0 : index
    %c0_147 = arith.constant 0 : index
    %83 = vector.load %arg9[%c0_144, %c1_145, %c0_146, %c0_147] : memref<1x18x16x8xbf16, #tpu.memory_space<vmem>>, vector<1x16x15x8xbf16>
    tpu.vector_store %arg9[%c0_144, %c1_145, %c0_146, %c0_147], %82 {strides = array<i32>} : memref<1x18x16x8xbf16, #tpu.memory_space<vmem>>, vector<1x16x15x8xbf16>,
    %c0_148 = arith.constant 0 : index
    %c0_149 = arith.constant 0 : index
    %c0_150 = arith.constant 0 : index
    %c0_151 = arith.constant 0 : index
    %84 = vector.load %arg7[%c0_148, %c0_149, %c0_150, %c0_151] : memref<1x18x16x8xbf16, #tpu.memory_space<vmem>>, vector<1x16x16x8xbf16>
    %85 = vector.shape_cast %84 : vector<1x16x16x8xbf16> to vector<256x8xbf16>
    %c0_152 = arith.constant 0 : index
    %c0_153 = arith.constant 0 : index
    %c0_154 = arith.constant 0 : index
    %c0_155 = arith.constant 0 : index
    %86 = vector.load %arg4[%c0_152, %c0_153, %c0_154, %c0_155] : memref<3x3x8x8xbf16, #tpu.memory_space<vmem>>, vector<1x1x8x8xbf16>
    %87 = vector.shape_cast %86 : vector<1x1x8x8xbf16> to vector<8x8xbf16>
    %cst_156 = arith.constant dense<0.000000e+00> : vector<256x8xf32>
    %88 = tpu.matmul %85, %87, %cst_156 {dimension_numbers = #tpu.dot_dimension_numbers<[1], [0], [0], [1], [0, 0, 1, 1], [], []>} : vector<256x8xbf16>, vector<8x8xbf16>, vector<256x8xf32> -> vector<256x8xf32>
    %c0_157 = arith.constant 0 : index
    %c0_158 = arith.constant 0 : index
    %c0_159 = arith.constant 0 : index
    %c0_160 = arith.constant 0 : index
    %89 = vector.load %arg8[%c0_157, %c0_158, %c0_159, %c0_160] : memref<1x18x16x8xbf16, #tpu.memory_space<vmem>>, vector<1x16x16x8xbf16>
    %90 = vector.shape_cast %89 : vector<1x16x16x8xbf16> to vector<256x8xbf16>
    %c0_161 = arith.constant 0 : index
    %c1_162 = arith.constant 1 : index
    %c0_163 = arith.constant 0 : index
    %c0_164 = arith.constant 0 : index
    %91 = vector.load %arg4[%c0_161, %c1_162, %c0_163, %c0_164] : memref<3x3x8x8xbf16, #tpu.memory_space<vmem>>, vector<1x1x8x8xbf16>
    %92 = vector.shape_cast %91 : vector<1x1x8x8xbf16> to vector<8x8xbf16>
    %cst_165 = arith.constant dense<0.000000e+00> : vector<256x8xf32>
    %93 = tpu.matmul %90, %92, %cst_165 {dimension_numbers = #tpu.dot_dimension_numbers<[1], [0], [0], [1], [0, 0, 1, 1], [], []>} : vector<256x8xbf16>, vector<8x8xbf16>, vector<256x8xf32> -> vector<256x8xf32>
    %94 = arith.addf %88, %93 : vector<256x8xf32>
    %c0_166 = arith.constant 0 : index
    %c0_167 = arith.constant 0 : index
    %c0_168 = arith.constant 0 : index
    %c0_169 = arith.constant 0 : index
    %95 = vector.load %arg9[%c0_166, %c0_167, %c0_168, %c0_169] : memref<1x18x16x8xbf16, #tpu.memory_space<vmem>>, vector<1x16x16x8xbf16>
    %96 = vector.shape_cast %95 : vector<1x16x16x8xbf16> to vector<256x8xbf16>
    %c0_170 = arith.constant 0 : index
    %c2_171 = arith.constant 2 : index
    %c0_172 = arith.constant 0 : index
    %c0_173 = arith.constant 0 : index
    %97 = vector.load %arg4[%c0_170, %c2_171, %c0_172, %c0_173] : memref<3x3x8x8xbf16, #tpu.memory_space<vmem>>, vector<1x1x8x8xbf16>
    %98 = vector.shape_cast %97 : vector<1x1x8x8xbf16> to vector<8x8xbf16>
    %cst_174 = arith.constant dense<0.000000e+00> : vector<256x8xf32>
    %99 = tpu.matmul %96, %98, %cst_174 {dimension_numbers = #tpu.dot_dimension_numbers<[1], [0], [0], [1], [0, 0, 1, 1], [], []>} : vector<256x8xbf16>, vector<8x8xbf16>, vector<256x8xf32> -> vector<256x8xf32>
    %100 = arith.addf %94, %99 : vector<256x8xf32>
    %c0_175 = arith.constant 0 : index
    %c1_176 = arith.constant 1 : index
    %c0_177 = arith.constant 0 : index
    %c0_178 = arith.constant 0 : index
    %101 = vector.load %arg7[%c0_175, %c1_176, %c0_177, %c0_178] : memref<1x18x16x8xbf16, #tpu.memory_space<vmem>>, vector<1x16x16x8xbf16>
    %102 = vector.shape_cast %101 : vector<1x16x16x8xbf16> to vector<256x8xbf16>
    %c1_179 = arith.constant 1 : index
    %c0_180 = arith.constant 0 : index
    %c0_181 = arith.constant 0 : index
    %c0_182 = arith.constant 0 : index
    %103 = vector.load %arg4[%c1_179, %c0_180, %c0_181, %c0_182] : memref<3x3x8x8xbf16, #tpu.memory_space<vmem>>, vector<1x1x8x8xbf16>
    %104 = vector.shape_cast %103 : vector<1x1x8x8xbf16> to vector<8x8xbf16>
    %cst_183 = arith.constant dense<0.000000e+00> : vector<256x8xf32>
    %105 = tpu.matmul %102, %104, %cst_183 {dimension_numbers = #tpu.dot_dimension_numbers<[1], [0], [0], [1], [0, 0, 1, 1], [], []>} : vector<256x8xbf16>, vector<8x8xbf16>, vector<256x8xf32> -> vector<256x8xf32>
    %106 = arith.addf %100, %105 : vector<256x8xf32>
    %c0_184 = arith.constant 0 : index
    %c1_185 = arith.constant 1 : index
    %c0_186 = arith.constant 0 : index
    %c0_187 = arith.constant 0 : index
    %107 = vector.load %arg8[%c0_184, %c1_185, %c0_186, %c0_187] : memref<1x18x16x8xbf16, #tpu.memory_space<vmem>>, vector<1x16x16x8xbf16>
    %108 = vector.shape_cast %107 : vector<1x16x16x8xbf16> to vector<256x8xbf16>
    %c1_188 = arith.constant 1 : index
    %c1_189 = arith.constant 1 : index
    %c0_190 = arith.constant 0 : index
    %c0_191 = arith.constant 0 : index
    %109 = vector.load %arg4[%c1_188, %c1_189, %c0_190, %c0_191] : memref<3x3x8x8xbf16, #tpu.memory_space<vmem>>, vector<1x1x8x8xbf16>
    %110 = vector.shape_cast %109 : vector<1x1x8x8xbf16> to vector<8x8xbf16>
    %cst_192 = arith.constant dense<0.000000e+00> : vector<256x8xf32>
    %111 = tpu.matmul %108, %110, %cst_192 {dimension_numbers = #tpu.dot_dimension_numbers<[1], [0], [0], [1], [0, 0, 1, 1], [], []>} : vector<256x8xbf16>, vector<8x8xbf16>, vector<256x8xf32> -> vector<256x8xf32>
    %112 = arith.addf %106, %111 : vector<256x8xf32>
    %c0_193 = arith.constant 0 : index
    %c1_194 = arith.constant 1 : index
    %c0_195 = arith.constant 0 : index
    %c0_196 = arith.constant 0 : index
    %113 = vector.load %arg9[%c0_193, %c1_194, %c0_195, %c0_196] : memref<1x18x16x8xbf16, #tpu.memory_space<vmem>>, vector<1x16x16x8xbf16>
    %114 = vector.shape_cast %113 : vector<1x16x16x8xbf16> to vector<256x8xbf16>
    %c1_197 = arith.constant 1 : index
    %c2_198 = arith.constant 2 : index
    %c0_199 = arith.constant 0 : index
    %c0_200 = arith.constant 0 : index
    %115 = vector.load %arg4[%c1_197, %c2_198, %c0_199, %c0_200] : memref<3x3x8x8xbf16, #tpu.memory_space<vmem>>, vector<1x1x8x8xbf16>
    %116 = vector.shape_cast %115 : vector<1x1x8x8xbf16> to vector<8x8xbf16>
    %cst_201 = arith.constant dense<0.000000e+00> : vector<256x8xf32>
    %117 = tpu.matmul %114, %116, %cst_201 {dimension_numbers = #tpu.dot_dimension_numbers<[1], [0], [0], [1], [0, 0, 1, 1], [], []>} : vector<256x8xbf16>, vector<8x8xbf16>, vector<256x8xf32> -> vector<256x8xf32>
    %118 = arith.addf %112, %117 : vector<256x8xf32>
    %c0_202 = arith.constant 0 : index
    %c2_203 = arith.constant 2 : index
    %c0_204 = arith.constant 0 : index
    %c0_205 = arith.constant 0 : index
    %119 = vector.load %arg7[%c0_202, %c2_203, %c0_204, %c0_205] : memref<1x18x16x8xbf16, #tpu.memory_space<vmem>>, vector<1x16x16x8xbf16>
    %120 = vector.shape_cast %119 : vector<1x16x16x8xbf16> to vector<256x8xbf16>
    %c2_206 = arith.constant 2 : index
    %c0_207 = arith.constant 0 : index
    %c0_208 = arith.constant 0 : index
    %c0_209 = arith.constant 0 : index
    %121 = vector.load %arg4[%c2_206, %c0_207, %c0_208, %c0_209] : memref<3x3x8x8xbf16, #tpu.memory_space<vmem>>, vector<1x1x8x8xbf16>
    %122 = vector.shape_cast %121 : vector<1x1x8x8xbf16> to vector<8x8xbf16>
    %cst_210 = arith.constant dense<0.000000e+00> : vector<256x8xf32>
    %123 = tpu.matmul %120, %122, %cst_210 {dimension_numbers = #tpu.dot_dimension_numbers<[1], [0], [0], [1], [0, 0, 1, 1], [], []>} : vector<256x8xbf16>, vector<8x8xbf16>, vector<256x8xf32> -> vector<256x8xf32>
    %124 = arith.addf %118, %123 : vector<256x8xf32>
    %c0_211 = arith.constant 0 : index
    %c2_212 = arith.constant 2 : index
    %c0_213 = arith.constant 0 : index
    %c0_214 = arith.constant 0 : index
    %125 = vector.load %arg8[%c0_211, %c2_212, %c0_213, %c0_214] : memref<1x18x16x8xbf16, #tpu.memory_space<vmem>>, vector<1x16x16x8xbf16>
    %126 = vector.shape_cast %125 : vector<1x16x16x8xbf16> to vector<256x8xbf16>
    %c2_215 = arith.constant 2 : index
    %c1_216 = arith.constant 1 : index
    %c0_217 = arith.constant 0 : index
    %c0_218 = arith.constant 0 : index
    %127 = vector.load %arg4[%c2_215, %c1_216, %c0_217, %c0_218] : memref<3x3x8x8xbf16, #tpu.memory_space<vmem>>, vector<1x1x8x8xbf16>
    %128 = vector.shape_cast %127 : vector<1x1x8x8xbf16> to vector<8x8xbf16>
    %cst_219 = arith.constant dense<0.000000e+00> : vector<256x8xf32>
    %129 = tpu.matmul %126, %128, %cst_219 {dimension_numbers = #tpu.dot_dimension_numbers<[1], [0], [0], [1], [0, 0, 1, 1], [], []>} : vector<256x8xbf16>, vector<8x8xbf16>, vector<256x8xf32> -> vector<256x8xf32>
    %130 = arith.addf %124, %129 : vector<256x8xf32>
    %c0_220 = arith.constant 0 : index
    %c2_221 = arith.constant 2 : index
    %c0_222 = arith.constant 0 : index
    %c0_223 = arith.constant 0 : index
    %131 = vector.load %arg9[%c0_220, %c2_221, %c0_222, %c0_223] : memref<1x18x16x8xbf16, #tpu.memory_space<vmem>>, vector<1x16x16x8xbf16>
    %132 = vector.shape_cast %131 : vector<1x16x16x8xbf16> to vector<256x8xbf16>
    %c2_224 = arith.constant 2 : index
    %c2_225 = arith.constant 2 : index
    %c0_226 = arith.constant 0 : index
    %c0_227 = arith.constant 0 : index
    %133 = vector.load %arg4[%c2_224, %c2_225, %c0_226, %c0_227] : memref<3x3x8x8xbf16, #tpu.memory_space<vmem>>, vector<1x1x8x8xbf16>
    %134 = vector.shape_cast %133 : vector<1x1x8x8xbf16> to vector<8x8xbf16>
    %cst_228 = arith.constant dense<0.000000e+00> : vector<256x8xf32>
    %135 = tpu.matmul %132, %134, %cst_228 {dimension_numbers = #tpu.dot_dimension_numbers<[1], [0], [0], [1], [0, 0, 1, 1], [], []>} : vector<256x8xbf16>, vector<8x8xbf16>, vector<256x8xf32> -> vector<256x8xf32>
    %136 = arith.addf %130, %135 : vector<256x8xf32>
    %c0_229 = arith.constant 0 : index
    %c0_230 = arith.constant 0 : index
    %137 = vector.load %arg5[%c0_229, %c0_230] : memref<1x8xf32, #tpu.memory_space<vmem>>, vector<1x8xf32>
    %138 = vector.broadcast %137 : vector<1x8xf32> to vector<256x8xf32>
    %139 = arith.addf %136, %138 : vector<256x8xf32>
    %c0_231 = arith.constant 0 : index
    %c0_232 = arith.constant 0 : index
    %c0_233 = arith.constant 0 : index
    %c0_234 = arith.constant 0 : index
    %140 = vector.load %arg1[%c0_231, %c0_232, %c0_233, %c0_234] : memref<1x16x16x8xf32, #tpu.memory_space<vmem>>, vector<1x16x16x8xf32>
    %141 = vector.shape_cast %139 : vector<256x8xf32> to vector<1x16x16x8xf32>
    %142 = arith.addf %140, %141 : vector<1x16x16x8xf32>
    %c0_235 = arith.constant 0 : index
    %c0_236 = arith.constant 0 : index
    %c0_237 = arith.constant 0 : index
    %c0_238 = arith.constant 0 : index
    %143 = vector.load %arg6[%c0_235, %c0_236, %c0_237, %c0_238] : memref<1x16x16x8xf32, #tpu.memory_space<vmem>>, vector<1x16x16x8xf32>
    tpu.vector_store %arg6[%c0_235, %c0_236, %c0_237, %c0_238], %142 {strides = array<i32>} : memref<1x16x16x8xf32, #tpu.memory_space<vmem>>, vector<1x16x16x8xf32>,
    return
  }
  func.func @transform_0(%arg0: i32) -> (i32, i32, i32, i32) {
    %c0_i32 = arith.constant 0 : i32
    %c0_i32_0 = arith.constant 0 : i32
    %c0_i32_1 = arith.constant 0 : i32
    %c0_i32_2 = arith.constant 0 : i32
    return %arg0, %c0_i32, %c0_i32_0, %c0_i32_1 : i32, i32, i32, i32
  }
  func.func @transform_1(%arg0: i32) -> (i32, i32, i32, i32) {
    %c0_i32 = arith.constant 0 : i32
    %c0_i32_0 = arith.constant 0 : i32
    %c0_i32_1 = arith.constant 0 : i32
    %c0_i32_2 = arith.constant 0 : i32
    %c0_i32_3 = arith.constant 0 : i32
    return %c0_i32, %c0_i32_0, %c0_i32_1, %c0_i32_2 : i32, i32, i32, i32
  }
  func.func @transform_2(%arg0: i32) -> (i32, i32) {
    %c0_i32 = arith.constant 0 : i32
    %c0_i32_0 = arith.constant 0 : i32
    %c0_i32_1 = arith.constant 0 : i32
    return %c0_i32, %c0_i32_0 : i32, i32
  }
  func.func @transform_3(%arg0: i32) -> (i32, i32, i32, i32) {
    %c0_i32 = arith.constant 0 : i32
    %c0_i32_0 = arith.constant 0 : i32
    %c0_i32_1 = arith.constant 0 : i32
    %c0_i32_2 = arith.constant 0 : i32
    %c0_i32_3 = arith.constant 0 : i32
    return %c0_i32, %c0_i32_0, %c0_i32_1, %c0_i32_2 : i32, i32, i32, i32
  }
  func.func @transform_4(%arg0: i32) -> (i32, i32) {
    %c0_i32 = arith.constant 0 : i32
    %c0_i32_0 = arith.constant 0 : i32
    %c0_i32_1 = arith.constant 0 : i32
    return %c0_i32, %c0_i32_0 : i32, i32
  }
  func.func @transform_5(%arg0: i32) -> (i32, i32, i32, i32) {
    %c0_i32 = arith.constant 0 : i32
    %c0_i32_0 = arith.constant 0 : i32
    %c0_i32_1 = arith.constant 0 : i32
    %c0_i32_2 = arith.constant 0 : i32
    return %arg0, %c0_i32, %c0_i32_0, %c0_i32_1 : i32, i32, i32, i32
  }
}

</mosaic_0001>

<llo_original>
// kernel: residual_block_forward_nhwc.1
$region0: #{residual_block_forward_nhwc.1}
  #allocation0 [shape = 'u32[]', space=smem, size = 0x4, offset = 0x4, fixed_abs, tag = 'smem constant byte address 0x4 - core index']
  #allocation1 [shape = 'u32[72,128]{1,0:T(1,128)}', space=vmem, size = 0x9000, scoped, tag = 'internal scratch']
  #allocation2 [shape = 'bf16[1,18,16,8]{3,2,1,0:T(8,128)(2,1)}', space=vmem, size = 0x12000, scoped, tag = 'scratch operand']
  #allocation3 [shape = 'bf16[1,18,16,8]{3,2,1,0:T(8,128)(2,1)}', space=vmem, size = 0x12000, scoped, tag = 'scratch operand']
  #allocation4 [shape = 'bf16[1,18,16,8]{3,2,1,0:T(8,128)(2,1)}', space=vmem, size = 0x12000, scoped, tag = 'scratch operand']
  %s0 = inlined_call_operand.vmem [shape: f32[2,16,16,8], index: 0, kind: input, shape index: {}]
  %s1 = inlined_call_operand.vmem [shape: bf16[3,3,8,8], index: 1, kind: input, shape index: {}]
  %s2 = inlined_call_operand.vmem [shape: f32[1,8], index: 2, kind: input, shape index: {}]
  %s3 = inlined_call_operand.vmem [shape: bf16[3,3,8,8], index: 3, kind: input, shape index: {}]
  %s4 = inlined_call_operand.vmem [shape: f32[1,8], index: 4, kind: input, shape index: {}]
  %s5 = inlined_call_operand.vmem [shape: f32[2,16,16,8], index: 5, kind: output, shape index: {}]
  %s6 = sld [smem:[#allocation0]]
  $region53: #{residual_block_forward_nhwc.1} parent=0
    _
  %s8 = ssub.s32 1, %s6
  %s9 = scalar_select 0, %s8, %s6
  loop: start=0, step=1, limit=4
  $region2: #{residual_block_forward_nhwc.1} parent=0 // loop_pre_header
    _
  $region3: #{residual_block_forward_nhwc.1} parent=0 // loop_header
    %s11 = sphi 0, %s15
    %p12 = scmp.ge.s32.totalorder %s11, 4
    %s21 = sphi 0, %s23
    %s24 = sphi 0, %s21
    %s25 = sphi 0, %s24
    %s41 = sphi 0, %s25
    %s45 = sphi 0, %s45
    %s47 = sphi 0, %s45
    %s48 = sphi 0, %s47
    %s62 = sphi 0, %s48
    %s66 = sphi 0, %s66
    %s68 = sphi 0, %s66
    %s69 = sphi 0, %s68
    %s83 = sphi 0, %s69
    %s87 = sphi 0, %s87
    %s89 = sphi 0, %s87
    %s90 = sphi 0, %s89
    %s104 = sphi 0, %s90
    %s108 = sphi 0, %s108
    %s110 = sphi 0, %s108
    %s111 = sphi 0, %s110
    %s125 = sphi 0, %s111
    %s131 = sphi 0, %s133
    %s134 = sphi 0, %s131
    %s135 = sphi 0, %s134
    %s151 = sphi 0, %s135
  $region4: #{residual_block_forward_nhwc.1} parent=0 // loop_header_branch
    %14 = sbr.rel (%p12) target = $region8
  $region5: #{residual_block_forward_nhwc.1} parent=0 // loop_body
    %s16 = ssub.s32 %s11, 1
    %s17 = ssub.s32 %s11, 2
    %s18 = sadd.s32 %s11, 1
    %s19 = ssub.s32 %s11, %s18
    %p20 = scmp.eq.s32.totalorder %s19, 0
    %s22 = sadd.s32 %s21, 1
    %s23 = scalar_select %p20, %s21, %s22
    %p26 = pneg %p20
    %p27 = scmp.eq.s32.totalorder %s11, 1
    %p28 = por %p26, %p27
    %p29 = scmp.ne.s32.totalorder %s21, %s24
    %p30 = scmp.eq.s32.totalorder %s11, 0
    %p31 = por %p29, %p30
    %p32 = scmp.ne.s32.totalorder %s21, %s24
    %p33 = scmp.eq.s32.totalorder %s16, 1
    %p34 = por %p32, %p33
    %p35 = scmp.ne.s32.totalorder %s24, %s25
    %p36 = scmp.eq.s32.totalorder %s16, 0
    %p37 = por %p35, %p36
    %p38 = scmp.ne.s32.totalorder %s24, %s25
    %p39 = scmp.eq.s32.totalorder %s17, 1
    %p40 = por %p38, %p39
    %p42 = scmp.ne.s32.totalorder %s25, %s41
    %p43 = scmp.eq.s32.totalorder %s17, 0
    %p44 = por %p42, %p43
    %s46 = sadd.s32 %s45, 1
    %p49 = scmp.eq.s32.totalorder %s11, 1
    %p50 = scmp.ne.s32.totalorder %s45, %s47
    %p51 = scmp.eq.s32.totalorder %s11, 0
    %p52 = por %p50, %p51
    %p53 = scmp.ne.s32.totalorder %s45, %s47
    %p54 = scmp.eq.s32.totalorder %s16, 1
    %p55 = por %p53, %p54
    %p56 = scmp.ne.s32.totalorder %s47, %s48
    %p57 = scmp.eq.s32.totalorder %s16, 0
    %p58 = por %p56, %p57
    %p59 = scmp.ne.s32.totalorder %s47, %s48
    %p60 = scmp.eq.s32.totalorder %s17, 1
    %p61 = por %p59, %p60
    %p63 = scmp.ne.s32.totalorder %s48, %s62
    %p64 = scmp.eq.s32.totalorder %s17, 0
    %p65 = por %p63, %p64
    %s67 = sadd.s32 %s66, 1
    %p70 = scmp.eq.s32.totalorder %s11, 1
    %p71 = scmp.ne.s32.totalorder %s66, %s68
    %p72 = scmp.eq.s32.totalorder %s11, 0
    %p73 = por %p71, %p72
    %p74 = scmp.ne.s32.totalorder %s66, %s68
    %p75 = scmp.eq.s32.totalorder %s16, 1
    %p76 = por %p74, %p75
    %p77 = scmp.ne.s32.totalorder %s68, %s69
    %p78 = scmp.eq.s32.totalorder %s16, 0
    %p79 = por %p77, %p78
    %p80 = scmp.ne.s32.totalorder %s68, %s69
    %p81 = scmp.eq.s32.totalorder %s17, 1
    %p82 = por %p80, %p81
    %p84 = scmp.ne.s32.totalorder %s69, %s83
    %p85 = scmp.eq.s32.totalorder %s17, 0
    %p86 = por %p84, %p85
    %s88 = sadd.s32 %s87, 1
    %p91 = scmp.eq.s32.totalorder %s11, 1
    %p92 = scmp.ne.s32.totalorder %s87, %s89
    %p93 = scmp.eq.s32.totalorder %s11, 0
    %p94 = por %p92, %p93
    %p95 = scmp.ne.s32.totalorder %s87, %s89
    %p96 = scmp.eq.s32.totalorder %s16, 1
    %p97 = por %p95, %p96
    %p98 = scmp.ne.s32.totalorder %s89, %s90
    %p99 = scmp.eq.s32.totalorder %s16, 0
    %p100 = por %p98, %p99
    %p101 = scmp.ne.s32.totalorder %s89, %s90
    %p102 = scmp.eq.s32.totalorder %s17, 1
    %p103 = por %p101, %p102
    %p105 = scmp.ne.s32.totalorder %s90, %s104
    %p106 = scmp.eq.s32.totalorder %s17, 0
    %p107 = por %p105, %p106
    %s109 = sadd.s32 %s108, 1
    %p112 = scmp.eq.s32.totalorder %s11, 1
    %p113 = scmp.ne.s32.totalorder %s108, %s110
    %p114 = scmp.eq.s32.totalorder %s11, 0
    %p115 = por %p113, %p114
    %p116 = scmp.ne.s32.totalorder %s108, %s110
    %p117 = scmp.eq.s32.totalorder %s16, 1
    %p118 = por %p116, %p117
    %p119 = scmp.ne.s32.totalorder %s110, %s111
    %p120 = scmp.eq.s32.totalorder %s16, 0
    %p121 = por %p119, %p120
    %p122 = scmp.ne.s32.totalorder %s110, %s111
    %p123 = scmp.eq.s32.totalorder %s17, 1
    %p124 = por %p122, %p123
    %p126 = scmp.ne.s32.totalorder %s111, %s125
    %p127 = scmp.eq.s32.totalorder %s17, 0
    %p128 = por %p126, %p127
    %s129 = ssub.s32 %s11, %s18
    %p130 = scmp.eq.s32.totalorder %s129, 0
    %s132 = sadd.s32 %s131, 1
    %s133 = scalar_select %p130, %s131, %s132
    %p136 = pneg %p130
    %p137 = scmp.eq.s32.totalorder %s11, 1
    %p138 = por %p136, %p137
    %p139 = scmp.ne.s32.totalorder %s131, %s134
    %p140 = scmp.eq.s32.totalorder %s11, 0
    %p141 = por %p139, %p140
    %p142 = scmp.ne.s32.totalorder %s131, %s134
    %p143 = scmp.eq.s32.totalorder %s16, 1
    %p144 = por %p142, %p143
    %p145 = scmp.ne.s32.totalorder %s134, %s135
    %p146 = scmp.eq.s32.totalorder %s16, 0
    %p147 = por %p145, %p146
    %p148 = scmp.ne.s32.totalorder %s134, %s135
    %p149 = scmp.eq.s32.totalorder %s17, 1
    %p150 = por %p148, %p149
    %p152 = scmp.ne.s32.totalorder %s135, %s151
    %p153 = scmp.eq.s32.totalorder %s17, 0
    %p154 = por %p152, %p153
    %p155 = scmp.le.s32.totalorder 1, %s11
    %p156 = scmp.lt.s32.totalorder %s11, 3
    %p157 = pnand %p155, %p156
    %p158 = pneg %p157
    // Predicated region
    $region9: #{residual_block_forward_nhwc.1} parent=5 // pred_check
      _
    $region10: #{residual_block_forward_nhwc.1} parent=5 // pred_check_branch
      %160 = sbr.rel (%p157) target = $region12
    $region11: #{residual_block_forward_nhwc.1} parent=5 // pred_region
      %s161 = ssub.s32 %s11, 1
      // Predicated region
      $region13: #{residual_block_forward_nhwc.1} parent=11 // pred_check
        %p162 = pneg %p58
      $region14: #{residual_block_forward_nhwc.1} parent=11 // pred_check_branch
        %164 = sbr.rel (%p162) target = $region16
      $region15: #{residual_block_forward_nhwc.1} parent=11 // pred_region
        _
      $region16: #{residual_block_forward_nhwc.1} parent=11 // pred_fallthru
        _
      // Predicated region
      $region17: #{residual_block_forward_nhwc.1} parent=11 // pred_check
        %p165 = pneg %p79
      $region18: #{residual_block_forward_nhwc.1} parent=11 // pred_check_branch
        %167 = sbr.rel (%p165) target = $region20
      $region19: #{residual_block_forward_nhwc.1} parent=11 // pred_region
        _
      $region20: #{residual_block_forward_nhwc.1} parent=11 // pred_fallthru
        _
      // Predicated region
      $region21: #{residual_block_forward_nhwc.1} parent=11 // pred_check
        %p168 = pneg %p100
      $region22: #{residual_block_forward_nhwc.1} parent=11 // pred_check_branch
        %170 = sbr.rel (%p168) target = $region24
      $region23: #{residual_block_forward_nhwc.1} parent=11 // pred_region
        _
      $region24: #{residual_block_forward_nhwc.1} parent=11 // pred_fallthru
        _
      // Predicated region
      $region25: #{residual_block_forward_nhwc.1} parent=11 // pred_check
        %p171 = pneg %p121
      $region26: #{residual_block_forward_nhwc.1} parent=11 // pred_check_branch
        %173 = sbr.rel (%p171) target = $region28
      $region27: #{residual_block_forward_nhwc.1} parent=11 // pred_region
        _
      $region28: #{residual_block_forward_nhwc.1} parent=11 // pred_fallthru
        _
    $region12: #{residual_block_forward_nhwc.1} parent=5 // pred_fallthru
      _
    %p174 = scmp.lt.s32.totalorder %s11, 2
    // Predicated region
    $region29: #{residual_block_forward_nhwc.1} parent=5 // pred_check
      %p175 = pneg %p174
    $region30: #{residual_block_forward_nhwc.1} parent=5 // pred_check_branch
      %177 = sbr.rel (%p175) target = $region32
    $region31: #{residual_block_forward_nhwc.1} parent=5 // pred_region
      // Predicated region
      $region33: #{residual_block_forward_nhwc.1} parent=31 // pred_check
        %p178 = pneg %p31
      $region34: #{residual_block_forward_nhwc.1} parent=31 // pred_check_branch
        %180 = sbr.rel (%p178) target = $region36
      $region35: #{residual_block_forward_nhwc.1} parent=31 // pred_region
        %p181 = scmp.lt.s32.totalorder %s11, 1
        %s182 = scalar_select %p181, %s11, 1
        %s183 = smul.addr %s182, 32
        %s184 = smul.addr %s183, 8
        %s185 = scalar_lea.vmem %s0, %s184
      $region36: #{residual_block_forward_nhwc.1} parent=31 // pred_fallthru
        _
    $region32: #{residual_block_forward_nhwc.1} parent=5 // pred_fallthru
      _
    %p186 = scmp.le.s32.totalorder 1, %s11
    %p187 = scmp.lt.s32.totalorder %s11, 3
    %p188 = pnand %p186, %p187
    %p189 = pneg %p188
    // Predicated region
    $region37: #{residual_block_forward_nhwc.1} parent=5 // pred_check
      _
    $region38: #{residual_block_forward_nhwc.1} parent=5 // pred_check_branch
      %191 = sbr.rel (%p188) target = $region40
    $region39: #{residual_block_forward_nhwc.1} parent=5 // pred_region
      %s192 = ssub.s32 %s11, 1
      %p193 = scmp.lt.s32.totalorder %s16, 1
      %s194 = scalar_select %p193, %s16, 1
      %s195 = smul.addr %s194, 32
      %s196 = smul.addr %s195, 8
      %s197 = scalar_lea.vmem %s0, %s196
      %p198 = pneg %p37
      %p199 = pneg %p34
      %p200 = pneg %p58
      %p201 = pneg %p55
      %p202 = pneg %p79
      %p203 = pneg %p76
      %p204 = pneg %p100
      %p205 = pneg %p97
      %p206 = pneg %p121
      %p207 = pneg %p118
      %p208 = pneg %p147
      %p209 = pneg %p144
      %p210 = scmp.lt.s32.totalorder %s16, 1
      %s211 = scalar_select %p210, %s16, 1
      %s212 = smul.addr %s211, 32
      %s213 = smul.addr %s212, 8
      %s214 = scalar_lea.vmem %s5, %s213
      %p215 = scmp.lt.s32.totalorder %s16, 1
      %s216 = scalar_select %p215, %s16, 1
      %s217 = smul.addr %s216, 32
      %s218 = smul.addr %s217, 8
      %s219 = scalar_lea.vmem %s0, %s218
      %p220 = scmp.lt.s32.totalorder %s16, 1
      %s221 = scalar_select %p220, %s16, 1
      %s222 = smul.addr %s221, 32
      %s223 = smul.addr %s222, 8
      %s224 = scalar_lea.vmem %s5, %s223
      %vm226 = vcmask 60416
      %227 = vst.msk [vmem:[#allocation2] sm:$0xf] %vm226, 0
      %228 = vst.msk [vmem:[#allocation2 + $0x4] sm:$0xf] %vm226, 0
      %s229 = scalar_lea.vmem [#allocation2], 136
      %230 = vst.msk [vmem:[%s229] sm:$0xf] %vm226, 0
      %231 = vst.msk [vmem:[%s229 + $0x4] sm:$0xf] %vm226, 0
      %232 = vst.msk [vmem:[#allocation3] sm:$0xf] %vm226, 0
      %233 = vst.msk [vmem:[#allocation3 + $0x4] sm:$0xf] %vm226, 0
      %s234 = scalar_lea.vmem [#allocation3], 136
      %235 = vst.msk [vmem:[%s234] sm:$0xf] %vm226, 0
      %236 = vst.msk [vmem:[%s234 + $0x4] sm:$0xf] %vm226, 0
      %237 = vst.msk [vmem:[#allocation4] sm:$0xf] %vm226, 0
      %238 = vst.msk [vmem:[#allocation4 + $0x4] sm:$0xf] %vm226, 0
      %s239 = scalar_lea.vmem [#allocation4], 136
      %240 = vst.msk [vmem:[%s239] sm:$0xf] %vm226, 0
      %241 = vst.msk [vmem:[%s239 + $0x4] sm:$0xf] %vm226, 0
      %v242 = vld [vmem:[%s219] sm:$0xff]
      %v243 = vld [vmem:[%s219 + $0x8] sm:$0xff]
      %v244 = vld [vmem:[%s219 + $0x10] sm:$0xff]
      %v245 = vld [vmem:[%s219 + $0x18] sm:$0xff]
      %v246 = vld [vmem:[%s219 + $0x20] sm:$0xff]
      %v247 = vld [vmem:[%s219 + $0x28] sm:$0xff]
      %v248 = vld [vmem:[%s219 + $0x30] sm:$0xff]
      %v249 = vld [vmem:[%s219 + $0x38] sm:$0xff]
      %v250 = vld [vmem:[%s219 + $0x40] sm:$0xff]
      %v251 = vld [vmem:[%s219 + $0x48] sm:$0xff]
      %v252 = vld [vmem:[%s219 + $0x50] sm:$0xff]
      %v253 = vld [vmem:[%s219 + $0x58] sm:$0xff]
      %v254 = vld [vmem:[%s219 + $0x60] sm:$0xff]
      %v255 = vld [vmem:[%s219 + $0x68] sm:$0xff]
      %v256 = vld [vmem:[%s219 + $0x70] sm:$0xff]
      %v257 = vld [vmem:[%s219 + $0x78] sm:$0xff]
      %v258 = vld [vmem:[%s219 + $0x80] sm:$0xff]
      %v259 = vld [vmem:[%s219 + $0x88] sm:$0xff]
      %v260 = vld [vmem:[%s219 + $0x90] sm:$0xff]
      %v261 = vld [vmem:[%s219 + $0x98] sm:$0xff]
      %v262 = vld [vmem:[%s219 + $0xa0] sm:$0xff]
      %v263 = vld [vmem:[%s219 + $0xa8] sm:$0xff]
      %v264 = vld [vmem:[%s219 + $0xb0] sm:$0xff]
      %v265 = vld [vmem:[%s219 + $0xb8] sm:$0xff]
      %v266 = vld [vmem:[%s219 + $0xc0] sm:$0xff]
      %v267 = vld [vmem:[%s219 + $0xc8] sm:$0xff]
      %v268 = vld [vmem:[%s219 + $0xd0] sm:$0xff]
      %v269 = vld [vmem:[%s219 + $0xd8] sm:$0xff]
      %v270 = vld [vmem:[%s219 + $0xe0] sm:$0xff]
      %v271 = vld [vmem:[%s219 + $0xe8] sm:$0xff]
      %v272 = vld [vmem:[%s219 + $0xf0] sm:$0xff]
      %v273 = vld [vmem:[%s219 + $0xf8] sm:$0xff]
      %v274 = vpack.c.bf16 %v242, %v242
      %v275 = vpack.c.bf16 %v243, %v243
      %v276 = vpack.c.bf16 %v244, %v244
      %v277 = vpack.c.bf16 %v245, %v245
      %v278 = vpack.c.bf16 %v246, %v246
      %v279 = vpack.c.bf16 %v247, %v247
      %v280 = vpack.c.bf16 %v248, %v248
      %v281 = vpack.c.bf16 %v249, %v249
      %v282 = vpack.c.bf16 %v250, %v250
      %v283 = vpack.c.bf16 %v251, %v251
      %v284 = vpack.c.bf16 %v252, %v252
      %v285 = vpack.c.bf16 %v253, %v253
      %v286 = vpack.c.bf16 %v254, %v254
      %v287 = vpack.c.bf16 %v255, %v255
      %v288 = vpack.c.bf16 %v256, %v256
      %v289 = vpack.c.bf16 %v257, %v257
      %v290 = vpack.c.bf16 %v258, %v258
      %v291 = vpack.c.bf16 %v259, %v259
      %v292 = vpack.c.bf16 %v260, %v260
      %v293 = vpack.c.bf16 %v261, %v261
      %v294 = vpack.c.bf16 %v262, %v262
      %v295 = vpack.c.bf16 %v263, %v263
      %v296 = vpack.c.bf16 %v264, %v264
      %v297 = vpack.c.bf16 %v265, %v265
      %v298 = vpack.c.bf16 %v266, %v266
      %v299 = vpack.c.bf16 %v267, %v267
      %v300 = vpack.c.bf16 %v268, %v268
      %v301 = vpack.c.bf16 %v269, %v269
      %v302 = vpack.c.bf16 %v270, %v270
      %v303 = vpack.c.bf16 %v271, %v271
      %v304 = vpack.c.bf16 %v272, %v272
      %v305 = vpack.c.bf16 %v273, %v273
      %s306 = scalar_lea.vmem [#allocation3], 8
      %307 = vst.msk [vmem:[%s306] sm:$0xf] %vm226, %v274
      %308 = vst.msk [vmem:[%s306 + $0x4] sm:$0xf] %vm226, %v275
      %309 = vst.msk [vmem:[%s306 + $0x8] sm:$0xf] %vm226, %v276
      %310 = vst.msk [vmem:[%s306 + $0xc] sm:$0xf] %vm226, %v277
      %311 = vst.msk [vmem:[%s306 + $0x10] sm:$0xf] %vm226, %v278
      %312 = vst.msk [vmem:[%s306 + $0x14] sm:$0xf] %vm226, %v279
      %313 = vst.msk [vmem:[%s306 + $0x18] sm:$0xf] %vm226, %v280
      %314 = vst.msk [vmem:[%s306 + $0x1c] sm:$0xf] %vm226, %v281
      %315 = vst.msk [vmem:[%s306 + $0x20] sm:$0xf] %vm226, %v282
      %316 = vst.msk [vmem:[%s306 + $0x24] sm:$0xf] %vm226, %v283
      %317 = vst.msk [vmem:[%s306 + $0x28] sm:$0xf] %vm226, %v284
      %318 = vst.msk [vmem:[%s306 + $0x2c] sm:$0xf] %vm226, %v285
      %319 = vst.msk [vmem:[%s306 + $0x30] sm:$0xf] %vm226, %v286
      %320 = vst.msk [vmem:[%s306 + $0x34] sm:$0xf] %vm226, %v287
      %321 = vst.msk [vmem:[%s306 + $0x38] sm:$0xf] %vm226, %v288
      %322 = vst.msk [vmem:[%s306 + $0x3c] sm:$0xf] %vm226, %v289
      %323 = vst.msk [vmem:[%s306 + $0x40] sm:$0xf] %vm226, %v290
      %324 = vst.msk [vmem:[%s306 + $0x44] sm:$0xf] %vm226, %v291
      %325 = vst.msk [vmem:[%s306 + $0x48] sm:$0xf] %vm226, %v292
      %326 = vst.msk [vmem:[%s306 + $0x4c] sm:$0xf] %vm226, %v293
      %327 = vst.msk [vmem:[%s306 + $0x50] sm:$0xf] %vm226, %v294
      %328 = vst.msk [vmem:[%s306 + $0x54] sm:$0xf] %vm226, %v295
      %329 = vst.msk [vmem:[%s306 + $0x58] sm:$0xf] %vm226, %v296
      %330 = vst.msk [vmem:[%s306 + $0x5c] sm:$0xf] %vm226, %v297
      %331 = vst.msk [vmem:[%s306 + $0x60] sm:$0xf] %vm226, %v298
      %332 = vst.msk [vmem:[%s306 + $0x64] sm:$0xf] %vm226, %v299
      %333 = vst.msk [vmem:[%s306 + $0x68] sm:$0xf] %vm226, %v300
      %334 = vst.msk [vmem:[%s306 + $0x6c] sm:$0xf] %vm226, %v301
      %335 = vst.msk [vmem:[%s306 + $0x70] sm:$0xf] %vm226, %v302
      %336 = vst.msk [vmem:[%s306 + $0x74] sm:$0xf] %vm226, %v303
      %337 = vst.msk [vmem:[%s306 + $0x78] sm:$0xf] %vm226, %v304
      %338 = vst.msk [vmem:[%s306 + $0x7c] sm:$0xf] %vm226, %v305
      %s339 = scalar_lea.vmem [#allocation2], 8
      %vm340 = vcmask 57344
      %vm341 = vsmask.f32 256
      %vm342 = vmand %vm340, %vm341
      %v343 = vld [vmem:[%s339] sm:$0x1]
      %v344 = vsel %vm342, 0, %v343
      %345 = vst [vmem:[%s339] sm:$0x1] %v344
      %v346 = vld [vmem:[%s339 + $0x8] sm:$0x1]
      %v347 = vsel %vm342, 0, %v346
      %348 = vst [vmem:[%s339 + $0x8] sm:$0x1] %v347
      %v349 = vld [vmem:[%s339 + $0x10] sm:$0x1]
      %v350 = vsel %vm342, 0, %v349
      %351 = vst [vmem:[%s339 + $0x10] sm:$0x1] %v350
      %v352 = vld [vmem:[%s339 + $0x18] sm:$0x1]
      %v353 = vsel %vm342, 0, %v352
      %354 = vst [vmem:[%s339 + $0x18] sm:$0x1] %v353
      %v355 = vld [vmem:[%s339 + $0x20] sm:$0x1]
      %v356 = vsel %vm342, 0, %v355
      %357 = vst [vmem:[%s339 + $0x20] sm:$0x1] %v356
      %v358 = vld [vmem:[%s339 + $0x28] sm:$0x1]
      %v359 = vsel %vm342, 0, %v358
      %360 = vst [vmem:[%s339 + $0x28] sm:$0x1] %v359
      %v361 = vld [vmem:[%s339 + $0x30] sm:$0x1]
      %v362 = vsel %vm342, 0, %v361
      %363 = vst [vmem:[%s339 + $0x30] sm:$0x1] %v362
      %v364 = vld [vmem:[%s339 + $0x38] sm:$0x1]
      %v365 = vsel %vm342, 0, %v364
      %366 = vst [vmem:[%s339 + $0x38] sm:$0x1] %v365
      %v367 = vld [vmem:[%s339 + $0x40] sm:$0x1]
      %v368 = vsel %vm342, 0, %v367
      %369 = vst [vmem:[%s339 + $0x40] sm:$0x1] %v368
      %v370 = vld [vmem:[%s339 + $0x48] sm:$0x1]
      %v371 = vsel %vm342, 0, %v370
      %372 = vst [vmem:[%s339 + $0x48] sm:$0x1] %v371
      %v373 = vld [vmem:[%s339 + $0x50] sm:$0x1]
      %v374 = vsel %vm342, 0, %v373
      %375 = vst [vmem:[%s339 + $0x50] sm:$0x1] %v374
      %v376 = vld [vmem:[%s339 + $0x58] sm:$0x1]
      %v377 = vsel %vm342, 0, %v376
      %378 = vst [vmem:[%s339 + $0x58] sm:$0x1] %v377
      %v379 = vld [vmem:[%s339 + $0x60] sm:$0x1]
      %v380 = vsel %vm342, 0, %v379
      %381 = vst [vmem:[%s339 + $0x60] sm:$0x1] %v380
      %v382 = vld [vmem:[%s339 + $0x68] sm:$0x1]
      %v383 = vsel %vm342, 0, %v382
      %384 = vst [vmem:[%s339 + $0x68] sm:$0x1] %v383
      %v385 = vld [vmem:[%s339 + $0x70] sm:$0x1]
      %v386 = vsel %vm342, 0, %v385
      %387 = vst [vmem:[%s339 + $0x70] sm:$0x1] %v386
      %v388 = vld [vmem:[%s339 + $0x78] sm:$0x1]
      %v389 = vsel %vm342, 0, %v388
      %390 = vst [vmem:[%s339 + $0x78] sm:$0x1] %v389
      %vm391 = vsmask.f32 4368
      %vm392 = vmor %vm341, %vm391
      %v394 = vshrl.u32 %v274, 16
      %v396 = vrot.slane %v394, 7
      %v397 = vshll.u32 %v274, 16
      %v399 = vor.u32 %v396, %v397
      %v400 = vrot.slane %v396, 4
      %v402 = vshrl.u32 %v275, 16
      %v404 = vrot.slane %v402, 7
      %v405 = vshll.u32 %v275, 16
      %v407 = vor.u32 %v404, %v405
      %v408 = vsel %vm392, %v400, %v407
      %v410 = vshrl.u32 %v276, 16
      %v412 = vrot.slane %v410, 7
      %v413 = vshll.u32 %v276, 16
      %v415 = vor.u32 %v412, %v413
      %v416 = vrot.slane %v412, 4
      %v418 = vshrl.u32 %v277, 16
      %v420 = vrot.slane %v418, 7
      %v421 = vshll.u32 %v277, 16
      %v423 = vor.u32 %v420, %v421
      %v424 = vsel %vm392, %v416, %v423
      %v426 = vshrl.u32 %v278, 16
      %v428 = vrot.slane %v426, 7
      %v429 = vshll.u32 %v278, 16
      %v431 = vor.u32 %v428, %v429
      %v432 = vrot.slane %v428, 4
      %v434 = vshrl.u32 %v279, 16
      %v436 = vrot.slane %v434, 7
      %v437 = vshll.u32 %v279, 16
      %v439 = vor.u32 %v436, %v437
      %v440 = vsel %vm392, %v432, %v439
      %v442 = vshrl.u32 %v280, 16
      %v444 = vrot.slane %v442, 7
      %v445 = vshll.u32 %v280, 16
      %v447 = vor.u32 %v444, %v445
      %v448 = vrot.slane %v444, 4
      %v450 = vshrl.u32 %v281, 16
      %v452 = vrot.slane %v450, 7
      %v453 = vshll.u32 %v281, 16
      %v455 = vor.u32 %v452, %v453
      %v456 = vsel %vm392, %v448, %v455
      %v458 = vshrl.u32 %v282, 16
      %v460 = vrot.slane %v458, 7
      %v461 = vshll.u32 %v282, 16
      %v463 = vor.u32 %v460, %v461
      %v464 = vrot.slane %v460, 4
      %v466 = vshrl.u32 %v283, 16
      %v468 = vrot.slane %v466, 7
      %v469 = vshll.u32 %v283, 16
      %v471 = vor.u32 %v468, %v469
      %v472 = vsel %vm392, %v464, %v471
      %v474 = vshrl.u32 %v284, 16
      %v476 = vrot.slane %v474, 7
      %v477 = vshll.u32 %v284, 16
      %v479 = vor.u32 %v476, %v477
      %v480 = vrot.slane %v476, 4
      %v482 = vshrl.u32 %v285, 16
      %v484 = vrot.slane %v482, 7
      %v485 = vshll.u32 %v285, 16
      %v487 = vor.u32 %v484, %v485
      %v488 = vsel %vm392, %v480, %v487
      %v490 = vshrl.u32 %v286, 16
      %v492 = vrot.slane %v490, 7
      %v493 = vshll.u32 %v286, 16
      %v495 = vor.u32 %v492, %v493
      %v496 = vrot.slane %v492, 4
      %v498 = vshrl.u32 %v287, 16
      %v500 = vrot.slane %v498, 7
      %v501 = vshll.u32 %v287, 16
      %v503 = vor.u32 %v500, %v501
      %v504 = vsel %vm392, %v496, %v503
      %v506 = vshrl.u32 %v288, 16
      %v508 = vrot.slane %v506, 7
      %v509 = vshll.u32 %v288, 16
      %v511 = vor.u32 %v508, %v509
      %v512 = vrot.slane %v508, 4
      %v514 = vshrl.u32 %v289, 16
      %v516 = vrot.slane %v514, 7
      %v517 = vshll.u32 %v289, 16
      %v519 = vor.u32 %v516, %v517
      %v520 = vsel %vm392, %v512, %v519
      %v522 = vshrl.u32 %v290, 16
      %v524 = vrot.slane %v522, 7
      %v525 = vshll.u32 %v290, 16
      %v527 = vor.u32 %v524, %v525
      %v528 = vrot.slane %v524, 4
      %v530 = vshrl.u32 %v291, 16
      %v532 = vrot.slane %v530, 7
      %v533 = vshll.u32 %v291, 16
      %v535 = vor.u32 %v532, %v533
      %v536 = vsel %vm392, %v528, %v535
      %v538 = vshrl.u32 %v292, 16
      %v540 = vrot.slane %v538, 7
      %v541 = vshll.u32 %v292, 16
      %v543 = vor.u32 %v540, %v541
      %v544 = vrot.slane %v540, 4
      %v546 = vshrl.u32 %v293, 16
      %v548 = vrot.slane %v546, 7
      %v549 = vshll.u32 %v293, 16
      %v551 = vor.u32 %v548, %v549
      %v552 = vsel %vm392, %v544, %v551
      %v554 = vshrl.u32 %v294, 16
      %v556 = vrot.slane %v554, 7
      %v557 = vshll.u32 %v294, 16
      %v559 = vor.u32 %v556, %v557
      %v560 = vrot.slane %v556, 4
      %v562 = vshrl.u32 %v295, 16
      %v564 = vrot.slane %v562, 7
      %v565 = vshll.u32 %v295, 16
      %v567 = vor.u32 %v564, %v565
      %v568 = vsel %vm392, %v560, %v567
      %v570 = vshrl.u32 %v296, 16
      %v572 = vrot.slane %v570, 7
      %v573 = vshll.u32 %v296, 16
      %v575 = vor.u32 %v572, %v573
      %v576 = vrot.slane %v572, 4
      %v578 = vshrl.u32 %v297, 16
      %v580 = vrot.slane %v578, 7
      %v581 = vshll.u32 %v297, 16
      %v583 = vor.u32 %v580, %v581
      %v584 = vsel %vm392, %v576, %v583
      %v586 = vshrl.u32 %v298, 16
      %v588 = vrot.slane %v586, 7
      %v589 = vshll.u32 %v298, 16
      %v591 = vor.u32 %v588, %v589
      %v592 = vrot.slane %v588, 4
      %v594 = vshrl.u32 %v299, 16
      %v596 = vrot.slane %v594, 7
      %v597 = vshll.u32 %v299, 16
      %v599 = vor.u32 %v596, %v597
      %v600 = vsel %vm392, %v592, %v599
      %v602 = vshrl.u32 %v300, 16
      %v604 = vrot.slane %v602, 7
      %v605 = vshll.u32 %v300, 16
      %v607 = vor.u32 %v604, %v605
      %v608 = vrot.slane %v604, 4
      %v610 = vshrl.u32 %v301, 16
      %v612 = vrot.slane %v610, 7
      %v613 = vshll.u32 %v301, 16
      %v615 = vor.u32 %v612, %v613
      %v616 = vsel %vm392, %v608, %v615
      %v618 = vshrl.u32 %v302, 16
      %v620 = vrot.slane %v618, 7
      %v621 = vshll.u32 %v302, 16
      %v623 = vor.u32 %v620, %v621
      %v624 = vrot.slane %v620, 4
      %v626 = vshrl.u32 %v303, 16
      %v628 = vrot.slane %v626, 7
      %v629 = vshll.u32 %v303, 16
      %v631 = vor.u32 %v628, %v629
      %v632 = vsel %vm392, %v624, %v631
      %v634 = vshrl.u32 %v304, 16
      %v636 = vrot.slane %v634, 7
      %v637 = vshll.u32 %v304, 16
      %v639 = vor.u32 %v636, %v637
      %v640 = vrot.slane %v636, 4
      %v642 = vshrl.u32 %v305, 16
      %v644 = vrot.slane %v642, 7
      %v645 = vshll.u32 %v305, 16
      %v647 = vor.u32 %v644, %v645
      %v648 = vsel %vm392, %v640, %v647
      %vm681 = vcmask 60416
      %vm682 = vsmask.f32 7938
      %vm683 = vmand %vm681, %vm682
      %v684 = vld [vmem:[%s339] sm:$0xf]
      %v685 = vsel %vm683, %v399, %v684
      %686 = vst [vmem:[%s339] sm:$0xf] %v685
      %687 = vst.msk [vmem:[%s339 + $0x4] sm:$0xf] %vm226, %v408
      %v688 = vld [vmem:[%s339 + $0x8] sm:$0xf]
      %v689 = vsel %vm683, %v415, %v688
      %690 = vst [vmem:[%s339 + $0x8] sm:$0xf] %v689
      %691 = vst.msk [vmem:[%s339 + $0xc] sm:$0xf] %vm226, %v424
      %v692 = vld [vmem:[%s339 + $0x10] sm:$0xf]
      %v693 = vsel %vm683, %v431, %v692
      %694 = vst [vmem:[%s339 + $0x10] sm:$0xf] %v693
      %695 = vst.msk [vmem:[%s339 + $0x14] sm:$0xf] %vm226, %v440
      %v696 = vld [vmem:[%s339 + $0x18] sm:$0xf]
      %v697 = vsel %vm683, %v447, %v696
      %698 = vst [vmem:[%s339 + $0x18] sm:$0xf] %v697
      %699 = vst.msk [vmem:[%s339 + $0x1c] sm:$0xf] %vm226, %v456
      %v700 = vld [vmem:[%s339 + $0x20] sm:$0xf]
      %v701 = vsel %vm683, %v463, %v700
      %702 = vst [vmem:[%s339 + $0x20] sm:$0xf] %v701
      %703 = vst.msk [vmem:[%s339 + $0x24] sm:$0xf] %vm226, %v472
      %v704 = vld [vmem:[%s339 + $0x28] sm:$0xf]
      %v705 = vsel %vm683, %v479, %v704
      %706 = vst [vmem:[%s339 + $0x28] sm:$0xf] %v705
      %707 = vst.msk [vmem:[%s339 + $0x2c] sm:$0xf] %vm226, %v488
      %v708 = vld [vmem:[%s339 + $0x30] sm:$0xf]
      %v709 = vsel %vm683, %v495, %v708
      %710 = vst [vmem:[%s339 + $0x30] sm:$0xf] %v709
      %711 = vst.msk [vmem:[%s339 + $0x34] sm:$0xf] %vm226, %v504
      %v712 = vld [vmem:[%s339 + $0x38] sm:$0xf]
      %v713 = vsel %vm683, %v511, %v712
      %714 = vst [vmem:[%s339 + $0x38] sm:$0xf] %v713
      %715 = vst.msk [vmem:[%s339 + $0x3c] sm:$0xf] %vm226, %v520
      %v716 = vld [vmem:[%s339 + $0x40] sm:$0xf]
      %v717 = vsel %vm683, %v527, %v716
      %718 = vst [vmem:[%s339 + $0x40] sm:$0xf] %v717
      %719 = vst.msk [vmem:[%s339 + $0x44] sm:$0xf] %vm226, %v536
      %v720 = vld [vmem:[%s339 + $0x48] sm:$0xf]
      %v721 = vsel %vm683, %v543, %v720
      %722 = vst [vmem:[%s339 + $0x48] sm:$0xf] %v721
      %723 = vst.msk [vmem:[%s339 + $0x4c] sm:$0xf] %vm226, %v552
      %v724 = vld [vmem:[%s339 + $0x50] sm:$0xf]
      %v725 = vsel %vm683, %v559, %v724
      %726 = vst [vmem:[%s339 + $0x50] sm:$0xf] %v725
      %727 = vst.msk [vmem:[%s339 + $0x54] sm:$0xf] %vm226, %v568
      %v728 = vld [vmem:[%s339 + $0x58] sm:$0xf]
      %v729 = vsel %vm683, %v575, %v728
      %730 = vst [vmem:[%s339 + $0x58] sm:$0xf] %v729
      %731 = vst.msk [vmem:[%s339 + $0x5c] sm:$0xf] %vm226, %v584
      %v732 = vld [vmem:[%s339 + $0x60] sm:$0xf]
      %v733 = vsel %vm683, %v591, %v732
      %734 = vst [vmem:[%s339 + $0x60] sm:$0xf] %v733
      %735 = vst.msk [vmem:[%s339 + $0x64] sm:$0xf] %vm226, %v600
      %v736 = vld [vmem:[%s339 + $0x68] sm:$0xf]
      %v737 = vsel %vm683, %v607, %v736
      %738 = vst [vmem:[%s339 + $0x68] sm:$0xf] %v737
      %739 = vst.msk [vmem:[%s339 + $0x6c] sm:$0xf] %vm226, %v616
      %v740 = vld [vmem:[%s339 + $0x70] sm:$0xf]
      %v741 = vsel %vm683, %v623, %v740
      %742 = vst [vmem:[%s339 + $0x70] sm:$0xf] %v741
      %743 = vst.msk [vmem:[%s339 + $0x74] sm:$0xf] %vm226, %v632
      %v744 = vld [vmem:[%s339 + $0x78] sm:$0xf]
      %v745 = vsel %vm683, %v639, %v744
      %746 = vst [vmem:[%s339 + $0x78] sm:$0xf] %v745
      %747 = vst.msk [vmem:[%s339 + $0x7c] sm:$0xf] %vm226, %v648
      %s748 = scalar_lea.vmem [#allocation4], 8
      %vm749 = vcmask 60419
      %vm750 = vsmask.f32 7950
      %vm751 = vmand %vm749, %vm750
      %v752 = vld [vmem:[%s748 + $0x4] sm:$0x8]
      %v753 = vsel %vm751, 0, %v752
      %754 = vst [vmem:[%s748 + $0x4] sm:$0x8] %v753
      %v755 = vld [vmem:[%s748 + $0xc] sm:$0x8]
      %v756 = vsel %vm751, 0, %v755
      %757 = vst [vmem:[%s748 + $0xc] sm:$0x8] %v756
      %v758 = vld [vmem:[%s748 + $0x14] sm:$0x8]
      %v759 = vsel %vm751, 0, %v758
      %760 = vst [vmem:[%s748 + $0x14] sm:$0x8] %v759
      %v761 = vld [vmem:[%s748 + $0x1c] sm:$0x8]
      %v762 = vsel %vm751, 0, %v761
      %763 = vst [vmem:[%s748 + $0x1c] sm:$0x8] %v762
      %v764 = vld [vmem:[%s748 + $0x24] sm:$0x8]
      %v765 = vsel %vm751, 0, %v764
      %766 = vst [vmem:[%s748 + $0x24] sm:$0x8] %v765
      %v767 = vld [vmem:[%s748 + $0x2c] sm:$0x8]
      %v768 = vsel %vm751, 0, %v767
      %769 = vst [vmem:[%s748 + $0x2c] sm:$0x8] %v768
      %v770 = vld [vmem:[%s748 + $0x34] sm:$0x8]
      %v771 = vsel %vm751, 0, %v770
      %772 = vst [vmem:[%s748 + $0x34] sm:$0x8] %v771
      %v773 = vld [vmem:[%s748 + $0x3c] sm:$0x8]
      %v774 = vsel %vm751, 0, %v773
      %775 = vst [vmem:[%s748 + $0x3c] sm:$0x8] %v774
      %v776 = vld [vmem:[%s748 + $0x44] sm:$0x8]
      %v777 = vsel %vm751, 0, %v776
      %778 = vst [vmem:[%s748 + $0x44] sm:$0x8] %v777
      %v779 = vld [vmem:[%s748 + $0x4c] sm:$0x8]
      %v780 = vsel %vm751, 0, %v779
      %781 = vst [vmem:[%s748 + $0x4c] sm:$0x8] %v780
      %v782 = vld [vmem:[%s748 + $0x54] sm:$0x8]
      %v783 = vsel %vm751, 0, %v782
      %784 = vst [vmem:[%s748 + $0x54] sm:$0x8] %v783
      %v785 = vld [vmem:[%s748 + $0x5c] sm:$0x8]
      %v786 = vsel %vm751, 0, %v785
      %787 = vst [vmem:[%s748 + $0x5c] sm:$0x8] %v786
      %v788 = vld [vmem:[%s748 + $0x64] sm:$0x8]
      %v789 = vsel %vm751, 0, %v788
      %790 = vst [vmem:[%s748 + $0x64] sm:$0x8] %v789
      %v791 = vld [vmem:[%s748 + $0x6c] sm:$0x8]
      %v792 = vsel %vm751, 0, %v791
      %793 = vst [vmem:[%s748 + $0x6c] sm:$0x8] %v792
      %v794 = vld [vmem:[%s748 + $0x74] sm:$0x8]
      %v795 = vsel %vm751, 0, %v794
      %796 = vst [vmem:[%s748 + $0x74] sm:$0x8] %v795
      %v797 = vld [vmem:[%s748 + $0x7c] sm:$0x8]
      %v798 = vsel %vm751, 0, %v797
      %799 = vst [vmem:[%s748 + $0x7c] sm:$0x8] %v798
      %vm800 = vsmask.f32 3328
      %vm801 = vsmask.f32 7440
      %vm802 = vmor %vm800, %vm801
      %v803 = vrot.slane %v394, 4
      %v804 = vrot.slane %v397, 5
      %v805 = vor.u32 %v803, %v804
      %v806 = vrot.slane %v805, 4
      %v807 = vrot.slane %v405, 5
      %v808 = vsel %vm802, %v806, %v807
      %v809 = vrot.slane %v402, 4
      %v810 = vor.u32 %v809, %v807
      %v811 = vrot.slane %v810, 4
      %v812 = vrot.slane %v410, 4
      %v813 = vrot.slane %v413, 5
      %v814 = vor.u32 %v812, %v813
      %v815 = vrot.slane %v814, 4
      %v816 = vrot.slane %v421, 5
      %v817 = vsel %vm802, %v815, %v816
      %v818 = vrot.slane %v418, 4
      %v819 = vor.u32 %v818, %v816
      %v820 = vrot.slane %v819, 4
      %v821 = vrot.slane %v426, 4
      %v822 = vrot.slane %v429, 5
      %v823 = vor.u32 %v821, %v822
      %v824 = vrot.slane %v823, 4
      %v825 = vrot.slane %v437, 5
      %v826 = vsel %vm802, %v824, %v825
      %v827 = vrot.slane %v434, 4
      %v828 = vor.u32 %v827, %v825
      %v829 = vrot.slane %v828, 4
      %v830 = vrot.slane %v442, 4
      %v831 = vrot.slane %v445, 5
      %v832 = vor.u32 %v830, %v831
      %v833 = vrot.slane %v832, 4
      %v834 = vrot.slane %v453, 5
      %v835 = vsel %vm802, %v833, %v834
      %v836 = vrot.slane %v450, 4
      %v837 = vor.u32 %v836, %v834
      %v838 = vrot.slane %v837, 4
      %v839 = vrot.slane %v458, 4
      %v840 = vrot.slane %v461, 5
      %v841 = vor.u32 %v839, %v840
      %v842 = vrot.slane %v841, 4
      %v843 = vrot.slane %v469, 5
      %v844 = vsel %vm802, %v842, %v843
      %v845 = vrot.slane %v466, 4
      %v846 = vor.u32 %v845, %v843
      %v847 = vrot.slane %v846, 4
      %v848 = vrot.slane %v474, 4
      %v849 = vrot.slane %v477, 5
      %v850 = vor.u32 %v848, %v849
      %v851 = vrot.slane %v850, 4
      %v852 = vrot.slane %v485, 5
      %v853 = vsel %vm802, %v851, %v852
      %v854 = vrot.slane %v482, 4
      %v855 = vor.u32 %v854, %v852
      %v856 = vrot.slane %v855, 4
      %v857 = vrot.slane %v490, 4
      %v858 = vrot.slane %v493, 5
      %v859 = vor.u32 %v857, %v858
      %v860 = vrot.slane %v859, 4
      %v861 = vrot.slane %v501, 5
      %v862 = vsel %vm802, %v860, %v861
      %v863 = vrot.slane %v498, 4
      %v864 = vor.u32 %v863, %v861
      %v865 = vrot.slane %v864, 4
      %v866 = vrot.slane %v506, 4
      %v867 = vrot.slane %v509, 5
      %v868 = vor.u32 %v866, %v867
      %v869 = vrot.slane %v868, 4
      %v870 = vrot.slane %v517, 5
      %v871 = vsel %vm802, %v869, %v870
      %v872 = vrot.slane %v514, 4
      %v873 = vor.u32 %v872, %v870
      %v874 = vrot.slane %v873, 4
      %v875 = vrot.slane %v522, 4
      %v876 = vrot.slane %v525, 5
      %v877 = vor.u32 %v875, %v876
      %v878 = vrot.slane %v877, 4
      %v879 = vrot.slane %v533, 5
      %v880 = vsel %vm802, %v878, %v879
      %v881 = vrot.slane %v530, 4
      %v882 = vor.u32 %v881, %v879
      %v883 = vrot.slane %v882, 4
      %v884 = vrot.slane %v538, 4
      %v885 = vrot.slane %v541, 5
      %v886 = vor.u32 %v884, %v885
      %v887 = vrot.slane %v886, 4
      %v888 = vrot.slane %v549, 5
      %v889 = vsel %vm802, %v887, %v888
      %v890 = vrot.slane %v546, 4
      %v891 = vor.u32 %v890, %v888
      %v892 = vrot.slane %v891, 4
      %v893 = vrot.slane %v554, 4
      %v894 = vrot.slane %v557, 5
      %v895 = vor.u32 %v893, %v894
      %v896 = vrot.slane %v895, 4
      %v897 = vrot.slane %v565, 5
      %v898 = vsel %vm802, %v896, %v897
      %v899 = vrot.slane %v562, 4
      %v900 = vor.u32 %v899, %v897
      %v901 = vrot.slane %v900, 4
      %v902 = vrot.slane %v570, 4
      %v903 = vrot.slane %v573, 5
      %v904 = vor.u32 %v902, %v903
      %v905 = vrot.slane %v904, 4
      %v906 = vrot.slane %v581, 5
      %v907 = vsel %vm802, %v905, %v906
      %v908 = vrot.slane %v578, 4
      %v909 = vor.u32 %v908, %v906
      %v910 = vrot.slane %v909, 4
      %v911 = vrot.slane %v586, 4
      %v912 = vrot.slane %v589, 5
      %v913 = vor.u32 %v911, %v912
      %v914 = vrot.slane %v913, 4
      %v915 = vrot.slane %v597, 5
      %v916 = vsel %vm802, %v914, %v915
      %v917 = vrot.slane %v594, 4
      %v918 = vor.u32 %v917, %v915
      %v919 = vrot.slane %v918, 4
      %v920 = vrot.slane %v602, 4
      %v921 = vrot.slane %v605, 5
      %v922 = vor.u32 %v920, %v921
      %v923 = vrot.slane %v922, 4
      %v924 = vrot.slane %v613, 5
      %v925 = vsel %vm802, %v923, %v924
      %v926 = vrot.slane %v610, 4
      %v927 = vor.u32 %v926, %v924
      %v928 = vrot.slane %v927, 4
      %v929 = vrot.slane %v618, 4
      %v930 = vrot.slane %v621, 5
      %v931 = vor.u32 %v929, %v930
      %v932 = vrot.slane %v931, 4
      %v933 = vrot.slane %v629, 5
      %v934 = vsel %vm802, %v932, %v933
      %v935 = vrot.slane %v626, 4
      %v936 = vor.u32 %v935, %v933
      %v937 = vrot.slane %v936, 4
      %v938 = vrot.slane %v634, 4
      %v939 = vrot.slane %v637, 5
      %v940 = vor.u32 %v938, %v939
      %v941 = vrot.slane %v940, 4
      %v942 = vrot.slane %v645, 5
      %v943 = vsel %vm802, %v941, %v942
      %v944 = vrot.slane %v642, 4
      %v945 = vor.u32 %v944, %v942
      %v946 = vrot.slane %v945, 4
      %979 = vst.msk [vmem:[%s748] sm:$0xf] %vm226, %v808
      %vm980 = vmand %vm681, %vm800
      %v981 = vld [vmem:[%s748 + $0x4] sm:$0xf]
      %v982 = vsel %vm980, %v811, %v981
      %983 = vst [vmem:[%s748 + $0x4] sm:$0xf] %v982
      %984 = vst.msk [vmem:[%s748 + $0x8] sm:$0xf] %vm226, %v817
      %v985 = vld [vmem:[%s748 + $0xc] sm:$0xf]
      %v986 = vsel %vm980, %v820, %v985
      %987 = vst [vmem:[%s748 + $0xc] sm:$0xf] %v986
      %988 = vst.msk [vmem:[%s748 + $0x10] sm:$0xf] %vm226, %v826
      %v989 = vld [vmem:[%s748 + $0x14] sm:$0xf]
      %v990 = vsel %vm980, %v829, %v989
      %991 = vst [vmem:[%s748 + $0x14] sm:$0xf] %v990
      %992 = vst.msk [vmem:[%s748 + $0x18] sm:$0xf] %vm226, %v835
      %v993 = vld [vmem:[%s748 + $0x1c] sm:$0xf]
      %v994 = vsel %vm980, %v838, %v993
      %995 = vst [vmem:[%s748 + $0x1c] sm:$0xf] %v994
      %996 = vst.msk [vmem:[%s748 + $0x20] sm:$0xf] %vm226, %v844
      %v997 = vld [vmem:[%s748 + $0x24] sm:$0xf]
      %v998 = vsel %vm980, %v847, %v997
      %999 = vst [vmem:[%s748 + $0x24] sm:$0xf] %v998
      %1000 = vst.msk [vmem:[%s748 + $0x28] sm:$0xf] %vm226, %v853
      %v1001 = vld [vmem:[%s748 + $0x2c] sm:$0xf]
      %v1002 = vsel %vm980, %v856, %v1001
      %1003 = vst [vmem:[%s748 + $0x2c] sm:$0xf] %v1002
      %1004 = vst.msk [vmem:[%s748 + $0x30] sm:$0xf] %vm226, %v862
      %v1005 = vld [vmem:[%s748 + $0x34] sm:$0xf]
      %v1006 = vsel %vm980, %v865, %v1005
      %1007 = vst [vmem:[%s748 + $0x34] sm:$0xf] %v1006
      %1008 = vst.msk [vmem:[%s748 + $0x38] sm:$0xf] %vm226, %v871
      %v1009 = vld [vmem:[%s748 + $0x3c] sm:$0xf]
      %v1010 = vsel %vm980, %v874, %v1009
      %1011 = vst [vmem:[%s748 + $0x3c] sm:$0xf] %v1010
      %1012 = vst.msk [vmem:[%s748 + $0x40] sm:$0xf] %vm226, %v880
      %v1013 = vld [vmem:[%s748 + $0x44] sm:$0xf]
      %v1014 = vsel %vm980, %v883, %v1013
      %1015 = vst [vmem:[%s748 + $0x44] sm:$0xf] %v1014
      %1016 = vst.msk [vmem:[%s748 + $0x48] sm:$0xf] %vm226, %v889
      %v1017 = vld [vmem:[%s748 + $0x4c] sm:$0xf]
      %v1018 = vsel %vm980, %v892, %v1017
      %1019 = vst [vmem:[%s748 + $0x4c] sm:$0xf] %v1018
      %1020 = vst.msk [vmem:[%s748 + $0x50] sm:$0xf] %vm226, %v898
      %v1021 = vld [vmem:[%s748 + $0x54] sm:$0xf]
      %v1022 = vsel %vm980, %v901, %v1021
      %1023 = vst [vmem:[%s748 + $0x54] sm:$0xf] %v1022
      %1024 = vst.msk [vmem:[%s748 + $0x58] sm:$0xf] %vm226, %v907
      %v1025 = vld [vmem:[%s748 + $0x5c] sm:$0xf]
      %v1026 = vsel %vm980, %v910, %v1025
      %1027 = vst [vmem:[%s748 + $0x5c] sm:$0xf] %v1026
      %1028 = vst.msk [vmem:[%s748 + $0x60] sm:$0xf] %vm226, %v916
      %v1029 = vld [vmem:[%s748 + $0x64] sm:$0xf]
      %v1030 = vsel %vm980, %v919, %v1029
      %1031 = vst [vmem:[%s748 + $0x64] sm:$0xf] %v1030
      %1032 = vst.msk [vmem:[%s748 + $0x68] sm:$0xf] %vm226, %v925
      %v1033 = vld [vmem:[%s748 + $0x6c] sm:$0xf]
      %v1034 = vsel %vm980, %v928, %v1033
      %1035 = vst [vmem:[%s748 + $0x6c] sm:$0xf] %v1034
      %1036 = vst.msk [vmem:[%s748 + $0x70] sm:$0xf] %vm226, %v934
      %v1037 = vld [vmem:[%s748 + $0x74] sm:$0xf]
      %v1038 = vsel %vm980, %v937, %v1037
      %1039 = vst [vmem:[%s748 + $0x74] sm:$0xf] %v1038
      %1040 = vst.msk [vmem:[%s748 + $0x78] sm:$0xf] %vm226, %v943
      %v1041 = vld [vmem:[%s748 + $0x7c] sm:$0xf]
      %v1042 = vsel %vm980, %v946, %v1041
      %1043 = vst [vmem:[%s748 + $0x7c] sm:$0xf] %v1042
      %v1044 = vld [vmem:[#allocation2] sm:$0xf]
      %v1045 = vld [vmem:[#allocation2 + $0x4] sm:$0xf]
      %v1046 = vld [vmem:[#allocation2 + $0x8] sm:$0xf]
      %v1047 = vld [vmem:[#allocation2 + $0xc] sm:$0xf]
      %v1048 = vld [vmem:[#allocation2 + $0x10] sm:$0xf]
      %v1049 = vld [vmem:[#allocation2 + $0x14] sm:$0xf]
      %v1050 = vld [vmem:[#allocation2 + $0x18] sm:$0xf]
      %v1051 = vld [vmem:[#allocation2 + $0x1c] sm:$0xf]
      %v1052 = vld [vmem:[#allocation2 + $0x20] sm:$0xf]
      %v1053 = vld [vmem:[#allocation2 + $0x24] sm:$0xf]
      %v1054 = vld [vmem:[#allocation2 + $0x28] sm:$0xf]
      %v1055 = vld [vmem:[#allocation2 + $0x2c] sm:$0xf]
      %v1056 = vld [vmem:[#allocation2 + $0x30] sm:$0xf]
      %v1057 = vld [vmem:[#allocation2 + $0x34] sm:$0xf]
      %v1058 = vld [vmem:[#allocation2 + $0x38] sm:$0xf]
      %v1059 = vld [vmem:[#allocation2 + $0x3c] sm:$0xf]
      %v1060 = vld [vmem:[#allocation2 + $0x40] sm:$0xf]
      %v1061 = vld [vmem:[#allocation2 + $0x44] sm:$0xf]
      %v1062 = vld [vmem:[#allocation2 + $0x48] sm:$0xf]
      %v1063 = vld [vmem:[#allocation2 + $0x4c] sm:$0xf]
      %v1064 = vld [vmem:[#allocation2 + $0x50] sm:$0xf]
      %v1065 = vld [vmem:[#allocation2 + $0x54] sm:$0xf]
      %v1066 = vld [vmem:[#allocation2 + $0x58] sm:$0xf]
      %v1067 = vld [vmem:[#allocation2 + $0x5c] sm:$0xf]
      %v1068 = vld [vmem:[#allocation2 + $0x60] sm:$0xf]
      %v1069 = vld [vmem:[#allocation2 + $0x64] sm:$0xf]
      %v1070 = vld [vmem:[#allocation2 + $0x68] sm:$0xf]
      %v1071 = vld [vmem:[#allocation2 + $0x6c] sm:$0xf]
      %v1072 = vld [vmem:[#allocation2 + $0x70] sm:$0xf]
      %v1073 = vld [vmem:[#allocation2 + $0x74] sm:$0xf]
      %v1074 = vld [vmem:[#allocation2 + $0x78] sm:$0xf]
      %v1075 = vld [vmem:[#allocation2 + $0x7c] sm:$0xf]
      %v1076 = vld [vmem:[%s1] sm:$0xf]
      %v1077 = vld [vmem:[#allocation3] sm:$0xf]
      %v1078 = vld [vmem:[#allocation3 + $0x4] sm:$0xf]
      %v1079 = vld [vmem:[#allocation3 + $0x8] sm:$0xf]
      %v1080 = vld [vmem:[#allocation3 + $0xc] sm:$0xf]
      %v1081 = vld [vmem:[#allocation3 + $0x10] sm:$0xf]
      %v1082 = vld [vmem:[#allocation3 + $0x14] sm:$0xf]
      %v1083 = vld [vmem:[#allocation3 + $0x18] sm:$0xf]
      %v1084 = vld [vmem:[#allocation3 + $0x1c] sm:$0xf]
      %v1085 = vld [vmem:[#allocation3 + $0x20] sm:$0xf]
      %v1086 = vld [vmem:[#allocation3 + $0x24] sm:$0xf]
      %v1087 = vld [vmem:[#allocation3 + $0x28] sm:$0xf]
      %v1088 = vld [vmem:[#allocation3 + $0x2c] sm:$0xf]
      %v1089 = vld [vmem:[#allocation3 + $0x30] sm:$0xf]
      %v1090 = vld [vmem:[#allocation3 + $0x34] sm:$0xf]
      %v1091 = vld [vmem:[#allocation3 + $0x38] sm:$0xf]
      %v1092 = vld [vmem:[#allocation3 + $0x3c] sm:$0xf]
      %v1093 = vld [vmem:[#allocation3 + $0x40] sm:$0xf]
      %v1094 = vld [vmem:[#allocation3 + $0x44] sm:$0xf]
      %v1095 = vld [vmem:[#allocation3 + $0x48] sm:$0xf]
      %v1096 = vld [vmem:[#allocation3 + $0x4c] sm:$0xf]
      %v1097 = vld [vmem:[#allocation3 + $0x50] sm:$0xf]
      %v1098 = vld [vmem:[#allocation3 + $0x54] sm:$0xf]
      %v1099 = vld [vmem:[#allocation3 + $0x58] sm:$0xf]
      %v1100 = vld [vmem:[#allocation3 + $0x5c] sm:$0xf]
      %v1101 = vld [vmem:[#allocation3 + $0x60] sm:$0xf]
      %v1102 = vld [vmem:[#allocation3 + $0x64] sm:$0xf]
      %v1103 = vld [vmem:[#allocation3 + $0x68] sm:$0xf]
      %v1104 = vld [vmem:[#allocation3 + $0x6c] sm:$0xf]
      %v1105 = vld [vmem:[#allocation3 + $0x70] sm:$0xf]
      %v1106 = vld [vmem:[#allocation3 + $0x74] sm:$0xf]
      %v1107 = vld [vmem:[#allocation3 + $0x78] sm:$0xf]
      %v1108 = vld [vmem:[#allocation3 + $0x7c] sm:$0xf]
      %s1109 = scalar_lea.vmem %s1, 4
      %v1110 = vld [vmem:[%s1109] sm:$0xf]
      %v1143 = vunpack.c.l.b16 %v1077
      %v1144 = vunpack.c.l.b16 %v1078
      %v1145 = vunpack.c.l.b16 %v1079
      %v1146 = vunpack.c.l.b16 %v1080
      %v1147 = vunpack.c.l.b16 %v1081
      %v1148 = vunpack.c.l.b16 %v1082
      %v1149 = vunpack.c.l.b16 %v1083
      %v1150 = vunpack.c.l.b16 %v1084
      %v1151 = vunpack.c.l.b16 %v1085
      %v1152 = vunpack.c.l.b16 %v1086
      %v1153 = vunpack.c.l.b16 %v1087
      %v1154 = vunpack.c.l.b16 %v1088
      %v1155 = vunpack.c.l.b16 %v1089
      %v1156 = vunpack.c.l.b16 %v1090
      %v1157 = vunpack.c.l.b16 %v1091
      %v1158 = vunpack.c.l.b16 %v1092
      %v1159 = vunpack.c.l.b16 %v1093
      %v1160 = vunpack.c.l.b16 %v1094
      %v1161 = vunpack.c.l.b16 %v1095
      %v1162 = vunpack.c.l.b16 %v1096
      %v1163 = vunpack.c.l.b16 %v1097
      %v1164 = vunpack.c.l.b16 %v1098
      %v1165 = vunpack.c.l.b16 %v1099
      %v1166 = vunpack.c.l.b16 %v1100
      %v1167 = vunpack.c.l.b16 %v1101
      %v1168 = vunpack.c.l.b16 %v1102
      %v1169 = vunpack.c.l.b16 %v1103
      %v1170 = vunpack.c.l.b16 %v1104
      %v1171 = vunpack.c.l.b16 %v1105
      %v1172 = vunpack.c.l.b16 %v1106
      %v1173 = vunpack.c.l.b16 %v1107
      %v1174 = vunpack.c.l.b16 %v1108
      %v1175 = vpack.c.b16 %v1144, %v1143
      %v1176 = vpack.c.b16 %v1146, %v1145
      %v1177 = vpack.c.b16 %v1148, %v1147
      %v1178 = vpack.c.b16 %v1150, %v1149
      %v1179 = vpack.c.b16 %v1152, %v1151
      %v1180 = vpack.c.b16 %v1154, %v1153
      %v1181 = vpack.c.b16 %v1156, %v1155
      %v1182 = vpack.c.b16 %v1158, %v1157
      %v1183 = vpack.c.b16 %v1160, %v1159
      %v1184 = vpack.c.b16 %v1162, %v1161
      %v1185 = vpack.c.b16 %v1164, %v1163
      %v1186 = vpack.c.b16 %v1166, %v1165
      %v1187 = vpack.c.b16 %v1168, %v1167
      %v1188 = vpack.c.b16 %v1170, %v1169
      %v1189 = vpack.c.b16 %v1172, %v1171
      %v1190 = vpack.c.b16 %v1174, %v1173
      %vm1191 = vcmask 64512
      %v1193 = vsel %vm1191, %v1175, 0
      %v1196 = vsel %vm1191, %v1176, 0
      %v1199 = vsel %vm1191, %v1177, 0
      %v1202 = vsel %vm1191, %v1178, 0
      %v1205 = vsel %vm1191, %v1179, 0
      %v1208 = vsel %vm1191, %v1180, 0
      %v1211 = vsel %vm1191, %v1181, 0
      %v1214 = vsel %vm1191, %v1182, 0
      %v1217 = vsel %vm1191, %v1183, 0
      %v1220 = vsel %vm1191, %v1184, 0
      %v1223 = vsel %vm1191, %v1185, 0
      %v1226 = vsel %vm1191, %v1186, 0
      %v1229 = vsel %vm1191, %v1187, 0
      %v1232 = vsel %vm1191, %v1188, 0
      %v1235 = vsel %vm1191, %v1189, 0
      %v1238 = vsel %vm1191, %v1190, 0
      %vm1240 = vcmask 1043456
      %v1242 = vsel %vm1240, %v1110, 0
      %1244 = vmatpush.bf16.msra.mxu0 0
      %1245 = vmatpush.bf16.msra.mxu0 0
      %1246 = vmatpush.bf16.msra.mxu0 0
      %1247 = vmatpush.bf16.msra.mxu0 0
      %1248 = vmatpush.bf16.msra.mxu0 0
      %1249 = vmatpush.bf16.msra.mxu0 0
      %1250 = vmatpush.bf16.msra.mxu0 0
      %1251 = vmatpush.bf16.msra.mxu0 %v1242
      %1252 = vmatmul.bf16.gmra.mxu0 %v1193
      %v1253 = vpop.f32.mrf.mxu0
      %v1254 = vadd.f32 0.0, %v1253
      %v1255 = vpop.f32.mrf.mxu0
      %v1256 = vadd.f32 0.0, %v1255
      %1257 = vmatmul.bf16.gmra.mxu0 %v1196
      %v1258 = vpop.f32.mrf.mxu0
      %v1259 = vadd.f32 0.0, %v1258
      %v1260 = vpop.f32.mrf.mxu0
      %v1261 = vadd.f32 0.0, %v1260
      %1262 = vmatmul.bf16.gmra.mxu0 %v1199
      %v1263 = vpop.f32.mrf.mxu0
      %v1264 = vadd.f32 0.0, %v1263
      %v1265 = vpop.f32.mrf.mxu0
      %v1266 = vadd.f32 0.0, %v1265
      %1267 = vmatmul.bf16.gmra.mxu0 %v1202
      %v1268 = vpop.f32.mrf.mxu0
      %v1269 = vadd.f32 0.0, %v1268
      %v1270 = vpop.f32.mrf.mxu0
      %v1271 = vadd.f32 0.0, %v1270
      %1272 = vmatmul.bf16.gmra.mxu0 %v1205
      %v1273 = vpop.f32.mrf.mxu0
      %v1274 = vadd.f32 0.0, %v1273
      %v1275 = vpop.f32.mrf.mxu0
      %v1276 = vadd.f32 0.0, %v1275
      %1277 = vmatmul.bf16.gmra.mxu0 %v1208
      %v1278 = vpop.f32.mrf.mxu0
      %v1279 = vadd.f32 0.0, %v1278
      %v1280 = vpop.f32.mrf.mxu0
      %v1281 = vadd.f32 0.0, %v1280
      %1282 = vmatmul.bf16.gmra.mxu0 %v1211
      %v1283 = vpop.f32.mrf.mxu0
      %v1284 = vadd.f32 0.0, %v1283
      %v1285 = vpop.f32.mrf.mxu0
      %v1286 = vadd.f32 0.0, %v1285
      %1287 = vmatmul.bf16.gmra.mxu0 %v1214
      %v1288 = vpop.f32.mrf.mxu0
      %v1289 = vadd.f32 0.0, %v1288
      %v1290 = vpop.f32.mrf.mxu0
      %v1291 = vadd.f32 0.0, %v1290
      %1292 = vmatmul.bf16.gmra.mxu0 %v1217
      %v1293 = vpop.f32.mrf.mxu0
      %v1294 = vadd.f32 0.0, %v1293
      %v1295 = vpop.f32.mrf.mxu0
      %v1296 = vadd.f32 0.0, %v1295
      %1297 = vmatmul.bf16.gmra.mxu0 %v1220
      %v1298 = vpop.f32.mrf.mxu0
      %v1299 = vadd.f32 0.0, %v1298
      %v1300 = vpop.f32.mrf.mxu0
      %v1301 = vadd.f32 0.0, %v1300
      %1302 = vmatmul.bf16.gmra.mxu0 %v1223
      %v1303 = vpop.f32.mrf.mxu0
      %v1304 = vadd.f32 0.0, %v1303
      %v1305 = vpop.f32.mrf.mxu0
      %v1306 = vadd.f32 0.0, %v1305
      %1307 = vmatmul.bf16.gmra.mxu0 %v1226
      %v1308 = vpop.f32.mrf.mxu0
      %v1309 = vadd.f32 0.0, %v1308
      %v1310 = vpop.f32.mrf.mxu0
      %v1311 = vadd.f32 0.0, %v1310
      %1312 = vmatmul.bf16.gmra.mxu0 %v1229
      %v1313 = vpop.f32.mrf.mxu0
      %v1314 = vadd.f32 0.0, %v1313
      %v1315 = vpop.f32.mrf.mxu0
      %v1316 = vadd.f32 0.0, %v1315
      %1317 = vmatmul.bf16.gmra.mxu0 %v1232
      %v1318 = vpop.f32.mrf.mxu0
      %v1319 = vadd.f32 0.0, %v1318
      %v1320 = vpop.f32.mrf.mxu0
      %v1321 = vadd.f32 0.0, %v1320
      %1322 = vmatmul.bf16.gmra.mxu0 %v1235
      %v1323 = vpop.f32.mrf.mxu0
      %v1324 = vadd.f32 0.0, %v1323
      %v1325 = vpop.f32.mrf.mxu0
      %v1326 = vadd.f32 0.0, %v1325
      %1327 = vmatmul.bf16.gmra.mxu0 %v1238
      %v1328 = vpop.f32.mrf.mxu0
      %v1329 = vadd.f32 0.0, %v1328
      %v1330 = vpop.f32.mrf.mxu0
      %v1331 = vadd.f32 0.0, %v1330
      %1332 = vdwg.mxu0
      %v1365 = vunpack.c.l.b16 %v1044
      %v1366 = vunpack.c.l.b16 %v1045
      %v1367 = vunpack.c.l.b16 %v1046
      %v1368 = vunpack.c.l.b16 %v1047
      %v1369 = vunpack.c.l.b16 %v1048
      %v1370 = vunpack.c.l.b16 %v1049
      %v1371 = vunpack.c.l.b16 %v1050
      %v1372 = vunpack.c.l.b16 %v1051
      %v1373 = vunpack.c.l.b16 %v1052
      %v1374 = vunpack.c.l.b16 %v1053
      %v1375 = vunpack.c.l.b16 %v1054
      %v1376 = vunpack.c.l.b16 %v1055
      %v1377 = vunpack.c.l.b16 %v1056
      %v1378 = vunpack.c.l.b16 %v1057
      %v1379 = vunpack.c.l.b16 %v1058
      %v1380 = vunpack.c.l.b16 %v1059
      %v1381 = vunpack.c.l.b16 %v1060
      %v1382 = vunpack.c.l.b16 %v1061
      %v1383 = vunpack.c.l.b16 %v1062
      %v1384 = vunpack.c.l.b16 %v1063
      %v1385 = vunpack.c.l.b16 %v1064
      %v1386 = vunpack.c.l.b16 %v1065
      %v1387 = vunpack.c.l.b16 %v1066
      %v1388 = vunpack.c.l.b16 %v1067
      %v1389 = vunpack.c.l.b16 %v1068
      %v1390 = vunpack.c.l.b16 %v1069
      %v1391 = vunpack.c.l.b16 %v1070
      %v1392 = vunpack.c.l.b16 %v1071
      %v1393 = vunpack.c.l.b16 %v1072
      %v1394 = vunpack.c.l.b16 %v1073
      %v1395 = vunpack.c.l.b16 %v1074
      %v1396 = vunpack.c.l.b16 %v1075
      %v1397 = vpack.c.b16 %v1366, %v1365
      %v1398 = vpack.c.b16 %v1368, %v1367
      %v1399 = vpack.c.b16 %v1370, %v1369
      %v1400 = vpack.c.b16 %v1372, %v1371
      %v1401 = vpack.c.b16 %v1374, %v1373
      %v1402 = vpack.c.b16 %v1376, %v1375
      %v1403 = vpack.c.b16 %v1378, %v1377
      %v1404 = vpack.c.b16 %v1380, %v1379
      %v1405 = vpack.c.b16 %v1382, %v1381
      %v1406 = vpack.c.b16 %v1384, %v1383
      %v1407 = vpack.c.b16 %v1386, %v1385
      %v1408 = vpack.c.b16 %v1388, %v1387
      %v1409 = vpack.c.b16 %v1390, %v1389
      %v1410 = vpack.c.b16 %v1392, %v1391
      %v1411 = vpack.c.b16 %v1394, %v1393
      %v1412 = vpack.c.b16 %v1396, %v1395
      %v1414 = vsel %vm1191, %v1397, 0
      %v1417 = vsel %vm1191, %v1398, 0
      %v1420 = vsel %vm1191, %v1399, 0
      %v1423 = vsel %vm1191, %v1400, 0
      %v1426 = vsel %vm1191, %v1401, 0
      %v1429 = vsel %vm1191, %v1402, 0
      %v1432 = vsel %vm1191, %v1403, 0
      %v1435 = vsel %vm1191, %v1404, 0
      %v1438 = vsel %vm1191, %v1405, 0
      %v1441 = vsel %vm1191, %v1406, 0
      %v1444 = vsel %vm1191, %v1407, 0
      %v1447 = vsel %vm1191, %v1408, 0
      %v1450 = vsel %vm1191, %v1409, 0
      %v1453 = vsel %vm1191, %v1410, 0
      %v1456 = vsel %vm1191, %v1411, 0
      %v1459 = vsel %vm1191, %v1412, 0
      %v1462 = vsel %vm1240, %v1076, 0
      %1464 = vmatpush.bf16.msra.mxu0 0
      %1465 = vmatpush.bf16.msra.mxu0 0
      %1466 = vmatpush.bf16.msra.mxu0 0
      %1467 = vmatpush.bf16.msra.mxu0 0
      %1468 = vmatpush.bf16.msra.mxu0 0
      %1469 = vmatpush.bf16.msra.mxu0 0
      %1470 = vmatpush.bf16.msra.mxu0 0
      %1471 = vmatpush.bf16.msra.mxu0 %v1462
      %1472 = vmatmul.bf16.gmra.mxu0 %v1414
      %v1473 = vpop.f32.mrf.mxu0
      %v1474 = vadd.f32 %v1254, %v1473
      %v1475 = vpop.f32.mrf.mxu0
      %v1476 = vadd.f32 %v1256, %v1475
      %1477 = vmatmul.bf16.gmra.mxu0 %v1417
      %v1478 = vpop.f32.mrf.mxu0
      %v1479 = vadd.f32 %v1259, %v1478
      %v1480 = vpop.f32.mrf.mxu0
      %v1481 = vadd.f32 %v1261, %v1480
      %1482 = vmatmul.bf16.gmra.mxu0 %v1420
      %v1483 = vpop.f32.mrf.mxu0
      %v1484 = vadd.f32 %v1264, %v1483
      %v1485 = vpop.f32.mrf.mxu0
      %v1486 = vadd.f32 %v1266, %v1485
      %1487 = vmatmul.bf16.gmra.mxu0 %v1423
      %v1488 = vpop.f32.mrf.mxu0
      %v1489 = vadd.f32 %v1269, %v1488
      %v1490 = vpop.f32.mrf.mxu0
      %v1491 = vadd.f32 %v1271, %v1490
      %1492 = vmatmul.bf16.gmra.mxu0 %v1426
      %v1493 = vpop.f32.mrf.mxu0
      %v1494 = vadd.f32 %v1274, %v1493
      %v1495 = vpop.f32.mrf.mxu0
      %v1496 = vadd.f32 %v1276, %v1495
      %1497 = vmatmul.bf16.gmra.mxu0 %v1429
      %v1498 = vpop.f32.mrf.mxu0
      %v1499 = vadd.f32 %v1279, %v1498
      %v1500 = vpop.f32.mrf.mxu0
      %v1501 = vadd.f32 %v1281, %v1500
      %1502 = vmatmul.bf16.gmra.mxu0 %v1432
      %v1503 = vpop.f32.mrf.mxu0
      %v1504 = vadd.f32 %v1284, %v1503
      %v1505 = vpop.f32.mrf.mxu0
      %v1506 = vadd.f32 %v1286, %v1505
      %1507 = vmatmul.bf16.gmra.mxu0 %v1435
      %v1508 = vpop.f32.mrf.mxu0
      %v1509 = vadd.f32 %v1289, %v1508
      %v1510 = vpop.f32.mrf.mxu0
      %v1511 = vadd.f32 %v1291, %v1510
      %1512 = vmatmul.bf16.gmra.mxu0 %v1438
      %v1513 = vpop.f32.mrf.mxu0
      %v1514 = vadd.f32 %v1294, %v1513
      %v1515 = vpop.f32.mrf.mxu0
      %v1516 = vadd.f32 %v1296, %v1515
      %1517 = vmatmul.bf16.gmra.mxu0 %v1441
      %v1518 = vpop.f32.mrf.mxu0
      %v1519 = vadd.f32 %v1299, %v1518
      %v1520 = vpop.f32.mrf.mxu0
      %v1521 = vadd.f32 %v1301, %v1520
      %1522 = vmatmul.bf16.gmra.mxu0 %v1444
      %v1523 = vpop.f32.mrf.mxu0
      %v1524 = vadd.f32 %v1304, %v1523
      %v1525 = vpop.f32.mrf.mxu0
      %v1526 = vadd.f32 %v1306, %v1525
      %1527 = vmatmul.bf16.gmra.mxu0 %v1447
      %v1528 = vpop.f32.mrf.mxu0
      %v1529 = vadd.f32 %v1309, %v1528
      %v1530 = vpop.f32.mrf.mxu0
      %v1531 = vadd.f32 %v1311, %v1530
      %1532 = vmatmul.bf16.gmra.mxu0 %v1450
      %v1533 = vpop.f32.mrf.mxu0
      %v1534 = vadd.f32 %v1314, %v1533
      %v1535 = vpop.f32.mrf.mxu0
      %v1536 = vadd.f32 %v1316, %v1535
      %1537 = vmatmul.bf16.gmra.mxu0 %v1453
      %v1538 = vpop.f32.mrf.mxu0
      %v1539 = vadd.f32 %v1319, %v1538
      %v1540 = vpop.f32.mrf.mxu0
      %v1541 = vadd.f32 %v1321, %v1540
      %1542 = vmatmul.bf16.gmra.mxu0 %v1456
      %v1543 = vpop.f32.mrf.mxu0
      %v1544 = vadd.f32 %v1324, %v1543
      %v1545 = vpop.f32.mrf.mxu0
      %v1546 = vadd.f32 %v1326, %v1545
      %1547 = vmatmul.bf16.gmra.mxu0 %v1459
      %v1548 = vpop.f32.mrf.mxu0
      %v1549 = vadd.f32 %v1329, %v1548
      %v1550 = vpop.f32.mrf.mxu0
      %v1551 = vadd.f32 %v1331, %v1550
      %1552 = vdwg.mxu0
      %v1553 = vld [vmem:[#allocation4] sm:$0xf]
      %v1554 = vld [vmem:[#allocation4 + $0x4] sm:$0xf]
      %v1555 = vld [vmem:[#allocation4 + $0x8] sm:$0xf]
      %v1556 = vld [vmem:[#allocation4 + $0xc] sm:$0xf]
      %v1557 = vld [vmem:[#allocation4 + $0x10] sm:$0xf]
      %v1558 = vld [vmem:[#allocation4 + $0x14] sm:$0xf]
      %v1559 = vld [vmem:[#allocation4 + $0x18] sm:$0xf]
      %v1560 = vld [vmem:[#allocation4 + $0x1c] sm:$0xf]
      %v1561 = vld [vmem:[#allocation4 + $0x20] sm:$0xf]
      %v1562 = vld [vmem:[#allocation4 + $0x24] sm:$0xf]
      %v1563 = vld [vmem:[#allocation4 + $0x28] sm:$0xf]
      %v1564 = vld [vmem:[#allocation4 + $0x2c] sm:$0xf]
      %v1565 = vld [vmem:[#allocation4 + $0x30] sm:$0xf]
      %v1566 = vld [vmem:[#allocation4 + $0x34] sm:$0xf]
      %v1567 = vld [vmem:[#allocation4 + $0x38] sm:$0xf]
      %v1568 = vld [vmem:[#allocation4 + $0x3c] sm:$0xf]
      %v1569 = vld [vmem:[#allocation4 + $0x40] sm:$0xf]
      %v1570 = vld [vmem:[#allocation4 + $0x44] sm:$0xf]
      %v1571 = vld [vmem:[#allocation4 + $0x48] sm:$0xf]
      %v1572 = vld [vmem:[#allocation4 + $0x4c] sm:$0xf]
      %v1573 = vld [vmem:[#allocation4 + $0x50] sm:$0xf]
      %v1574 = vld [vmem:[#allocation4 + $0x54] sm:$0xf]
      %v1575 = vld [vmem:[#allocation4 + $0x58] sm:$0xf]
      %v1576 = vld [vmem:[#allocation4 + $0x5c] sm:$0xf]
      %v1577 = vld [vmem:[#allocation4 + $0x60] sm:$0xf]
      %v1578 = vld [vmem:[#allocation4 + $0x64] sm:$0xf]
      %v1579 = vld [vmem:[#allocation4 + $0x68] sm:$0xf]
      %v1580 = vld [vmem:[#allocation4 + $0x6c] sm:$0xf]
      %v1581 = vld [vmem:[#allocation4 + $0x70] sm:$0xf]
      %v1582 = vld [vmem:[#allocation4 + $0x74] sm:$0xf]
      %v1583 = vld [vmem:[#allocation4 + $0x78] sm:$0xf]
      %v1584 = vld [vmem:[#allocation4 + $0x7c] sm:$0xf]
      %s1585 = scalar_lea.vmem %s1, 8
      %v1586 = vld [vmem:[%s1585] sm:$0xf]
      %v1619 = vunpack.c.l.b16 %v1553
      %v1620 = vunpack.c.l.b16 %v1554
      %v1621 = vunpack.c.l.b16 %v1555
      %v1622 = vunpack.c.l.b16 %v1556
      %v1623 = vunpack.c.l.b16 %v1557
      %v1624 = vunpack.c.l.b16 %v1558
      %v1625 = vunpack.c.l.b16 %v1559
      %v1626 = vunpack.c.l.b16 %v1560
      %v1627 = vunpack.c.l.b16 %v1561
      %v1628 = vunpack.c.l.b16 %v1562
      %v1629 = vunpack.c.l.b16 %v1563
      %v1630 = vunpack.c.l.b16 %v1564
      %v1631 = vunpack.c.l.b16 %v1565
      %v1632 = vunpack.c.l.b16 %v1566
      %v1633 = vunpack.c.l.b16 %v1567
      %v1634 = vunpack.c.l.b16 %v1568
      %v1635 = vunpack.c.l.b16 %v1569
      %v1636 = vunpack.c.l.b16 %v1570
      %v1637 = vunpack.c.l.b16 %v1571
      %v1638 = vunpack.c.l.b16 %v1572
      %v1639 = vunpack.c.l.b16 %v1573
      %v1640 = vunpack.c.l.b16 %v1574
      %v1641 = vunpack.c.l.b16 %v1575
      %v1642 = vunpack.c.l.b16 %v1576
      %v1643 = vunpack.c.l.b16 %v1577
      %v1644 = vunpack.c.l.b16 %v1578
      %v1645 = vunpack.c.l.b16 %v1579
      %v1646 = vunpack.c.l.b16 %v1580
      %v1647 = vunpack.c.l.b16 %v1581
      %v1648 = vunpack.c.l.b16 %v1582
      %v1649 = vunpack.c.l.b16 %v1583
      %v1650 = vunpack.c.l.b16 %v1584
      %v1651 = vpack.c.b16 %v1620, %v1619
      %v1652 = vpack.c.b16 %v1622, %v1621
      %v1653 = vpack.c.b16 %v1624, %v1623
      %v1654 = vpack.c.b16 %v1626, %v1625
      %v1655 = vpack.c.b16 %v1628, %v1627
      %v1656 = vpack.c.b16 %v1630, %v1629
      %v1657 = vpack.c.b16 %v1632, %v1631
      %v1658 = vpack.c.b16 %v1634, %v1633
      %v1659 = vpack.c.b16 %v1636, %v1635
      %v1660 = vpack.c.b16 %v1638, %v1637
      %v1661 = vpack.c.b16 %v1640, %v1639
      %v1662 = vpack.c.b16 %v1642, %v1641
      %v1663 = vpack.c.b16 %v1644, %v1643
      %v1664 = vpack.c.b16 %v1646, %v1645
      %v1665 = vpack.c.b16 %v1648, %v1647
      %v1666 = vpack.c.b16 %v1650, %v1649
      %v1668 = vsel %vm1191, %v1651, 0
      %v1671 = vsel %vm1191, %v1652, 0
      %v1674 = vsel %vm1191, %v1653, 0
      %v1677 = vsel %vm1191, %v1654, 0
      %v1680 = vsel %vm1191, %v1655, 0
      %v1683 = vsel %vm1191, %v1656, 0
      %v1686 = vsel %vm1191, %v1657, 0
      %v1689 = vsel %vm1191, %v1658, 0
      %v1692 = vsel %vm1191, %v1659, 0
      %v1695 = vsel %vm1191, %v1660, 0
      %v1698 = vsel %vm1191, %v1661, 0
      %v1701 = vsel %vm1191, %v1662, 0
      %v1704 = vsel %vm1191, %v1663, 0
      %v1707 = vsel %vm1191, %v1664, 0
      %v1710 = vsel %vm1191, %v1665, 0
      %v1713 = vsel %vm1191, %v1666, 0
      %v1716 = vsel %vm1240, %v1586, 0
      %1718 = vmatpush.bf16.msra.mxu0 0
      %1719 = vmatpush.bf16.msra.mxu0 0
      %1720 = vmatpush.bf16.msra.mxu0 0
      %1721 = vmatpush.bf16.msra.mxu0 0
      %1722 = vmatpush.bf16.msra.mxu0 0
      %1723 = vmatpush.bf16.msra.mxu0 0
      %1724 = vmatpush.bf16.msra.mxu0 0
      %1725 = vmatpush.bf16.msra.mxu0 %v1716
      %1726 = vmatmul.bf16.gmra.mxu0 %v1668
      %v1727 = vpop.f32.mrf.mxu0
      %v1728 = vadd.f32 0.0, %v1727
      %v1729 = vpop.f32.mrf.mxu0
      %v1730 = vadd.f32 0.0, %v1729
      %1731 = vmatmul.bf16.gmra.mxu0 %v1671
      %v1732 = vpop.f32.mrf.mxu0
      %v1733 = vadd.f32 0.0, %v1732
      %v1734 = vpop.f32.mrf.mxu0
      %v1735 = vadd.f32 0.0, %v1734
      %1736 = vmatmul.bf16.gmra.mxu0 %v1674
      %v1737 = vpop.f32.mrf.mxu0
      %v1738 = vadd.f32 0.0, %v1737
      %v1739 = vpop.f32.mrf.mxu0
      %v1740 = vadd.f32 0.0, %v1739
      %1741 = vmatmul.bf16.gmra.mxu0 %v1677
      %v1742 = vpop.f32.mrf.mxu0
      %v1743 = vadd.f32 0.0, %v1742
      %v1744 = vpop.f32.mrf.mxu0
      %v1745 = vadd.f32 0.0, %v1744
      %1746 = vmatmul.bf16.gmra.mxu0 %v1680
      %v1747 = vpop.f32.mrf.mxu0
      %v1748 = vadd.f32 0.0, %v1747
      %v1749 = vpop.f32.mrf.mxu0
      %v1750 = vadd.f32 0.0, %v1749
      %1751 = vmatmul.bf16.gmra.mxu0 %v1683
      %v1752 = vpop.f32.mrf.mxu0
      %v1753 = vadd.f32 0.0, %v1752
      %v1754 = vpop.f32.mrf.mxu0
      %v1755 = vadd.f32 0.0, %v1754
      %1756 = vmatmul.bf16.gmra.mxu0 %v1686
      %v1757 = vpop.f32.mrf.mxu0
      %v1758 = vadd.f32 0.0, %v1757
      %v1759 = vpop.f32.mrf.mxu0
      %v1760 = vadd.f32 0.0, %v1759
      %1761 = vmatmul.bf16.gmra.mxu0 %v1689
      %v1762 = vpop.f32.mrf.mxu0
      %v1763 = vadd.f32 0.0, %v1762
      %v1764 = vpop.f32.mrf.mxu0
      %v1765 = vadd.f32 0.0, %v1764
      %1766 = vmatmul.bf16.gmra.mxu0 %v1692
      %v1767 = vpop.f32.mrf.mxu0
      %v1768 = vadd.f32 0.0, %v1767
      %v1769 = vpop.f32.mrf.mxu0
      %v1770 = vadd.f32 0.0, %v1769
      %1771 = vmatmul.bf16.gmra.mxu0 %v1695
      %v1772 = vpop.f32.mrf.mxu0
      %v1773 = vadd.f32 0.0, %v1772
      %v1774 = vpop.f32.mrf.mxu0
      %v1775 = vadd.f32 0.0, %v1774
      %1776 = vmatmul.bf16.gmra.mxu0 %v1698
      %v1777 = vpop.f32.mrf.mxu0
      %v1778 = vadd.f32 0.0, %v1777
      %v1779 = vpop.f32.mrf.mxu0
      %v1780 = vadd.f32 0.0, %v1779
      %1781 = vmatmul.bf16.gmra.mxu0 %v1701
      %v1782 = vpop.f32.mrf.mxu0
      %v1783 = vadd.f32 0.0, %v1782
      %v1784 = vpop.f32.mrf.mxu0
      %v1785 = vadd.f32 0.0, %v1784
      %1786 = vmatmul.bf16.gmra.mxu0 %v1704
      %v1787 = vpop.f32.mrf.mxu0
      %v1788 = vadd.f32 0.0, %v1787
      %v1789 = vpop.f32.mrf.mxu0
      %v1790 = vadd.f32 0.0, %v1789
      %1791 = vmatmul.bf16.gmra.mxu0 %v1707
      %v1792 = vpop.f32.mrf.mxu0
      %v1793 = vadd.f32 0.0, %v1792
      %v1794 = vpop.f32.mrf.mxu0
      %v1795 = vadd.f32 0.0, %v1794
      %1796 = vmatmul.bf16.gmra.mxu0 %v1710
      %v1797 = vpop.f32.mrf.mxu0
      %v1798 = vadd.f32 0.0, %v1797
      %v1799 = vpop.f32.mrf.mxu0
      %v1800 = vadd.f32 0.0, %v1799
      %1801 = vmatmul.bf16.gmra.mxu0 %v1713
      %v1802 = vpop.f32.mrf.mxu0
      %v1803 = vadd.f32 0.0, %v1802
      %v1804 = vpop.f32.mrf.mxu0
      %v1805 = vadd.f32 0.0, %v1804
      %1806 = vdwg.mxu0
      %v1807 = vadd.f32 %v1474, %v1728
      %v1808 = vadd.f32 %v1476, %v1730
      %v1809 = vadd.f32 %v1479, %v1733
      %v1810 = vadd.f32 %v1481, %v1735
      %v1811 = vadd.f32 %v1484, %v1738
      %v1812 = vadd.f32 %v1486, %v1740
      %v1813 = vadd.f32 %v1489, %v1743
      %v1814 = vadd.f32 %v1491, %v1745
      %v1815 = vadd.f32 %v1494, %v1748
      %v1816 = vadd.f32 %v1496, %v1750
      %v1817 = vadd.f32 %v1499, %v1753
      %v1818 = vadd.f32 %v1501, %v1755
      %v1819 = vadd.f32 %v1504, %v1758
      %v1820 = vadd.f32 %v1506, %v1760
      %v1821 = vadd.f32 %v1509, %v1763
      %v1822 = vadd.f32 %v1511, %v1765
      %v1823 = vadd.f32 %v1514, %v1768
      %v1824 = vadd.f32 %v1516, %v1770
      %v1825 = vadd.f32 %v1519, %v1773
      %v1826 = vadd.f32 %v1521, %v1775
      %v1827 = vadd.f32 %v1524, %v1778
      %v1828 = vadd.f32 %v1526, %v1780
      %v1829 = vadd.f32 %v1529, %v1783
      %v1830 = vadd.f32 %v1531, %v1785
      %v1831 = vadd.f32 %v1534, %v1788
      %v1832 = vadd.f32 %v1536, %v1790
      %v1833 = vadd.f32 %v1539, %v1793
      %v1834 = vadd.f32 %v1541, %v1795
      %v1835 = vadd.f32 %v1544, %v1798
      %v1836 = vadd.f32 %v1546, %v1800
      %v1837 = vadd.f32 %v1549, %v1803
      %v1838 = vadd.f32 %v1551, %v1805
      %v1839 = vld [vmem:[%s339] sm:$0xf]
      %v1840 = vld [vmem:[%s339 + $0x4] sm:$0xf]
      %v1841 = vld [vmem:[%s339 + $0x8] sm:$0xf]
      %v1842 = vld [vmem:[%s339 + $0xc] sm:$0xf]
      %v1843 = vld [vmem:[%s339 + $0x10] sm:$0xf]
      %v1844 = vld [vmem:[%s339 + $0x14] sm:$0xf]
      %v1845 = vld [vmem:[%s339 + $0x18] sm:$0xf]
      %v1846 = vld [vmem:[%s339 + $0x1c] sm:$0xf]
      %v1847 = vld [vmem:[%s339 + $0x20] sm:$0xf]
      %v1848 = vld [vmem:[%s339 + $0x24] sm:$0xf]
      %v1849 = vld [vmem:[%s339 + $0x28] sm:$0xf]
      %v1850 = vld [vmem:[%s339 + $0x2c] sm:$0xf]
      %v1851 = vld [vmem:[%s339 + $0x30] sm:$0xf]
      %v1852 = vld [vmem:[%s339 + $0x34] sm:$0xf]
      %v1853 = vld [vmem:[%s339 + $0x38] sm:$0xf]
      %v1854 = vld [vmem:[%s339 + $0x3c] sm:$0xf]
      %v1855 = vld [vmem:[%s339 + $0x40] sm:$0xf]
      %v1856 = vld [vmem:[%s339 + $0x44] sm:$0xf]
      %v1857 = vld [vmem:[%s339 + $0x48] sm:$0xf]
      %v1858 = vld [vmem:[%s339 + $0x4c] sm:$0xf]
      %v1859 = vld [vmem:[%s339 + $0x50] sm:$0xf]
      %v1860 = vld [vmem:[%s339 + $0x54] sm:$0xf]
      %v1861 = vld [vmem:[%s339 + $0x58] sm:$0xf]
      %v1862 = vld [vmem:[%s339 + $0x5c] sm:$0xf]
      %v1863 = vld [vmem:[%s339 + $0x60] sm:$0xf]
      %v1864 = vld [vmem:[%s339 + $0x64] sm:$0xf]
      %v1865 = vld [vmem:[%s339 + $0x68] sm:$0xf]
      %v1866 = vld [vmem:[%s339 + $0x6c] sm:$0xf]
      %v1867 = vld [vmem:[%s339 + $0x70] sm:$0xf]
      %v1868 = vld [vmem:[%s339 + $0x74] sm:$0xf]
      %v1869 = vld [vmem:[%s339 + $0x78] sm:$0xf]
      %v1870 = vld [vmem:[%s339 + $0x7c] sm:$0xf]
      %s1871 = scalar_lea.vmem %s1, 12
      %v1872 = vld [vmem:[%s1871] sm:$0xf]
      %v1905 = vunpack.c.l.b16 %v1839
      %v1906 = vunpack.c.l.b16 %v1840
      %v1907 = vunpack.c.l.b16 %v1841
      %v1908 = vunpack.c.l.b16 %v1842
      %v1909 = vunpack.c.l.b16 %v1843
      %v1910 = vunpack.c.l.b16 %v1844
      %v1911 = vunpack.c.l.b16 %v1845
      %v1912 = vunpack.c.l.b16 %v1846
      %v1913 = vunpack.c.l.b16 %v1847
      %v1914 = vunpack.c.l.b16 %v1848
      %v1915 = vunpack.c.l.b16 %v1849
      %v1916 = vunpack.c.l.b16 %v1850
      %v1917 = vunpack.c.l.b16 %v1851
      %v1918 = vunpack.c.l.b16 %v1852
      %v1919 = vunpack.c.l.b16 %v1853
      %v1920 = vunpack.c.l.b16 %v1854
      %v1921 = vunpack.c.l.b16 %v1855
      %v1922 = vunpack.c.l.b16 %v1856
      %v1923 = vunpack.c.l.b16 %v1857
      %v1924 = vunpack.c.l.b16 %v1858
      %v1925 = vunpack.c.l.b16 %v1859
      %v1926 = vunpack.c.l.b16 %v1860
      %v1927 = vunpack.c.l.b16 %v1861
      %v1928 = vunpack.c.l.b16 %v1862
      %v1929 = vunpack.c.l.b16 %v1863
      %v1930 = vunpack.c.l.b16 %v1864
      %v1931 = vunpack.c.l.b16 %v1865
      %v1932 = vunpack.c.l.b16 %v1866
      %v1933 = vunpack.c.l.b16 %v1867
      %v1934 = vunpack.c.l.b16 %v1868
      %v1935 = vunpack.c.l.b16 %v1869
      %v1936 = vunpack.c.l.b16 %v1870
      %v1937 = vpack.c.b16 %v1906, %v1905
      %v1938 = vpack.c.b16 %v1908, %v1907
      %v1939 = vpack.c.b16 %v1910, %v1909
      %v1940 = vpack.c.b16 %v1912, %v1911
      %v1941 = vpack.c.b16 %v1914, %v1913
      %v1942 = vpack.c.b16 %v1916, %v1915
      %v1943 = vpack.c.b16 %v1918, %v1917
      %v1944 = vpack.c.b16 %v1920, %v1919
      %v1945 = vpack.c.b16 %v1922, %v1921
      %v1946 = vpack.c.b16 %v1924, %v1923
      %v1947 = vpack.c.b16 %v1926, %v1925
      %v1948 = vpack.c.b16 %v1928, %v1927
      %v1949 = vpack.c.b16 %v1930, %v1929
      %v1950 = vpack.c.b16 %v1932, %v1931
      %v1951 = vpack.c.b16 %v1934, %v1933
      %v1952 = vpack.c.b16 %v1936, %v1935
      %v1954 = vsel %vm1191, %v1937, 0
      %v1957 = vsel %vm1191, %v1938, 0
      %v1960 = vsel %vm1191, %v1939, 0
      %v1963 = vsel %vm1191, %v1940, 0
      %v1966 = vsel %vm1191, %v1941, 0
      %v1969 = vsel %vm1191, %v1942, 0
      %v1972 = vsel %vm1191, %v1943, 0
      %v1975 = vsel %vm1191, %v1944, 0
      %v1978 = vsel %vm1191, %v1945, 0
      %v1981 = vsel %vm1191, %v1946, 0
      %v1984 = vsel %vm1191, %v1947, 0
      %v1987 = vsel %vm1191, %v1948, 0
      %v1990 = vsel %vm1191, %v1949, 0
      %v1993 = vsel %vm1191, %v1950, 0
      %v1996 = vsel %vm1191, %v1951, 0
      %v1999 = vsel %vm1191, %v1952, 0
      %v2002 = vsel %vm1240, %v1872, 0
      %2004 = vmatpush.bf16.msra.mxu0 0
      %2005 = vmatpush.bf16.msra.mxu0 0
      %2006 = vmatpush.bf16.msra.mxu0 0
      %2007 = vmatpush.bf16.msra.mxu0 0
      %2008 = vmatpush.bf16.msra.mxu0 0
      %2009 = vmatpush.bf16.msra.mxu0 0
      %2010 = vmatpush.bf16.msra.mxu0 0
      %2011 = vmatpush.bf16.msra.mxu0 %v2002
      %2012 = vmatmul.bf16.gmra.mxu0 %v1954
      %v2013 = vpop.f32.mrf.mxu0
      %v2014 = vadd.f32 0.0, %v2013
      %v2015 = vpop.f32.mrf.mxu0
      %v2016 = vadd.f32 0.0, %v2015
      %2017 = vmatmul.bf16.gmra.mxu0 %v1957
      %v2018 = vpop.f32.mrf.mxu0
      %v2019 = vadd.f32 0.0, %v2018
      %v2020 = vpop.f32.mrf.mxu0
      %v2021 = vadd.f32 0.0, %v2020
      %2022 = vmatmul.bf16.gmra.mxu0 %v1960
      %v2023 = vpop.f32.mrf.mxu0
      %v2024 = vadd.f32 0.0, %v2023
      %v2025 = vpop.f32.mrf.mxu0
      %v2026 = vadd.f32 0.0, %v2025
      %2027 = vmatmul.bf16.gmra.mxu0 %v1963
      %v2028 = vpop.f32.mrf.mxu0
      %v2029 = vadd.f32 0.0, %v2028
      %v2030 = vpop.f32.mrf.mxu0
      %v2031 = vadd.f32 0.0, %v2030
      %2032 = vmatmul.bf16.gmra.mxu0 %v1966
      %v2033 = vpop.f32.mrf.mxu0
      %v2034 = vadd.f32 0.0, %v2033
      %v2035 = vpop.f32.mrf.mxu0
      %v2036 = vadd.f32 0.0, %v2035
      %2037 = vmatmul.bf16.gmra.mxu0 %v1969
      %v2038 = vpop.f32.mrf.mxu0
      %v2039 = vadd.f32 0.0, %v2038
      %v2040 = vpop.f32.mrf.mxu0
      %v2041 = vadd.f32 0.0, %v2040
      %2042 = vmatmul.bf16.gmra.mxu0 %v1972
      %v2043 = vpop.f32.mrf.mxu0
      %v2044 = vadd.f32 0.0, %v2043
      %v2045 = vpop.f32.mrf.mxu0
      %v2046 = vadd.f32 0.0, %v2045
      %2047 = vmatmul.bf16.gmra.mxu0 %v1975
      %v2048 = vpop.f32.mrf.mxu0
      %v2049 = vadd.f32 0.0, %v2048
      %v2050 = vpop.f32.mrf.mxu0
      %v2051 = vadd.f32 0.0, %v2050
      %2052 = vmatmul.bf16.gmra.mxu0 %v1978
      %v2053 = vpop.f32.mrf.mxu0
      %v2054 = vadd.f32 0.0, %v2053
      %v2055 = vpop.f32.mrf.mxu0
      %v2056 = vadd.f32 0.0, %v2055
      %2057 = vmatmul.bf16.gmra.mxu0 %v1981
      %v2058 = vpop.f32.mrf.mxu0
      %v2059 = vadd.f32 0.0, %v2058
      %v2060 = vpop.f32.mrf.mxu0
      %v2061 = vadd.f32 0.0, %v2060
      %2062 = vmatmul.bf16.gmra.mxu0 %v1984
      %v2063 = vpop.f32.mrf.mxu0
      %v2064 = vadd.f32 0.0, %v2063
      %v2065 = vpop.f32.mrf.mxu0
      %v2066 = vadd.f32 0.0, %v2065
      %2067 = vmatmul.bf16.gmra.mxu0 %v1987
      %v2068 = vpop.f32.mrf.mxu0
      %v2069 = vadd.f32 0.0, %v2068
      %v2070 = vpop.f32.mrf.mxu0
      %v2071 = vadd.f32 0.0, %v2070
      %2072 = vmatmul.bf16.gmra.mxu0 %v1990
      %v2073 = vpop.f32.mrf.mxu0
      %v2074 = vadd.f32 0.0, %v2073
      %v2075 = vpop.f32.mrf.mxu0
      %v2076 = vadd.f32 0.0, %v2075
      %2077 = vmatmul.bf16.gmra.mxu0 %v1993
      %v2078 = vpop.f32.mrf.mxu0
      %v2079 = vadd.f32 0.0, %v2078
      %v2080 = vpop.f32.mrf.mxu0
      %v2081 = vadd.f32 0.0, %v2080
      %2082 = vmatmul.bf16.gmra.mxu0 %v1996
      %v2083 = vpop.f32.mrf.mxu0
      %v2084 = vadd.f32 0.0, %v2083
      %v2085 = vpop.f32.mrf.mxu0
      %v2086 = vadd.f32 0.0, %v2085
      %2087 = vmatmul.bf16.gmra.mxu0 %v1999
      %v2088 = vpop.f32.mrf.mxu0
      %v2089 = vadd.f32 0.0, %v2088
      %v2090 = vpop.f32.mrf.mxu0
      %v2091 = vadd.f32 0.0, %v2090
      %2092 = vdwg.mxu0
      %v2093 = vadd.f32 %v1807, %v2014
      %v2094 = vadd.f32 %v1808, %v2016
      %v2095 = vadd.f32 %v1809, %v2019
      %v2096 = vadd.f32 %v1810, %v2021
      %v2097 = vadd.f32 %v1811, %v2024
      %v2098 = vadd.f32 %v1812, %v2026
      %v2099 = vadd.f32 %v1813, %v2029
      %v2100 = vadd.f32 %v1814, %v2031
      %v2101 = vadd.f32 %v1815, %v2034
      %v2102 = vadd.f32 %v1816, %v2036
      %v2103 = vadd.f32 %v1817, %v2039
      %v2104 = vadd.f32 %v1818, %v2041
      %v2105 = vadd.f32 %v1819, %v2044
      %v2106 = vadd.f32 %v1820, %v2046
      %v2107 = vadd.f32 %v1821, %v2049
      %v2108 = vadd.f32 %v1822, %v2051
      %v2109 = vadd.f32 %v1823, %v2054
      %v2110 = vadd.f32 %v1824, %v2056
      %v2111 = vadd.f32 %v1825, %v2059
      %v2112 = vadd.f32 %v1826, %v2061
      %v2113 = vadd.f32 %v1827, %v2064
      %v2114 = vadd.f32 %v1828, %v2066
      %v2115 = vadd.f32 %v1829, %v2069
      %v2116 = vadd.f32 %v1830, %v2071
      %v2117 = vadd.f32 %v1831, %v2074
      %v2118 = vadd.f32 %v1832, %v2076
      %v2119 = vadd.f32 %v1833, %v2079
      %v2120 = vadd.f32 %v1834, %v2081
      %v2121 = vadd.f32 %v1835, %v2084
      %v2122 = vadd.f32 %v1836, %v2086
      %v2123 = vadd.f32 %v1837, %v2089
      %v2124 = vadd.f32 %v1838, %v2091
      %v2125 = vld [vmem:[%s306] sm:$0xf]
      %v2126 = vld [vmem:[%s306 + $0x4] sm:$0xf]
      %v2127 = vld [vmem:[%s306 + $0x8] sm:$0xf]
      %v2128 = vld [vmem:[%s306 + $0xc] sm:$0xf]
      %v2129 = vld [vmem:[%s306 + $0x10] sm:$0xf]
      %v2130 = vld [vmem:[%s306 + $0x14] sm:$0xf]
      %v2131 = vld [vmem:[%s306 + $0x18] sm:$0xf]
      %v2132 = vld [vmem:[%s306 + $0x1c] sm:$0xf]
      %v2133 = vld [vmem:[%s306 + $0x20] sm:$0xf]
      %v2134 = vld [vmem:[%s306 + $0x24] sm:$0xf]
      %v2135 = vld [vmem:[%s306 + $0x28] sm:$0xf]
      %v2136 = vld [vmem:[%s306 + $0x2c] sm:$0xf]
      %v2137 = vld [vmem:[%s306 + $0x30] sm:$0xf]
      %v2138 = vld [vmem:[%s306 + $0x34] sm:$0xf]
      %v2139 = vld [vmem:[%s306 + $0x38] sm:$0xf]
      %v2140 = vld [vmem:[%s306 + $0x3c] sm:$0xf]
      %v2141 = vld [vmem:[%s306 + $0x40] sm:$0xf]
      %v2142 = vld [vmem:[%s306 + $0x44] sm:$0xf]
      %v2143 = vld [vmem:[%s306 + $0x48] sm:$0xf]
      %v2144 = vld [vmem:[%s306 + $0x4c] sm:$0xf]
      %v2145 = vld [vmem:[%s306 + $0x50] sm:$0xf]
      %v2146 = vld [vmem:[%s306 + $0x54] sm:$0xf]
      %v2147 = vld [vmem:[%s306 + $0x58] sm:$0xf]
      %v2148 = vld [vmem:[%s306 + $0x5c] sm:$0xf]
      %v2149 = vld [vmem:[%s306 + $0x60] sm:$0xf]
      %v2150 = vld [vmem:[%s306 + $0x64] sm:$0xf]
      %v2151 = vld [vmem:[%s306 + $0x68] sm:$0xf]
      %v2152 = vld [vmem:[%s306 + $0x6c] sm:$0xf]
      %v2153 = vld [vmem:[%s306 + $0x70] sm:$0xf]
      %v2154 = vld [vmem:[%s306 + $0x74] sm:$0xf]
      %v2155 = vld [vmem:[%s306 + $0x78] sm:$0xf]
      %v2156 = vld [vmem:[%s306 + $0x7c] sm:$0xf]
      %s2157 = scalar_lea.vmem %s1, 16
      %v2158 = vld [vmem:[%s2157] sm:$0xf]
      %v2191 = vunpack.c.l.b16 %v2125
      %v2192 = vunpack.c.l.b16 %v2126
      %v2193 = vunpack.c.l.b16 %v2127
      %v2194 = vunpack.c.l.b16 %v2128
      %v2195 = vunpack.c.l.b16 %v2129
      %v2196 = vunpack.c.l.b16 %v2130
      %v2197 = vunpack.c.l.b16 %v2131
      %v2198 = vunpack.c.l.b16 %v2132
      %v2199 = vunpack.c.l.b16 %v2133
      %v2200 = vunpack.c.l.b16 %v2134
      %v2201 = vunpack.c.l.b16 %v2135
      %v2202 = vunpack.c.l.b16 %v2136
      %v2203 = vunpack.c.l.b16 %v2137
      %v2204 = vunpack.c.l.b16 %v2138
      %v2205 = vunpack.c.l.b16 %v2139
      %v2206 = vunpack.c.l.b16 %v2140
      %v2207 = vunpack.c.l.b16 %v2141
      %v2208 = vunpack.c.l.b16 %v2142
      %v2209 = vunpack.c.l.b16 %v2143
      %v2210 = vunpack.c.l.b16 %v2144
      %v2211 = vunpack.c.l.b16 %v2145
      %v2212 = vunpack.c.l.b16 %v2146
      %v2213 = vunpack.c.l.b16 %v2147
      %v2214 = vunpack.c.l.b16 %v2148
      %v2215 = vunpack.c.l.b16 %v2149
      %v2216 = vunpack.c.l.b16 %v2150
      %v2217 = vunpack.c.l.b16 %v2151
      %v2218 = vunpack.c.l.b16 %v2152
      %v2219 = vunpack.c.l.b16 %v2153
      %v2220 = vunpack.c.l.b16 %v2154
      %v2221 = vunpack.c.l.b16 %v2155
      %v2222 = vunpack.c.l.b16 %v2156
      %v2223 = vpack.c.b16 %v2192, %v2191
      %v2224 = vpack.c.b16 %v2194, %v2193
      %v2225 = vpack.c.b16 %v2196, %v2195
      %v2226 = vpack.c.b16 %v2198, %v2197
      %v2227 = vpack.c.b16 %v2200, %v2199
      %v2228 = vpack.c.b16 %v2202, %v2201
      %v2229 = vpack.c.b16 %v2204, %v2203
      %v2230 = vpack.c.b16 %v2206, %v2205
      %v2231 = vpack.c.b16 %v2208, %v2207
      %v2232 = vpack.c.b16 %v2210, %v2209
      %v2233 = vpack.c.b16 %v2212, %v2211
      %v2234 = vpack.c.b16 %v2214, %v2213
      %v2235 = vpack.c.b16 %v2216, %v2215
      %v2236 = vpack.c.b16 %v2218, %v2217
      %v2237 = vpack.c.b16 %v2220, %v2219
      %v2238 = vpack.c.b16 %v2222, %v2221
      %v2240 = vsel %vm1191, %v2223, 0
      %v2243 = vsel %vm1191, %v2224, 0
      %v2246 = vsel %vm1191, %v2225, 0
      %v2249 = vsel %vm1191, %v2226, 0
      %v2252 = vsel %vm1191, %v2227, 0
      %v2255 = vsel %vm1191, %v2228, 0
      %v2258 = vsel %vm1191, %v2229, 0
      %v2261 = vsel %vm1191, %v2230, 0
      %v2264 = vsel %vm1191, %v2231, 0
      %v2267 = vsel %vm1191, %v2232, 0
      %v2270 = vsel %vm1191, %v2233, 0
      %v2273 = vsel %vm1191, %v2234, 0
      %v2276 = vsel %vm1191, %v2235, 0
      %v2279 = vsel %vm1191, %v2236, 0
      %v2282 = vsel %vm1191, %v2237, 0
      %v2285 = vsel %vm1191, %v2238, 0
      %v2288 = vsel %vm1240, %v2158, 0
      %2290 = vmatpush.bf16.msra.mxu0 0
      %2291 = vmatpush.bf16.msra.mxu0 0
      %2292 = vmatpush.bf16.msra.mxu0 0
      %2293 = vmatpush.bf16.msra.mxu0 0
      %2294 = vmatpush.bf16.msra.mxu0 0
      %2295 = vmatpush.bf16.msra.mxu0 0
      %2296 = vmatpush.bf16.msra.mxu0 0
      %2297 = vmatpush.bf16.msra.mxu0 %v2288
      %2298 = vmatmul.bf16.gmra.mxu0 %v2240
      %v2299 = vpop.f32.mrf.mxu0
      %v2300 = vadd.f32 0.0, %v2299
      %v2301 = vpop.f32.mrf.mxu0
      %v2302 = vadd.f32 0.0, %v2301
      %2303 = vmatmul.bf16.gmra.mxu0 %v2243
      %v2304 = vpop.f32.mrf.mxu0
      %v2305 = vadd.f32 0.0, %v2304
      %v2306 = vpop.f32.mrf.mxu0
      %v2307 = vadd.f32 0.0, %v2306
      %2308 = vmatmul.bf16.gmra.mxu0 %v2246
      %v2309 = vpop.f32.mrf.mxu0
      %v2310 = vadd.f32 0.0, %v2309
      %v2311 = vpop.f32.mrf.mxu0
      %v2312 = vadd.f32 0.0, %v2311
      %2313 = vmatmul.bf16.gmra.mxu0 %v2249
      %v2314 = vpop.f32.mrf.mxu0
      %v2315 = vadd.f32 0.0, %v2314
      %v2316 = vpop.f32.mrf.mxu0
      %v2317 = vadd.f32 0.0, %v2316
      %2318 = vmatmul.bf16.gmra.mxu0 %v2252
      %v2319 = vpop.f32.mrf.mxu0
      %v2320 = vadd.f32 0.0, %v2319
      %v2321 = vpop.f32.mrf.mxu0
      %v2322 = vadd.f32 0.0, %v2321
      %2323 = vmatmul.bf16.gmra.mxu0 %v2255
      %v2324 = vpop.f32.mrf.mxu0
      %v2325 = vadd.f32 0.0, %v2324
      %v2326 = vpop.f32.mrf.mxu0
      %v2327 = vadd.f32 0.0, %v2326
      %2328 = vmatmul.bf16.gmra.mxu0 %v2258
      %v2329 = vpop.f32.mrf.mxu0
      %v2330 = vadd.f32 0.0, %v2329
      %v2331 = vpop.f32.mrf.mxu0
      %v2332 = vadd.f32 0.0, %v2331
      %2333 = vmatmul.bf16.gmra.mxu0 %v2261
      %v2334 = vpop.f32.mrf.mxu0
      %v2335 = vadd.f32 0.0, %v2334
      %v2336 = vpop.f32.mrf.mxu0
      %v2337 = vadd.f32 0.0, %v2336
      %2338 = vmatmul.bf16.gmra.mxu0 %v2264
      %v2339 = vpop.f32.mrf.mxu0
      %v2340 = vadd.f32 0.0, %v2339
      %v2341 = vpop.f32.mrf.mxu0
      %v2342 = vadd.f32 0.0, %v2341
      %2343 = vmatmul.bf16.gmra.mxu0 %v2267
      %v2344 = vpop.f32.mrf.mxu0
      %v2345 = vadd.f32 0.0, %v2344
      %v2346 = vpop.f32.mrf.mxu0
      %v2347 = vadd.f32 0.0, %v2346
      %2348 = vmatmul.bf16.gmra.mxu0 %v2270
      %v2349 = vpop.f32.mrf.mxu0
      %v2350 = vadd.f32 0.0, %v2349
      %v2351 = vpop.f32.mrf.mxu0
      %v2352 = vadd.f32 0.0, %v2351
      %2353 = vmatmul.bf16.gmra.mxu0 %v2273
      %v2354 = vpop.f32.mrf.mxu0
      %v2355 = vadd.f32 0.0, %v2354
      %v2356 = vpop.f32.mrf.mxu0
      %v2357 = vadd.f32 0.0, %v2356
      %2358 = vmatmul.bf16.gmra.mxu0 %v2276
      %v2359 = vpop.f32.mrf.mxu0
      %v2360 = vadd.f32 0.0, %v2359
      %v2361 = vpop.f32.mrf.mxu0
      %v2362 = vadd.f32 0.0, %v2361
      %2363 = vmatmul.bf16.gmra.mxu0 %v2279
      %v2364 = vpop.f32.mrf.mxu0
      %v2365 = vadd.f32 0.0, %v2364
      %v2366 = vpop.f32.mrf.mxu0
      %v2367 = vadd.f32 0.0, %v2366
      %2368 = vmatmul.bf16.gmra.mxu0 %v2282
      %v2369 = vpop.f32.mrf.mxu0
      %v2370 = vadd.f32 0.0, %v2369
      %v2371 = vpop.f32.mrf.mxu0
      %v2372 = vadd.f32 0.0, %v2371
      %2373 = vmatmul.bf16.gmra.mxu0 %v2285
      %v2374 = vpop.f32.mrf.mxu0
      %v2375 = vadd.f32 0.0, %v2374
      %v2376 = vpop.f32.mrf.mxu0
      %v2377 = vadd.f32 0.0, %v2376
      %2378 = vdwg.mxu0
      %v2379 = vadd.f32 %v2093, %v2300
      %v2380 = vadd.f32 %v2094, %v2302
      %v2381 = vadd.f32 %v2095, %v2305
      %v2382 = vadd.f32 %v2096, %v2307
      %v2383 = vadd.f32 %v2097, %v2310
      %v2384 = vadd.f32 %v2098, %v2312
      %v2385 = vadd.f32 %v2099, %v2315
      %v2386 = vadd.f32 %v2100, %v2317
      %v2387 = vadd.f32 %v2101, %v2320
      %v2388 = vadd.f32 %v2102, %v2322
      %v2389 = vadd.f32 %v2103, %v2325
      %v2390 = vadd.f32 %v2104, %v2327
      %v2391 = vadd.f32 %v2105, %v2330
      %v2392 = vadd.f32 %v2106, %v2332
      %v2393 = vadd.f32 %v2107, %v2335
      %v2394 = vadd.f32 %v2108, %v2337
      %v2395 = vadd.f32 %v2109, %v2340
      %v2396 = vadd.f32 %v2110, %v2342
      %v2397 = vadd.f32 %v2111, %v2345
      %v2398 = vadd.f32 %v2112, %v2347
      %v2399 = vadd.f32 %v2113, %v2350
      %v2400 = vadd.f32 %v2114, %v2352
      %v2401 = vadd.f32 %v2115, %v2355
      %v2402 = vadd.f32 %v2116, %v2357
      %v2403 = vadd.f32 %v2117, %v2360
      %v2404 = vadd.f32 %v2118, %v2362
      %v2405 = vadd.f32 %v2119, %v2365
      %v2406 = vadd.f32 %v2120, %v2367
      %v2407 = vadd.f32 %v2121, %v2370
      %v2408 = vadd.f32 %v2122, %v2372
      %v2409 = vadd.f32 %v2123, %v2375
      %v2410 = vadd.f32 %v2124, %v2377
      %v2411 = vld [vmem:[%s748] sm:$0xf]
      %v2412 = vld [vmem:[%s748 + $0x4] sm:$0xf]
      %v2413 = vld [vmem:[%s748 + $0x8] sm:$0xf]
      %v2414 = vld [vmem:[%s748 + $0xc] sm:$0xf]
      %v2415 = vld [vmem:[%s748 + $0x10] sm:$0xf]
      %v2416 = vld [vmem:[%s748 + $0x14] sm:$0xf]
      %v2417 = vld [vmem:[%s748 + $0x18] sm:$0xf]
      %v2418 = vld [vmem:[%s748 + $0x1c] sm:$0xf]
      %v2419 = vld [vmem:[%s748 + $0x20] sm:$0xf]
      %v2420 = vld [vmem:[%s748 + $0x24] sm:$0xf]
      %v2421 = vld [vmem:[%s748 + $0x28] sm:$0xf]
      %v2422 = vld [vmem:[%s748 + $0x2c] sm:$0xf]
      %v2423 = vld [vmem:[%s748 + $0x30] sm:$0xf]
      %v2424 = vld [vmem:[%s748 + $0x34] sm:$0xf]
      %v2425 = vld [vmem:[%s748 + $0x38] sm:$0xf]
      %v2426 = vld [vmem:[%s748 + $0x3c] sm:$0xf]
      %v2427 = vld [vmem:[%s748 + $0x40] sm:$0xf]
      %v2428 = vld [vmem:[%s748 + $0x44] sm:$0xf]
      %v2429 = vld [vmem:[%s748 + $0x48] sm:$0xf]
      %v2430 = vld [vmem:[%s748 + $0x4c] sm:$0xf]
      %v2431 = vld [vmem:[%s748 + $0x50] sm:$0xf]
      %v2432 = vld [vmem:[%s748 + $0x54] sm:$0xf]
      %v2433 = vld [vmem:[%s748 + $0x58] sm:$0xf]
      %v2434 = vld [vmem:[%s748 + $0x5c] sm:$0xf]
      %v2435 = vld [vmem:[%s748 + $0x60] sm:$0xf]
      %v2436 = vld [vmem:[%s748 + $0x64] sm:$0xf]
      %v2437 = vld [vmem:[%s748 + $0x68] sm:$0xf]
      %v2438 = vld [vmem:[%s748 + $0x6c] sm:$0xf]
      %v2439 = vld [vmem:[%s748 + $0x70] sm:$0xf]
      %v2440 = vld [vmem:[%s748 + $0x74] sm:$0xf]
      %v2441 = vld [vmem:[%s748 + $0x78] sm:$0xf]
      %v2442 = vld [vmem:[%s748 + $0x7c] sm:$0xf]
      %s2443 = scalar_lea.vmem %s1, 20
      %v2444 = vld [vmem:[%s2443] sm:$0xf]
      %v2477 = vunpack.c.l.b16 %v2411
      %v2478 = vunpack.c.l.b16 %v2412
      %v2479 = vunpack.c.l.b16 %v2413
      %v2480 = vunpack.c.l.b16 %v2414
      %v2481 = vunpack.c.l.b16 %v2415
      %v2482 = vunpack.c.l.b16 %v2416
      %v2483 = vunpack.c.l.b16 %v2417
      %v2484 = vunpack.c.l.b16 %v2418
      %v2485 = vunpack.c.l.b16 %v2419
      %v2486 = vunpack.c.l.b16 %v2420
      %v2487 = vunpack.c.l.b16 %v2421
      %v2488 = vunpack.c.l.b16 %v2422
      %v2489 = vunpack.c.l.b16 %v2423
      %v2490 = vunpack.c.l.b16 %v2424
      %v2491 = vunpack.c.l.b16 %v2425
      %v2492 = vunpack.c.l.b16 %v2426
      %v2493 = vunpack.c.l.b16 %v2427
      %v2494 = vunpack.c.l.b16 %v2428
      %v2495 = vunpack.c.l.b16 %v2429
      %v2496 = vunpack.c.l.b16 %v2430
      %v2497 = vunpack.c.l.b16 %v2431
      %v2498 = vunpack.c.l.b16 %v2432
      %v2499 = vunpack.c.l.b16 %v2433
      %v2500 = vunpack.c.l.b16 %v2434
      %v2501 = vunpack.c.l.b16 %v2435
      %v2502 = vunpack.c.l.b16 %v2436
      %v2503 = vunpack.c.l.b16 %v2437
      %v2504 = vunpack.c.l.b16 %v2438
      %v2505 = vunpack.c.l.b16 %v2439
      %v2506 = vunpack.c.l.b16 %v2440
      %v2507 = vunpack.c.l.b16 %v2441
      %v2508 = vunpack.c.l.b16 %v2442
      %v2509 = vpack.c.b16 %v2478, %v2477
      %v2510 = vpack.c.b16 %v2480, %v2479
      %v2511 = vpack.c.b16 %v2482, %v2481
      %v2512 = vpack.c.b16 %v2484, %v2483
      %v2513 = vpack.c.b16 %v2486, %v2485
      %v2514 = vpack.c.b16 %v2488, %v2487
      %v2515 = vpack.c.b16 %v2490, %v2489
      %v2516 = vpack.c.b16 %v2492, %v2491
      %v2517 = vpack.c.b16 %v2494, %v2493
      %v2518 = vpack.c.b16 %v2496, %v2495
      %v2519 = vpack.c.b16 %v2498, %v2497
      %v2520 = vpack.c.b16 %v2500, %v2499
      %v2521 = vpack.c.b16 %v2502, %v2501
      %v2522 = vpack.c.b16 %v2504, %v2503
      %v2523 = vpack.c.b16 %v2506, %v2505
      %v2524 = vpack.c.b16 %v2508, %v2507
      %v2526 = vsel %vm1191, %v2509, 0
      %v2529 = vsel %vm1191, %v2510, 0
      %v2532 = vsel %vm1191, %v2511, 0
      %v2535 = vsel %vm1191, %v2512, 0
      %v2538 = vsel %vm1191, %v2513, 0
      %v2541 = vsel %vm1191, %v2514, 0
      %v2544 = vsel %vm1191, %v2515, 0
      %v2547 = vsel %vm1191, %v2516, 0
      %v2550 = vsel %vm1191, %v2517, 0
      %v2553 = vsel %vm1191, %v2518, 0
      %v2556 = vsel %vm1191, %v2519, 0
      %v2559 = vsel %vm1191, %v2520, 0
      %v2562 = vsel %vm1191, %v2521, 0
      %v2565 = vsel %vm1191, %v2522, 0
      %v2568 = vsel %vm1191, %v2523, 0
      %v2571 = vsel %vm1191, %v2524, 0
      %v2574 = vsel %vm1240, %v2444, 0
      %2576 = vmatpush.bf16.msra.mxu0 0
      %2577 = vmatpush.bf16.msra.mxu0 0
      %2578 = vmatpush.bf16.msra.mxu0 0
      %2579 = vmatpush.bf16.msra.mxu0 0
      %2580 = vmatpush.bf16.msra.mxu0 0
      %2581 = vmatpush.bf16.msra.mxu0 0
      %2582 = vmatpush.bf16.msra.mxu0 0
      %2583 = vmatpush.bf16.msra.mxu0 %v2574
      %2584 = vmatmul.bf16.gmra.mxu0 %v2526
      %v2585 = vpop.f32.mrf.mxu0
      %v2586 = vadd.f32 0.0, %v2585
      %v2587 = vpop.f32.mrf.mxu0
      %v2588 = vadd.f32 0.0, %v2587
      %2589 = vmatmul.bf16.gmra.mxu0 %v2529
      %v2590 = vpop.f32.mrf.mxu0
      %v2591 = vadd.f32 0.0, %v2590
      %v2592 = vpop.f32.mrf.mxu0
      %v2593 = vadd.f32 0.0, %v2592
      %2594 = vmatmul.bf16.gmra.mxu0 %v2532
      %v2595 = vpop.f32.mrf.mxu0
      %v2596 = vadd.f32 0.0, %v2595
      %v2597 = vpop.f32.mrf.mxu0
      %v2598 = vadd.f32 0.0, %v2597
      %2599 = vmatmul.bf16.gmra.mxu0 %v2535
      %v2600 = vpop.f32.mrf.mxu0
      %v2601 = vadd.f32 0.0, %v2600
      %v2602 = vpop.f32.mrf.mxu0
      %v2603 = vadd.f32 0.0, %v2602
      %2604 = vmatmul.bf16.gmra.mxu0 %v2538
      %v2605 = vpop.f32.mrf.mxu0
      %v2606 = vadd.f32 0.0, %v2605
      %v2607 = vpop.f32.mrf.mxu0
      %v2608 = vadd.f32 0.0, %v2607
      %2609 = vmatmul.bf16.gmra.mxu0 %v2541
      %v2610 = vpop.f32.mrf.mxu0
      %v2611 = vadd.f32 0.0, %v2610
      %v2612 = vpop.f32.mrf.mxu0
      %v2613 = vadd.f32 0.0, %v2612
      %2614 = vmatmul.bf16.gmra.mxu0 %v2544
      %v2615 = vpop.f32.mrf.mxu0
      %v2616 = vadd.f32 0.0, %v2615
      %v2617 = vpop.f32.mrf.mxu0
      %v2618 = vadd.f32 0.0, %v2617
      %2619 = vmatmul.bf16.gmra.mxu0 %v2547
      %v2620 = vpop.f32.mrf.mxu0
      %v2621 = vadd.f32 0.0, %v2620
      %v2622 = vpop.f32.mrf.mxu0
      %v2623 = vadd.f32 0.0, %v2622
      %2624 = vmatmul.bf16.gmra.mxu0 %v2550
      %v2625 = vpop.f32.mrf.mxu0
      %v2626 = vadd.f32 0.0, %v2625
      %v2627 = vpop.f32.mrf.mxu0
      %v2628 = vadd.f32 0.0, %v2627
      %2629 = vmatmul.bf16.gmra.mxu0 %v2553
      %v2630 = vpop.f32.mrf.mxu0
      %v2631 = vadd.f32 0.0, %v2630
      %v2632 = vpop.f32.mrf.mxu0
      %v2633 = vadd.f32 0.0, %v2632
      %2634 = vmatmul.bf16.gmra.mxu0 %v2556
      %v2635 = vpop.f32.mrf.mxu0
      %v2636 = vadd.f32 0.0, %v2635
      %v2637 = vpop.f32.mrf.mxu0
      %v2638 = vadd.f32 0.0, %v2637
      %2639 = vmatmul.bf16.gmra.mxu0 %v2559
      %v2640 = vpop.f32.mrf.mxu0
      %v2641 = vadd.f32 0.0, %v2640
      %v2642 = vpop.f32.mrf.mxu0
      %v2643 = vadd.f32 0.0, %v2642
      %2644 = vmatmul.bf16.gmra.mxu0 %v2562
      %v2645 = vpop.f32.mrf.mxu0
      %v2646 = vadd.f32 0.0, %v2645
      %v2647 = vpop.f32.mrf.mxu0
      %v2648 = vadd.f32 0.0, %v2647
      %2649 = vmatmul.bf16.gmra.mxu0 %v2565
      %v2650 = vpop.f32.mrf.mxu0
      %v2651 = vadd.f32 0.0, %v2650
      %v2652 = vpop.f32.mrf.mxu0
      %v2653 = vadd.f32 0.0, %v2652
      %2654 = vmatmul.bf16.gmra.mxu0 %v2568
      %v2655 = vpop.f32.mrf.mxu0
      %v2656 = vadd.f32 0.0, %v2655
      %v2657 = vpop.f32.mrf.mxu0
      %v2658 = vadd.f32 0.0, %v2657
      %2659 = vmatmul.bf16.gmra.mxu0 %v2571
      %v2660 = vpop.f32.mrf.mxu0
      %v2661 = vadd.f32 0.0, %v2660
      %v2662 = vpop.f32.mrf.mxu0
      %v2663 = vadd.f32 0.0, %v2662
      %2664 = vdwg.mxu0
      %v2665 = vadd.f32 %v2379, %v2586
      %v2666 = vadd.f32 %v2380, %v2588
      %v2667 = vadd.f32 %v2381, %v2591
      %v2668 = vadd.f32 %v2382, %v2593
      %v2669 = vadd.f32 %v2383, %v2596
      %v2670 = vadd.f32 %v2384, %v2598
      %v2671 = vadd.f32 %v2385, %v2601
      %v2672 = vadd.f32 %v2386, %v2603
      %v2673 = vadd.f32 %v2387, %v2606
      %v2674 = vadd.f32 %v2388, %v2608
      %v2675 = vadd.f32 %v2389, %v2611
      %v2676 = vadd.f32 %v2390, %v2613
      %v2677 = vadd.f32 %v2391, %v2616
      %v2678 = vadd.f32 %v2392, %v2618
      %v2679 = vadd.f32 %v2393, %v2621
      %v2680 = vadd.f32 %v2394, %v2623
      %v2681 = vadd.f32 %v2395, %v2626
      %v2682 = vadd.f32 %v2396, %v2628
      %v2683 = vadd.f32 %v2397, %v2631
      %v2684 = vadd.f32 %v2398, %v2633
      %v2685 = vadd.f32 %v2399, %v2636
      %v2686 = vadd.f32 %v2400, %v2638
      %v2687 = vadd.f32 %v2401, %v2641
      %v2688 = vadd.f32 %v2402, %v2643
      %v2689 = vadd.f32 %v2403, %v2646
      %v2690 = vadd.f32 %v2404, %v2648
      %v2691 = vadd.f32 %v2405, %v2651
      %v2692 = vadd.f32 %v2406, %v2653
      %v2693 = vadd.f32 %v2407, %v2656
      %v2694 = vadd.f32 %v2408, %v2658
      %v2695 = vadd.f32 %v2409, %v2661
      %v2696 = vadd.f32 %v2410, %v2663
      %s2697 = scalar_lea.vmem [#allocation2], 16
      %v2698 = vld [vmem:[%s2697] sm:$0xf]
      %v2699 = vld [vmem:[%s2697 + $0x4] sm:$0xf]
      %v2700 = vld [vmem:[%s2697 + $0x8] sm:$0xf]
      %v2701 = vld [vmem:[%s2697 + $0xc] sm:$0xf]
      %v2702 = vld [vmem:[%s2697 + $0x10] sm:$0xf]
      %v2703 = vld [vmem:[%s2697 + $0x14] sm:$0xf]
      %v2704 = vld [vmem:[%s2697 + $0x18] sm:$0xf]
      %v2705 = vld [vmem:[%s2697 + $0x1c] sm:$0xf]
      %v2706 = vld [vmem:[%s2697 + $0x20] sm:$0xf]
      %v2707 = vld [vmem:[%s2697 + $0x24] sm:$0xf]
      %v2708 = vld [vmem:[%s2697 + $0x28] sm:$0xf]
      %v2709 = vld [vmem:[%s2697 + $0x2c] sm:$0xf]
      %v2710 = vld [vmem:[%s2697 + $0x30] sm:$0xf]
      %v2711 = vld [vmem:[%s2697 + $0x34] sm:$0xf]
      %v2712 = vld [vmem:[%s2697 + $0x38] sm:$0xf]
      %v2713 = vld [vmem:[%s2697 + $0x3c] sm:$0xf]
      %v2714 = vld [vmem:[%s2697 + $0x40] sm:$0xf]
      %v2715 = vld [vmem:[%s2697 + $0x44] sm:$0xf]
      %v2716 = vld [vmem:[%s2697 + $0x48] sm:$0xf]
      %v2717 = vld [vmem:[%s2697 + $0x4c] sm:$0xf]
      %v2718 = vld [vmem:[%s2697 + $0x50] sm:$0xf]
      %v2719 = vld [vmem:[%s2697 + $0x54] sm:$0xf]
      %v2720 = vld [vmem:[%s2697 + $0x58] sm:$0xf]
      %v2721 = vld [vmem:[%s2697 + $0x5c] sm:$0xf]
      %v2722 = vld [vmem:[%s2697 + $0x60] sm:$0xf]
      %v2723 = vld [vmem:[%s2697 + $0x64] sm:$0xf]
      %v2724 = vld [vmem:[%s2697 + $0x68] sm:$0xf]
      %v2725 = vld [vmem:[%s2697 + $0x6c] sm:$0xf]
      %v2726 = vld [vmem:[%s2697 + $0x70] sm:$0xf]
      %v2727 = vld [vmem:[%s2697 + $0x74] sm:$0xf]
      %v2728 = vld [vmem:[%s2697 + $0x78] sm:$0xf]
      %v2729 = vld [vmem:[%s2697 + $0x7c] sm:$0xf]
      %s2730 = scalar_lea.vmem %s1, 24
      %v2731 = vld [vmem:[%s2730] sm:$0xf]
      %v2764 = vunpack.c.l.b16 %v2698
      %v2765 = vunpack.c.l.b16 %v2699
      %v2766 = vunpack.c.l.b16 %v2700
      %v2767 = vunpack.c.l.b16 %v2701
      %v2768 = vunpack.c.l.b16 %v2702
      %v2769 = vunpack.c.l.b16 %v2703
      %v2770 = vunpack.c.l.b16 %v2704
      %v2771 = vunpack.c.l.b16 %v2705
      %v2772 = vunpack.c.l.b16 %v2706
      %v2773 = vunpack.c.l.b16 %v2707
      %v2774 = vunpack.c.l.b16 %v2708
      %v2775 = vunpack.c.l.b16 %v2709
      %v2776 = vunpack.c.l.b16 %v2710
      %v2777 = vunpack.c.l.b16 %v2711
      %v2778 = vunpack.c.l.b16 %v2712
      %v2779 = vunpack.c.l.b16 %v2713
      %v2780 = vunpack.c.l.b16 %v2714
      %v2781 = vunpack.c.l.b16 %v2715
      %v2782 = vunpack.c.l.b16 %v2716
      %v2783 = vunpack.c.l.b16 %v2717
      %v2784 = vunpack.c.l.b16 %v2718
      %v2785 = vunpack.c.l.b16 %v2719
      %v2786 = vunpack.c.l.b16 %v2720
      %v2787 = vunpack.c.l.b16 %v2721
      %v2788 = vunpack.c.l.b16 %v2722
      %v2789 = vunpack.c.l.b16 %v2723
      %v2790 = vunpack.c.l.b16 %v2724
      %v2791 = vunpack.c.l.b16 %v2725
      %v2792 = vunpack.c.l.b16 %v2726
      %v2793 = vunpack.c.l.b16 %v2727
      %v2794 = vunpack.c.l.b16 %v2728
      %v2795 = vunpack.c.l.b16 %v2729
      %v2796 = vpack.c.b16 %v2765, %v2764
      %v2797 = vpack.c.b16 %v2767, %v2766
      %v2798 = vpack.c.b16 %v2769, %v2768
      %v2799 = vpack.c.b16 %v2771, %v2770
      %v2800 = vpack.c.b16 %v2773, %v2772
      %v2801 = vpack.c.b16 %v2775, %v2774
      %v2802 = vpack.c.b16 %v2777, %v2776
      %v2803 = vpack.c.b16 %v2779, %v2778
      %v2804 = vpack.c.b16 %v2781, %v2780
      %v2805 = vpack.c.b16 %v2783, %v2782
      %v2806 = vpack.c.b16 %v2785, %v2784
      %v2807 = vpack.c.b16 %v2787, %v2786
      %v2808 = vpack.c.b16 %v2789, %v2788
      %v2809 = vpack.c.b16 %v2791, %v2790
      %v2810 = vpack.c.b16 %v2793, %v2792
      %v2811 = vpack.c.b16 %v2795, %v2794
      %v2813 = vsel %vm1191, %v2796, 0
      %v2816 = vsel %vm1191, %v2797, 0
      %v2819 = vsel %vm1191, %v2798, 0
      %v2822 = vsel %vm1191, %v2799, 0
      %v2825 = vsel %vm1191, %v2800, 0
      %v2828 = vsel %vm1191, %v2801, 0
      %v2831 = vsel %vm1191, %v2802, 0
      %v2834 = vsel %vm1191, %v2803, 0
      %v2837 = vsel %vm1191, %v2804, 0
      %v2840 = vsel %vm1191, %v2805, 0
      %v2843 = vsel %vm1191, %v2806, 0
      %v2846 = vsel %vm1191, %v2807, 0
      %v2849 = vsel %vm1191, %v2808, 0
      %v2852 = vsel %vm1191, %v2809, 0
      %v2855 = vsel %vm1191, %v2810, 0
      %v2858 = vsel %vm1191, %v2811, 0
      %v2861 = vsel %vm1240, %v2731, 0
      %2863 = vmatpush.bf16.msra.mxu0 0
      %2864 = vmatpush.bf16.msra.mxu0 0
      %2865 = vmatpush.bf16.msra.mxu0 0
      %2866 = vmatpush.bf16.msra.mxu0 0
      %2867 = vmatpush.bf16.msra.mxu0 0
      %2868 = vmatpush.bf16.msra.mxu0 0
      %2869 = vmatpush.bf16.msra.mxu0 0
      %2870 = vmatpush.bf16.msra.mxu0 %v2861
      %2871 = vmatmul.bf16.gmra.mxu0 %v2813
      %v2872 = vpop.f32.mrf.mxu0
      %v2873 = vadd.f32 0.0, %v2872
      %v2874 = vpop.f32.mrf.mxu0
      %v2875 = vadd.f32 0.0, %v2874
      %2876 = vmatmul.bf16.gmra.mxu0 %v2816
      %v2877 = vpop.f32.mrf.mxu0
      %v2878 = vadd.f32 0.0, %v2877
      %v2879 = vpop.f32.mrf.mxu0
      %v2880 = vadd.f32 0.0, %v2879
      %2881 = vmatmul.bf16.gmra.mxu0 %v2819
      %v2882 = vpop.f32.mrf.mxu0
      %v2883 = vadd.f32 0.0, %v2882
      %v2884 = vpop.f32.mrf.mxu0
      %v2885 = vadd.f32 0.0, %v2884
      %2886 = vmatmul.bf16.gmra.mxu0 %v2822
      %v2887 = vpop.f32.mrf.mxu0
      %v2888 = vadd.f32 0.0, %v2887
      %v2889 = vpop.f32.mrf.mxu0
      %v2890 = vadd.f32 0.0, %v2889
      %2891 = vmatmul.bf16.gmra.mxu0 %v2825
      %v2892 = vpop.f32.mrf.mxu0
      %v2893 = vadd.f32 0.0, %v2892
      %v2894 = vpop.f32.mrf.mxu0
      %v2895 = vadd.f32 0.0, %v2894
      %2896 = vmatmul.bf16.gmra.mxu0 %v2828
      %v2897 = vpop.f32.mrf.mxu0
      %v2898 = vadd.f32 0.0, %v2897
      %v2899 = vpop.f32.mrf.mxu0
      %v2900 = vadd.f32 0.0, %v2899
      %2901 = vmatmul.bf16.gmra.mxu0 %v2831
      %v2902 = vpop.f32.mrf.mxu0
      %v2903 = vadd.f32 0.0, %v2902
      %v2904 = vpop.f32.mrf.mxu0
      %v2905 = vadd.f32 0.0, %v2904
      %2906 = vmatmul.bf16.gmra.mxu0 %v2834
      %v2907 = vpop.f32.mrf.mxu0
      %v2908 = vadd.f32 0.0, %v2907
      %v2909 = vpop.f32.mrf.mxu0
      %v2910 = vadd.f32 0.0, %v2909
      %2911 = vmatmul.bf16.gmra.mxu0 %v2837
      %v2912 = vpop.f32.mrf.mxu0
      %v2913 = vadd.f32 0.0, %v2912
      %v2914 = vpop.f32.mrf.mxu0
      %v2915 = vadd.f32 0.0, %v2914
      %2916 = vmatmul.bf16.gmra.mxu0 %v2840
      %v2917 = vpop.f32.mrf.mxu0
      %v2918 = vadd.f32 0.0, %v2917
      %v2919 = vpop.f32.mrf.mxu0
      %v2920 = vadd.f32 0.0, %v2919
      %2921 = vmatmul.bf16.gmra.mxu0 %v2843
      %v2922 = vpop.f32.mrf.mxu0
      %v2923 = vadd.f32 0.0, %v2922
      %v2924 = vpop.f32.mrf.mxu0
      %v2925 = vadd.f32 0.0, %v2924
      %2926 = vmatmul.bf16.gmra.mxu0 %v2846
      %v2927 = vpop.f32.mrf.mxu0
      %v2928 = vadd.f32 0.0, %v2927
      %v2929 = vpop.f32.mrf.mxu0
      %v2930 = vadd.f32 0.0, %v2929
      %2931 = vmatmul.bf16.gmra.mxu0 %v2849
      %v2932 = vpop.f32.mrf.mxu0
      %v2933 = vadd.f32 0.0, %v2932
      %v2934 = vpop.f32.mrf.mxu0
      %v2935 = vadd.f32 0.0, %v2934
      %2936 = vmatmul.bf16.gmra.mxu0 %v2852
      %v2937 = vpop.f32.mrf.mxu0
      %v2938 = vadd.f32 0.0, %v2937
      %v2939 = vpop.f32.mrf.mxu0
      %v2940 = vadd.f32 0.0, %v2939
      %2941 = vmatmul.bf16.gmra.mxu0 %v2855
      %v2942 = vpop.f32.mrf.mxu0
      %v2943 = vadd.f32 0.0, %v2942
      %v2944 = vpop.f32.mrf.mxu0
      %v2945 = vadd.f32 0.0, %v2944
      %2946 = vmatmul.bf16.gmra.mxu0 %v2858
      %v2947 = vpop.f32.mrf.mxu0
      %v2948 = vadd.f32 0.0, %v2947
      %v2949 = vpop.f32.mrf.mxu0
      %v2950 = vadd.f32 0.0, %v2949
      %2951 = vdwg.mxu0
      %v2952 = vadd.f32 %v2665, %v2873
      %v2953 = vadd.f32 %v2666, %v2875
      %v2954 = vadd.f32 %v2667, %v2878
      %v2955 = vadd.f32 %v2668, %v2880
      %v2956 = vadd.f32 %v2669, %v2883
      %v2957 = vadd.f32 %v2670, %v2885
      %v2958 = vadd.f32 %v2671, %v2888
      %v2959 = vadd.f32 %v2672, %v2890
      %v2960 = vadd.f32 %v2673, %v2893
      %v2961 = vadd.f32 %v2674, %v2895
      %v2962 = vadd.f32 %v2675, %v2898
      %v2963 = vadd.f32 %v2676, %v2900
      %v2964 = vadd.f32 %v2677, %v2903
      %v2965 = vadd.f32 %v2678, %v2905
      %v2966 = vadd.f32 %v2679, %v2908
      %v2967 = vadd.f32 %v2680, %v2910
      %v2968 = vadd.f32 %v2681, %v2913
      %v2969 = vadd.f32 %v2682, %v2915
      %v2970 = vadd.f32 %v2683, %v2918
      %v2971 = vadd.f32 %v2684, %v2920
      %v2972 = vadd.f32 %v2685, %v2923
      %v2973 = vadd.f32 %v2686, %v2925
      %v2974 = vadd.f32 %v2687, %v2928
      %v2975 = vadd.f32 %v2688, %v2930
      %v2976 = vadd.f32 %v2689, %v2933
      %v2977 = vadd.f32 %v2690, %v2935
      %v2978 = vadd.f32 %v2691, %v2938
      %v2979 = vadd.f32 %v2692, %v2940
      %v2980 = vadd.f32 %v2693, %v2943
      %v2981 = vadd.f32 %v2694, %v2945
      %v2982 = vadd.f32 %v2695, %v2948
      %v2983 = vadd.f32 %v2696, %v2950
      %s2984 = scalar_lea.vmem [#allocation3], 16
      %v2985 = vld [vmem:[%s2984] sm:$0xf]
      %v2986 = vld [vmem:[%s2984 + $0x4] sm:$0xf]
      %v2987 = vld [vmem:[%s2984 + $0x8] sm:$0xf]
      %v2988 = vld [vmem:[%s2984 + $0xc] sm:$0xf]
      %v2989 = vld [vmem:[%s2984 + $0x10] sm:$0xf]
      %v2990 = vld [vmem:[%s2984 + $0x14] sm:$0xf]
      %v2991 = vld [vmem:[%s2984 + $0x18] sm:$0xf]
      %v2992 = vld [vmem:[%s2984 + $0x1c] sm:$0xf]
      %v2993 = vld [vmem:[%s2984 + $0x20] sm:$0xf]
      %v2994 = vld [vmem:[%s2984 + $0x24] sm:$0xf]
      %v2995 = vld [vmem:[%s2984 + $0x28] sm:$0xf]
      %v2996 = vld [vmem:[%s2984 + $0x2c] sm:$0xf]
      %v2997 = vld [vmem:[%s2984 + $0x30] sm:$0xf]
      %v2998 = vld [vmem:[%s2984 + $0x34] sm:$0xf]
      %v2999 = vld [vmem:[%s2984 + $0x38] sm:$0xf]
      %v3000 = vld [vmem:[%s2984 + $0x3c] sm:$0xf]
      %v3001 = vld [vmem:[%s2984 + $0x40] sm:$0xf]
      %v3002 = vld [vmem:[%s2984 + $0x44] sm:$0xf]
      %v3003 = vld [vmem:[%s2984 + $0x48] sm:$0xf]
      %v3004 = vld [vmem:[%s2984 + $0x4c] sm:$0xf]
      %v3005 = vld [vmem:[%s2984 + $0x50] sm:$0xf]
      %v3006 = vld [vmem:[%s2984 + $0x54] sm:$0xf]
      %v3007 = vld [vmem:[%s2984 + $0x58] sm:$0xf]
      %v3008 = vld [vmem:[%s2984 + $0x5c] sm:$0xf]
      %v3009 = vld [vmem:[%s2984 + $0x60] sm:$0xf]
      %v3010 = vld [vmem:[%s2984 + $0x64] sm:$0xf]
      %v3011 = vld [vmem:[%s2984 + $0x68] sm:$0xf]
      %v3012 = vld [vmem:[%s2984 + $0x6c] sm:$0xf]
      %v3013 = vld [vmem:[%s2984 + $0x70] sm:$0xf]
      %v3014 = vld [vmem:[%s2984 + $0x74] sm:$0xf]
      %v3015 = vld [vmem:[%s2984 + $0x78] sm:$0xf]
      %v3016 = vld [vmem:[%s2984 + $0x7c] sm:$0xf]
      %s3017 = scalar_lea.vmem %s1, 28
      %v3018 = vld [vmem:[%s3017] sm:$0xf]
      %v3051 = vunpack.c.l.b16 %v2985
      %v3052 = vunpack.c.l.b16 %v2986
      %v3053 = vunpack.c.l.b16 %v2987
      %v3054 = vunpack.c.l.b16 %v2988
      %v3055 = vunpack.c.l.b16 %v2989
      %v3056 = vunpack.c.l.b16 %v2990
      %v3057 = vunpack.c.l.b16 %v2991
      %v3058 = vunpack.c.l.b16 %v2992
      %v3059 = vunpack.c.l.b16 %v2993
      %v3060 = vunpack.c.l.b16 %v2994
      %v3061 = vunpack.c.l.b16 %v2995
      %v3062 = vunpack.c.l.b16 %v2996
      %v3063 = vunpack.c.l.b16 %v2997
      %v3064 = vunpack.c.l.b16 %v2998
      %v3065 = vunpack.c.l.b16 %v2999
      %v3066 = vunpack.c.l.b16 %v3000
      %v3067 = vunpack.c.l.b16 %v3001
      %v3068 = vunpack.c.l.b16 %v3002
      %v3069 = vunpack.c.l.b16 %v3003
      %v3070 = vunpack.c.l.b16 %v3004
      %v3071 = vunpack.c.l.b16 %v3005
      %v3072 = vunpack.c.l.b16 %v3006
      %v3073 = vunpack.c.l.b16 %v3007
      %v3074 = vunpack.c.l.b16 %v3008
      %v3075 = vunpack.c.l.b16 %v3009
      %v3076 = vunpack.c.l.b16 %v3010
      %v3077 = vunpack.c.l.b16 %v3011
      %v3078 = vunpack.c.l.b16 %v3012
      %v3079 = vunpack.c.l.b16 %v3013
      %v3080 = vunpack.c.l.b16 %v3014
      %v3081 = vunpack.c.l.b16 %v3015
      %v3082 = vunpack.c.l.b16 %v3016
      %v3083 = vpack.c.b16 %v3052, %v3051
      %v3084 = vpack.c.b16 %v3054, %v3053
      %v3085 = vpack.c.b16 %v3056, %v3055
      %v3086 = vpack.c.b16 %v3058, %v3057
      %v3087 = vpack.c.b16 %v3060, %v3059
      %v3088 = vpack.c.b16 %v3062, %v3061
      %v3089 = vpack.c.b16 %v3064, %v3063
      %v3090 = vpack.c.b16 %v3066, %v3065
      %v3091 = vpack.c.b16 %v3068, %v3067
      %v3092 = vpack.c.b16 %v3070, %v3069
      %v3093 = vpack.c.b16 %v3072, %v3071
      %v3094 = vpack.c.b16 %v3074, %v3073
      %v3095 = vpack.c.b16 %v3076, %v3075
      %v3096 = vpack.c.b16 %v3078, %v3077
      %v3097 = vpack.c.b16 %v3080, %v3079
      %v3098 = vpack.c.b16 %v3082, %v3081
      %v3100 = vsel %vm1191, %v3083, 0
      %v3103 = vsel %vm1191, %v3084, 0
      %v3106 = vsel %vm1191, %v3085, 0
      %v3109 = vsel %vm1191, %v3086, 0
      %v3112 = vsel %vm1191, %v3087, 0
      %v3115 = vsel %vm1191, %v3088, 0
      %v3118 = vsel %vm1191, %v3089, 0
      %v3121 = vsel %vm1191, %v3090, 0
      %v3124 = vsel %vm1191, %v3091, 0
      %v3127 = vsel %vm1191, %v3092, 0
      %v3130 = vsel %vm1191, %v3093, 0
      %v3133 = vsel %vm1191, %v3094, 0
      %v3136 = vsel %vm1191, %v3095, 0
      %v3139 = vsel %vm1191, %v3096, 0
      %v3142 = vsel %vm1191, %v3097, 0
      %v3145 = vsel %vm1191, %v3098, 0
      %v3148 = vsel %vm1240, %v3018, 0
      %3150 = vmatpush.bf16.msra.mxu0 0
      %3151 = vmatpush.bf16.msra.mxu0 0
      %3152 = vmatpush.bf16.msra.mxu0 0
      %3153 = vmatpush.bf16.msra.mxu0 0
      %3154 = vmatpush.bf16.msra.mxu0 0
      %3155 = vmatpush.bf16.msra.mxu0 0
      %3156 = vmatpush.bf16.msra.mxu0 0
      %3157 = vmatpush.bf16.msra.mxu0 %v3148
      %3158 = vmatmul.bf16.gmra.mxu0 %v3100
      %v3159 = vpop.f32.mrf.mxu0
      %v3160 = vadd.f32 0.0, %v3159
      %v3161 = vpop.f32.mrf.mxu0
      %v3162 = vadd.f32 0.0, %v3161
      %3163 = vmatmul.bf16.gmra.mxu0 %v3103
      %v3164 = vpop.f32.mrf.mxu0
      %v3165 = vadd.f32 0.0, %v3164
      %v3166 = vpop.f32.mrf.mxu0
      %v3167 = vadd.f32 0.0, %v3166
      %3168 = vmatmul.bf16.gmra.mxu0 %v3106
      %v3169 = vpop.f32.mrf.mxu0
      %v3170 = vadd.f32 0.0, %v3169
      %v3171 = vpop.f32.mrf.mxu0
      %v3172 = vadd.f32 0.0, %v3171
      %3173 = vmatmul.bf16.gmra.mxu0 %v3109
      %v3174 = vpop.f32.mrf.mxu0
      %v3175 = vadd.f32 0.0, %v3174
      %v3176 = vpop.f32.mrf.mxu0
      %v3177 = vadd.f32 0.0, %v3176
      %3178 = vmatmul.bf16.gmra.mxu0 %v3112
      %v3179 = vpop.f32.mrf.mxu0
      %v3180 = vadd.f32 0.0, %v3179
      %v3181 = vpop.f32.mrf.mxu0
      %v3182 = vadd.f32 0.0, %v3181
      %3183 = vmatmul.bf16.gmra.mxu0 %v3115
      %v3184 = vpop.f32.mrf.mxu0
      %v3185 = vadd.f32 0.0, %v3184
      %v3186 = vpop.f32.mrf.mxu0
      %v3187 = vadd.f32 0.0, %v3186
      %3188 = vmatmul.bf16.gmra.mxu0 %v3118
      %v3189 = vpop.f32.mrf.mxu0
      %v3190 = vadd.f32 0.0, %v3189
      %v3191 = vpop.f32.mrf.mxu0
      %v3192 = vadd.f32 0.0, %v3191
      %3193 = vmatmul.bf16.gmra.mxu0 %v3121
      %v3194 = vpop.f32.mrf.mxu0
      %v3195 = vadd.f32 0.0, %v3194
      %v3196 = vpop.f32.mrf.mxu0
      %v3197 = vadd.f32 0.0, %v3196
      %3198 = vmatmul.bf16.gmra.mxu0 %v3124
      %v3199 = vpop.f32.mrf.mxu0
      %v3200 = vadd.f32 0.0, %v3199
      %v3201 = vpop.f32.mrf.mxu0
      %v3202 = vadd.f32 0.0, %v3201
      %3203 = vmatmul.bf16.gmra.mxu0 %v3127
      %v3204 = vpop.f32.mrf.mxu0
      %v3205 = vadd.f32 0.0, %v3204
      %v3206 = vpop.f32.mrf.mxu0
      %v3207 = vadd.f32 0.0, %v3206
      %3208 = vmatmul.bf16.gmra.mxu0 %v3130
      %v3209 = vpop.f32.mrf.mxu0
      %v3210 = vadd.f32 0.0, %v3209
      %v3211 = vpop.f32.mrf.mxu0
      %v3212 = vadd.f32 0.0, %v3211
      %3213 = vmatmul.bf16.gmra.mxu0 %v3133
      %v3214 = vpop.f32.mrf.mxu0
      %v3215 = vadd.f32 0.0, %v3214
      %v3216 = vpop.f32.mrf.mxu0
      %v3217 = vadd.f32 0.0, %v3216
      %3218 = vmatmul.bf16.gmra.mxu0 %v3136
      %v3219 = vpop.f32.mrf.mxu0
      %v3220 = vadd.f32 0.0, %v3219
      %v3221 = vpop.f32.mrf.mxu0
      %v3222 = vadd.f32 0.0, %v3221
      %3223 = vmatmul.bf16.gmra.mxu0 %v3139
      %v3224 = vpop.f32.mrf.mxu0
      %v3225 = vadd.f32 0.0, %v3224
      %v3226 = vpop.f32.mrf.mxu0
      %v3227 = vadd.f32 0.0, %v3226
      %3228 = vmatmul.bf16.gmra.mxu0 %v3142
      %v3229 = vpop.f32.mrf.mxu0
      %v3230 = vadd.f32 0.0, %v3229
      %v3231 = vpop.f32.mrf.mxu0
      %v3232 = vadd.f32 0.0, %v3231
      %3233 = vmatmul.bf16.gmra.mxu0 %v3145
      %v3234 = vpop.f32.mrf.mxu0
      %v3235 = vadd.f32 0.0, %v3234
      %v3236 = vpop.f32.mrf.mxu0
      %v3237 = vadd.f32 0.0, %v3236
      %3238 = vdwg.mxu0
      %v3239 = vadd.f32 %v2952, %v3160
      %v3240 = vadd.f32 %v2953, %v3162
      %v3241 = vadd.f32 %v2954, %v3165
      %v3242 = vadd.f32 %v2955, %v3167
      %v3243 = vadd.f32 %v2956, %v3170
      %v3244 = vadd.f32 %v2957, %v3172
      %v3245 = vadd.f32 %v2958, %v3175
      %v3246 = vadd.f32 %v2959, %v3177
      %v3247 = vadd.f32 %v2960, %v3180
      %v3248 = vadd.f32 %v2961, %v3182
      %v3249 = vadd.f32 %v2962, %v3185
      %v3250 = vadd.f32 %v2963, %v3187
      %v3251 = vadd.f32 %v2964, %v3190
      %v3252 = vadd.f32 %v2965, %v3192
      %v3253 = vadd.f32 %v2966, %v3195
      %v3254 = vadd.f32 %v2967, %v3197
      %v3255 = vadd.f32 %v2968, %v3200
      %v3256 = vadd.f32 %v2969, %v3202
      %v3257 = vadd.f32 %v2970, %v3205
      %v3258 = vadd.f32 %v2971, %v3207
      %v3259 = vadd.f32 %v2972, %v3210
      %v3260 = vadd.f32 %v2973, %v3212
      %v3261 = vadd.f32 %v2974, %v3215
      %v3262 = vadd.f32 %v2975, %v3217
      %v3263 = vadd.f32 %v2976, %v3220
      %v3264 = vadd.f32 %v2977, %v3222
      %v3265 = vadd.f32 %v2978, %v3225
      %v3266 = vadd.f32 %v2979, %v3227
      %v3267 = vadd.f32 %v2980, %v3230
      %v3268 = vadd.f32 %v2981, %v3232
      %v3269 = vadd.f32 %v2982, %v3235
      %v3270 = vadd.f32 %v2983, %v3237
      %s3271 = scalar_lea.vmem [#allocation4], 16
      %v3272 = vld [vmem:[%s3271] sm:$0xf]
      %v3273 = vld [vmem:[%s3271 + $0x4] sm:$0xf]
      %v3274 = vld [vmem:[%s3271 + $0x8] sm:$0xf]
      %v3275 = vld [vmem:[%s3271 + $0xc] sm:$0xf]
      %v3276 = vld [vmem:[%s3271 + $0x10] sm:$0xf]
      %v3277 = vld [vmem:[%s3271 + $0x14] sm:$0xf]
      %v3278 = vld [vmem:[%s3271 + $0x18] sm:$0xf]
      %v3279 = vld [vmem:[%s3271 + $0x1c] sm:$0xf]
      %v3280 = vld [vmem:[%s3271 + $0x20] sm:$0xf]
      %v3281 = vld [vmem:[%s3271 + $0x24] sm:$0xf]
      %v3282 = vld [vmem:[%s3271 + $0x28] sm:$0xf]
      %v3283 = vld [vmem:[%s3271 + $0x2c] sm:$0xf]
      %v3284 = vld [vmem:[%s3271 + $0x30] sm:$0xf]
      %v3285 = vld [vmem:[%s3271 + $0x34] sm:$0xf]
      %v3286 = vld [vmem:[%s3271 + $0x38] sm:$0xf]
      %v3287 = vld [vmem:[%s3271 + $0x3c] sm:$0xf]
      %v3288 = vld [vmem:[%s3271 + $0x40] sm:$0xf]
      %v3289 = vld [vmem:[%s3271 + $0x44] sm:$0xf]
      %v3290 = vld [vmem:[%s3271 + $0x48] sm:$0xf]
      %v3291 = vld [vmem:[%s3271 + $0x4c] sm:$0xf]
      %v3292 = vld [vmem:[%s3271 + $0x50] sm:$0xf]
      %v3293 = vld [vmem:[%s3271 + $0x54] sm:$0xf]
      %v3294 = vld [vmem:[%s3271 + $0x58] sm:$0xf]
      %v3295 = vld [vmem:[%s3271 + $0x5c] sm:$0xf]
      %v3296 = vld [vmem:[%s3271 + $0x60] sm:$0xf]
      %v3297 = vld [vmem:[%s3271 + $0x64] sm:$0xf]
      %v3298 = vld [vmem:[%s3271 + $0x68] sm:$0xf]
      %v3299 = vld [vmem:[%s3271 + $0x6c] sm:$0xf]
      %v3300 = vld [vmem:[%s3271 + $0x70] sm:$0xf]
      %v3301 = vld [vmem:[%s3271 + $0x74] sm:$0xf]
      %v3302 = vld [vmem:[%s3271 + $0x78] sm:$0xf]
      %v3303 = vld [vmem:[%s3271 + $0x7c] sm:$0xf]
      %s3304 = scalar_lea.vmem %s1, 32
      %v3305 = vld [vmem:[%s3304] sm:$0xf]
      %v3338 = vunpack.c.l.b16 %v3272
      %v3339 = vunpack.c.l.b16 %v3273
      %v3340 = vunpack.c.l.b16 %v3274
      %v3341 = vunpack.c.l.b16 %v3275
      %v3342 = vunpack.c.l.b16 %v3276
      %v3343 = vunpack.c.l.b16 %v3277
      %v3344 = vunpack.c.l.b16 %v3278
      %v3345 = vunpack.c.l.b16 %v3279
      %v3346 = vunpack.c.l.b16 %v3280
      %v3347 = vunpack.c.l.b16 %v3281
      %v3348 = vunpack.c.l.b16 %v3282
      %v3349 = vunpack.c.l.b16 %v3283
      %v3350 = vunpack.c.l.b16 %v3284
      %v3351 = vunpack.c.l.b16 %v3285
      %v3352 = vunpack.c.l.b16 %v3286
      %v3353 = vunpack.c.l.b16 %v3287
      %v3354 = vunpack.c.l.b16 %v3288
      %v3355 = vunpack.c.l.b16 %v3289
      %v3356 = vunpack.c.l.b16 %v3290
      %v3357 = vunpack.c.l.b16 %v3291
      %v3358 = vunpack.c.l.b16 %v3292
      %v3359 = vunpack.c.l.b16 %v3293
      %v3360 = vunpack.c.l.b16 %v3294
      %v3361 = vunpack.c.l.b16 %v3295
      %v3362 = vunpack.c.l.b16 %v3296
      %v3363 = vunpack.c.l.b16 %v3297
      %v3364 = vunpack.c.l.b16 %v3298
      %v3365 = vunpack.c.l.b16 %v3299
      %v3366 = vunpack.c.l.b16 %v3300
      %v3367 = vunpack.c.l.b16 %v3301
      %v3368 = vunpack.c.l.b16 %v3302
      %v3369 = vunpack.c.l.b16 %v3303
      %v3370 = vpack.c.b16 %v3339, %v3338
      %v3371 = vpack.c.b16 %v3341, %v3340
      %v3372 = vpack.c.b16 %v3343, %v3342
      %v3373 = vpack.c.b16 %v3345, %v3344
      %v3374 = vpack.c.b16 %v3347, %v3346
      %v3375 = vpack.c.b16 %v3349, %v3348
      %v3376 = vpack.c.b16 %v3351, %v3350
      %v3377 = vpack.c.b16 %v3353, %v3352
      %v3378 = vpack.c.b16 %v3355, %v3354
      %v3379 = vpack.c.b16 %v3357, %v3356
      %v3380 = vpack.c.b16 %v3359, %v3358
      %v3381 = vpack.c.b16 %v3361, %v3360
      %v3382 = vpack.c.b16 %v3363, %v3362
      %v3383 = vpack.c.b16 %v3365, %v3364
      %v3384 = vpack.c.b16 %v3367, %v3366
      %v3385 = vpack.c.b16 %v3369, %v3368
      %v3387 = vsel %vm1191, %v3370, 0
      %v3390 = vsel %vm1191, %v3371, 0
      %v3393 = vsel %vm1191, %v3372, 0
      %v3396 = vsel %vm1191, %v3373, 0
      %v3399 = vsel %vm1191, %v3374, 0
      %v3402 = vsel %vm1191, %v3375, 0
      %v3405 = vsel %vm1191, %v3376, 0
      %v3408 = vsel %vm1191, %v3377, 0
      %v3411 = vsel %vm1191, %v3378, 0
      %v3414 = vsel %vm1191, %v3379, 0
      %v3417 = vsel %vm1191, %v3380, 0
      %v3420 = vsel %vm1191, %v3381, 0
      %v3423 = vsel %vm1191, %v3382, 0
      %v3426 = vsel %vm1191, %v3383, 0
      %v3429 = vsel %vm1191, %v3384, 0
      %v3432 = vsel %vm1191, %v3385, 0
      %v3435 = vsel %vm1240, %v3305, 0
      %3437 = vmatpush.bf16.msra.mxu0 0
      %3438 = vmatpush.bf16.msra.mxu0 0
      %3439 = vmatpush.bf16.msra.mxu0 0
      %3440 = vmatpush.bf16.msra.mxu0 0
      %3441 = vmatpush.bf16.msra.mxu0 0
      %3442 = vmatpush.bf16.msra.mxu0 0
      %3443 = vmatpush.bf16.msra.mxu0 0
      %3444 = vmatpush.bf16.msra.mxu0 %v3435
      %3445 = vmatmul.bf16.gmra.mxu0 %v3387
      %v3446 = vpop.f32.mrf.mxu0
      %v3447 = vadd.f32 0.0, %v3446
      %v3448 = vpop.f32.mrf.mxu0
      %v3449 = vadd.f32 0.0, %v3448
      %3450 = vmatmul.bf16.gmra.mxu0 %v3390
      %v3451 = vpop.f32.mrf.mxu0
      %v3452 = vadd.f32 0.0, %v3451
      %v3453 = vpop.f32.mrf.mxu0
      %v3454 = vadd.f32 0.0, %v3453
      %3455 = vmatmul.bf16.gmra.mxu0 %v3393
      %v3456 = vpop.f32.mrf.mxu0
      %v3457 = vadd.f32 0.0, %v3456
      %v3458 = vpop.f32.mrf.mxu0
      %v3459 = vadd.f32 0.0, %v3458
      %3460 = vmatmul.bf16.gmra.mxu0 %v3396
      %v3461 = vpop.f32.mrf.mxu0
      %v3462 = vadd.f32 0.0, %v3461
      %v3463 = vpop.f32.mrf.mxu0
      %v3464 = vadd.f32 0.0, %v3463
      %3465 = vmatmul.bf16.gmra.mxu0 %v3399
      %v3466 = vpop.f32.mrf.mxu0
      %v3467 = vadd.f32 0.0, %v3466
      %v3468 = vpop.f32.mrf.mxu0
      %v3469 = vadd.f32 0.0, %v3468
      %3470 = vmatmul.bf16.gmra.mxu0 %v3402
      %v3471 = vpop.f32.mrf.mxu0
      %v3472 = vadd.f32 0.0, %v3471
      %v3473 = vpop.f32.mrf.mxu0
      %v3474 = vadd.f32 0.0, %v3473
      %3475 = vmatmul.bf16.gmra.mxu0 %v3405
      %v3476 = vpop.f32.mrf.mxu0
      %v3477 = vadd.f32 0.0, %v3476
      %v3478 = vpop.f32.mrf.mxu0
      %v3479 = vadd.f32 0.0, %v3478
      %3480 = vmatmul.bf16.gmra.mxu0 %v3408
      %v3481 = vpop.f32.mrf.mxu0
      %v3482 = vadd.f32 0.0, %v3481
      %v3483 = vpop.f32.mrf.mxu0
      %v3484 = vadd.f32 0.0, %v3483
      %3485 = vmatmul.bf16.gmra.mxu0 %v3411
      %v3486 = vpop.f32.mrf.mxu0
      %v3487 = vadd.f32 0.0, %v3486
      %v3488 = vpop.f32.mrf.mxu0
      %v3489 = vadd.f32 0.0, %v3488
      %3490 = vmatmul.bf16.gmra.mxu0 %v3414
      %v3491 = vpop.f32.mrf.mxu0
      %v3492 = vadd.f32 0.0, %v3491
      %v3493 = vpop.f32.mrf.mxu0
      %v3494 = vadd.f32 0.0, %v3493
      %3495 = vmatmul.bf16.gmra.mxu0 %v3417
      %v3496 = vpop.f32.mrf.mxu0
      %v3497 = vadd.f32 0.0, %v3496
      %v3498 = vpop.f32.mrf.mxu0
      %v3499 = vadd.f32 0.0, %v3498
      %3500 = vmatmul.bf16.gmra.mxu0 %v3420
      %v3501 = vpop.f32.mrf.mxu0
      %v3502 = vadd.f32 0.0, %v3501
      %v3503 = vpop.f32.mrf.mxu0
      %v3504 = vadd.f32 0.0, %v3503
      %3505 = vmatmul.bf16.gmra.mxu0 %v3423
      %v3506 = vpop.f32.mrf.mxu0
      %v3507 = vadd.f32 0.0, %v3506
      %v3508 = vpop.f32.mrf.mxu0
      %v3509 = vadd.f32 0.0, %v3508
      %3510 = vmatmul.bf16.gmra.mxu0 %v3426
      %v3511 = vpop.f32.mrf.mxu0
      %v3512 = vadd.f32 0.0, %v3511
      %v3513 = vpop.f32.mrf.mxu0
      %v3514 = vadd.f32 0.0, %v3513
      %3515 = vmatmul.bf16.gmra.mxu0 %v3429
      %v3516 = vpop.f32.mrf.mxu0
      %v3517 = vadd.f32 0.0, %v3516
      %v3518 = vpop.f32.mrf.mxu0
      %v3519 = vadd.f32 0.0, %v3518
      %3520 = vmatmul.bf16.gmra.mxu0 %v3432
      %v3521 = vpop.f32.mrf.mxu0
      %v3522 = vadd.f32 0.0, %v3521
      %v3523 = vpop.f32.mrf.mxu0
      %v3524 = vadd.f32 0.0, %v3523
      %3525 = vdwg.mxu0
      %v3526 = vadd.f32 %v3239, %v3447
      %v3527 = vadd.f32 %v3240, %v3449
      %v3528 = vadd.f32 %v3241, %v3452
      %v3529 = vadd.f32 %v3242, %v3454
      %v3530 = vadd.f32 %v3243, %v3457
      %v3531 = vadd.f32 %v3244, %v3459
      %v3532 = vadd.f32 %v3245, %v3462
      %v3533 = vadd.f32 %v3246, %v3464
      %v3534 = vadd.f32 %v3247, %v3467
      %v3535 = vadd.f32 %v3248, %v3469
      %v3536 = vadd.f32 %v3249, %v3472
      %v3537 = vadd.f32 %v3250, %v3474
      %v3538 = vadd.f32 %v3251, %v3477
      %v3539 = vadd.f32 %v3252, %v3479
      %v3540 = vadd.f32 %v3253, %v3482
      %v3541 = vadd.f32 %v3254, %v3484
      %v3542 = vadd.f32 %v3255, %v3487
      %v3543 = vadd.f32 %v3256, %v3489
      %v3544 = vadd.f32 %v3257, %v3492
      %v3545 = vadd.f32 %v3258, %v3494
      %v3546 = vadd.f32 %v3259, %v3497
      %v3547 = vadd.f32 %v3260, %v3499
      %v3548 = vadd.f32 %v3261, %v3502
      %v3549 = vadd.f32 %v3262, %v3504
      %v3550 = vadd.f32 %v3263, %v3507
      %v3551 = vadd.f32 %v3264, %v3509
      %v3552 = vadd.f32 %v3265, %v3512
      %v3553 = vadd.f32 %v3266, %v3514
      %v3554 = vadd.f32 %v3267, %v3517
      %v3555 = vadd.f32 %v3268, %v3519
      %v3556 = vadd.f32 %v3269, %v3522
      %v3557 = vadd.f32 %v3270, %v3524
      %v3558 = vld [vmem:[%s2] sm:$0x1]
      %v3560 = vperm.slane %v3558, 0
      %v3562 = vadd.f32 %v3526, %v3560
      %v3563 = vadd.f32 %v3527, %v3560
      %v3564 = vadd.f32 %v3528, %v3560
      %v3565 = vadd.f32 %v3529, %v3560
      %v3566 = vadd.f32 %v3530, %v3560
      %v3567 = vadd.f32 %v3531, %v3560
      %v3568 = vadd.f32 %v3532, %v3560
      %v3569 = vadd.f32 %v3533, %v3560
      %v3570 = vadd.f32 %v3534, %v3560
      %v3571 = vadd.f32 %v3535, %v3560
      %v3572 = vadd.f32 %v3536, %v3560
      %v3573 = vadd.f32 %v3537, %v3560
      %v3574 = vadd.f32 %v3538, %v3560
      %v3575 = vadd.f32 %v3539, %v3560
      %v3576 = vadd.f32 %v3540, %v3560
      %v3577 = vadd.f32 %v3541, %v3560
      %v3578 = vadd.f32 %v3542, %v3560
      %v3579 = vadd.f32 %v3543, %v3560
      %v3580 = vadd.f32 %v3544, %v3560
      %v3581 = vadd.f32 %v3545, %v3560
      %v3582 = vadd.f32 %v3546, %v3560
      %v3583 = vadd.f32 %v3547, %v3560
      %v3584 = vadd.f32 %v3548, %v3560
      %v3585 = vadd.f32 %v3549, %v3560
      %v3586 = vadd.f32 %v3550, %v3560
      %v3587 = vadd.f32 %v3551, %v3560
      %v3588 = vadd.f32 %v3552, %v3560
      %v3589 = vadd.f32 %v3553, %v3560
      %v3590 = vadd.f32 %v3554, %v3560
      %v3591 = vadd.f32 %v3555, %v3560
      %v3592 = vadd.f32 %v3556, %v3560
      %v3593 = vadd.f32 %v3557, %v3560
      %v3594 = vmax.f32 %v3562, 0.0
      %v3595 = vmax.f32 %v3563, 0.0
      %v3596 = vmax.f32 %v3564, 0.0
      %v3597 = vmax.f32 %v3565, 0.0
      %v3598 = vmax.f32 %v3566, 0.0
      %v3599 = vmax.f32 %v3567, 0.0
      %v3600 = vmax.f32 %v3568, 0.0
      %v3601 = vmax.f32 %v3569, 0.0
      %v3602 = vmax.f32 %v3570, 0.0
      %v3603 = vmax.f32 %v3571, 0.0
      %v3604 = vmax.f32 %v3572, 0.0
      %v3605 = vmax.f32 %v3573, 0.0
      %v3606 = vmax.f32 %v3574, 0.0
      %v3607 = vmax.f32 %v3575, 0.0
      %v3608 = vmax.f32 %v3576, 0.0
      %v3609 = vmax.f32 %v3577, 0.0
      %v3610 = vmax.f32 %v3578, 0.0
      %v3611 = vmax.f32 %v3579, 0.0
      %v3612 = vmax.f32 %v3580, 0.0
      %v3613 = vmax.f32 %v3581, 0.0
      %v3614 = vmax.f32 %v3582, 0.0
      %v3615 = vmax.f32 %v3583, 0.0
      %v3616 = vmax.f32 %v3584, 0.0
      %v3617 = vmax.f32 %v3585, 0.0
      %v3618 = vmax.f32 %v3586, 0.0
      %v3619 = vmax.f32 %v3587, 0.0
      %v3620 = vmax.f32 %v3588, 0.0
      %v3621 = vmax.f32 %v3589, 0.0
      %v3622 = vmax.f32 %v3590, 0.0
      %v3623 = vmax.f32 %v3591, 0.0
      %v3624 = vmax.f32 %v3592, 0.0
      %v3625 = vmax.f32 %v3593, 0.0
      %v3626 = vpack.c.bf16 %v3594, %v3594
      %v3627 = vpack.c.bf16 %v3595, %v3595
      %v3628 = vpack.c.bf16 %v3596, %v3596
      %v3629 = vpack.c.bf16 %v3597, %v3597
      %v3630 = vpack.c.bf16 %v3598, %v3598
      %v3631 = vpack.c.bf16 %v3599, %v3599
      %v3632 = vpack.c.bf16 %v3600, %v3600
      %v3633 = vpack.c.bf16 %v3601, %v3601
      %v3634 = vpack.c.bf16 %v3602, %v3602
      %v3635 = vpack.c.bf16 %v3603, %v3603
      %v3636 = vpack.c.bf16 %v3604, %v3604
      %v3637 = vpack.c.bf16 %v3605, %v3605
      %v3638 = vpack.c.bf16 %v3606, %v3606
      %v3639 = vpack.c.bf16 %v3607, %v3607
      %v3640 = vpack.c.bf16 %v3608, %v3608
      %v3641 = vpack.c.bf16 %v3609, %v3609
      %v3642 = vpack.c.bf16 %v3610, %v3610
      %v3643 = vpack.c.bf16 %v3611, %v3611
      %v3644 = vpack.c.bf16 %v3612, %v3612
      %v3645 = vpack.c.bf16 %v3613, %v3613
      %v3646 = vpack.c.bf16 %v3614, %v3614
      %v3647 = vpack.c.bf16 %v3615, %v3615
      %v3648 = vpack.c.bf16 %v3616, %v3616
      %v3649 = vpack.c.bf16 %v3617, %v3617
      %v3650 = vpack.c.bf16 %v3618, %v3618
      %v3651 = vpack.c.bf16 %v3619, %v3619
      %v3652 = vpack.c.bf16 %v3620, %v3620
      %v3653 = vpack.c.bf16 %v3621, %v3621
      %v3654 = vpack.c.bf16 %v3622, %v3622
      %v3655 = vpack.c.bf16 %v3623, %v3623
      %v3656 = vpack.c.bf16 %v3624, %v3624
      %v3657 = vpack.c.bf16 %v3625, %v3625
      %3658 = vst.msk [vmem:[%s306] sm:$0xf] %vm226, %v3626
      %3659 = vst.msk [vmem:[%s306 + $0x4] sm:$0xf] %vm226, %v3627
      %3660 = vst.msk [vmem:[%s306 + $0x8] sm:$0xf] %vm226, %v3628
      %3661 = vst.msk [vmem:[%s306 + $0xc] sm:$0xf] %vm226, %v3629
      %3662 = vst.msk [vmem:[%s306 + $0x10] sm:$0xf] %vm226, %v3630
      %3663 = vst.msk [vmem:[%s306 + $0x14] sm:$0xf] %vm226, %v3631
      %3664 = vst.msk [vmem:[%s306 + $0x18] sm:$0xf] %vm226, %v3632
      %3665 = vst.msk [vmem:[%s306 + $0x1c] sm:$0xf] %vm226, %v3633
      %3666 = vst.msk [vmem:[%s306 + $0x20] sm:$0xf] %vm226, %v3634
      %3667 = vst.msk [vmem:[%s306 + $0x24] sm:$0xf] %vm226, %v3635
      %3668 = vst.msk [vmem:[%s306 + $0x28] sm:$0xf] %vm226, %v3636
      %3669 = vst.msk [vmem:[%s306 + $0x2c] sm:$0xf] %vm226, %v3637
      %3670 = vst.msk [vmem:[%s306 + $0x30] sm:$0xf] %vm226, %v3638
      %3671 = vst.msk [vmem:[%s306 + $0x34] sm:$0xf] %vm226, %v3639
      %3672 = vst.msk [vmem:[%s306 + $0x38] sm:$0xf] %vm226, %v3640
      %3673 = vst.msk [vmem:[%s306 + $0x3c] sm:$0xf] %vm226, %v3641
      %3674 = vst.msk [vmem:[%s306 + $0x40] sm:$0xf] %vm226, %v3642
      %3675 = vst.msk [vmem:[%s306 + $0x44] sm:$0xf] %vm226, %v3643
      %3676 = vst.msk [vmem:[%s306 + $0x48] sm:$0xf] %vm226, %v3644
      %3677 = vst.msk [vmem:[%s306 + $0x4c] sm:$0xf] %vm226, %v3645
      %3678 = vst.msk [vmem:[%s306 + $0x50] sm:$0xf] %vm226, %v3646
      %3679 = vst.msk [vmem:[%s306 + $0x54] sm:$0xf] %vm226, %v3647
      %3680 = vst.msk [vmem:[%s306 + $0x58] sm:$0xf] %vm226, %v3648
      %3681 = vst.msk [vmem:[%s306 + $0x5c] sm:$0xf] %vm226, %v3649
      %3682 = vst.msk [vmem:[%s306 + $0x60] sm:$0xf] %vm226, %v3650
      %3683 = vst.msk [vmem:[%s306 + $0x64] sm:$0xf] %vm226, %v3651
      %3684 = vst.msk [vmem:[%s306 + $0x68] sm:$0xf] %vm226, %v3652
      %3685 = vst.msk [vmem:[%s306 + $0x6c] sm:$0xf] %vm226, %v3653
      %3686 = vst.msk [vmem:[%s306 + $0x70] sm:$0xf] %vm226, %v3654
      %3687 = vst.msk [vmem:[%s306 + $0x74] sm:$0xf] %vm226, %v3655
      %3688 = vst.msk [vmem:[%s306 + $0x78] sm:$0xf] %vm226, %v3656
      %3689 = vst.msk [vmem:[%s306 + $0x7c] sm:$0xf] %vm226, %v3657
      %v3690 = vld [vmem:[%s339] sm:$0x1]
      %v3691 = vsel %vm342, 0, %v3690
      %3692 = vst [vmem:[%s339] sm:$0x1] %v3691
      %v3693 = vld [vmem:[%s339 + $0x8] sm:$0x1]
      %v3694 = vsel %vm342, 0, %v3693
      %3695 = vst [vmem:[%s339 + $0x8] sm:$0x1] %v3694
      %v3696 = vld [vmem:[%s339 + $0x10] sm:$0x1]
      %v3697 = vsel %vm342, 0, %v3696
      %3698 = vst [vmem:[%s339 + $0x10] sm:$0x1] %v3697
      %v3699 = vld [vmem:[%s339 + $0x18] sm:$0x1]
      %v3700 = vsel %vm342, 0, %v3699
      %3701 = vst [vmem:[%s339 + $0x18] sm:$0x1] %v3700
      %v3702 = vld [vmem:[%s339 + $0x20] sm:$0x1]
      %v3703 = vsel %vm342, 0, %v3702
      %3704 = vst [vmem:[%s339 + $0x20] sm:$0x1] %v3703
      %v3705 = vld [vmem:[%s339 + $0x28] sm:$0x1]
      %v3706 = vsel %vm342, 0, %v3705
      %3707 = vst [vmem:[%s339 + $0x28] sm:$0x1] %v3706
      %v3708 = vld [vmem:[%s339 + $0x30] sm:$0x1]
      %v3709 = vsel %vm342, 0, %v3708
      %3710 = vst [vmem:[%s339 + $0x30] sm:$0x1] %v3709
      %v3711 = vld [vmem:[%s339 + $0x38] sm:$0x1]
      %v3712 = vsel %vm342, 0, %v3711
      %3713 = vst [vmem:[%s339 + $0x38] sm:$0x1] %v3712
      %v3714 = vld [vmem:[%s339 + $0x40] sm:$0x1]
      %v3715 = vsel %vm342, 0, %v3714
      %3716 = vst [vmem:[%s339 + $0x40] sm:$0x1] %v3715
      %v3717 = vld [vmem:[%s339 + $0x48] sm:$0x1]
      %v3718 = vsel %vm342, 0, %v3717
      %3719 = vst [vmem:[%s339 + $0x48] sm:$0x1] %v3718
      %v3720 = vld [vmem:[%s339 + $0x50] sm:$0x1]
      %v3721 = vsel %vm342, 0, %v3720
      %3722 = vst [vmem:[%s339 + $0x50] sm:$0x1] %v3721
      %v3723 = vld [vmem:[%s339 + $0x58] sm:$0x1]
      %v3724 = vsel %vm342, 0, %v3723
      %3725 = vst [vmem:[%s339 + $0x58] sm:$0x1] %v3724
      %v3726 = vld [vmem:[%s339 + $0x60] sm:$0x1]
      %v3727 = vsel %vm342, 0, %v3726
      %3728 = vst [vmem:[%s339 + $0x60] sm:$0x1] %v3727
      %v3729 = vld [vmem:[%s339 + $0x68] sm:$0x1]
      %v3730 = vsel %vm342, 0, %v3729
      %3731 = vst [vmem:[%s339 + $0x68] sm:$0x1] %v3730
      %v3732 = vld [vmem:[%s339 + $0x70] sm:$0x1]
      %v3733 = vsel %vm342, 0, %v3732
      %3734 = vst [vmem:[%s339 + $0x70] sm:$0x1] %v3733
      %v3735 = vld [vmem:[%s339 + $0x78] sm:$0x1]
      %v3736 = vsel %vm342, 0, %v3735
      %3737 = vst [vmem:[%s339 + $0x78] sm:$0x1] %v3736
      %v3739 = vshrl.u32 %v3626, 16
      %v3741 = vrot.slane %v3739, 7
      %v3742 = vshll.u32 %v3626, 16
      %v3744 = vor.u32 %v3741, %v3742
      %v3745 = vrot.slane %v3741, 4
      %v3747 = vshrl.u32 %v3627, 16
      %v3749 = vrot.slane %v3747, 7
      %v3750 = vshll.u32 %v3627, 16
      %v3752 = vor.u32 %v3749, %v3750
      %v3753 = vsel %vm392, %v3745, %v3752
      %v3755 = vshrl.u32 %v3628, 16
      %v3757 = vrot.slane %v3755, 7
      %v3758 = vshll.u32 %v3628, 16
      %v3760 = vor.u32 %v3757, %v3758
      %v3761 = vrot.slane %v3757, 4
      %v3763 = vshrl.u32 %v3629, 16
      %v3765 = vrot.slane %v3763, 7
      %v3766 = vshll.u32 %v3629, 16
      %v3768 = vor.u32 %v3765, %v3766
      %v3769 = vsel %vm392, %v3761, %v3768
      %v3771 = vshrl.u32 %v3630, 16
      %v3773 = vrot.slane %v3771, 7
      %v3774 = vshll.u32 %v3630, 16
      %v3776 = vor.u32 %v3773, %v3774
      %v3777 = vrot.slane %v3773, 4
      %v3779 = vshrl.u32 %v3631, 16
      %v3781 = vrot.slane %v3779, 7
      %v3782 = vshll.u32 %v3631, 16
      %v3784 = vor.u32 %v3781, %v3782
      %v3785 = vsel %vm392, %v3777, %v3784
      %v3787 = vshrl.u32 %v3632, 16
      %v3789 = vrot.slane %v3787, 7
      %v3790 = vshll.u32 %v3632, 16
      %v3792 = vor.u32 %v3789, %v3790
      %v3793 = vrot.slane %v3789, 4
      %v3795 = vshrl.u32 %v3633, 16
      %v3797 = vrot.slane %v3795, 7
      %v3798 = vshll.u32 %v3633, 16
      %v3800 = vor.u32 %v3797, %v3798
      %v3801 = vsel %vm392, %v3793, %v3800
      %v3803 = vshrl.u32 %v3634, 16
      %v3805 = vrot.slane %v3803, 7
      %v3806 = vshll.u32 %v3634, 16
      %v3808 = vor.u32 %v3805, %v3806
      %v3809 = vrot.slane %v3805, 4
      %v3811 = vshrl.u32 %v3635, 16
      %v3813 = vrot.slane %v3811, 7
      %v3814 = vshll.u32 %v3635, 16
      %v3816 = vor.u32 %v3813, %v3814
      %v3817 = vsel %vm392, %v3809, %v3816
      %v3819 = vshrl.u32 %v3636, 16
      %v3821 = vrot.slane %v3819, 7
      %v3822 = vshll.u32 %v3636, 16
      %v3824 = vor.u32 %v3821, %v3822
      %v3825 = vrot.slane %v3821, 4
      %v3827 = vshrl.u32 %v3637, 16
      %v3829 = vrot.slane %v3827, 7
      %v3830 = vshll.u32 %v3637, 16
      %v3832 = vor.u32 %v3829, %v3830
      %v3833 = vsel %vm392, %v3825, %v3832
      %v3835 = vshrl.u32 %v3638, 16
      %v3837 = vrot.slane %v3835, 7
      %v3838 = vshll.u32 %v3638, 16
      %v3840 = vor.u32 %v3837, %v3838
      %v3841 = vrot.slane %v3837, 4
      %v3843 = vshrl.u32 %v3639, 16
      %v3845 = vrot.slane %v3843, 7
      %v3846 = vshll.u32 %v3639, 16
      %v3848 = vor.u32 %v3845, %v3846
      %v3849 = vsel %vm392, %v3841, %v3848
      %v3851 = vshrl.u32 %v3640, 16
      %v3853 = vrot.slane %v3851, 7
      %v3854 = vshll.u32 %v3640, 16
      %v3856 = vor.u32 %v3853, %v3854
      %v3857 = vrot.slane %v3853, 4
      %v3859 = vshrl.u32 %v3641, 16
      %v3861 = vrot.slane %v3859, 7
      %v3862 = vshll.u32 %v3641, 16
      %v3864 = vor.u32 %v3861, %v3862
      %v3865 = vsel %vm392, %v3857, %v3864
      %v3867 = vshrl.u32 %v3642, 16
      %v3869 = vrot.slane %v3867, 7
      %v3870 = vshll.u32 %v3642, 16
      %v3872 = vor.u32 %v3869, %v3870
      %v3873 = vrot.slane %v3869, 4
      %v3875 = vshrl.u32 %v3643, 16
      %v3877 = vrot.slane %v3875, 7
      %v3878 = vshll.u32 %v3643, 16
      %v3880 = vor.u32 %v3877, %v3878
      %v3881 = vsel %vm392, %v3873, %v3880
      %v3883 = vshrl.u32 %v3644, 16
      %v3885 = vrot.slane %v3883, 7
      %v3886 = vshll.u32 %v3644, 16
      %v3888 = vor.u32 %v3885, %v3886
      %v3889 = vrot.slane %v3885, 4
      %v3891 = vshrl.u32 %v3645, 16
      %v3893 = vrot.slane %v3891, 7
      %v3894 = vshll.u32 %v3645, 16
      %v3896 = vor.u32 %v3893, %v3894
      %v3897 = vsel %vm392, %v3889, %v3896
      %v3899 = vshrl.u32 %v3646, 16
      %v3901 = vrot.slane %v3899, 7
      %v3902 = vshll.u32 %v3646, 16
      %v3904 = vor.u32 %v3901, %v3902
      %v3905 = vrot.slane %v3901, 4
      %v3907 = vshrl.u32 %v3647, 16
      %v3909 = vrot.slane %v3907, 7
      %v3910 = vshll.u32 %v3647, 16
      %v3912 = vor.u32 %v3909, %v3910
      %v3913 = vsel %vm392, %v3905, %v3912
      %v3915 = vshrl.u32 %v3648, 16
      %v3917 = vrot.slane %v3915, 7
      %v3918 = vshll.u32 %v3648, 16
      %v3920 = vor.u32 %v3917, %v3918
      %v3921 = vrot.slane %v3917, 4
      %v3923 = vshrl.u32 %v3649, 16
      %v3925 = vrot.slane %v3923, 7
      %v3926 = vshll.u32 %v3649, 16
      %v3928 = vor.u32 %v3925, %v3926
      %v3929 = vsel %vm392, %v3921, %v3928
      %v3931 = vshrl.u32 %v3650, 16
      %v3933 = vrot.slane %v3931, 7
      %v3934 = vshll.u32 %v3650, 16
      %v3936 = vor.u32 %v3933, %v3934
      %v3937 = vrot.slane %v3933, 4
      %v3939 = vshrl.u32 %v3651, 16
      %v3941 = vrot.slane %v3939, 7
      %v3942 = vshll.u32 %v3651, 16
      %v3944 = vor.u32 %v3941, %v3942
      %v3945 = vsel %vm392, %v3937, %v3944
      %v3947 = vshrl.u32 %v3652, 16
      %v3949 = vrot.slane %v3947, 7
      %v3950 = vshll.u32 %v3652, 16
      %v3952 = vor.u32 %v3949, %v3950
      %v3953 = vrot.slane %v3949, 4
      %v3955 = vshrl.u32 %v3653, 16
      %v3957 = vrot.slane %v3955, 7
      %v3958 = vshll.u32 %v3653, 16
      %v3960 = vor.u32 %v3957, %v3958
      %v3961 = vsel %vm392, %v3953, %v3960
      %v3963 = vshrl.u32 %v3654, 16
      %v3965 = vrot.slane %v3963, 7
      %v3966 = vshll.u32 %v3654, 16
      %v3968 = vor.u32 %v3965, %v3966
      %v3969 = vrot.slane %v3965, 4
      %v3971 = vshrl.u32 %v3655, 16
      %v3973 = vrot.slane %v3971, 7
      %v3974 = vshll.u32 %v3655, 16
      %v3976 = vor.u32 %v3973, %v3974
      %v3977 = vsel %vm392, %v3969, %v3976
      %v3979 = vshrl.u32 %v3656, 16
      %v3981 = vrot.slane %v3979, 7
      %v3982 = vshll.u32 %v3656, 16
      %v3984 = vor.u32 %v3981, %v3982
      %v3985 = vrot.slane %v3981, 4
      %v3987 = vshrl.u32 %v3657, 16
      %v3989 = vrot.slane %v3987, 7
      %v3990 = vshll.u32 %v3657, 16
      %v3992 = vor.u32 %v3989, %v3990
      %v3993 = vsel %vm392, %v3985, %v3992
      %v4026 = vld [vmem:[%s339] sm:$0xf]
      %v4027 = vsel %vm683, %v3744, %v4026
      %4028 = vst [vmem:[%s339] sm:$0xf] %v4027
      %4029 = vst.msk [vmem:[%s339 + $0x4] sm:$0xf] %vm226, %v3753
      %v4030 = vld [vmem:[%s339 + $0x8] sm:$0xf]
      %v4031 = vsel %vm683, %v3760, %v4030
      %4032 = vst [vmem:[%s339 + $0x8] sm:$0xf] %v4031
      %4033 = vst.msk [vmem:[%s339 + $0xc] sm:$0xf] %vm226, %v3769
      %v4034 = vld [vmem:[%s339 + $0x10] sm:$0xf]
      %v4035 = vsel %vm683, %v3776, %v4034
      %4036 = vst [vmem:[%s339 + $0x10] sm:$0xf] %v4035
      %4037 = vst.msk [vmem:[%s339 + $0x14] sm:$0xf] %vm226, %v3785
      %v4038 = vld [vmem:[%s339 + $0x18] sm:$0xf]
      %v4039 = vsel %vm683, %v3792, %v4038
      %4040 = vst [vmem:[%s339 + $0x18] sm:$0xf] %v4039
      %4041 = vst.msk [vmem:[%s339 + $0x1c] sm:$0xf] %vm226, %v3801
      %v4042 = vld [vmem:[%s339 + $0x20] sm:$0xf]
      %v4043 = vsel %vm683, %v3808, %v4042
      %4044 = vst [vmem:[%s339 + $0x20] sm:$0xf] %v4043
      %4045 = vst.msk [vmem:[%s339 + $0x24] sm:$0xf] %vm226, %v3817
      %v4046 = vld [vmem:[%s339 + $0x28] sm:$0xf]
      %v4047 = vsel %vm683, %v3824, %v4046
      %4048 = vst [vmem:[%s339 + $0x28] sm:$0xf] %v4047
      %4049 = vst.msk [vmem:[%s339 + $0x2c] sm:$0xf] %vm226, %v3833
      %v4050 = vld [vmem:[%s339 + $0x30] sm:$0xf]
      %v4051 = vsel %vm683, %v3840, %v4050
      %4052 = vst [vmem:[%s339 + $0x30] sm:$0xf] %v4051
      %4053 = vst.msk [vmem:[%s339 + $0x34] sm:$0xf] %vm226, %v3849
      %v4054 = vld [vmem:[%s339 + $0x38] sm:$0xf]
      %v4055 = vsel %vm683, %v3856, %v4054
      %4056 = vst [vmem:[%s339 + $0x38] sm:$0xf] %v4055
      %4057 = vst.msk [vmem:[%s339 + $0x3c] sm:$0xf] %vm226, %v3865
      %v4058 = vld [vmem:[%s339 + $0x40] sm:$0xf]
      %v4059 = vsel %vm683, %v3872, %v4058
      %4060 = vst [vmem:[%s339 + $0x40] sm:$0xf] %v4059
      %4061 = vst.msk [vmem:[%s339 + $0x44] sm:$0xf] %vm226, %v3881
      %v4062 = vld [vmem:[%s339 + $0x48] sm:$0xf]
      %v4063 = vsel %vm683, %v3888, %v4062
      %4064 = vst [vmem:[%s339 + $0x48] sm:$0xf] %v4063
      %4065 = vst.msk [vmem:[%s339 + $0x4c] sm:$0xf] %vm226, %v3897
      %v4066 = vld [vmem:[%s339 + $0x50] sm:$0xf]
      %v4067 = vsel %vm683, %v3904, %v4066
      %4068 = vst [vmem:[%s339 + $0x50] sm:$0xf] %v4067
      %4069 = vst.msk [vmem:[%s339 + $0x54] sm:$0xf] %vm226, %v3913
      %v4070 = vld [vmem:[%s339 + $0x58] sm:$0xf]
      %v4071 = vsel %vm683, %v3920, %v4070
      %4072 = vst [vmem:[%s339 + $0x58] sm:$0xf] %v4071
      %4073 = vst.msk [vmem:[%s339 + $0x5c] sm:$0xf] %vm226, %v3929
      %v4074 = vld [vmem:[%s339 + $0x60] sm:$0xf]
      %v4075 = vsel %vm683, %v3936, %v4074
      %4076 = vst [vmem:[%s339 + $0x60] sm:$0xf] %v4075
      %4077 = vst.msk [vmem:[%s339 + $0x64] sm:$0xf] %vm226, %v3945
      %v4078 = vld [vmem:[%s339 + $0x68] sm:$0xf]
      %v4079 = vsel %vm683, %v3952, %v4078
      %4080 = vst [vmem:[%s339 + $0x68] sm:$0xf] %v4079
      %4081 = vst.msk [vmem:[%s339 + $0x6c] sm:$0xf] %vm226, %v3961
      %v4082 = vld [vmem:[%s339 + $0x70] sm:$0xf]
      %v4083 = vsel %vm683, %v3968, %v4082
      %4084 = vst [vmem:[%s339 + $0x70] sm:$0xf] %v4083
      %4085 = vst.msk [vmem:[%s339 + $0x74] sm:$0xf] %vm226, %v3977
      %v4086 = vld [vmem:[%s339 + $0x78] sm:$0xf]
      %v4087 = vsel %vm683, %v3984, %v4086
      %4088 = vst [vmem:[%s339 + $0x78] sm:$0xf] %v4087
      %4089 = vst.msk [vmem:[%s339 + $0x7c] sm:$0xf] %vm226, %v3993
      %v4090 = vld [vmem:[%s748 + $0x4] sm:$0x8]
      %v4091 = vsel %vm751, 0, %v4090
      %4092 = vst [vmem:[%s748 + $0x4] sm:$0x8] %v4091
      %v4093 = vld [vmem:[%s748 + $0xc] sm:$0x8]
      %v4094 = vsel %vm751, 0, %v4093
      %4095 = vst [vmem:[%s748 + $0xc] sm:$0x8] %v4094
      %v4096 = vld [vmem:[%s748 + $0x14] sm:$0x8]
      %v4097 = vsel %vm751, 0, %v4096
      %4098 = vst [vmem:[%s748 + $0x14] sm:$0x8] %v4097
      %v4099 = vld [vmem:[%s748 + $0x1c] sm:$0x8]
      %v4100 = vsel %vm751, 0, %v4099
      %4101 = vst [vmem:[%s748 + $0x1c] sm:$0x8] %v4100
      %v4102 = vld [vmem:[%s748 + $0x24] sm:$0x8]
      %v4103 = vsel %vm751, 0, %v4102
      %4104 = vst [vmem:[%s748 + $0x24] sm:$0x8] %v4103
      %v4105 = vld [vmem:[%s748 + $0x2c] sm:$0x8]
      %v4106 = vsel %vm751, 0, %v4105
      %4107 = vst [vmem:[%s748 + $0x2c] sm:$0x8] %v4106
      %v4108 = vld [vmem:[%s748 + $0x34] sm:$0x8]
      %v4109 = vsel %vm751, 0, %v4108
      %4110 = vst [vmem:[%s748 + $0x34] sm:$0x8] %v4109
      %v4111 = vld [vmem:[%s748 + $0x3c] sm:$0x8]
      %v4112 = vsel %vm751, 0, %v4111
      %4113 = vst [vmem:[%s748 + $0x3c] sm:$0x8] %v4112
      %v4114 = vld [vmem:[%s748 + $0x44] sm:$0x8]
      %v4115 = vsel %vm751, 0, %v4114
      %4116 = vst [vmem:[%s748 + $0x44] sm:$0x8] %v4115
      %v4117 = vld [vmem:[%s748 + $0x4c] sm:$0x8]
      %v4118 = vsel %vm751, 0, %v4117
      %4119 = vst [vmem:[%s748 + $0x4c] sm:$0x8] %v4118
      %v4120 = vld [vmem:[%s748 + $0x54] sm:$0x8]
      %v4121 = vsel %vm751, 0, %v4120
      %4122 = vst [vmem:[%s748 + $0x54] sm:$0x8] %v4121
      %v4123 = vld [vmem:[%s748 + $0x5c] sm:$0x8]
      %v4124 = vsel %vm751, 0, %v4123
      %4125 = vst [vmem:[%s748 + $0x5c] sm:$0x8] %v4124
      %v4126 = vld [vmem:[%s748 + $0x64] sm:$0x8]
      %v4127 = vsel %vm751, 0, %v4126
      %4128 = vst [vmem:[%s748 + $0x64] sm:$0x8] %v4127
      %v4129 = vld [vmem:[%s748 + $0x6c] sm:$0x8]
      %v4130 = vsel %vm751, 0, %v4129
      %4131 = vst [vmem:[%s748 + $0x6c] sm:$0x8] %v4130
      %v4132 = vld [vmem:[%s748 + $0x74] sm:$0x8]
      %v4133 = vsel %vm751, 0, %v4132
      %4134 = vst [vmem:[%s748 + $0x74] sm:$0x8] %v4133
      %v4135 = vld [vmem:[%s748 + $0x7c] sm:$0x8]
      %v4136 = vsel %vm751, 0, %v4135
      %4137 = vst [vmem:[%s748 + $0x7c] sm:$0x8] %v4136
      %v4138 = vrot.slane %v3739, 4
      %v4139 = vrot.slane %v3742, 5
      %v4140 = vor.u32 %v4138, %v4139
      %v4141 = vrot.slane %v4140, 4
      %v4142 = vrot.slane %v3750, 5
      %v4143 = vsel %vm802, %v4141, %v4142
      %v4144 = vrot.slane %v3747, 4
      %v4145 = vor.u32 %v4144, %v4142
      %v4146 = vrot.slane %v4145, 4
      %v4147 = vrot.slane %v3755, 4
      %v4148 = vrot.slane %v3758, 5
      %v4149 = vor.u32 %v4147, %v4148
      %v4150 = vrot.slane %v4149, 4
      %v4151 = vrot.slane %v3766, 5
      %v4152 = vsel %vm802, %v4150, %v4151
      %v4153 = vrot.slane %v3763, 4
      %v4154 = vor.u32 %v4153, %v4151
      %v4155 = vrot.slane %v4154, 4
      %v4156 = vrot.slane %v3771, 4
      %v4157 = vrot.slane %v3774, 5
      %v4158 = vor.u32 %v4156, %v4157
      %v4159 = vrot.slane %v4158, 4
      %v4160 = vrot.slane %v3782, 5
      %v4161 = vsel %vm802, %v4159, %v4160
      %v4162 = vrot.slane %v3779, 4
      %v4163 = vor.u32 %v4162, %v4160
      %v4164 = vrot.slane %v4163, 4
      %v4165 = vrot.slane %v3787, 4
      %v4166 = vrot.slane %v3790, 5
      %v4167 = vor.u32 %v4165, %v4166
      %v4168 = vrot.slane %v4167, 4
      %v4169 = vrot.slane %v3798, 5
      %v4170 = vsel %vm802, %v4168, %v4169
      %v4171 = vrot.slane %v3795, 4
      %v4172 = vor.u32 %v4171, %v4169
      %v4173 = vrot.slane %v4172, 4
      %v4174 = vrot.slane %v3803, 4
      %v4175 = vrot.slane %v3806, 5
      %v4176 = vor.u32 %v4174, %v4175
      %v4177 = vrot.slane %v4176, 4
      %v4178 = vrot.slane %v3814, 5
      %v4179 = vsel %vm802, %v4177, %v4178
      %v4180 = vrot.slane %v3811, 4
      %v4181 = vor.u32 %v4180, %v4178
      %v4182 = vrot.slane %v4181, 4
      %v4183 = vrot.slane %v3819, 4
      %v4184 = vrot.slane %v3822, 5
      %v4185 = vor.u32 %v4183, %v4184
      %v4186 = vrot.slane %v4185, 4
      %v4187 = vrot.slane %v3830, 5
      %v4188 = vsel %vm802, %v4186, %v4187
      %v4189 = vrot.slane %v3827, 4
      %v4190 = vor.u32 %v4189, %v4187
      %v4191 = vrot.slane %v4190, 4
      %v4192 = vrot.slane %v3835, 4
      %v4193 = vrot.slane %v3838, 5
      %v4194 = vor.u32 %v4192, %v4193
      %v4195 = vrot.slane %v4194, 4
      %v4196 = vrot.slane %v3846, 5
      %v4197 = vsel %vm802, %v4195, %v4196
      %v4198 = vrot.slane %v3843, 4
      %v4199 = vor.u32 %v4198, %v4196
      %v4200 = vrot.slane %v4199, 4
      %v4201 = vrot.slane %v3851, 4
      %v4202 = vrot.slane %v3854, 5
      %v4203 = vor.u32 %v4201, %v4202
      %v4204 = vrot.slane %v4203, 4
      %v4205 = vrot.slane %v3862, 5
      %v4206 = vsel %vm802, %v4204, %v4205
      %v4207 = vrot.slane %v3859, 4
      %v4208 = vor.u32 %v4207, %v4205
      %v4209 = vrot.slane %v4208, 4
      %v4210 = vrot.slane %v3867, 4
      %v4211 = vrot.slane %v3870, 5
      %v4212 = vor.u32 %v4210, %v4211
      %v4213 = vrot.slane %v4212, 4
      %v4214 = vrot.slane %v3878, 5
      %v4215 = vsel %vm802, %v4213, %v4214
      %v4216 = vrot.slane %v3875, 4
      %v4217 = vor.u32 %v4216, %v4214
      %v4218 = vrot.slane %v4217, 4
      %v4219 = vrot.slane %v3883, 4
      %v4220 = vrot.slane %v3886, 5
      %v4221 = vor.u32 %v4219, %v4220
      %v4222 = vrot.slane %v4221, 4
      %v4223 = vrot.slane %v3894, 5
      %v4224 = vsel %vm802, %v4222, %v4223
      %v4225 = vrot.slane %v3891, 4
      %v4226 = vor.u32 %v4225, %v4223
      %v4227 = vrot.slane %v4226, 4
      %v4228 = vrot.slane %v3899, 4
      %v4229 = vrot.slane %v3902, 5
      %v4230 = vor.u32 %v4228, %v4229
      %v4231 = vrot.slane %v4230, 4
      %v4232 = vrot.slane %v3910, 5
      %v4233 = vsel %vm802, %v4231, %v4232
      %v4234 = vrot.slane %v3907, 4
      %v4235 = vor.u32 %v4234, %v4232
      %v4236 = vrot.slane %v4235, 4
      %v4237 = vrot.slane %v3915, 4
      %v4238 = vrot.slane %v3918, 5
      %v4239 = vor.u32 %v4237, %v4238
      %v4240 = vrot.slane %v4239, 4
      %v4241 = vrot.slane %v3926, 5
      %v4242 = vsel %vm802, %v4240, %v4241
      %v4243 = vrot.slane %v3923, 4
      %v4244 = vor.u32 %v4243, %v4241
      %v4245 = vrot.slane %v4244, 4
      %v4246 = vrot.slane %v3931, 4
      %v4247 = vrot.slane %v3934, 5
      %v4248 = vor.u32 %v4246, %v4247
      %v4249 = vrot.slane %v4248, 4
      %v4250 = vrot.slane %v3942, 5
      %v4251 = vsel %vm802, %v4249, %v4250
      %v4252 = vrot.slane %v3939, 4
      %v4253 = vor.u32 %v4252, %v4250
      %v4254 = vrot.slane %v4253, 4
      %v4255 = vrot.slane %v3947, 4
      %v4256 = vrot.slane %v3950, 5
      %v4257 = vor.u32 %v4255, %v4256
      %v4258 = vrot.slane %v4257, 4
      %v4259 = vrot.slane %v3958, 5
      %v4260 = vsel %vm802, %v4258, %v4259
      %v4261 = vrot.slane %v3955, 4
      %v4262 = vor.u32 %v4261, %v4259
      %v4263 = vrot.slane %v4262, 4
      %v4264 = vrot.slane %v3963, 4
      %v4265 = vrot.slane %v3966, 5
      %v4266 = vor.u32 %v4264, %v4265
      %v4267 = vrot.slane %v4266, 4
      %v4268 = vrot.slane %v3974, 5
      %v4269 = vsel %vm802, %v4267, %v4268
      %v4270 = vrot.slane %v3971, 4
      %v4271 = vor.u32 %v4270, %v4268
      %v4272 = vrot.slane %v4271, 4
      %v4273 = vrot.slane %v3979, 4
      %v4274 = vrot.slane %v3982, 5
      %v4275 = vor.u32 %v4273, %v4274
      %v4276 = vrot.slane %v4275, 4
      %v4277 = vrot.slane %v3990, 5
      %v4278 = vsel %vm802, %v4276, %v4277
      %v4279 = vrot.slane %v3987, 4
      %v4280 = vor.u32 %v4279, %v4277
      %v4281 = vrot.slane %v4280, 4
      %4314 = vst.msk [vmem:[%s748] sm:$0xf] %vm226, %v4143
      %v4315 = vld [vmem:[%s748 + $0x4] sm:$0xf]
      %v4316 = vsel %vm980, %v4146, %v4315
      %4317 = vst [vmem:[%s748 + $0x4] sm:$0xf] %v4316
      %4318 = vst.msk [vmem:[%s748 + $0x8] sm:$0xf] %vm226, %v4152
      %v4319 = vld [vmem:[%s748 + $0xc] sm:$0xf]
      %v4320 = vsel %vm980, %v4155, %v4319
      %4321 = vst [vmem:[%s748 + $0xc] sm:$0xf] %v4320
      %4322 = vst.msk [vmem:[%s748 + $0x10] sm:$0xf] %vm226, %v4161
      %v4323 = vld [vmem:[%s748 + $0x14] sm:$0xf]
      %v4324 = vsel %vm980, %v4164, %v4323
      %4325 = vst [vmem:[%s748 + $0x14] sm:$0xf] %v4324
      %4326 = vst.msk [vmem:[%s748 + $0x18] sm:$0xf] %vm226, %v4170
      %v4327 = vld [vmem:[%s748 + $0x1c] sm:$0xf]
      %v4328 = vsel %vm980, %v4173, %v4327
      %4329 = vst [vmem:[%s748 + $0x1c] sm:$0xf] %v4328
      %4330 = vst.msk [vmem:[%s748 + $0x20] sm:$0xf] %vm226, %v4179
      %v4331 = vld [vmem:[%s748 + $0x24] sm:$0xf]
      %v4332 = vsel %vm980, %v4182, %v4331
      %4333 = vst [vmem:[%s748 + $0x24] sm:$0xf] %v4332
      %4334 = vst.msk [vmem:[%s748 + $0x28] sm:$0xf] %vm226, %v4188
      %v4335 = vld [vmem:[%s748 + $0x2c] sm:$0xf]
      %v4336 = vsel %vm980, %v4191, %v4335
      %4337 = vst [vmem:[%s748 + $0x2c] sm:$0xf] %v4336
      %4338 = vst.msk [vmem:[%s748 + $0x30] sm:$0xf] %vm226, %v4197
      %v4339 = vld [vmem:[%s748 + $0x34] sm:$0xf]
      %v4340 = vsel %vm980, %v4200, %v4339
      %4341 = vst [vmem:[%s748 + $0x34] sm:$0xf] %v4340
      %4342 = vst.msk [vmem:[%s748 + $0x38] sm:$0xf] %vm226, %v4206
      %v4343 = vld [vmem:[%s748 + $0x3c] sm:$0xf]
      %v4344 = vsel %vm980, %v4209, %v4343
      %4345 = vst [vmem:[%s748 + $0x3c] sm:$0xf] %v4344
      %4346 = vst.msk [vmem:[%s748 + $0x40] sm:$0xf] %vm226, %v4215
      %v4347 = vld [vmem:[%s748 + $0x44] sm:$0xf]
      %v4348 = vsel %vm980, %v4218, %v4347
      %4349 = vst [vmem:[%s748 + $0x44] sm:$0xf] %v4348
      %4350 = vst.msk [vmem:[%s748 + $0x48] sm:$0xf] %vm226, %v4224
      %v4351 = vld [vmem:[%s748 + $0x4c] sm:$0xf]
      %v4352 = vsel %vm980, %v4227, %v4351
      %4353 = vst [vmem:[%s748 + $0x4c] sm:$0xf] %v4352
      %4354 = vst.msk [vmem:[%s748 + $0x50] sm:$0xf] %vm226, %v4233
      %v4355 = vld [vmem:[%s748 + $0x54] sm:$0xf]
      %v4356 = vsel %vm980, %v4236, %v4355
      %4357 = vst [vmem:[%s748 + $0x54] sm:$0xf] %v4356
      %4358 = vst.msk [vmem:[%s748 + $0x58] sm:$0xf] %vm226, %v4242
      %v4359 = vld [vmem:[%s748 + $0x5c] sm:$0xf]
      %v4360 = vsel %vm980, %v4245, %v4359
      %4361 = vst [vmem:[%s748 + $0x5c] sm:$0xf] %v4360
      %4362 = vst.msk [vmem:[%s748 + $0x60] sm:$0xf] %vm226, %v4251
      %v4363 = vld [vmem:[%s748 + $0x64] sm:$0xf]
      %v4364 = vsel %vm980, %v4254, %v4363
      %4365 = vst [vmem:[%s748 + $0x64] sm:$0xf] %v4364
      %4366 = vst.msk [vmem:[%s748 + $0x68] sm:$0xf] %vm226, %v4260
      %v4367 = vld [vmem:[%s748 + $0x6c] sm:$0xf]
      %v4368 = vsel %vm980, %v4263, %v4367
      %4369 = vst [vmem:[%s748 + $0x6c] sm:$0xf] %v4368
      %4370 = vst.msk [vmem:[%s748 + $0x70] sm:$0xf] %vm226, %v4269
      %v4371 = vld [vmem:[%s748 + $0x74] sm:$0xf]
      %v4372 = vsel %vm980, %v4272, %v4371
      %4373 = vst [vmem:[%s748 + $0x74] sm:$0xf] %v4372
      %4374 = vst.msk [vmem:[%s748 + $0x78] sm:$0xf] %vm226, %v4278
      %v4375 = vld [vmem:[%s748 + $0x7c] sm:$0xf]
      %v4376 = vsel %vm980, %v4281, %v4375
      %4377 = vst [vmem:[%s748 + $0x7c] sm:$0xf] %v4376
      %v4378 = vld [vmem:[#allocation2] sm:$0xf]
      %v4379 = vld [vmem:[#allocation2 + $0x4] sm:$0xf]
      %v4380 = vld [vmem:[#allocation2 + $0x8] sm:$0xf]
      %v4381 = vld [vmem:[#allocation2 + $0xc] sm:$0xf]
      %v4382 = vld [vmem:[#allocation2 + $0x10] sm:$0xf]
      %v4383 = vld [vmem:[#allocation2 + $0x14] sm:$0xf]
      %v4384 = vld [vmem:[#allocation2 + $0x18] sm:$0xf]
      %v4385 = vld [vmem:[#allocation2 + $0x1c] sm:$0xf]
      %v4386 = vld [vmem:[#allocation2 + $0x20] sm:$0xf]
      %v4387 = vld [vmem:[#allocation2 + $0x24] sm:$0xf]
      %v4388 = vld [vmem:[#allocation2 + $0x28] sm:$0xf]
      %v4389 = vld [vmem:[#allocation2 + $0x2c] sm:$0xf]
      %v4390 = vld [vmem:[#allocation2 + $0x30] sm:$0xf]
      %v4391 = vld [vmem:[#allocation2 + $0x34] sm:$0xf]
      %v4392 = vld [vmem:[#allocation2 + $0x38] sm:$0xf]
      %v4393 = vld [vmem:[#allocation2 + $0x3c] sm:$0xf]
      %v4394 = vld [vmem:[#allocation2 + $0x40] sm:$0xf]
      %v4395 = vld [vmem:[#allocation2 + $0x44] sm:$0xf]
      %v4396 = vld [vmem:[#allocation2 + $0x48] sm:$0xf]
      %v4397 = vld [vmem:[#allocation2 + $0x4c] sm:$0xf]
      %v4398 = vld [vmem:[#allocation2 + $0x50] sm:$0xf]
      %v4399 = vld [vmem:[#allocation2 + $0x54] sm:$0xf]
      %v4400 = vld [vmem:[#allocation2 + $0x58] sm:$0xf]
      %v4401 = vld [vmem:[#allocation2 + $0x5c] sm:$0xf]
      %v4402 = vld [vmem:[#allocation2 + $0x60] sm:$0xf]
      %v4403 = vld [vmem:[#allocation2 + $0x64] sm:$0xf]
      %v4404 = vld [vmem:[#allocation2 + $0x68] sm:$0xf]
      %v4405 = vld [vmem:[#allocation2 + $0x6c] sm:$0xf]
      %v4406 = vld [vmem:[#allocation2 + $0x70] sm:$0xf]
      %v4407 = vld [vmem:[#allocation2 + $0x74] sm:$0xf]
      %v4408 = vld [vmem:[#allocation2 + $0x78] sm:$0xf]
      %v4409 = vld [vmem:[#allocation2 + $0x7c] sm:$0xf]
      %v4410 = vld [vmem:[%s3] sm:$0xf]
      %v4411 = vld [vmem:[#allocation3] sm:$0xf]
      %v4412 = vld [vmem:[#allocation3 + $0x4] sm:$0xf]
      %v4413 = vld [vmem:[#allocation3 + $0x8] sm:$0xf]
      %v4414 = vld [vmem:[#allocation3 + $0xc] sm:$0xf]
      %v4415 = vld [vmem:[#allocation3 + $0x10] sm:$0xf]
      %v4416 = vld [vmem:[#allocation3 + $0x14] sm:$0xf]
      %v4417 = vld [vmem:[#allocation3 + $0x18] sm:$0xf]
      %v4418 = vld [vmem:[#allocation3 + $0x1c] sm:$0xf]
      %v4419 = vld [vmem:[#allocation3 + $0x20] sm:$0xf]
      %v4420 = vld [vmem:[#allocation3 + $0x24] sm:$0xf]
      %v4421 = vld [vmem:[#allocation3 + $0x28] sm:$0xf]
      %v4422 = vld [vmem:[#allocation3 + $0x2c] sm:$0xf]
      %v4423 = vld [vmem:[#allocation3 + $0x30] sm:$0xf]
      %v4424 = vld [vmem:[#allocation3 + $0x34] sm:$0xf]
      %v4425 = vld [vmem:[#allocation3 + $0x38] sm:$0xf]
      %v4426 = vld [vmem:[#allocation3 + $0x3c] sm:$0xf]
      %v4427 = vld [vmem:[#allocation3 + $0x40] sm:$0xf]
      %v4428 = vld [vmem:[#allocation3 + $0x44] sm:$0xf]
      %v4429 = vld [vmem:[#allocation3 + $0x48] sm:$0xf]
      %v4430 = vld [vmem:[#allocation3 + $0x4c] sm:$0xf]
      %v4431 = vld [vmem:[#allocation3 + $0x50] sm:$0xf]
      %v4432 = vld [vmem:[#allocation3 + $0x54] sm:$0xf]
      %v4433 = vld [vmem:[#allocation3 + $0x58] sm:$0xf]
      %v4434 = vld [vmem:[#allocation3 + $0x5c] sm:$0xf]
      %v4435 = vld [vmem:[#allocation3 + $0x60] sm:$0xf]
      %v4436 = vld [vmem:[#allocation3 + $0x64] sm:$0xf]
      %v4437 = vld [vmem:[#allocation3 + $0x68] sm:$0xf]
      %v4438 = vld [vmem:[#allocation3 + $0x6c] sm:$0xf]
      %v4439 = vld [vmem:[#allocation3 + $0x70] sm:$0xf]
      %v4440 = vld [vmem:[#allocation3 + $0x74] sm:$0xf]
      %v4441 = vld [vmem:[#allocation3 + $0x78] sm:$0xf]
      %v4442 = vld [vmem:[#allocation3 + $0x7c] sm:$0xf]
      %s4443 = scalar_lea.vmem %s3, 4
      %v4444 = vld [vmem:[%s4443] sm:$0xf]
      %v4477 = vunpack.c.l.b16 %v4411
      %v4478 = vunpack.c.l.b16 %v4412
      %v4479 = vunpack.c.l.b16 %v4413
      %v4480 = vunpack.c.l.b16 %v4414
      %v4481 = vunpack.c.l.b16 %v4415
      %v4482 = vunpack.c.l.b16 %v4416
      %v4483 = vunpack.c.l.b16 %v4417
      %v4484 = vunpack.c.l.b16 %v4418
      %v4485 = vunpack.c.l.b16 %v4419
      %v4486 = vunpack.c.l.b16 %v4420
      %v4487 = vunpack.c.l.b16 %v4421
      %v4488 = vunpack.c.l.b16 %v4422
      %v4489 = vunpack.c.l.b16 %v4423
      %v4490 = vunpack.c.l.b16 %v4424
      %v4491 = vunpack.c.l.b16 %v4425
      %v4492 = vunpack.c.l.b16 %v4426
      %v4493 = vunpack.c.l.b16 %v4427
      %v4494 = vunpack.c.l.b16 %v4428
      %v4495 = vunpack.c.l.b16 %v4429
      %v4496 = vunpack.c.l.b16 %v4430
      %v4497 = vunpack.c.l.b16 %v4431
      %v4498 = vunpack.c.l.b16 %v4432
      %v4499 = vunpack.c.l.b16 %v4433
      %v4500 = vunpack.c.l.b16 %v4434
      %v4501 = vunpack.c.l.b16 %v4435
      %v4502 = vunpack.c.l.b16 %v4436
      %v4503 = vunpack.c.l.b16 %v4437
      %v4504 = vunpack.c.l.b16 %v4438
      %v4505 = vunpack.c.l.b16 %v4439
      %v4506 = vunpack.c.l.b16 %v4440
      %v4507 = vunpack.c.l.b16 %v4441
      %v4508 = vunpack.c.l.b16 %v4442
      %v4509 = vpack.c.b16 %v4478, %v4477
      %v4510 = vpack.c.b16 %v4480, %v4479
      %v4511 = vpack.c.b16 %v4482, %v4481
      %v4512 = vpack.c.b16 %v4484, %v4483
      %v4513 = vpack.c.b16 %v4486, %v4485
      %v4514 = vpack.c.b16 %v4488, %v4487
      %v4515 = vpack.c.b16 %v4490, %v4489
      %v4516 = vpack.c.b16 %v4492, %v4491
      %v4517 = vpack.c.b16 %v4494, %v4493
      %v4518 = vpack.c.b16 %v4496, %v4495
      %v4519 = vpack.c.b16 %v4498, %v4497
      %v4520 = vpack.c.b16 %v4500, %v4499
      %v4521 = vpack.c.b16 %v4502, %v4501
      %v4522 = vpack.c.b16 %v4504, %v4503
      %v4523 = vpack.c.b16 %v4506, %v4505
      %v4524 = vpack.c.b16 %v4508, %v4507
      %v4526 = vsel %vm1191, %v4509, 0
      %v4529 = vsel %vm1191, %v4510, 0
      %v4532 = vsel %vm1191, %v4511, 0
      %v4535 = vsel %vm1191, %v4512, 0
      %v4538 = vsel %vm1191, %v4513, 0
      %v4541 = vsel %vm1191, %v4514, 0
      %v4544 = vsel %vm1191, %v4515, 0
      %v4547 = vsel %vm1191, %v4516, 0
      %v4550 = vsel %vm1191, %v4517, 0
      %v4553 = vsel %vm1191, %v4518, 0
      %v4556 = vsel %vm1191, %v4519, 0
      %v4559 = vsel %vm1191, %v4520, 0
      %v4562 = vsel %vm1191, %v4521, 0
      %v4565 = vsel %vm1191, %v4522, 0
      %v4568 = vsel %vm1191, %v4523, 0
      %v4571 = vsel %vm1191, %v4524, 0
      %v4574 = vsel %vm1240, %v4444, 0
      %4576 = vmatpush.bf16.msra.mxu0 0
      %4577 = vmatpush.bf16.msra.mxu0 0
      %4578 = vmatpush.bf16.msra.mxu0 0
      %4579 = vmatpush.bf16.msra.mxu0 0
      %4580 = vmatpush.bf16.msra.mxu0 0
      %4581 = vmatpush.bf16.msra.mxu0 0
      %4582 = vmatpush.bf16.msra.mxu0 0
      %4583 = vmatpush.bf16.msra.mxu0 %v4574
      %4584 = vmatmul.bf16.gmra.mxu0 %v4526
      %v4585 = vpop.f32.mrf.mxu0
      %v4586 = vadd.f32 0.0, %v4585
      %v4587 = vpop.f32.mrf.mxu0
      %v4588 = vadd.f32 0.0, %v4587
      %4589 = vmatmul.bf16.gmra.mxu0 %v4529
      %v4590 = vpop.f32.mrf.mxu0
      %v4591 = vadd.f32 0.0, %v4590
      %v4592 = vpop.f32.mrf.mxu0
      %v4593 = vadd.f32 0.0, %v4592
      %4594 = vmatmul.bf16.gmra.mxu0 %v4532
      %v4595 = vpop.f32.mrf.mxu0
      %v4596 = vadd.f32 0.0, %v4595
      %v4597 = vpop.f32.mrf.mxu0
      %v4598 = vadd.f32 0.0, %v4597
      %4599 = vmatmul.bf16.gmra.mxu0 %v4535
      %v4600 = vpop.f32.mrf.mxu0
      %v4601 = vadd.f32 0.0, %v4600
      %v4602 = vpop.f32.mrf.mxu0
      %v4603 = vadd.f32 0.0, %v4602
      %4604 = vmatmul.bf16.gmra.mxu0 %v4538
      %v4605 = vpop.f32.mrf.mxu0
      %v4606 = vadd.f32 0.0, %v4605
      %v4607 = vpop.f32.mrf.mxu0
      %v4608 = vadd.f32 0.0, %v4607
      %4609 = vmatmul.bf16.gmra.mxu0 %v4541
      %v4610 = vpop.f32.mrf.mxu0
      %v4611 = vadd.f32 0.0, %v4610
      %v4612 = vpop.f32.mrf.mxu0
      %v4613 = vadd.f32 0.0, %v4612
      %4614 = vmatmul.bf16.gmra.mxu0 %v4544
      %v4615 = vpop.f32.mrf.mxu0
      %v4616 = vadd.f32 0.0, %v4615
      %v4617 = vpop.f32.mrf.mxu0
      %v4618 = vadd.f32 0.0, %v4617
      %4619 = vmatmul.bf16.gmra.mxu0 %v4547
      %v4620 = vpop.f32.mrf.mxu0
      %v4621 = vadd.f32 0.0, %v4620
      %v4622 = vpop.f32.mrf.mxu0
      %v4623 = vadd.f32 0.0, %v4622
      %4624 = vmatmul.bf16.gmra.mxu0 %v4550
      %v4625 = vpop.f32.mrf.mxu0
      %v4626 = vadd.f32 0.0, %v4625
      %v4627 = vpop.f32.mrf.mxu0
      %v4628 = vadd.f32 0.0, %v4627
      %4629 = vmatmul.bf16.gmra.mxu0 %v4553
      %v4630 = vpop.f32.mrf.mxu0
      %v4631 = vadd.f32 0.0, %v4630
      %v4632 = vpop.f32.mrf.mxu0
      %v4633 = vadd.f32 0.0, %v4632
      %4634 = vmatmul.bf16.gmra.mxu0 %v4556
      %v4635 = vpop.f32.mrf.mxu0
      %v4636 = vadd.f32 0.0, %v4635
      %v4637 = vpop.f32.mrf.mxu0
      %v4638 = vadd.f32 0.0, %v4637
      %4639 = vmatmul.bf16.gmra.mxu0 %v4559
      %v4640 = vpop.f32.mrf.mxu0
      %v4641 = vadd.f32 0.0, %v4640
      %v4642 = vpop.f32.mrf.mxu0
      %v4643 = vadd.f32 0.0, %v4642
      %4644 = vmatmul.bf16.gmra.mxu0 %v4562
      %v4645 = vpop.f32.mrf.mxu0
      %v4646 = vadd.f32 0.0, %v4645
      %v4647 = vpop.f32.mrf.mxu0
      %v4648 = vadd.f32 0.0, %v4647
      %4649 = vmatmul.bf16.gmra.mxu0 %v4565
      %v4650 = vpop.f32.mrf.mxu0
      %v4651 = vadd.f32 0.0, %v4650
      %v4652 = vpop.f32.mrf.mxu0
      %v4653 = vadd.f32 0.0, %v4652
      %4654 = vmatmul.bf16.gmra.mxu0 %v4568
      %v4655 = vpop.f32.mrf.mxu0
      %v4656 = vadd.f32 0.0, %v4655
      %v4657 = vpop.f32.mrf.mxu0
      %v4658 = vadd.f32 0.0, %v4657
      %4659 = vmatmul.bf16.gmra.mxu0 %v4571
      %v4660 = vpop.f32.mrf.mxu0
      %v4661 = vadd.f32 0.0, %v4660
      %v4662 = vpop.f32.mrf.mxu0
      %v4663 = vadd.f32 0.0, %v4662
      %4664 = vdwg.mxu0
      %v4697 = vunpack.c.l.b16 %v4378
      %v4698 = vunpack.c.l.b16 %v4379
      %v4699 = vunpack.c.l.b16 %v4380
      %v4700 = vunpack.c.l.b16 %v4381
      %v4701 = vunpack.c.l.b16 %v4382
      %v4702 = vunpack.c.l.b16 %v4383
      %v4703 = vunpack.c.l.b16 %v4384
      %v4704 = vunpack.c.l.b16 %v4385
      %v4705 = vunpack.c.l.b16 %v4386
      %v4706 = vunpack.c.l.b16 %v4387
      %v4707 = vunpack.c.l.b16 %v4388
      %v4708 = vunpack.c.l.b16 %v4389
      %v4709 = vunpack.c.l.b16 %v4390
      %v4710 = vunpack.c.l.b16 %v4391
      %v4711 = vunpack.c.l.b16 %v4392
      %v4712 = vunpack.c.l.b16 %v4393
      %v4713 = vunpack.c.l.b16 %v4394
      %v4714 = vunpack.c.l.b16 %v4395
      %v4715 = vunpack.c.l.b16 %v4396
      %v4716 = vunpack.c.l.b16 %v4397
      %v4717 = vunpack.c.l.b16 %v4398
      %v4718 = vunpack.c.l.b16 %v4399
      %v4719 = vunpack.c.l.b16 %v4400
      %v4720 = vunpack.c.l.b16 %v4401
      %v4721 = vunpack.c.l.b16 %v4402
      %v4722 = vunpack.c.l.b16 %v4403
      %v4723 = vunpack.c.l.b16 %v4404
      %v4724 = vunpack.c.l.b16 %v4405
      %v4725 = vunpack.c.l.b16 %v4406
      %v4726 = vunpack.c.l.b16 %v4407
      %v4727 = vunpack.c.l.b16 %v4408
      %v4728 = vunpack.c.l.b16 %v4409
      %v4729 = vpack.c.b16 %v4698, %v4697
      %v4730 = vpack.c.b16 %v4700, %v4699
      %v4731 = vpack.c.b16 %v4702, %v4701
      %v4732 = vpack.c.b16 %v4704, %v4703
      %v4733 = vpack.c.b16 %v4706, %v4705
      %v4734 = vpack.c.b16 %v4708, %v4707
      %v4735 = vpack.c.b16 %v4710, %v4709
      %v4736 = vpack.c.b16 %v4712, %v4711
      %v4737 = vpack.c.b16 %v4714, %v4713
      %v4738 = vpack.c.b16 %v4716, %v4715
      %v4739 = vpack.c.b16 %v4718, %v4717
      %v4740 = vpack.c.b16 %v4720, %v4719
      %v4741 = vpack.c.b16 %v4722, %v4721
      %v4742 = vpack.c.b16 %v4724, %v4723
      %v4743 = vpack.c.b16 %v4726, %v4725
      %v4744 = vpack.c.b16 %v4728, %v4727
      %v4746 = vsel %vm1191, %v4729, 0
      %v4749 = vsel %vm1191, %v4730, 0
      %v4752 = vsel %vm1191, %v4731, 0
      %v4755 = vsel %vm1191, %v4732, 0
      %v4758 = vsel %vm1191, %v4733, 0
      %v4761 = vsel %vm1191, %v4734, 0
      %v4764 = vsel %vm1191, %v4735, 0
      %v4767 = vsel %vm1191, %v4736, 0
      %v4770 = vsel %vm1191, %v4737, 0
      %v4773 = vsel %vm1191, %v4738, 0
      %v4776 = vsel %vm1191, %v4739, 0
      %v4779 = vsel %vm1191, %v4740, 0
      %v4782 = vsel %vm1191, %v4741, 0
      %v4785 = vsel %vm1191, %v4742, 0
      %v4788 = vsel %vm1191, %v4743, 0
      %v4791 = vsel %vm1191, %v4744, 0
      %v4794 = vsel %vm1240, %v4410, 0
      %4796 = vmatpush.bf16.msra.mxu0 0
      %4797 = vmatpush.bf16.msra.mxu0 0
      %4798 = vmatpush.bf16.msra.mxu0 0
      %4799 = vmatpush.bf16.msra.mxu0 0
      %4800 = vmatpush.bf16.msra.mxu0 0
      %4801 = vmatpush.bf16.msra.mxu0 0
      %4802 = vmatpush.bf16.msra.mxu0 0
      %4803 = vmatpush.bf16.msra.mxu0 %v4794
      %4804 = vmatmul.bf16.gmra.mxu0 %v4746
      %v4805 = vpop.f32.mrf.mxu0
      %v4806 = vadd.f32 %v4586, %v4805
      %v4807 = vpop.f32.mrf.mxu0
      %v4808 = vadd.f32 %v4588, %v4807
      %4809 = vmatmul.bf16.gmra.mxu0 %v4749
      %v4810 = vpop.f32.mrf.mxu0
      %v4811 = vadd.f32 %v4591, %v4810
      %v4812 = vpop.f32.mrf.mxu0
      %v4813 = vadd.f32 %v4593, %v4812
      %4814 = vmatmul.bf16.gmra.mxu0 %v4752
      %v4815 = vpop.f32.mrf.mxu0
      %v4816 = vadd.f32 %v4596, %v4815
      %v4817 = vpop.f32.mrf.mxu0
      %v4818 = vadd.f32 %v4598, %v4817
      %4819 = vmatmul.bf16.gmra.mxu0 %v4755
      %v4820 = vpop.f32.mrf.mxu0
      %v4821 = vadd.f32 %v4601, %v4820
      %v4822 = vpop.f32.mrf.mxu0
      %v4823 = vadd.f32 %v4603, %v4822
      %4824 = vmatmul.bf16.gmra.mxu0 %v4758
      %v4825 = vpop.f32.mrf.mxu0
      %v4826 = vadd.f32 %v4606, %v4825
      %v4827 = vpop.f32.mrf.mxu0
      %v4828 = vadd.f32 %v4608, %v4827
      %4829 = vmatmul.bf16.gmra.mxu0 %v4761
      %v4830 = vpop.f32.mrf.mxu0
      %v4831 = vadd.f32 %v4611, %v4830
      %v4832 = vpop.f32.mrf.mxu0
      %v4833 = vadd.f32 %v4613, %v4832
      %4834 = vmatmul.bf16.gmra.mxu0 %v4764
      %v4835 = vpop.f32.mrf.mxu0
      %v4836 = vadd.f32 %v4616, %v4835
      %v4837 = vpop.f32.mrf.mxu0
      %v4838 = vadd.f32 %v4618, %v4837
      %4839 = vmatmul.bf16.gmra.mxu0 %v4767
      %v4840 = vpop.f32.mrf.mxu0
      %v4841 = vadd.f32 %v4621, %v4840
      %v4842 = vpop.f32.mrf.mxu0
      %v4843 = vadd.f32 %v4623, %v4842
      %4844 = vmatmul.bf16.gmra.mxu0 %v4770
      %v4845 = vpop.f32.mrf.mxu0
      %v4846 = vadd.f32 %v4626, %v4845
      %v4847 = vpop.f32.mrf.mxu0
      %v4848 = vadd.f32 %v4628, %v4847
      %4849 = vmatmul.bf16.gmra.mxu0 %v4773
      %v4850 = vpop.f32.mrf.mxu0
      %v4851 = vadd.f32 %v4631, %v4850
      %v4852 = vpop.f32.mrf.mxu0
      %v4853 = vadd.f32 %v4633, %v4852
      %4854 = vmatmul.bf16.gmra.mxu0 %v4776
      %v4855 = vpop.f32.mrf.mxu0
      %v4856 = vadd.f32 %v4636, %v4855
      %v4857 = vpop.f32.mrf.mxu0
      %v4858 = vadd.f32 %v4638, %v4857
      %4859 = vmatmul.bf16.gmra.mxu0 %v4779
      %v4860 = vpop.f32.mrf.mxu0
      %v4861 = vadd.f32 %v4641, %v4860
      %v4862 = vpop.f32.mrf.mxu0
      %v4863 = vadd.f32 %v4643, %v4862
      %4864 = vmatmul.bf16.gmra.mxu0 %v4782
      %v4865 = vpop.f32.mrf.mxu0
      %v4866 = vadd.f32 %v4646, %v4865
      %v4867 = vpop.f32.mrf.mxu0
      %v4868 = vadd.f32 %v4648, %v4867
      %4869 = vmatmul.bf16.gmra.mxu0 %v4785
      %v4870 = vpop.f32.mrf.mxu0
      %v4871 = vadd.f32 %v4651, %v4870
      %v4872 = vpop.f32.mrf.mxu0
      %v4873 = vadd.f32 %v4653, %v4872
      %4874 = vmatmul.bf16.gmra.mxu0 %v4788
      %v4875 = vpop.f32.mrf.mxu0
      %v4876 = vadd.f32 %v4656, %v4875
      %v4877 = vpop.f32.mrf.mxu0
      %v4878 = vadd.f32 %v4658, %v4877
      %4879 = vmatmul.bf16.gmra.mxu0 %v4791
      %v4880 = vpop.f32.mrf.mxu0
      %v4881 = vadd.f32 %v4661, %v4880
      %v4882 = vpop.f32.mrf.mxu0
      %v4883 = vadd.f32 %v4663, %v4882
      %4884 = vdwg.mxu0
      %v4885 = vld [vmem:[#allocation4] sm:$0xf]
      %v4886 = vld [vmem:[#allocation4 + $0x4] sm:$0xf]
      %v4887 = vld [vmem:[#allocation4 + $0x8] sm:$0xf]
      %v4888 = vld [vmem:[#allocation4 + $0xc] sm:$0xf]
      %v4889 = vld [vmem:[#allocation4 + $0x10] sm:$0xf]
      %v4890 = vld [vmem:[#allocation4 + $0x14] sm:$0xf]
      %v4891 = vld [vmem:[#allocation4 + $0x18] sm:$0xf]
      %v4892 = vld [vmem:[#allocation4 + $0x1c] sm:$0xf]
      %v4893 = vld [vmem:[#allocation4 + $0x20] sm:$0xf]
      %v4894 = vld [vmem:[#allocation4 + $0x24] sm:$0xf]
      %v4895 = vld [vmem:[#allocation4 + $0x28] sm:$0xf]
      %v4896 = vld [vmem:[#allocation4 + $0x2c] sm:$0xf]
      %v4897 = vld [vmem:[#allocation4 + $0x30] sm:$0xf]
      %v4898 = vld [vmem:[#allocation4 + $0x34] sm:$0xf]
      %v4899 = vld [vmem:[#allocation4 + $0x38] sm:$0xf]
      %v4900 = vld [vmem:[#allocation4 + $0x3c] sm:$0xf]
      %v4901 = vld [vmem:[#allocation4 + $0x40] sm:$0xf]
      %v4902 = vld [vmem:[#allocation4 + $0x44] sm:$0xf]
      %v4903 = vld [vmem:[#allocation4 + $0x48] sm:$0xf]
      %v4904 = vld [vmem:[#allocation4 + $0x4c] sm:$0xf]
      %v4905 = vld [vmem:[#allocation4 + $0x50] sm:$0xf]
      %v4906 = vld [vmem:[#allocation4 + $0x54] sm:$0xf]
      %v4907 = vld [vmem:[#allocation4 + $0x58] sm:$0xf]
      %v4908 = vld [vmem:[#allocation4 + $0x5c] sm:$0xf]
      %v4909 = vld [vmem:[#allocation4 + $0x60] sm:$0xf]
      %v4910 = vld [vmem:[#allocation4 + $0x64] sm:$0xf]
      %v4911 = vld [vmem:[#allocation4 + $0x68] sm:$0xf]
      %v4912 = vld [vmem:[#allocation4 + $0x6c] sm:$0xf]
      %v4913 = vld [vmem:[#allocation4 + $0x70] sm:$0xf]
      %v4914 = vld [vmem:[#allocation4 + $0x74] sm:$0xf]
      %v4915 = vld [vmem:[#allocation4 + $0x78] sm:$0xf]
      %v4916 = vld [vmem:[#allocation4 + $0x7c] sm:$0xf]
      %s4917 = scalar_lea.vmem %s3, 8
      %v4918 = vld [vmem:[%s4917] sm:$0xf]
      %v4951 = vunpack.c.l.b16 %v4885
      %v4952 = vunpack.c.l.b16 %v4886
      %v4953 = vunpack.c.l.b16 %v4887
      %v4954 = vunpack.c.l.b16 %v4888
      %v4955 = vunpack.c.l.b16 %v4889
      %v4956 = vunpack.c.l.b16 %v4890
      %v4957 = vunpack.c.l.b16 %v4891
      %v4958 = vunpack.c.l.b16 %v4892
      %v4959 = vunpack.c.l.b16 %v4893
      %v4960 = vunpack.c.l.b16 %v4894
      %v4961 = vunpack.c.l.b16 %v4895
      %v4962 = vunpack.c.l.b16 %v4896
      %v4963 = vunpack.c.l.b16 %v4897
      %v4964 = vunpack.c.l.b16 %v4898
      %v4965 = vunpack.c.l.b16 %v4899
      %v4966 = vunpack.c.l.b16 %v4900
      %v4967 = vunpack.c.l.b16 %v4901
      %v4968 = vunpack.c.l.b16 %v4902
      %v4969 = vunpack.c.l.b16 %v4903
      %v4970 = vunpack.c.l.b16 %v4904
      %v4971 = vunpack.c.l.b16 %v4905
      %v4972 = vunpack.c.l.b16 %v4906
      %v4973 = vunpack.c.l.b16 %v4907
      %v4974 = vunpack.c.l.b16 %v4908
      %v4975 = vunpack.c.l.b16 %v4909
      %v4976 = vunpack.c.l.b16 %v4910
      %v4977 = vunpack.c.l.b16 %v4911
      %v4978 = vunpack.c.l.b16 %v4912
      %v4979 = vunpack.c.l.b16 %v4913
      %v4980 = vunpack.c.l.b16 %v4914
      %v4981 = vunpack.c.l.b16 %v4915
      %v4982 = vunpack.c.l.b16 %v4916
      %v4983 = vpack.c.b16 %v4952, %v4951
      %v4984 = vpack.c.b16 %v4954, %v4953
      %v4985 = vpack.c.b16 %v4956, %v4955
      %v4986 = vpack.c.b16 %v4958, %v4957
      %v4987 = vpack.c.b16 %v4960, %v4959
      %v4988 = vpack.c.b16 %v4962, %v4961
      %v4989 = vpack.c.b16 %v4964, %v4963
      %v4990 = vpack.c.b16 %v4966, %v4965
      %v4991 = vpack.c.b16 %v4968, %v4967
      %v4992 = vpack.c.b16 %v4970, %v4969
      %v4993 = vpack.c.b16 %v4972, %v4971
      %v4994 = vpack.c.b16 %v4974, %v4973
      %v4995 = vpack.c.b16 %v4976, %v4975
      %v4996 = vpack.c.b16 %v4978, %v4977
      %v4997 = vpack.c.b16 %v4980, %v4979
      %v4998 = vpack.c.b16 %v4982, %v4981
      %v5000 = vsel %vm1191, %v4983, 0
      %v5003 = vsel %vm1191, %v4984, 0
      %v5006 = vsel %vm1191, %v4985, 0
      %v5009 = vsel %vm1191, %v4986, 0
      %v5012 = vsel %vm1191, %v4987, 0
      %v5015 = vsel %vm1191, %v4988, 0
      %v5018 = vsel %vm1191, %v4989, 0
      %v5021 = vsel %vm1191, %v4990, 0
      %v5024 = vsel %vm1191, %v4991, 0
      %v5027 = vsel %vm1191, %v4992, 0
      %v5030 = vsel %vm1191, %v4993, 0
      %v5033 = vsel %vm1191, %v4994, 0
      %v5036 = vsel %vm1191, %v4995, 0
      %v5039 = vsel %vm1191, %v4996, 0
      %v5042 = vsel %vm1191, %v4997, 0
      %v5045 = vsel %vm1191, %v4998, 0
      %v5048 = vsel %vm1240, %v4918, 0
      %5050 = vmatpush.bf16.msra.mxu0 0
      %5051 = vmatpush.bf16.msra.mxu0 0
      %5052 = vmatpush.bf16.msra.mxu0 0
      %5053 = vmatpush.bf16.msra.mxu0 0
      %5054 = vmatpush.bf16.msra.mxu0 0
      %5055 = vmatpush.bf16.msra.mxu0 0
      %5056 = vmatpush.bf16.msra.mxu0 0
      %5057 = vmatpush.bf16.msra.mxu0 %v5048
      %5058 = vmatmul.bf16.gmra.mxu0 %v5000
      %v5059 = vpop.f32.mrf.mxu0
      %v5060 = vadd.f32 0.0, %v5059
      %v5061 = vpop.f32.mrf.mxu0
      %v5062 = vadd.f32 0.0, %v5061
      %5063 = vmatmul.bf16.gmra.mxu0 %v5003
      %v5064 = vpop.f32.mrf.mxu0
      %v5065 = vadd.f32 0.0, %v5064
      %v5066 = vpop.f32.mrf.mxu0
      %v5067 = vadd.f32 0.0, %v5066
      %5068 = vmatmul.bf16.gmra.mxu0 %v5006
      %v5069 = vpop.f32.mrf.mxu0
      %v5070 = vadd.f32 0.0, %v5069
      %v5071 = vpop.f32.mrf.mxu0
      %v5072 = vadd.f32 0.0, %v5071
      %5073 = vmatmul.bf16.gmra.mxu0 %v5009
      %v5074 = vpop.f32.mrf.mxu0
      %v5075 = vadd.f32 0.0, %v5074
      %v5076 = vpop.f32.mrf.mxu0
      %v5077 = vadd.f32 0.0, %v5076
      %5078 = vmatmul.bf16.gmra.mxu0 %v5012
      %v5079 = vpop.f32.mrf.mxu0
      %v5080 = vadd.f32 0.0, %v5079
      %v5081 = vpop.f32.mrf.mxu0
      %v5082 = vadd.f32 0.0, %v5081
      %5083 = vmatmul.bf16.gmra.mxu0 %v5015
      %v5084 = vpop.f32.mrf.mxu0
      %v5085 = vadd.f32 0.0, %v5084
      %v5086 = vpop.f32.mrf.mxu0
      %v5087 = vadd.f32 0.0, %v5086
      %5088 = vmatmul.bf16.gmra.mxu0 %v5018
      %v5089 = vpop.f32.mrf.mxu0
      %v5090 = vadd.f32 0.0, %v5089
      %v5091 = vpop.f32.mrf.mxu0
      %v5092 = vadd.f32 0.0, %v5091
      %5093 = vmatmul.bf16.gmra.mxu0 %v5021
      %v5094 = vpop.f32.mrf.mxu0
      %v5095 = vadd.f32 0.0, %v5094
      %v5096 = vpop.f32.mrf.mxu0
      %v5097 = vadd.f32 0.0, %v5096
      %5098 = vmatmul.bf16.gmra.mxu0 %v5024
      %v5099 = vpop.f32.mrf.mxu0
      %v5100 = vadd.f32 0.0, %v5099
      %v5101 = vpop.f32.mrf.mxu0
      %v5102 = vadd.f32 0.0, %v5101
      %5103 = vmatmul.bf16.gmra.mxu0 %v5027
      %v5104 = vpop.f32.mrf.mxu0
      %v5105 = vadd.f32 0.0, %v5104
      %v5106 = vpop.f32.mrf.mxu0
      %v5107 = vadd.f32 0.0, %v5106
      %5108 = vmatmul.bf16.gmra.mxu0 %v5030
      %v5109 = vpop.f32.mrf.mxu0
      %v5110 = vadd.f32 0.0, %v5109
      %v5111 = vpop.f32.mrf.mxu0
      %v5112 = vadd.f32 0.0, %v5111
      %5113 = vmatmul.bf16.gmra.mxu0 %v5033
      %v5114 = vpop.f32.mrf.mxu0
      %v5115 = vadd.f32 0.0, %v5114
      %v5116 = vpop.f32.mrf.mxu0
      %v5117 = vadd.f32 0.0, %v5116
      %5118 = vmatmul.bf16.gmra.mxu0 %v5036
      %v5119 = vpop.f32.mrf.mxu0
      %v5120 = vadd.f32 0.0, %v5119
      %v5121 = vpop.f32.mrf.mxu0
      %v5122 = vadd.f32 0.0, %v5121
      %5123 = vmatmul.bf16.gmra.mxu0 %v5039
      %v5124 = vpop.f32.mrf.mxu0
      %v5125 = vadd.f32 0.0, %v5124
      %v5126 = vpop.f32.mrf.mxu0
      %v5127 = vadd.f32 0.0, %v5126
      %5128 = vmatmul.bf16.gmra.mxu0 %v5042
      %v5129 = vpop.f32.mrf.mxu0
      %v5130 = vadd.f32 0.0, %v5129
      %v5131 = vpop.f32.mrf.mxu0
      %v5132 = vadd.f32 0.0, %v5131
      %5133 = vmatmul.bf16.gmra.mxu0 %v5045
      %v5134 = vpop.f32.mrf.mxu0
      %v5135 = vadd.f32 0.0, %v5134
      %v5136 = vpop.f32.mrf.mxu0
      %v5137 = vadd.f32 0.0, %v5136
      %5138 = vdwg.mxu0
      %v5139 = vadd.f32 %v4806, %v5060
      %v5140 = vadd.f32 %v4808, %v5062
      %v5141 = vadd.f32 %v4811, %v5065
      %v5142 = vadd.f32 %v4813, %v5067
      %v5143 = vadd.f32 %v4816, %v5070
      %v5144 = vadd.f32 %v4818, %v5072
      %v5145 = vadd.f32 %v4821, %v5075
      %v5146 = vadd.f32 %v4823, %v5077
      %v5147 = vadd.f32 %v4826, %v5080
      %v5148 = vadd.f32 %v4828, %v5082
      %v5149 = vadd.f32 %v4831, %v5085
      %v5150 = vadd.f32 %v4833, %v5087
      %v5151 = vadd.f32 %v4836, %v5090
      %v5152 = vadd.f32 %v4838, %v5092
      %v5153 = vadd.f32 %v4841, %v5095
      %v5154 = vadd.f32 %v4843, %v5097
      %v5155 = vadd.f32 %v4846, %v5100
      %v5156 = vadd.f32 %v4848, %v5102
      %v5157 = vadd.f32 %v4851, %v5105
      %v5158 = vadd.f32 %v4853, %v5107
      %v5159 = vadd.f32 %v4856, %v5110
      %v5160 = vadd.f32 %v4858, %v5112
      %v5161 = vadd.f32 %v4861, %v5115
      %v5162 = vadd.f32 %v4863, %v5117
      %v5163 = vadd.f32 %v4866, %v5120
      %v5164 = vadd.f32 %v4868, %v5122
      %v5165 = vadd.f32 %v4871, %v5125
      %v5166 = vadd.f32 %v4873, %v5127
      %v5167 = vadd.f32 %v4876, %v5130
      %v5168 = vadd.f32 %v4878, %v5132
      %v5169 = vadd.f32 %v4881, %v5135
      %v5170 = vadd.f32 %v4883, %v5137
      %v5171 = vld [vmem:[%s339] sm:$0xf]
      %v5172 = vld [vmem:[%s339 + $0x4] sm:$0xf]
      %v5173 = vld [vmem:[%s339 + $0x8] sm:$0xf]
      %v5174 = vld [vmem:[%s339 + $0xc] sm:$0xf]
      %v5175 = vld [vmem:[%s339 + $0x10] sm:$0xf]
      %v5176 = vld [vmem:[%s339 + $0x14] sm:$0xf]
      %v5177 = vld [vmem:[%s339 + $0x18] sm:$0xf]
      %v5178 = vld [vmem:[%s339 + $0x1c] sm:$0xf]
      %v5179 = vld [vmem:[%s339 + $0x20] sm:$0xf]
      %v5180 = vld [vmem:[%s339 + $0x24] sm:$0xf]
      %v5181 = vld [vmem:[%s339 + $0x28] sm:$0xf]
      %v5182 = vld [vmem:[%s339 + $0x2c] sm:$0xf]
      %v5183 = vld [vmem:[%s339 + $0x30] sm:$0xf]
      %v5184 = vld [vmem:[%s339 + $0x34] sm:$0xf]
      %v5185 = vld [vmem:[%s339 + $0x38] sm:$0xf]
      %v5186 = vld [vmem:[%s339 + $0x3c] sm:$0xf]
      %v5187 = vld [vmem:[%s339 + $0x40] sm:$0xf]
      %v5188 = vld [vmem:[%s339 + $0x44] sm:$0xf]
      %v5189 = vld [vmem:[%s339 + $0x48] sm:$0xf]
      %v5190 = vld [vmem:[%s339 + $0x4c] sm:$0xf]
      %v5191 = vld [vmem:[%s339 + $0x50] sm:$0xf]
      %v5192 = vld [vmem:[%s339 + $0x54] sm:$0xf]
      %v5193 = vld [vmem:[%s339 + $0x58] sm:$0xf]
      %v5194 = vld [vmem:[%s339 + $0x5c] sm:$0xf]
      %v5195 = vld [vmem:[%s339 + $0x60] sm:$0xf]
      %v5196 = vld [vmem:[%s339 + $0x64] sm:$0xf]
      %v5197 = vld [vmem:[%s339 + $0x68] sm:$0xf]
      %v5198 = vld [vmem:[%s339 + $0x6c] sm:$0xf]
      %v5199 = vld [vmem:[%s339 + $0x70] sm:$0xf]
      %v5200 = vld [vmem:[%s339 + $0x74] sm:$0xf]
      %v5201 = vld [vmem:[%s339 + $0x78] sm:$0xf]
      %v5202 = vld [vmem:[%s339 + $0x7c] sm:$0xf]
      %s5203 = scalar_lea.vmem %s3, 12
      %v5204 = vld [vmem:[%s5203] sm:$0xf]
      %v5237 = vunpack.c.l.b16 %v5171
      %v5238 = vunpack.c.l.b16 %v5172
      %v5239 = vunpack.c.l.b16 %v5173
      %v5240 = vunpack.c.l.b16 %v5174
      %v5241 = vunpack.c.l.b16 %v5175
      %v5242 = vunpack.c.l.b16 %v5176
      %v5243 = vunpack.c.l.b16 %v5177
      %v5244 = vunpack.c.l.b16 %v5178
      %v5245 = vunpack.c.l.b16 %v5179
      %v5246 = vunpack.c.l.b16 %v5180
      %v5247 = vunpack.c.l.b16 %v5181
      %v5248 = vunpack.c.l.b16 %v5182
      %v5249 = vunpack.c.l.b16 %v5183
      %v5250 = vunpack.c.l.b16 %v5184
      %v5251 = vunpack.c.l.b16 %v5185
      %v5252 = vunpack.c.l.b16 %v5186
      %v5253 = vunpack.c.l.b16 %v5187
      %v5254 = vunpack.c.l.b16 %v5188
      %v5255 = vunpack.c.l.b16 %v5189
      %v5256 = vunpack.c.l.b16 %v5190
      %v5257 = vunpack.c.l.b16 %v5191
      %v5258 = vunpack.c.l.b16 %v5192
      %v5259 = vunpack.c.l.b16 %v5193
      %v5260 = vunpack.c.l.b16 %v5194
      %v5261 = vunpack.c.l.b16 %v5195
      %v5262 = vunpack.c.l.b16 %v5196
      %v5263 = vunpack.c.l.b16 %v5197
      %v5264 = vunpack.c.l.b16 %v5198
      %v5265 = vunpack.c.l.b16 %v5199
      %v5266 = vunpack.c.l.b16 %v5200
      %v5267 = vunpack.c.l.b16 %v5201
      %v5268 = vunpack.c.l.b16 %v5202
      %v5269 = vpack.c.b16 %v5238, %v5237
      %v5270 = vpack.c.b16 %v5240, %v5239
      %v5271 = vpack.c.b16 %v5242, %v5241
      %v5272 = vpack.c.b16 %v5244, %v5243
      %v5273 = vpack.c.b16 %v5246, %v5245
      %v5274 = vpack.c.b16 %v5248, %v5247
      %v5275 = vpack.c.b16 %v5250, %v5249
      %v5276 = vpack.c.b16 %v5252, %v5251
      %v5277 = vpack.c.b16 %v5254, %v5253
      %v5278 = vpack.c.b16 %v5256, %v5255
      %v5279 = vpack.c.b16 %v5258, %v5257
      %v5280 = vpack.c.b16 %v5260, %v5259
      %v5281 = vpack.c.b16 %v5262, %v5261
      %v5282 = vpack.c.b16 %v5264, %v5263
      %v5283 = vpack.c.b16 %v5266, %v5265
      %v5284 = vpack.c.b16 %v5268, %v5267
      %v5286 = vsel %vm1191, %v5269, 0
      %v5289 = vsel %vm1191, %v5270, 0
      %v5292 = vsel %vm1191, %v5271, 0
      %v5295 = vsel %vm1191, %v5272, 0
      %v5298 = vsel %vm1191, %v5273, 0
      %v5301 = vsel %vm1191, %v5274, 0
      %v5304 = vsel %vm1191, %v5275, 0
      %v5307 = vsel %vm1191, %v5276, 0
      %v5310 = vsel %vm1191, %v5277, 0
      %v5313 = vsel %vm1191, %v5278, 0
      %v5316 = vsel %vm1191, %v5279, 0
      %v5319 = vsel %vm1191, %v5280, 0
      %v5322 = vsel %vm1191, %v5281, 0
      %v5325 = vsel %vm1191, %v5282, 0
      %v5328 = vsel %vm1191, %v5283, 0
      %v5331 = vsel %vm1191, %v5284, 0
      %v5334 = vsel %vm1240, %v5204, 0
      %5336 = vmatpush.bf16.msra.mxu0 0
      %5337 = vmatpush.bf16.msra.mxu0 0
      %5338 = vmatpush.bf16.msra.mxu0 0
      %5339 = vmatpush.bf16.msra.mxu0 0
      %5340 = vmatpush.bf16.msra.mxu0 0
      %5341 = vmatpush.bf16.msra.mxu0 0
      %5342 = vmatpush.bf16.msra.mxu0 0
      %5343 = vmatpush.bf16.msra.mxu0 %v5334
      %5344 = vmatmul.bf16.gmra.mxu0 %v5286
      %v5345 = vpop.f32.mrf.mxu0
      %v5346 = vadd.f32 0.0, %v5345
      %v5347 = vpop.f32.mrf.mxu0
      %v5348 = vadd.f32 0.0, %v5347
      %5349 = vmatmul.bf16.gmra.mxu0 %v5289
      %v5350 = vpop.f32.mrf.mxu0
      %v5351 = vadd.f32 0.0, %v5350
      %v5352 = vpop.f32.mrf.mxu0
      %v5353 = vadd.f32 0.0, %v5352
      %5354 = vmatmul.bf16.gmra.mxu0 %v5292
      %v5355 = vpop.f32.mrf.mxu0
      %v5356 = vadd.f32 0.0, %v5355
      %v5357 = vpop.f32.mrf.mxu0
      %v5358 = vadd.f32 0.0, %v5357
      %5359 = vmatmul.bf16.gmra.mxu0 %v5295
      %v5360 = vpop.f32.mrf.mxu0
      %v5361 = vadd.f32 0.0, %v5360
      %v5362 = vpop.f32.mrf.mxu0
      %v5363 = vadd.f32 0.0, %v5362
      %5364 = vmatmul.bf16.gmra.mxu0 %v5298
      %v5365 = vpop.f32.mrf.mxu0
      %v5366 = vadd.f32 0.0, %v5365
      %v5367 = vpop.f32.mrf.mxu0
      %v5368 = vadd.f32 0.0, %v5367
      %5369 = vmatmul.bf16.gmra.mxu0 %v5301
      %v5370 = vpop.f32.mrf.mxu0
      %v5371 = vadd.f32 0.0, %v5370
      %v5372 = vpop.f32.mrf.mxu0
      %v5373 = vadd.f32 0.0, %v5372
      %5374 = vmatmul.bf16.gmra.mxu0 %v5304
      %v5375 = vpop.f32.mrf.mxu0
      %v5376 = vadd.f32 0.0, %v5375
      %v5377 = vpop.f32.mrf.mxu0
      %v5378 = vadd.f32 0.0, %v5377
      %5379 = vmatmul.bf16.gmra.mxu0 %v5307
      %v5380 = vpop.f32.mrf.mxu0
      %v5381 = vadd.f32 0.0, %v5380
      %v5382 = vpop.f32.mrf.mxu0
      %v5383 = vadd.f32 0.0, %v5382
      %5384 = vmatmul.bf16.gmra.mxu0 %v5310
      %v5385 = vpop.f32.mrf.mxu0
      %v5386 = vadd.f32 0.0, %v5385
      %v5387 = vpop.f32.mrf.mxu0
      %v5388 = vadd.f32 0.0, %v5387
      %5389 = vmatmul.bf16.gmra.mxu0 %v5313
      %v5390 = vpop.f32.mrf.mxu0
      %v5391 = vadd.f32 0.0, %v5390
      %v5392 = vpop.f32.mrf.mxu0
      %v5393 = vadd.f32 0.0, %v5392
      %5394 = vmatmul.bf16.gmra.mxu0 %v5316
      %v5395 = vpop.f32.mrf.mxu0
      %v5396 = vadd.f32 0.0, %v5395
      %v5397 = vpop.f32.mrf.mxu0
      %v5398 = vadd.f32 0.0, %v5397
      %5399 = vmatmul.bf16.gmra.mxu0 %v5319
      %v5400 = vpop.f32.mrf.mxu0
      %v5401 = vadd.f32 0.0, %v5400
      %v5402 = vpop.f32.mrf.mxu0
      %v5403 = vadd.f32 0.0, %v5402
      %5404 = vmatmul.bf16.gmra.mxu0 %v5322
      %v5405 = vpop.f32.mrf.mxu0
      %v5406 = vadd.f32 0.0, %v5405
      %v5407 = vpop.f32.mrf.mxu0
      %v5408 = vadd.f32 0.0, %v5407
      %5409 = vmatmul.bf16.gmra.mxu0 %v5325
      %v5410 = vpop.f32.mrf.mxu0
      %v5411 = vadd.f32 0.0, %v5410
      %v5412 = vpop.f32.mrf.mxu0
      %v5413 = vadd.f32 0.0, %v5412
      %5414 = vmatmul.bf16.gmra.mxu0 %v5328
      %v5415 = vpop.f32.mrf.mxu0
      %v5416 = vadd.f32 0.0, %v5415
      %v5417 = vpop.f32.mrf.mxu0
      %v5418 = vadd.f32 0.0, %v5417
      %5419 = vmatmul.bf16.gmra.mxu0 %v5331
      %v5420 = vpop.f32.mrf.mxu0
      %v5421 = vadd.f32 0.0, %v5420
      %v5422 = vpop.f32.mrf.mxu0
      %v5423 = vadd.f32 0.0, %v5422
      %5424 = vdwg.mxu0
      %v5425 = vadd.f32 %v5139, %v5346
      %v5426 = vadd.f32 %v5140, %v5348
      %v5427 = vadd.f32 %v5141, %v5351
      %v5428 = vadd.f32 %v5142, %v5353
      %v5429 = vadd.f32 %v5143, %v5356
      %v5430 = vadd.f32 %v5144, %v5358
      %v5431 = vadd.f32 %v5145, %v5361
      %v5432 = vadd.f32 %v5146, %v5363
      %v5433 = vadd.f32 %v5147, %v5366
      %v5434 = vadd.f32 %v5148, %v5368
      %v5435 = vadd.f32 %v5149, %v5371
      %v5436 = vadd.f32 %v5150, %v5373
      %v5437 = vadd.f32 %v5151, %v5376
      %v5438 = vadd.f32 %v5152, %v5378
      %v5439 = vadd.f32 %v5153, %v5381
      %v5440 = vadd.f32 %v5154, %v5383
      %v5441 = vadd.f32 %v5155, %v5386
      %v5442 = vadd.f32 %v5156, %v5388
      %v5443 = vadd.f32 %v5157, %v5391
      %v5444 = vadd.f32 %v5158, %v5393
      %v5445 = vadd.f32 %v5159, %v5396
      %v5446 = vadd.f32 %v5160, %v5398
      %v5447 = vadd.f32 %v5161, %v5401
      %v5448 = vadd.f32 %v5162, %v5403
      %v5449 = vadd.f32 %v5163, %v5406
      %v5450 = vadd.f32 %v5164, %v5408
      %v5451 = vadd.f32 %v5165, %v5411
      %v5452 = vadd.f32 %v5166, %v5413
      %v5453 = vadd.f32 %v5167, %v5416
      %v5454 = vadd.f32 %v5168, %v5418
      %v5455 = vadd.f32 %v5169, %v5421
      %v5456 = vadd.f32 %v5170, %v5423
      %v5457 = vld [vmem:[%s306] sm:$0xf]
      %v5458 = vld [vmem:[%s306 + $0x4] sm:$0xf]
      %v5459 = vld [vmem:[%s306 + $0x8] sm:$0xf]
      %v5460 = vld [vmem:[%s306 + $0xc] sm:$0xf]
      %v5461 = vld [vmem:[%s306 + $0x10] sm:$0xf]
      %v5462 = vld [vmem:[%s306 + $0x14] sm:$0xf]
      %v5463 = vld [vmem:[%s306 + $0x18] sm:$0xf]
      %v5464 = vld [vmem:[%s306 + $0x1c] sm:$0xf]
      %v5465 = vld [vmem:[%s306 + $0x20] sm:$0xf]
      %v5466 = vld [vmem:[%s306 + $0x24] sm:$0xf]
      %v5467 = vld [vmem:[%s306 + $0x28] sm:$0xf]
      %v5468 = vld [vmem:[%s306 + $0x2c] sm:$0xf]
      %v5469 = vld [vmem:[%s306 + $0x30] sm:$0xf]
      %v5470 = vld [vmem:[%s306 + $0x34] sm:$0xf]
      %v5471 = vld [vmem:[%s306 + $0x38] sm:$0xf]
      %v5472 = vld [vmem:[%s306 + $0x3c] sm:$0xf]
      %v5473 = vld [vmem:[%s306 + $0x40] sm:$0xf]
      %v5474 = vld [vmem:[%s306 + $0x44] sm:$0xf]
      %v5475 = vld [vmem:[%s306 + $0x48] sm:$0xf]
      %v5476 = vld [vmem:[%s306 + $0x4c] sm:$0xf]
      %v5477 = vld [vmem:[%s306 + $0x50] sm:$0xf]
      %v5478 = vld [vmem:[%s306 + $0x54] sm:$0xf]
      %v5479 = vld [vmem:[%s306 + $0x58] sm:$0xf]
      %v5480 = vld [vmem:[%s306 + $0x5c] sm:$0xf]
      %v5481 = vld [vmem:[%s306 + $0x60] sm:$0xf]
      %v5482 = vld [vmem:[%s306 + $0x64] sm:$0xf]
      %v5483 = vld [vmem:[%s306 + $0x68] sm:$0xf]
      %v5484 = vld [vmem:[%s306 + $0x6c] sm:$0xf]
      %v5485 = vld [vmem:[%s306 + $0x70] sm:$0xf]
      %v5486 = vld [vmem:[%s306 + $0x74] sm:$0xf]
      %v5487 = vld [vmem:[%s306 + $0x78] sm:$0xf]
      %v5488 = vld [vmem:[%s306 + $0x7c] sm:$0xf]
      %s5489 = scalar_lea.vmem %s3, 16
      %v5490 = vld [vmem:[%s5489] sm:$0xf]
      %v5523 = vunpack.c.l.b16 %v5457
      %v5524 = vunpack.c.l.b16 %v5458
      %v5525 = vunpack.c.l.b16 %v5459
      %v5526 = vunpack.c.l.b16 %v5460
      %v5527 = vunpack.c.l.b16 %v5461
      %v5528 = vunpack.c.l.b16 %v5462
      %v5529 = vunpack.c.l.b16 %v5463
      %v5530 = vunpack.c.l.b16 %v5464
      %v5531 = vunpack.c.l.b16 %v5465
      %v5532 = vunpack.c.l.b16 %v5466
      %v5533 = vunpack.c.l.b16 %v5467
      %v5534 = vunpack.c.l.b16 %v5468
      %v5535 = vunpack.c.l.b16 %v5469
      %v5536 = vunpack.c.l.b16 %v5470
      %v5537 = vunpack.c.l.b16 %v5471
      %v5538 = vunpack.c.l.b16 %v5472
      %v5539 = vunpack.c.l.b16 %v5473
      %v5540 = vunpack.c.l.b16 %v5474
      %v5541 = vunpack.c.l.b16 %v5475
      %v5542 = vunpack.c.l.b16 %v5476
      %v5543 = vunpack.c.l.b16 %v5477
      %v5544 = vunpack.c.l.b16 %v5478
      %v5545 = vunpack.c.l.b16 %v5479
      %v5546 = vunpack.c.l.b16 %v5480
      %v5547 = vunpack.c.l.b16 %v5481
      %v5548 = vunpack.c.l.b16 %v5482
      %v5549 = vunpack.c.l.b16 %v5483
      %v5550 = vunpack.c.l.b16 %v5484
      %v5551 = vunpack.c.l.b16 %v5485
      %v5552 = vunpack.c.l.b16 %v5486
      %v5553 = vunpack.c.l.b16 %v5487
      %v5554 = vunpack.c.l.b16 %v5488
      %v5555 = vpack.c.b16 %v5524, %v5523
      %v5556 = vpack.c.b16 %v5526, %v5525
      %v5557 = vpack.c.b16 %v5528, %v5527
      %v5558 = vpack.c.b16 %v5530, %v5529
      %v5559 = vpack.c.b16 %v5532, %v5531
      %v5560 = vpack.c.b16 %v5534, %v5533
      %v5561 = vpack.c.b16 %v5536, %v5535
      %v5562 = vpack.c.b16 %v5538, %v5537
      %v5563 = vpack.c.b16 %v5540, %v5539
      %v5564 = vpack.c.b16 %v5542, %v5541
      %v5565 = vpack.c.b16 %v5544, %v5543
      %v5566 = vpack.c.b16 %v5546, %v5545
      %v5567 = vpack.c.b16 %v5548, %v5547
      %v5568 = vpack.c.b16 %v5550, %v5549
      %v5569 = vpack.c.b16 %v5552, %v5551
      %v5570 = vpack.c.b16 %v5554, %v5553
      %v5572 = vsel %vm1191, %v5555, 0
      %v5575 = vsel %vm1191, %v5556, 0
      %v5578 = vsel %vm1191, %v5557, 0
      %v5581 = vsel %vm1191, %v5558, 0
      %v5584 = vsel %vm1191, %v5559, 0
      %v5587 = vsel %vm1191, %v5560, 0
      %v5590 = vsel %vm1191, %v5561, 0
      %v5593 = vsel %vm1191, %v5562, 0
      %v5596 = vsel %vm1191, %v5563, 0
      %v5599 = vsel %vm1191, %v5564, 0
      %v5602 = vsel %vm1191, %v5565, 0
      %v5605 = vsel %vm1191, %v5566, 0
      %v5608 = vsel %vm1191, %v5567, 0
      %v5611 = vsel %vm1191, %v5568, 0
      %v5614 = vsel %vm1191, %v5569, 0
      %v5617 = vsel %vm1191, %v5570, 0
      %v5620 = vsel %vm1240, %v5490, 0
      %5622 = vmatpush.bf16.msra.mxu0 0
      %5623 = vmatpush.bf16.msra.mxu0 0
      %5624 = vmatpush.bf16.msra.mxu0 0
      %5625 = vmatpush.bf16.msra.mxu0 0
      %5626 = vmatpush.bf16.msra.mxu0 0
      %5627 = vmatpush.bf16.msra.mxu0 0
      %5628 = vmatpush.bf16.msra.mxu0 0
      %5629 = vmatpush.bf16.msra.mxu0 %v5620
      %5630 = vmatmul.bf16.gmra.mxu0 %v5572
      %v5631 = vpop.f32.mrf.mxu0
      %v5632 = vadd.f32 0.0, %v5631
      %v5633 = vpop.f32.mrf.mxu0
      %v5634 = vadd.f32 0.0, %v5633
      %5635 = vmatmul.bf16.gmra.mxu0 %v5575
      %v5636 = vpop.f32.mrf.mxu0
      %v5637 = vadd.f32 0.0, %v5636
      %v5638 = vpop.f32.mrf.mxu0
      %v5639 = vadd.f32 0.0, %v5638
      %5640 = vmatmul.bf16.gmra.mxu0 %v5578
      %v5641 = vpop.f32.mrf.mxu0
      %v5642 = vadd.f32 0.0, %v5641
      %v5643 = vpop.f32.mrf.mxu0
      %v5644 = vadd.f32 0.0, %v5643
      %5645 = vmatmul.bf16.gmra.mxu0 %v5581
      %v5646 = vpop.f32.mrf.mxu0
      %v5647 = vadd.f32 0.0, %v5646
      %v5648 = vpop.f32.mrf.mxu0
      %v5649 = vadd.f32 0.0, %v5648
      %5650 = vmatmul.bf16.gmra.mxu0 %v5584
      %v5651 = vpop.f32.mrf.mxu0
      %v5652 = vadd.f32 0.0, %v5651
      %v5653 = vpop.f32.mrf.mxu0
      %v5654 = vadd.f32 0.0, %v5653
      %5655 = vmatmul.bf16.gmra.mxu0 %v5587
      %v5656 = vpop.f32.mrf.mxu0
      %v5657 = vadd.f32 0.0, %v5656
      %v5658 = vpop.f32.mrf.mxu0
      %v5659 = vadd.f32 0.0, %v5658
      %5660 = vmatmul.bf16.gmra.mxu0 %v5590
      %v5661 = vpop.f32.mrf.mxu0
      %v5662 = vadd.f32 0.0, %v5661
      %v5663 = vpop.f32.mrf.mxu0
      %v5664 = vadd.f32 0.0, %v5663
      %5665 = vmatmul.bf16.gmra.mxu0 %v5593
      %v5666 = vpop.f32.mrf.mxu0
      %v5667 = vadd.f32 0.0, %v5666
      %v5668 = vpop.f32.mrf.mxu0
      %v5669 = vadd.f32 0.0, %v5668
      %5670 = vmatmul.bf16.gmra.mxu0 %v5596
      %v5671 = vpop.f32.mrf.mxu0
      %v5672 = vadd.f32 0.0, %v5671
      %v5673 = vpop.f32.mrf.mxu0
      %v5674 = vadd.f32 0.0, %v5673
      %5675 = vmatmul.bf16.gmra.mxu0 %v5599
      %v5676 = vpop.f32.mrf.mxu0
      %v5677 = vadd.f32 0.0, %v5676
      %v5678 = vpop.f32.mrf.mxu0
      %v5679 = vadd.f32 0.0, %v5678
      %5680 = vmatmul.bf16.gmra.mxu0 %v5602
      %v5681 = vpop.f32.mrf.mxu0
      %v5682 = vadd.f32 0.0, %v5681
      %v5683 = vpop.f32.mrf.mxu0
      %v5684 = vadd.f32 0.0, %v5683
      %5685 = vmatmul.bf16.gmra.mxu0 %v5605
      %v5686 = vpop.f32.mrf.mxu0
      %v5687 = vadd.f32 0.0, %v5686
      %v5688 = vpop.f32.mrf.mxu0
      %v5689 = vadd.f32 0.0, %v5688
      %5690 = vmatmul.bf16.gmra.mxu0 %v5608
      %v5691 = vpop.f32.mrf.mxu0
      %v5692 = vadd.f32 0.0, %v5691
      %v5693 = vpop.f32.mrf.mxu0
      %v5694 = vadd.f32 0.0, %v5693
      %5695 = vmatmul.bf16.gmra.mxu0 %v5611
      %v5696 = vpop.f32.mrf.mxu0
      %v5697 = vadd.f32 0.0, %v5696
      %v5698 = vpop.f32.mrf.mxu0
      %v5699 = vadd.f32 0.0, %v5698
      %5700 = vmatmul.bf16.gmra.mxu0 %v5614
      %v5701 = vpop.f32.mrf.mxu0
      %v5702 = vadd.f32 0.0, %v5701
      %v5703 = vpop.f32.mrf.mxu0
      %v5704 = vadd.f32 0.0, %v5703
      %5705 = vmatmul.bf16.gmra.mxu0 %v5617
      %v5706 = vpop.f32.mrf.mxu0
      %v5707 = vadd.f32 0.0, %v5706
      %v5708 = vpop.f32.mrf.mxu0
      %v5709 = vadd.f32 0.0, %v5708
      %5710 = vdwg.mxu0
      %v5711 = vadd.f32 %v5425, %v5632
      %v5712 = vadd.f32 %v5426, %v5634
      %v5713 = vadd.f32 %v5427, %v5637
      %v5714 = vadd.f32 %v5428, %v5639
      %v5715 = vadd.f32 %v5429, %v5642
      %v5716 = vadd.f32 %v5430, %v5644
      %v5717 = vadd.f32 %v5431, %v5647
      %v5718 = vadd.f32 %v5432, %v5649
      %v5719 = vadd.f32 %v5433, %v5652
      %v5720 = vadd.f32 %v5434, %v5654
      %v5721 = vadd.f32 %v5435, %v5657
      %v5722 = vadd.f32 %v5436, %v5659
      %v5723 = vadd.f32 %v5437, %v5662
      %v5724 = vadd.f32 %v5438, %v5664
      %v5725 = vadd.f32 %v5439, %v5667
      %v5726 = vadd.f32 %v5440, %v5669
      %v5727 = vadd.f32 %v5441, %v5672
      %v5728 = vadd.f32 %v5442, %v5674
      %v5729 = vadd.f32 %v5443, %v5677
      %v5730 = vadd.f32 %v5444, %v5679
      %v5731 = vadd.f32 %v5445, %v5682
      %v5732 = vadd.f32 %v5446, %v5684
      %v5733 = vadd.f32 %v5447, %v5687
      %v5734 = vadd.f32 %v5448, %v5689
      %v5735 = vadd.f32 %v5449, %v5692
      %v5736 = vadd.f32 %v5450, %v5694
      %v5737 = vadd.f32 %v5451, %v5697
      %v5738 = vadd.f32 %v5452, %v5699
      %v5739 = vadd.f32 %v5453, %v5702
      %v5740 = vadd.f32 %v5454, %v5704
      %v5741 = vadd.f32 %v5455, %v5707
      %v5742 = vadd.f32 %v5456, %v5709
      %v5743 = vld [vmem:[%s748] sm:$0xf]
      %v5744 = vld [vmem:[%s748 + $0x4] sm:$0xf]
      %v5745 = vld [vmem:[%s748 + $0x8] sm:$0xf]
      %v5746 = vld [vmem:[%s748 + $0xc] sm:$0xf]
      %v5747 = vld [vmem:[%s748 + $0x10] sm:$0xf]
      %v5748 = vld [vmem:[%s748 + $0x14] sm:$0xf]
      %v5749 = vld [vmem:[%s748 + $0x18] sm:$0xf]
      %v5750 = vld [vmem:[%s748 + $0x1c] sm:$0xf]
      %v5751 = vld [vmem:[%s748 + $0x20] sm:$0xf]
      %v5752 = vld [vmem:[%s748 + $0x24] sm:$0xf]
      %v5753 = vld [vmem:[%s748 + $0x28] sm:$0xf]
      %v5754 = vld [vmem:[%s748 + $0x2c] sm:$0xf]
      %v5755 = vld [vmem:[%s748 + $0x30] sm:$0xf]
      %v5756 = vld [vmem:[%s748 + $0x34] sm:$0xf]
      %v5757 = vld [vmem:[%s748 + $0x38] sm:$0xf]
      %v5758 = vld [vmem:[%s748 + $0x3c] sm:$0xf]
      %v5759 = vld [vmem:[%s748 + $0x40] sm:$0xf]
      %v5760 = vld [vmem:[%s748 + $0x44] sm:$0xf]
      %v5761 = vld [vmem:[%s748 + $0x48] sm:$0xf]
      %v5762 = vld [vmem:[%s748 + $0x4c] sm:$0xf]
      %v5763 = vld [vmem:[%s748 + $0x50] sm:$0xf]
      %v5764 = vld [vmem:[%s748 + $0x54] sm:$0xf]
      %v5765 = vld [vmem:[%s748 + $0x58] sm:$0xf]
      %v5766 = vld [vmem:[%s748 + $0x5c] sm:$0xf]
      %v5767 = vld [vmem:[%s748 + $0x60] sm:$0xf]
      %v5768 = vld [vmem:[%s748 + $0x64] sm:$0xf]
      %v5769 = vld [vmem:[%s748 + $0x68] sm:$0xf]
      %v5770 = vld [vmem:[%s748 + $0x6c] sm:$0xf]
      %v5771 = vld [vmem:[%s748 + $0x70] sm:$0xf]
      %v5772 = vld [vmem:[%s748 + $0x74] sm:$0xf]
      %v5773 = vld [vmem:[%s748 + $0x78] sm:$0xf]
      %v5774 = vld [vmem:[%s748 + $0x7c] sm:$0xf]
      %s5775 = scalar_lea.vmem %s3, 20
      %v5776 = vld [vmem:[%s5775] sm:$0xf]
      %v5809 = vunpack.c.l.b16 %v5743
      %v5810 = vunpack.c.l.b16 %v5744
      %v5811 = vunpack.c.l.b16 %v5745
      %v5812 = vunpack.c.l.b16 %v5746
      %v5813 = vunpack.c.l.b16 %v5747
      %v5814 = vunpack.c.l.b16 %v5748
      %v5815 = vunpack.c.l.b16 %v5749
      %v5816 = vunpack.c.l.b16 %v5750
      %v5817 = vunpack.c.l.b16 %v5751
      %v5818 = vunpack.c.l.b16 %v5752
      %v5819 = vunpack.c.l.b16 %v5753
      %v5820 = vunpack.c.l.b16 %v5754
      %v5821 = vunpack.c.l.b16 %v5755
      %v5822 = vunpack.c.l.b16 %v5756
      %v5823 = vunpack.c.l.b16 %v5757
      %v5824 = vunpack.c.l.b16 %v5758
      %v5825 = vunpack.c.l.b16 %v5759
      %v5826 = vunpack.c.l.b16 %v5760
      %v5827 = vunpack.c.l.b16 %v5761
      %v5828 = vunpack.c.l.b16 %v5762
      %v5829 = vunpack.c.l.b16 %v5763
      %v5830 = vunpack.c.l.b16 %v5764
      %v5831 = vunpack.c.l.b16 %v5765
      %v5832 = vunpack.c.l.b16 %v5766
      %v5833 = vunpack.c.l.b16 %v5767
      %v5834 = vunpack.c.l.b16 %v5768
      %v5835 = vunpack.c.l.b16 %v5769
      %v5836 = vunpack.c.l.b16 %v5770
      %v5837 = vunpack.c.l.b16 %v5771
      %v5838 = vunpack.c.l.b16 %v5772
      %v5839 = vunpack.c.l.b16 %v5773
      %v5840 = vunpack.c.l.b16 %v5774
      %v5841 = vpack.c.b16 %v5810, %v5809
      %v5842 = vpack.c.b16 %v5812, %v5811
      %v5843 = vpack.c.b16 %v5814, %v5813
      %v5844 = vpack.c.b16 %v5816, %v5815
      %v5845 = vpack.c.b16 %v5818, %v5817
      %v5846 = vpack.c.b16 %v5820, %v5819
      %v5847 = vpack.c.b16 %v5822, %v5821
      %v5848 = vpack.c.b16 %v5824, %v5823
      %v5849 = vpack.c.b16 %v5826, %v5825
      %v5850 = vpack.c.b16 %v5828, %v5827
      %v5851 = vpack.c.b16 %v5830, %v5829
      %v5852 = vpack.c.b16 %v5832, %v5831
      %v5853 = vpack.c.b16 %v5834, %v5833
      %v5854 = vpack.c.b16 %v5836, %v5835
      %v5855 = vpack.c.b16 %v5838, %v5837
      %v5856 = vpack.c.b16 %v5840, %v5839
      %v5858 = vsel %vm1191, %v5841, 0
      %v5861 = vsel %vm1191, %v5842, 0
      %v5864 = vsel %vm1191, %v5843, 0
      %v5867 = vsel %vm1191, %v5844, 0
      %v5870 = vsel %vm1191, %v5845, 0
      %v5873 = vsel %vm1191, %v5846, 0
      %v5876 = vsel %vm1191, %v5847, 0
      %v5879 = vsel %vm1191, %v5848, 0
      %v5882 = vsel %vm1191, %v5849, 0
      %v5885 = vsel %vm1191, %v5850, 0
      %v5888 = vsel %vm1191, %v5851, 0
      %v5891 = vsel %vm1191, %v5852, 0
      %v5894 = vsel %vm1191, %v5853, 0
      %v5897 = vsel %vm1191, %v5854, 0
      %v5900 = vsel %vm1191, %v5855, 0
      %v5903 = vsel %vm1191, %v5856, 0
      %v5906 = vsel %vm1240, %v5776, 0
      %5908 = vmatpush.bf16.msra.mxu0 0
      %5909 = vmatpush.bf16.msra.mxu0 0
      %5910 = vmatpush.bf16.msra.mxu0 0
      %5911 = vmatpush.bf16.msra.mxu0 0
      %5912 = vmatpush.bf16.msra.mxu0 0
      %5913 = vmatpush.bf16.msra.mxu0 0
      %5914 = vmatpush.bf16.msra.mxu0 0
      %5915 = vmatpush.bf16.msra.mxu0 %v5906
      %5916 = vmatmul.bf16.gmra.mxu0 %v5858
      %v5917 = vpop.f32.mrf.mxu0
      %v5918 = vadd.f32 0.0, %v5917
      %v5919 = vpop.f32.mrf.mxu0
      %v5920 = vadd.f32 0.0, %v5919
      %5921 = vmatmul.bf16.gmra.mxu0 %v5861
      %v5922 = vpop.f32.mrf.mxu0
      %v5923 = vadd.f32 0.0, %v5922
      %v5924 = vpop.f32.mrf.mxu0
      %v5925 = vadd.f32 0.0, %v5924
      %5926 = vmatmul.bf16.gmra.mxu0 %v5864
      %v5927 = vpop.f32.mrf.mxu0
      %v5928 = vadd.f32 0.0, %v5927
      %v5929 = vpop.f32.mrf.mxu0
      %v5930 = vadd.f32 0.0, %v5929
      %5931 = vmatmul.bf16.gmra.mxu0 %v5867
      %v5932 = vpop.f32.mrf.mxu0
      %v5933 = vadd.f32 0.0, %v5932
      %v5934 = vpop.f32.mrf.mxu0
      %v5935 = vadd.f32 0.0, %v5934
      %5936 = vmatmul.bf16.gmra.mxu0 %v5870
      %v5937 = vpop.f32.mrf.mxu0
      %v5938 = vadd.f32 0.0, %v5937
      %v5939 = vpop.f32.mrf.mxu0
      %v5940 = vadd.f32 0.0, %v5939
      %5941 = vmatmul.bf16.gmra.mxu0 %v5873
      %v5942 = vpop.f32.mrf.mxu0
      %v5943 = vadd.f32 0.0, %v5942
      %v5944 = vpop.f32.mrf.mxu0
      %v5945 = vadd.f32 0.0, %v5944
      %5946 = vmatmul.bf16.gmra.mxu0 %v5876
      %v5947 = vpop.f32.mrf.mxu0
      %v5948 = vadd.f32 0.0, %v5947
      %v5949 = vpop.f32.mrf.mxu0
      %v5950 = vadd.f32 0.0, %v5949
      %5951 = vmatmul.bf16.gmra.mxu0 %v5879
      %v5952 = vpop.f32.mrf.mxu0
      %v5953 = vadd.f32 0.0, %v5952
      %v5954 = vpop.f32.mrf.mxu0
      %v5955 = vadd.f32 0.0, %v5954
      %5956 = vmatmul.bf16.gmra.mxu0 %v5882
      %v5957 = vpop.f32.mrf.mxu0
      %v5958 = vadd.f32 0.0, %v5957
      %v5959 = vpop.f32.mrf.mxu0
      %v5960 = vadd.f32 0.0, %v5959
      %5961 = vmatmul.bf16.gmra.mxu0 %v5885
      %v5962 = vpop.f32.mrf.mxu0
      %v5963 = vadd.f32 0.0, %v5962
      %v5964 = vpop.f32.mrf.mxu0
      %v5965 = vadd.f32 0.0, %v5964
      %5966 = vmatmul.bf16.gmra.mxu0 %v5888
      %v5967 = vpop.f32.mrf.mxu0
      %v5968 = vadd.f32 0.0, %v5967
      %v5969 = vpop.f32.mrf.mxu0
      %v5970 = vadd.f32 0.0, %v5969
      %5971 = vmatmul.bf16.gmra.mxu0 %v5891
      %v5972 = vpop.f32.mrf.mxu0
      %v5973 = vadd.f32 0.0, %v5972
      %v5974 = vpop.f32.mrf.mxu0
      %v5975 = vadd.f32 0.0, %v5974
      %5976 = vmatmul.bf16.gmra.mxu0 %v5894
      %v5977 = vpop.f32.mrf.mxu0
      %v5978 = vadd.f32 0.0, %v5977
      %v5979 = vpop.f32.mrf.mxu0
      %v5980 = vadd.f32 0.0, %v5979
      %5981 = vmatmul.bf16.gmra.mxu0 %v5897
      %v5982 = vpop.f32.mrf.mxu0
      %v5983 = vadd.f32 0.0, %v5982
      %v5984 = vpop.f32.mrf.mxu0
      %v5985 = vadd.f32 0.0, %v5984
      %5986 = vmatmul.bf16.gmra.mxu0 %v5900
      %v5987 = vpop.f32.mrf.mxu0
      %v5988 = vadd.f32 0.0, %v5987
      %v5989 = vpop.f32.mrf.mxu0
      %v5990 = vadd.f32 0.0, %v5989
      %5991 = vmatmul.bf16.gmra.mxu0 %v5903
      %v5992 = vpop.f32.mrf.mxu0
      %v5993 = vadd.f32 0.0, %v5992
      %v5994 = vpop.f32.mrf.mxu0
      %v5995 = vadd.f32 0.0, %v5994
      %5996 = vdwg.mxu0
      %v5997 = vadd.f32 %v5711, %v5918
      %v5998 = vadd.f32 %v5712, %v5920
      %v5999 = vadd.f32 %v5713, %v5923
      %v6000 = vadd.f32 %v5714, %v5925
      %v6001 = vadd.f32 %v5715, %v5928
      %v6002 = vadd.f32 %v5716, %v5930
      %v6003 = vadd.f32 %v5717, %v5933
      %v6004 = vadd.f32 %v5718, %v5935
      %v6005 = vadd.f32 %v5719, %v5938
      %v6006 = vadd.f32 %v5720, %v5940
      %v6007 = vadd.f32 %v5721, %v5943
      %v6008 = vadd.f32 %v5722, %v5945
      %v6009 = vadd.f32 %v5723, %v5948
      %v6010 = vadd.f32 %v5724, %v5950
      %v6011 = vadd.f32 %v5725, %v5953
      %v6012 = vadd.f32 %v5726, %v5955
      %v6013 = vadd.f32 %v5727, %v5958
      %v6014 = vadd.f32 %v5728, %v5960
      %v6015 = vadd.f32 %v5729, %v5963
      %v6016 = vadd.f32 %v5730, %v5965
      %v6017 = vadd.f32 %v5731, %v5968
      %v6018 = vadd.f32 %v5732, %v5970
      %v6019 = vadd.f32 %v5733, %v5973
      %v6020 = vadd.f32 %v5734, %v5975
      %v6021 = vadd.f32 %v5735, %v5978
      %v6022 = vadd.f32 %v5736, %v5980
      %v6023 = vadd.f32 %v5737, %v5983
      %v6024 = vadd.f32 %v5738, %v5985
      %v6025 = vadd.f32 %v5739, %v5988
      %v6026 = vadd.f32 %v5740, %v5990
      %v6027 = vadd.f32 %v5741, %v5993
      %v6028 = vadd.f32 %v5742, %v5995
      %v6029 = vld [vmem:[%s2697] sm:$0xf]
      %v6030 = vld [vmem:[%s2697 + $0x4] sm:$0xf]
      %v6031 = vld [vmem:[%s2697 + $0x8] sm:$0xf]
      %v6032 = vld [vmem:[%s2697 + $0xc] sm:$0xf]
      %v6033 = vld [vmem:[%s2697 + $0x10] sm:$0xf]
      %v6034 = vld [vmem:[%s2697 + $0x14] sm:$0xf]
      %v6035 = vld [vmem:[%s2697 + $0x18] sm:$0xf]
      %v6036 = vld [vmem:[%s2697 + $0x1c] sm:$0xf]
      %v6037 = vld [vmem:[%s2697 + $0x20] sm:$0xf]
      %v6038 = vld [vmem:[%s2697 + $0x24] sm:$0xf]
      %v6039 = vld [vmem:[%s2697 + $0x28] sm:$0xf]
      %v6040 = vld [vmem:[%s2697 + $0x2c] sm:$0xf]
      %v6041 = vld [vmem:[%s2697 + $0x30] sm:$0xf]
      %v6042 = vld [vmem:[%s2697 + $0x34] sm:$0xf]
      %v6043 = vld [vmem:[%s2697 + $0x38] sm:$0xf]
      %v6044 = vld [vmem:[%s2697 + $0x3c] sm:$0xf]
      %v6045 = vld [vmem:[%s2697 + $0x40] sm:$0xf]
      %v6046 = vld [vmem:[%s2697 + $0x44] sm:$0xf]
      %v6047 = vld [vmem:[%s2697 + $0x48] sm:$0xf]
      %v6048 = vld [vmem:[%s2697 + $0x4c] sm:$0xf]
      %v6049 = vld [vmem:[%s2697 + $0x50] sm:$0xf]
      %v6050 = vld [vmem:[%s2697 + $0x54] sm:$0xf]
      %v6051 = vld [vmem:[%s2697 + $0x58] sm:$0xf]
      %v6052 = vld [vmem:[%s2697 + $0x5c] sm:$0xf]
      %v6053 = vld [vmem:[%s2697 + $0x60] sm:$0xf]
      %v6054 = vld [vmem:[%s2697 + $0x64] sm:$0xf]
      %v6055 = vld [vmem:[%s2697 + $0x68] sm:$0xf]
      %v6056 = vld [vmem:[%s2697 + $0x6c] sm:$0xf]
      %v6057 = vld [vmem:[%s2697 + $0x70] sm:$0xf]
      %v6058 = vld [vmem:[%s2697 + $0x74] sm:$0xf]
      %v6059 = vld [vmem:[%s2697 + $0x78] sm:$0xf]
      %v6060 = vld [vmem:[%s2697 + $0x7c] sm:$0xf]
      %s6061 = scalar_lea.vmem %s3, 24
      %v6062 = vld [vmem:[%s6061] sm:$0xf]
      %v6095 = vunpack.c.l.b16 %v6029
      %v6096 = vunpack.c.l.b16 %v6030
      %v6097 = vunpack.c.l.b16 %v6031
      %v6098 = vunpack.c.l.b16 %v6032
      %v6099 = vunpack.c.l.b16 %v6033
      %v6100 = vunpack.c.l.b16 %v6034
      %v6101 = vunpack.c.l.b16 %v6035
      %v6102 = vunpack.c.l.b16 %v6036
      %v6103 = vunpack.c.l.b16 %v6037
      %v6104 = vunpack.c.l.b16 %v6038
      %v6105 = vunpack.c.l.b16 %v6039
      %v6106 = vunpack.c.l.b16 %v6040
      %v6107 = vunpack.c.l.b16 %v6041
      %v6108 = vunpack.c.l.b16 %v6042
      %v6109 = vunpack.c.l.b16 %v6043
      %v6110 = vunpack.c.l.b16 %v6044
      %v6111 = vunpack.c.l.b16 %v6045
      %v6112 = vunpack.c.l.b16 %v6046
      %v6113 = vunpack.c.l.b16 %v6047
      %v6114 = vunpack.c.l.b16 %v6048
      %v6115 = vunpack.c.l.b16 %v6049
      %v6116 = vunpack.c.l.b16 %v6050
      %v6117 = vunpack.c.l.b16 %v6051
      %v6118 = vunpack.c.l.b16 %v6052
      %v6119 = vunpack.c.l.b16 %v6053
      %v6120 = vunpack.c.l.b16 %v6054
      %v6121 = vunpack.c.l.b16 %v6055
      %v6122 = vunpack.c.l.b16 %v6056
      %v6123 = vunpack.c.l.b16 %v6057
      %v6124 = vunpack.c.l.b16 %v6058
      %v6125 = vunpack.c.l.b16 %v6059
      %v6126 = vunpack.c.l.b16 %v6060
      %v6127 = vpack.c.b16 %v6096, %v6095
      %v6128 = vpack.c.b16 %v6098, %v6097
      %v6129 = vpack.c.b16 %v6100, %v6099
      %v6130 = vpack.c.b16 %v6102, %v6101
      %v6131 = vpack.c.b16 %v6104, %v6103
      %v6132 = vpack.c.b16 %v6106, %v6105
      %v6133 = vpack.c.b16 %v6108, %v6107
      %v6134 = vpack.c.b16 %v6110, %v6109
      %v6135 = vpack.c.b16 %v6112, %v6111
      %v6136 = vpack.c.b16 %v6114, %v6113
      %v6137 = vpack.c.b16 %v6116, %v6115
      %v6138 = vpack.c.b16 %v6118, %v6117
      %v6139 = vpack.c.b16 %v6120, %v6119
      %v6140 = vpack.c.b16 %v6122, %v6121
      %v6141 = vpack.c.b16 %v6124, %v6123
      %v6142 = vpack.c.b16 %v6126, %v6125
      %v6144 = vsel %vm1191, %v6127, 0
      %v6147 = vsel %vm1191, %v6128, 0
      %v6150 = vsel %vm1191, %v6129, 0
      %v6153 = vsel %vm1191, %v6130, 0
      %v6156 = vsel %vm1191, %v6131, 0
      %v6159 = vsel %vm1191, %v6132, 0
      %v6162 = vsel %vm1191, %v6133, 0
      %v6165 = vsel %vm1191, %v6134, 0
      %v6168 = vsel %vm1191, %v6135, 0
      %v6171 = vsel %vm1191, %v6136, 0
      %v6174 = vsel %vm1191, %v6137, 0
      %v6177 = vsel %vm1191, %v6138, 0
      %v6180 = vsel %vm1191, %v6139, 0
      %v6183 = vsel %vm1191, %v6140, 0
      %v6186 = vsel %vm1191, %v6141, 0
      %v6189 = vsel %vm1191, %v6142, 0
      %v6192 = vsel %vm1240, %v6062, 0
      %6194 = vmatpush.bf16.msra.mxu0 0
      %6195 = vmatpush.bf16.msra.mxu0 0
      %6196 = vmatpush.bf16.msra.mxu0 0
      %6197 = vmatpush.bf16.msra.mxu0 0
      %6198 = vmatpush.bf16.msra.mxu0 0
      %6199 = vmatpush.bf16.msra.mxu0 0
      %6200 = vmatpush.bf16.msra.mxu0 0
      %6201 = vmatpush.bf16.msra.mxu0 %v6192
      %6202 = vmatmul.bf16.gmra.mxu0 %v6144
      %v6203 = vpop.f32.mrf.mxu0
      %v6204 = vadd.f32 0.0, %v6203
      %v6205 = vpop.f32.mrf.mxu0
      %v6206 = vadd.f32 0.0, %v6205
      %6207 = vmatmul.bf16.gmra.mxu0 %v6147
      %v6208 = vpop.f32.mrf.mxu0
      %v6209 = vadd.f32 0.0, %v6208
      %v6210 = vpop.f32.mrf.mxu0
      %v6211 = vadd.f32 0.0, %v6210
      %6212 = vmatmul.bf16.gmra.mxu0 %v6150
      %v6213 = vpop.f32.mrf.mxu0
      %v6214 = vadd.f32 0.0, %v6213
      %v6215 = vpop.f32.mrf.mxu0
      %v6216 = vadd.f32 0.0, %v6215
      %6217 = vmatmul.bf16.gmra.mxu0 %v6153
      %v6218 = vpop.f32.mrf.mxu0
      %v6219 = vadd.f32 0.0, %v6218
      %v6220 = vpop.f32.mrf.mxu0
      %v6221 = vadd.f32 0.0, %v6220
      %6222 = vmatmul.bf16.gmra.mxu0 %v6156
      %v6223 = vpop.f32.mrf.mxu0
      %v6224 = vadd.f32 0.0, %v6223
      %v6225 = vpop.f32.mrf.mxu0
      %v6226 = vadd.f32 0.0, %v6225
      %6227 = vmatmul.bf16.gmra.mxu0 %v6159
      %v6228 = vpop.f32.mrf.mxu0
      %v6229 = vadd.f32 0.0, %v6228
      %v6230 = vpop.f32.mrf.mxu0
      %v6231 = vadd.f32 0.0, %v6230
      %6232 = vmatmul.bf16.gmra.mxu0 %v6162
      %v6233 = vpop.f32.mrf.mxu0
      %v6234 = vadd.f32 0.0, %v6233
      %v6235 = vpop.f32.mrf.mxu0
      %v6236 = vadd.f32 0.0, %v6235
      %6237 = vmatmul.bf16.gmra.mxu0 %v6165
      %v6238 = vpop.f32.mrf.mxu0
      %v6239 = vadd.f32 0.0, %v6238
      %v6240 = vpop.f32.mrf.mxu0
      %v6241 = vadd.f32 0.0, %v6240
      %6242 = vmatmul.bf16.gmra.mxu0 %v6168
      %v6243 = vpop.f32.mrf.mxu0
      %v6244 = vadd.f32 0.0, %v6243
      %v6245 = vpop.f32.mrf.mxu0
      %v6246 = vadd.f32 0.0, %v6245
      %6247 = vmatmul.bf16.gmra.mxu0 %v6171
      %v6248 = vpop.f32.mrf.mxu0
      %v6249 = vadd.f32 0.0, %v6248
      %v6250 = vpop.f32.mrf.mxu0
      %v6251 = vadd.f32 0.0, %v6250
      %6252 = vmatmul.bf16.gmra.mxu0 %v6174
      %v6253 = vpop.f32.mrf.mxu0
      %v6254 = vadd.f32 0.0, %v6253
      %v6255 = vpop.f32.mrf.mxu0
      %v6256 = vadd.f32 0.0, %v6255
      %6257 = vmatmul.bf16.gmra.mxu0 %v6177
      %v6258 = vpop.f32.mrf.mxu0
      %v6259 = vadd.f32 0.0, %v6258
      %v6260 = vpop.f32.mrf.mxu0
      %v6261 = vadd.f32 0.0, %v6260
      %6262 = vmatmul.bf16.gmra.mxu0 %v6180
      %v6263 = vpop.f32.mrf.mxu0
      %v6264 = vadd.f32 0.0, %v6263
      %v6265 = vpop.f32.mrf.mxu0
      %v6266 = vadd.f32 0.0, %v6265
      %6267 = vmatmul.bf16.gmra.mxu0 %v6183
      %v6268 = vpop.f32.mrf.mxu0
      %v6269 = vadd.f32 0.0, %v6268
      %v6270 = vpop.f32.mrf.mxu0
      %v6271 = vadd.f32 0.0, %v6270
      %6272 = vmatmul.bf16.gmra.mxu0 %v6186
      %v6273 = vpop.f32.mrf.mxu0
      %v6274 = vadd.f32 0.0, %v6273
      %v6275 = vpop.f32.mrf.mxu0
      %v6276 = vadd.f32 0.0, %v6275
      %6277 = vmatmul.bf16.gmra.mxu0 %v6189
      %v6278 = vpop.f32.mrf.mxu0
      %v6279 = vadd.f32 0.0, %v6278
      %v6280 = vpop.f32.mrf.mxu0
      %v6281 = vadd.f32 0.0, %v6280
      %6282 = vdwg.mxu0
      %v6283 = vadd.f32 %v5997, %v6204
      %v6284 = vadd.f32 %v5998, %v6206
      %v6285 = vadd.f32 %v5999, %v6209
      %v6286 = vadd.f32 %v6000, %v6211
      %v6287 = vadd.f32 %v6001, %v6214
      %v6288 = vadd.f32 %v6002, %v6216
      %v6289 = vadd.f32 %v6003, %v6219
      %v6290 = vadd.f32 %v6004, %v6221
      %v6291 = vadd.f32 %v6005, %v6224
      %v6292 = vadd.f32 %v6006, %v6226
      %v6293 = vadd.f32 %v6007, %v6229
      %v6294 = vadd.f32 %v6008, %v6231
      %v6295 = vadd.f32 %v6009, %v6234
      %v6296 = vadd.f32 %v6010, %v6236
      %v6297 = vadd.f32 %v6011, %v6239
      %v6298 = vadd.f32 %v6012, %v6241
      %v6299 = vadd.f32 %v6013, %v6244
      %v6300 = vadd.f32 %v6014, %v6246
      %v6301 = vadd.f32 %v6015, %v6249
      %v6302 = vadd.f32 %v6016, %v6251
      %v6303 = vadd.f32 %v6017, %v6254
      %v6304 = vadd.f32 %v6018, %v6256
      %v6305 = vadd.f32 %v6019, %v6259
      %v6306 = vadd.f32 %v6020, %v6261
      %v6307 = vadd.f32 %v6021, %v6264
      %v6308 = vadd.f32 %v6022, %v6266
      %v6309 = vadd.f32 %v6023, %v6269
      %v6310 = vadd.f32 %v6024, %v6271
      %v6311 = vadd.f32 %v6025, %v6274
      %v6312 = vadd.f32 %v6026, %v6276
      %v6313 = vadd.f32 %v6027, %v6279
      %v6314 = vadd.f32 %v6028, %v6281
      %v6315 = vld [vmem:[%s2984] sm:$0xf]
      %v6316 = vld [vmem:[%s2984 + $0x4] sm:$0xf]
      %v6317 = vld [vmem:[%s2984 + $0x8] sm:$0xf]
      %v6318 = vld [vmem:[%s2984 + $0xc] sm:$0xf]
      %v6319 = vld [vmem:[%s2984 + $0x10] sm:$0xf]
      %v6320 = vld [vmem:[%s2984 + $0x14] sm:$0xf]
      %v6321 = vld [vmem:[%s2984 + $0x18] sm:$0xf]
      %v6322 = vld [vmem:[%s2984 + $0x1c] sm:$0xf]
      %v6323 = vld [vmem:[%s2984 + $0x20] sm:$0xf]
      %v6324 = vld [vmem:[%s2984 + $0x24] sm:$0xf]
      %v6325 = vld [vmem:[%s2984 + $0x28] sm:$0xf]
      %v6326 = vld [vmem:[%s2984 + $0x2c] sm:$0xf]
      %v6327 = vld [vmem:[%s2984 + $0x30] sm:$0xf]
      %v6328 = vld [vmem:[%s2984 + $0x34] sm:$0xf]
      %v6329 = vld [vmem:[%s2984 + $0x38] sm:$0xf]
      %v6330 = vld [vmem:[%s2984 + $0x3c] sm:$0xf]
      %v6331 = vld [vmem:[%s2984 + $0x40] sm:$0xf]
      %v6332 = vld [vmem:[%s2984 + $0x44] sm:$0xf]
      %v6333 = vld [vmem:[%s2984 + $0x48] sm:$0xf]
      %v6334 = vld [vmem:[%s2984 + $0x4c] sm:$0xf]
      %v6335 = vld [vmem:[%s2984 + $0x50] sm:$0xf]
      %v6336 = vld [vmem:[%s2984 + $0x54] sm:$0xf]
      %v6337 = vld [vmem:[%s2984 + $0x58] sm:$0xf]
      %v6338 = vld [vmem:[%s2984 + $0x5c] sm:$0xf]
      %v6339 = vld [vmem:[%s2984 + $0x60] sm:$0xf]
      %v6340 = vld [vmem:[%s2984 + $0x64] sm:$0xf]
      %v6341 = vld [vmem:[%s2984 + $0x68] sm:$0xf]
      %v6342 = vld [vmem:[%s2984 + $0x6c] sm:$0xf]
      %v6343 = vld [vmem:[%s2984 + $0x70] sm:$0xf]
      %v6344 = vld [vmem:[%s2984 + $0x74] sm:$0xf]
      %v6345 = vld [vmem:[%s2984 + $0x78] sm:$0xf]
      %v6346 = vld [vmem:[%s2984 + $0x7c] sm:$0xf]
      %s6347 = scalar_lea.vmem %s3, 28
      %v6348 = vld [vmem:[%s6347] sm:$0xf]
      %v6381 = vunpack.c.l.b16 %v6315
      %v6382 = vunpack.c.l.b16 %v6316
      %v6383 = vunpack.c.l.b16 %v6317
      %v6384 = vunpack.c.l.b16 %v6318
      %v6385 = vunpack.c.l.b16 %v6319
      %v6386 = vunpack.c.l.b16 %v6320
      %v6387 = vunpack.c.l.b16 %v6321
      %v6388 = vunpack.c.l.b16 %v6322
      %v6389 = vunpack.c.l.b16 %v6323
      %v6390 = vunpack.c.l.b16 %v6324
      %v6391 = vunpack.c.l.b16 %v6325
      %v6392 = vunpack.c.l.b16 %v6326
      %v6393 = vunpack.c.l.b16 %v6327
      %v6394 = vunpack.c.l.b16 %v6328
      %v6395 = vunpack.c.l.b16 %v6329
      %v6396 = vunpack.c.l.b16 %v6330
      %v6397 = vunpack.c.l.b16 %v6331
      %v6398 = vunpack.c.l.b16 %v6332
      %v6399 = vunpack.c.l.b16 %v6333
      %v6400 = vunpack.c.l.b16 %v6334
      %v6401 = vunpack.c.l.b16 %v6335
      %v6402 = vunpack.c.l.b16 %v6336
      %v6403 = vunpack.c.l.b16 %v6337
      %v6404 = vunpack.c.l.b16 %v6338
      %v6405 = vunpack.c.l.b16 %v6339
      %v6406 = vunpack.c.l.b16 %v6340
      %v6407 = vunpack.c.l.b16 %v6341
      %v6408 = vunpack.c.l.b16 %v6342
      %v6409 = vunpack.c.l.b16 %v6343
      %v6410 = vunpack.c.l.b16 %v6344
      %v6411 = vunpack.c.l.b16 %v6345
      %v6412 = vunpack.c.l.b16 %v6346
      %v6413 = vpack.c.b16 %v6382, %v6381
      %v6414 = vpack.c.b16 %v6384, %v6383
      %v6415 = vpack.c.b16 %v6386, %v6385
      %v6416 = vpack.c.b16 %v6388, %v6387
      %v6417 = vpack.c.b16 %v6390, %v6389
      %v6418 = vpack.c.b16 %v6392, %v6391
      %v6419 = vpack.c.b16 %v6394, %v6393
      %v6420 = vpack.c.b16 %v6396, %v6395
      %v6421 = vpack.c.b16 %v6398, %v6397
      %v6422 = vpack.c.b16 %v6400, %v6399
      %v6423 = vpack.c.b16 %v6402, %v6401
      %v6424 = vpack.c.b16 %v6404, %v6403
      %v6425 = vpack.c.b16 %v6406, %v6405
      %v6426 = vpack.c.b16 %v6408, %v6407
      %v6427 = vpack.c.b16 %v6410, %v6409
      %v6428 = vpack.c.b16 %v6412, %v6411
      %v6430 = vsel %vm1191, %v6413, 0
      %v6433 = vsel %vm1191, %v6414, 0
      %v6436 = vsel %vm1191, %v6415, 0
      %v6439 = vsel %vm1191, %v6416, 0
      %v6442 = vsel %vm1191, %v6417, 0
      %v6445 = vsel %vm1191, %v6418, 0
      %v6448 = vsel %vm1191, %v6419, 0
      %v6451 = vsel %vm1191, %v6420, 0
      %v6454 = vsel %vm1191, %v6421, 0
      %v6457 = vsel %vm1191, %v6422, 0
      %v6460 = vsel %vm1191, %v6423, 0
      %v6463 = vsel %vm1191, %v6424, 0
      %v6466 = vsel %vm1191, %v6425, 0
      %v6469 = vsel %vm1191, %v6426, 0
      %v6472 = vsel %vm1191, %v6427, 0
      %v6475 = vsel %vm1191, %v6428, 0
      %v6478 = vsel %vm1240, %v6348, 0
      %6480 = vmatpush.bf16.msra.mxu0 0
      %6481 = vmatpush.bf16.msra.mxu0 0
      %6482 = vmatpush.bf16.msra.mxu0 0
      %6483 = vmatpush.bf16.msra.mxu0 0
      %6484 = vmatpush.bf16.msra.mxu0 0
      %6485 = vmatpush.bf16.msra.mxu0 0
      %6486 = vmatpush.bf16.msra.mxu0 0
      %6487 = vmatpush.bf16.msra.mxu0 %v6478
      %6488 = vmatmul.bf16.gmra.mxu0 %v6430
      %v6489 = vpop.f32.mrf.mxu0
      %v6490 = vadd.f32 0.0, %v6489
      %v6491 = vpop.f32.mrf.mxu0
      %v6492 = vadd.f32 0.0, %v6491
      %6493 = vmatmul.bf16.gmra.mxu0 %v6433
      %v6494 = vpop.f32.mrf.mxu0
      %v6495 = vadd.f32 0.0, %v6494
      %v6496 = vpop.f32.mrf.mxu0
      %v6497 = vadd.f32 0.0, %v6496
      %6498 = vmatmul.bf16.gmra.mxu0 %v6436
      %v6499 = vpop.f32.mrf.mxu0
      %v6500 = vadd.f32 0.0, %v6499
      %v6501 = vpop.f32.mrf.mxu0
      %v6502 = vadd.f32 0.0, %v6501
      %6503 = vmatmul.bf16.gmra.mxu0 %v6439
      %v6504 = vpop.f32.mrf.mxu0
      %v6505 = vadd.f32 0.0, %v6504
      %v6506 = vpop.f32.mrf.mxu0
      %v6507 = vadd.f32 0.0, %v6506
      %6508 = vmatmul.bf16.gmra.mxu0 %v6442
      %v6509 = vpop.f32.mrf.mxu0
      %v6510 = vadd.f32 0.0, %v6509
      %v6511 = vpop.f32.mrf.mxu0
      %v6512 = vadd.f32 0.0, %v6511
      %6513 = vmatmul.bf16.gmra.mxu0 %v6445
      %v6514 = vpop.f32.mrf.mxu0
      %v6515 = vadd.f32 0.0, %v6514
      %v6516 = vpop.f32.mrf.mxu0
      %v6517 = vadd.f32 0.0, %v6516
      %6518 = vmatmul.bf16.gmra.mxu0 %v6448
      %v6519 = vpop.f32.mrf.mxu0
      %v6520 = vadd.f32 0.0, %v6519
      %v6521 = vpop.f32.mrf.mxu0
      %v6522 = vadd.f32 0.0, %v6521
      %6523 = vmatmul.bf16.gmra.mxu0 %v6451
      %v6524 = vpop.f32.mrf.mxu0
      %v6525 = vadd.f32 0.0, %v6524
      %v6526 = vpop.f32.mrf.mxu0
      %v6527 = vadd.f32 0.0, %v6526
      %6528 = vmatmul.bf16.gmra.mxu0 %v6454
      %v6529 = vpop.f32.mrf.mxu0
      %v6530 = vadd.f32 0.0, %v6529
      %v6531 = vpop.f32.mrf.mxu0
      %v6532 = vadd.f32 0.0, %v6531
      %6533 = vmatmul.bf16.gmra.mxu0 %v6457
      %v6534 = vpop.f32.mrf.mxu0
      %v6535 = vadd.f32 0.0, %v6534
      %v6536 = vpop.f32.mrf.mxu0
      %v6537 = vadd.f32 0.0, %v6536
      %6538 = vmatmul.bf16.gmra.mxu0 %v6460
      %v6539 = vpop.f32.mrf.mxu0
      %v6540 = vadd.f32 0.0, %v6539
      %v6541 = vpop.f32.mrf.mxu0
      %v6542 = vadd.f32 0.0, %v6541
      %6543 = vmatmul.bf16.gmra.mxu0 %v6463
      %v6544 = vpop.f32.mrf.mxu0
      %v6545 = vadd.f32 0.0, %v6544
      %v6546 = vpop.f32.mrf.mxu0
      %v6547 = vadd.f32 0.0, %v6546
      %6548 = vmatmul.bf16.gmra.mxu0 %v6466
      %v6549 = vpop.f32.mrf.mxu0
      %v6550 = vadd.f32 0.0, %v6549
      %v6551 = vpop.f32.mrf.mxu0
      %v6552 = vadd.f32 0.0, %v6551
      %6553 = vmatmul.bf16.gmra.mxu0 %v6469
      %v6554 = vpop.f32.mrf.mxu0
      %v6555 = vadd.f32 0.0, %v6554
      %v6556 = vpop.f32.mrf.mxu0
      %v6557 = vadd.f32 0.0, %v6556
      %6558 = vmatmul.bf16.gmra.mxu0 %v6472
      %v6559 = vpop.f32.mrf.mxu0
      %v6560 = vadd.f32 0.0, %v6559
      %v6561 = vpop.f32.mrf.mxu0
      %v6562 = vadd.f32 0.0, %v6561
      %6563 = vmatmul.bf16.gmra.mxu0 %v6475
      %v6564 = vpop.f32.mrf.mxu0
      %v6565 = vadd.f32 0.0, %v6564
      %v6566 = vpop.f32.mrf.mxu0
      %v6567 = vadd.f32 0.0, %v6566
      %6568 = vdwg.mxu0
      %v6569 = vadd.f32 %v6283, %v6490
      %v6570 = vadd.f32 %v6284, %v6492
      %v6571 = vadd.f32 %v6285, %v6495
      %v6572 = vadd.f32 %v6286, %v6497
      %v6573 = vadd.f32 %v6287, %v6500
      %v6574 = vadd.f32 %v6288, %v6502
      %v6575 = vadd.f32 %v6289, %v6505
      %v6576 = vadd.f32 %v6290, %v6507
      %v6577 = vadd.f32 %v6291, %v6510
      %v6578 = vadd.f32 %v6292, %v6512
      %v6579 = vadd.f32 %v6293, %v6515
      %v6580 = vadd.f32 %v6294, %v6517
      %v6581 = vadd.f32 %v6295, %v6520
      %v6582 = vadd.f32 %v6296, %v6522
      %v6583 = vadd.f32 %v6297, %v6525
      %v6584 = vadd.f32 %v6298, %v6527
      %v6585 = vadd.f32 %v6299, %v6530
      %v6586 = vadd.f32 %v6300, %v6532
      %v6587 = vadd.f32 %v6301, %v6535
      %v6588 = vadd.f32 %v6302, %v6537
      %v6589 = vadd.f32 %v6303, %v6540
      %v6590 = vadd.f32 %v6304, %v6542
      %v6591 = vadd.f32 %v6305, %v6545
      %v6592 = vadd.f32 %v6306, %v6547
      %v6593 = vadd.f32 %v6307, %v6550
      %v6594 = vadd.f32 %v6308, %v6552
      %v6595 = vadd.f32 %v6309, %v6555
      %v6596 = vadd.f32 %v6310, %v6557
      %v6597 = vadd.f32 %v6311, %v6560
      %v6598 = vadd.f32 %v6312, %v6562
      %v6599 = vadd.f32 %v6313, %v6565
      %v6600 = vadd.f32 %v6314, %v6567
      %v6601 = vld [vmem:[%s3271] sm:$0xf]
      %v6602 = vld [vmem:[%s3271 + $0x4] sm:$0xf]
      %v6603 = vld [vmem:[%s3271 + $0x8] sm:$0xf]
      %v6604 = vld [vmem:[%s3271 + $0xc] sm:$0xf]
      %v6605 = vld [vmem:[%s3271 + $0x10] sm:$0xf]
      %v6606 = vld [vmem:[%s3271 + $0x14] sm:$0xf]
      %v6607 = vld [vmem:[%s3271 + $0x18] sm:$0xf]
      %v6608 = vld [vmem:[%s3271 + $0x1c] sm:$0xf]
      %v6609 = vld [vmem:[%s3271 + $0x20] sm:$0xf]
      %v6610 = vld [vmem:[%s3271 + $0x24] sm:$0xf]
      %v6611 = vld [vmem:[%s3271 + $0x28] sm:$0xf]
      %v6612 = vld [vmem:[%s3271 + $0x2c] sm:$0xf]
      %v6613 = vld [vmem:[%s3271 + $0x30] sm:$0xf]
      %v6614 = vld [vmem:[%s3271 + $0x34] sm:$0xf]
      %v6615 = vld [vmem:[%s3271 + $0x38] sm:$0xf]
      %v6616 = vld [vmem:[%s3271 + $0x3c] sm:$0xf]
      %v6617 = vld [vmem:[%s3271 + $0x40] sm:$0xf]
      %v6618 = vld [vmem:[%s3271 + $0x44] sm:$0xf]
      %v6619 = vld [vmem:[%s3271 + $0x48] sm:$0xf]
      %v6620 = vld [vmem:[%s3271 + $0x4c] sm:$0xf]
      %v6621 = vld [vmem:[%s3271 + $0x50] sm:$0xf]
      %v6622 = vld [vmem:[%s3271 + $0x54] sm:$0xf]
      %v6623 = vld [vmem:[%s3271 + $0x58] sm:$0xf]
      %v6624 = vld [vmem:[%s3271 + $0x5c] sm:$0xf]
      %v6625 = vld [vmem:[%s3271 + $0x60] sm:$0xf]
      %v6626 = vld [vmem:[%s3271 + $0x64] sm:$0xf]
      %v6627 = vld [vmem:[%s3271 + $0x68] sm:$0xf]
      %v6628 = vld [vmem:[%s3271 + $0x6c] sm:$0xf]
      %v6629 = vld [vmem:[%s3271 + $0x70] sm:$0xf]
      %v6630 = vld [vmem:[%s3271 + $0x74] sm:$0xf]
      %v6631 = vld [vmem:[%s3271 + $0x78] sm:$0xf]
      %v6632 = vld [vmem:[%s3271 + $0x7c] sm:$0xf]
      %s6633 = scalar_lea.vmem %s3, 32
      %v6634 = vld [vmem:[%s6633] sm:$0xf]
      %v6667 = vunpack.c.l.b16 %v6601
      %v6668 = vunpack.c.l.b16 %v6602
      %v6669 = vunpack.c.l.b16 %v6603
      %v6670 = vunpack.c.l.b16 %v6604
      %v6671 = vunpack.c.l.b16 %v6605
      %v6672 = vunpack.c.l.b16 %v6606
      %v6673 = vunpack.c.l.b16 %v6607
      %v6674 = vunpack.c.l.b16 %v6608
      %v6675 = vunpack.c.l.b16 %v6609
      %v6676 = vunpack.c.l.b16 %v6610
      %v6677 = vunpack.c.l.b16 %v6611
      %v6678 = vunpack.c.l.b16 %v6612
      %v6679 = vunpack.c.l.b16 %v6613
      %v6680 = vunpack.c.l.b16 %v6614
      %v6681 = vunpack.c.l.b16 %v6615
      %v6682 = vunpack.c.l.b16 %v6616
      %v6683 = vunpack.c.l.b16 %v6617
      %v6684 = vunpack.c.l.b16 %v6618
      %v6685 = vunpack.c.l.b16 %v6619
      %v6686 = vunpack.c.l.b16 %v6620
      %v6687 = vunpack.c.l.b16 %v6621
      %v6688 = vunpack.c.l.b16 %v6622
      %v6689 = vunpack.c.l.b16 %v6623
      %v6690 = vunpack.c.l.b16 %v6624
      %v6691 = vunpack.c.l.b16 %v6625
      %v6692 = vunpack.c.l.b16 %v6626
      %v6693 = vunpack.c.l.b16 %v6627
      %v6694 = vunpack.c.l.b16 %v6628
      %v6695 = vunpack.c.l.b16 %v6629
      %v6696 = vunpack.c.l.b16 %v6630
      %v6697 = vunpack.c.l.b16 %v6631
      %v6698 = vunpack.c.l.b16 %v6632
      %v6699 = vpack.c.b16 %v6668, %v6667
      %v6700 = vpack.c.b16 %v6670, %v6669
      %v6701 = vpack.c.b16 %v6672, %v6671
      %v6702 = vpack.c.b16 %v6674, %v6673
      %v6703 = vpack.c.b16 %v6676, %v6675
      %v6704 = vpack.c.b16 %v6678, %v6677
      %v6705 = vpack.c.b16 %v6680, %v6679
      %v6706 = vpack.c.b16 %v6682, %v6681
      %v6707 = vpack.c.b16 %v6684, %v6683
      %v6708 = vpack.c.b16 %v6686, %v6685
      %v6709 = vpack.c.b16 %v6688, %v6687
      %v6710 = vpack.c.b16 %v6690, %v6689
      %v6711 = vpack.c.b16 %v6692, %v6691
      %v6712 = vpack.c.b16 %v6694, %v6693
      %v6713 = vpack.c.b16 %v6696, %v6695
      %v6714 = vpack.c.b16 %v6698, %v6697
      %v6716 = vsel %vm1191, %v6699, 0
      %v6719 = vsel %vm1191, %v6700, 0
      %v6722 = vsel %vm1191, %v6701, 0
      %v6725 = vsel %vm1191, %v6702, 0
      %v6728 = vsel %vm1191, %v6703, 0
      %v6731 = vsel %vm1191, %v6704, 0
      %v6734 = vsel %vm1191, %v6705, 0
      %v6737 = vsel %vm1191, %v6706, 0
      %v6740 = vsel %vm1191, %v6707, 0
      %v6743 = vsel %vm1191, %v6708, 0
      %v6746 = vsel %vm1191, %v6709, 0
      %v6749 = vsel %vm1191, %v6710, 0
      %v6752 = vsel %vm1191, %v6711, 0
      %v6755 = vsel %vm1191, %v6712, 0
      %v6758 = vsel %vm1191, %v6713, 0
      %v6761 = vsel %vm1191, %v6714, 0
      %v6764 = vsel %vm1240, %v6634, 0
      %6766 = vmatpush.bf16.msra.mxu0 0
      %6767 = vmatpush.bf16.msra.mxu0 0
      %6768 = vmatpush.bf16.msra.mxu0 0
      %6769 = vmatpush.bf16.msra.mxu0 0
      %6770 = vmatpush.bf16.msra.mxu0 0
      %6771 = vmatpush.bf16.msra.mxu0 0
      %6772 = vmatpush.bf16.msra.mxu0 0
      %6773 = vmatpush.bf16.msra.mxu0 %v6764
      %6774 = vmatmul.bf16.gmra.mxu0 %v6716
      %v6775 = vpop.f32.mrf.mxu0
      %v6776 = vadd.f32 0.0, %v6775
      %v6777 = vpop.f32.mrf.mxu0
      %v6778 = vadd.f32 0.0, %v6777
      %6779 = vmatmul.bf16.gmra.mxu0 %v6719
      %v6780 = vpop.f32.mrf.mxu0
      %v6781 = vadd.f32 0.0, %v6780
      %v6782 = vpop.f32.mrf.mxu0
      %v6783 = vadd.f32 0.0, %v6782
      %6784 = vmatmul.bf16.gmra.mxu0 %v6722
      %v6785 = vpop.f32.mrf.mxu0
      %v6786 = vadd.f32 0.0, %v6785
      %v6787 = vpop.f32.mrf.mxu0
      %v6788 = vadd.f32 0.0, %v6787
      %6789 = vmatmul.bf16.gmra.mxu0 %v6725
      %v6790 = vpop.f32.mrf.mxu0
      %v6791 = vadd.f32 0.0, %v6790
      %v6792 = vpop.f32.mrf.mxu0
      %v6793 = vadd.f32 0.0, %v6792
      %6794 = vmatmul.bf16.gmra.mxu0 %v6728
      %v6795 = vpop.f32.mrf.mxu0
      %v6796 = vadd.f32 0.0, %v6795
      %v6797 = vpop.f32.mrf.mxu0
      %v6798 = vadd.f32 0.0, %v6797
      %6799 = vmatmul.bf16.gmra.mxu0 %v6731
      %v6800 = vpop.f32.mrf.mxu0
      %v6801 = vadd.f32 0.0, %v6800
      %v6802 = vpop.f32.mrf.mxu0
      %v6803 = vadd.f32 0.0, %v6802
      %6804 = vmatmul.bf16.gmra.mxu0 %v6734
      %v6805 = vpop.f32.mrf.mxu0
      %v6806 = vadd.f32 0.0, %v6805
      %v6807 = vpop.f32.mrf.mxu0
      %v6808 = vadd.f32 0.0, %v6807
      %6809 = vmatmul.bf16.gmra.mxu0 %v6737
      %v6810 = vpop.f32.mrf.mxu0
      %v6811 = vadd.f32 0.0, %v6810
      %v6812 = vpop.f32.mrf.mxu0
      %v6813 = vadd.f32 0.0, %v6812
      %6814 = vmatmul.bf16.gmra.mxu0 %v6740
      %v6815 = vpop.f32.mrf.mxu0
      %v6816 = vadd.f32 0.0, %v6815
      %v6817 = vpop.f32.mrf.mxu0
      %v6818 = vadd.f32 0.0, %v6817
      %6819 = vmatmul.bf16.gmra.mxu0 %v6743
      %v6820 = vpop.f32.mrf.mxu0
      %v6821 = vadd.f32 0.0, %v6820
      %v6822 = vpop.f32.mrf.mxu0
      %v6823 = vadd.f32 0.0, %v6822
      %6824 = vmatmul.bf16.gmra.mxu0 %v6746
      %v6825 = vpop.f32.mrf.mxu0
      %v6826 = vadd.f32 0.0, %v6825
      %v6827 = vpop.f32.mrf.mxu0
      %v6828 = vadd.f32 0.0, %v6827
      %6829 = vmatmul.bf16.gmra.mxu0 %v6749
      %v6830 = vpop.f32.mrf.mxu0
      %v6831 = vadd.f32 0.0, %v6830
      %v6832 = vpop.f32.mrf.mxu0
      %v6833 = vadd.f32 0.0, %v6832
      %6834 = vmatmul.bf16.gmra.mxu0 %v6752
      %v6835 = vpop.f32.mrf.mxu0
      %v6836 = vadd.f32 0.0, %v6835
      %v6837 = vpop.f32.mrf.mxu0
      %v6838 = vadd.f32 0.0, %v6837
      %6839 = vmatmul.bf16.gmra.mxu0 %v6755
      %v6840 = vpop.f32.mrf.mxu0
      %v6841 = vadd.f32 0.0, %v6840
      %v6842 = vpop.f32.mrf.mxu0
      %v6843 = vadd.f32 0.0, %v6842
      %6844 = vmatmul.bf16.gmra.mxu0 %v6758
      %v6845 = vpop.f32.mrf.mxu0
      %v6846 = vadd.f32 0.0, %v6845
      %v6847 = vpop.f32.mrf.mxu0
      %v6848 = vadd.f32 0.0, %v6847
      %6849 = vmatmul.bf16.gmra.mxu0 %v6761
      %v6850 = vpop.f32.mrf.mxu0
      %v6851 = vadd.f32 0.0, %v6850
      %v6852 = vpop.f32.mrf.mxu0
      %v6853 = vadd.f32 0.0, %v6852
      %6854 = vdwg.mxu0
      %v6855 = vadd.f32 %v6569, %v6776
      %v6856 = vadd.f32 %v6570, %v6778
      %v6857 = vadd.f32 %v6571, %v6781
      %v6858 = vadd.f32 %v6572, %v6783
      %v6859 = vadd.f32 %v6573, %v6786
      %v6860 = vadd.f32 %v6574, %v6788
      %v6861 = vadd.f32 %v6575, %v6791
      %v6862 = vadd.f32 %v6576, %v6793
      %v6863 = vadd.f32 %v6577, %v6796
      %v6864 = vadd.f32 %v6578, %v6798
      %v6865 = vadd.f32 %v6579, %v6801
      %v6866 = vadd.f32 %v6580, %v6803
      %v6867 = vadd.f32 %v6581, %v6806
      %v6868 = vadd.f32 %v6582, %v6808
      %v6869 = vadd.f32 %v6583, %v6811
      %v6870 = vadd.f32 %v6584, %v6813
      %v6871 = vadd.f32 %v6585, %v6816
      %v6872 = vadd.f32 %v6586, %v6818
      %v6873 = vadd.f32 %v6587, %v6821
      %v6874 = vadd.f32 %v6588, %v6823
      %v6875 = vadd.f32 %v6589, %v6826
      %v6876 = vadd.f32 %v6590, %v6828
      %v6877 = vadd.f32 %v6591, %v6831
      %v6878 = vadd.f32 %v6592, %v6833
      %v6879 = vadd.f32 %v6593, %v6836
      %v6880 = vadd.f32 %v6594, %v6838
      %v6881 = vadd.f32 %v6595, %v6841
      %v6882 = vadd.f32 %v6596, %v6843
      %v6883 = vadd.f32 %v6597, %v6846
      %v6884 = vadd.f32 %v6598, %v6848
      %v6885 = vadd.f32 %v6599, %v6851
      %v6886 = vadd.f32 %v6600, %v6853
      %v6887 = vld [vmem:[%s4] sm:$0x1]
      %v6889 = vperm.slane %v6887, 0
      %v6891 = vadd.f32 %v6855, %v6889
      %v6892 = vadd.f32 %v6856, %v6889
      %v6893 = vadd.f32 %v6857, %v6889
      %v6894 = vadd.f32 %v6858, %v6889
      %v6895 = vadd.f32 %v6859, %v6889
      %v6896 = vadd.f32 %v6860, %v6889
      %v6897 = vadd.f32 %v6861, %v6889
      %v6898 = vadd.f32 %v6862, %v6889
      %v6899 = vadd.f32 %v6863, %v6889
      %v6900 = vadd.f32 %v6864, %v6889
      %v6901 = vadd.f32 %v6865, %v6889
      %v6902 = vadd.f32 %v6866, %v6889
      %v6903 = vadd.f32 %v6867, %v6889
      %v6904 = vadd.f32 %v6868, %v6889
      %v6905 = vadd.f32 %v6869, %v6889
      %v6906 = vadd.f32 %v6870, %v6889
      %v6907 = vadd.f32 %v6871, %v6889
      %v6908 = vadd.f32 %v6872, %v6889
      %v6909 = vadd.f32 %v6873, %v6889
      %v6910 = vadd.f32 %v6874, %v6889
      %v6911 = vadd.f32 %v6875, %v6889
      %v6912 = vadd.f32 %v6876, %v6889
      %v6913 = vadd.f32 %v6877, %v6889
      %v6914 = vadd.f32 %v6878, %v6889
      %v6915 = vadd.f32 %v6879, %v6889
      %v6916 = vadd.f32 %v6880, %v6889
      %v6917 = vadd.f32 %v6881, %v6889
      %v6918 = vadd.f32 %v6882, %v6889
      %v6919 = vadd.f32 %v6883, %v6889
      %v6920 = vadd.f32 %v6884, %v6889
      %v6921 = vadd.f32 %v6885, %v6889
      %v6922 = vadd.f32 %v6886, %v6889
      %v6923 = vld [vmem:[%s219] sm:$0xff]
      %v6924 = vld [vmem:[%s219 + $0x8] sm:$0xff]
      %v6925 = vld [vmem:[%s219 + $0x10] sm:$0xff]
      %v6926 = vld [vmem:[%s219 + $0x18] sm:$0xff]
      %v6927 = vld [vmem:[%s219 + $0x20] sm:$0xff]
      %v6928 = vld [vmem:[%s219 + $0x28] sm:$0xff]
      %v6929 = vld [vmem:[%s219 + $0x30] sm:$0xff]
      %v6930 = vld [vmem:[%s219 + $0x38] sm:$0xff]
      %v6931 = vld [vmem:[%s219 + $0x40] sm:$0xff]
      %v6932 = vld [vmem:[%s219 + $0x48] sm:$0xff]
      %v6933 = vld [vmem:[%s219 + $0x50] sm:$0xff]
      %v6934 = vld [vmem:[%s219 + $0x58] sm:$0xff]
      %v6935 = vld [vmem:[%s219 + $0x60] sm:$0xff]
      %v6936 = vld [vmem:[%s219 + $0x68] sm:$0xff]
      %v6937 = vld [vmem:[%s219 + $0x70] sm:$0xff]
      %v6938 = vld [vmem:[%s219 + $0x78] sm:$0xff]
      %v6939 = vld [vmem:[%s219 + $0x80] sm:$0xff]
      %v6940 = vld [vmem:[%s219 + $0x88] sm:$0xff]
      %v6941 = vld [vmem:[%s219 + $0x90] sm:$0xff]
      %v6942 = vld [vmem:[%s219 + $0x98] sm:$0xff]
      %v6943 = vld [vmem:[%s219 + $0xa0] sm:$0xff]
      %v6944 = vld [vmem:[%s219 + $0xa8] sm:$0xff]
      %v6945 = vld [vmem:[%s219 + $0xb0] sm:$0xff]
      %v6946 = vld [vmem:[%s219 + $0xb8] sm:$0xff]
      %v6947 = vld [vmem:[%s219 + $0xc0] sm:$0xff]
      %v6948 = vld [vmem:[%s219 + $0xc8] sm:$0xff]
      %v6949 = vld [vmem:[%s219 + $0xd0] sm:$0xff]
      %v6950 = vld [vmem:[%s219 + $0xd8] sm:$0xff]
      %v6951 = vld [vmem:[%s219 + $0xe0] sm:$0xff]
      %v6952 = vld [vmem:[%s219 + $0xe8] sm:$0xff]
      %v6953 = vld [vmem:[%s219 + $0xf0] sm:$0xff]
      %v6954 = vld [vmem:[%s219 + $0xf8] sm:$0xff]
      %v6955 = vadd.f32 %v6923, %v6891
      %v6956 = vadd.f32 %v6924, %v6892
      %v6957 = vadd.f32 %v6925, %v6893
      %v6958 = vadd.f32 %v6926, %v6894
      %v6959 = vadd.f32 %v6927, %v6895
      %v6960 = vadd.f32 %v6928, %v6896
      %v6961 = vadd.f32 %v6929, %v6897
      %v6962 = vadd.f32 %v6930, %v6898
      %v6963 = vadd.f32 %v6931, %v6899
      %v6964 = vadd.f32 %v6932, %v6900
      %v6965 = vadd.f32 %v6933, %v6901
      %v6966 = vadd.f32 %v6934, %v6902
      %v6967 = vadd.f32 %v6935, %v6903
      %v6968 = vadd.f32 %v6936, %v6904
      %v6969 = vadd.f32 %v6937, %v6905
      %v6970 = vadd.f32 %v6938, %v6906
      %v6971 = vadd.f32 %v6939, %v6907
      %v6972 = vadd.f32 %v6940, %v6908
      %v6973 = vadd.f32 %v6941, %v6909
      %v6974 = vadd.f32 %v6942, %v6910
      %v6975 = vadd.f32 %v6943, %v6911
      %v6976 = vadd.f32 %v6944, %v6912
      %v6977 = vadd.f32 %v6945, %v6913
      %v6978 = vadd.f32 %v6946, %v6914
      %v6979 = vadd.f32 %v6947, %v6915
      %v6980 = vadd.f32 %v6948, %v6916
      %v6981 = vadd.f32 %v6949, %v6917
      %v6982 = vadd.f32 %v6950, %v6918
      %v6983 = vadd.f32 %v6951, %v6919
      %v6984 = vadd.f32 %v6952, %v6920
      %v6985 = vadd.f32 %v6953, %v6921
      %v6986 = vadd.f32 %v6954, %v6922
      %6987 = vst.msk [vmem:[%s224] sm:$0xff] %vm1191, %v6955
      %6988 = vst.msk [vmem:[%s224 + $0x8] sm:$0xff] %vm1191, %v6956
      %6989 = vst.msk [vmem:[%s224 + $0x10] sm:$0xff] %vm1191, %v6957
      %6990 = vst.msk [vmem:[%s224 + $0x18] sm:$0xff] %vm1191, %v6958
      %6991 = vst.msk [vmem:[%s224 + $0x20] sm:$0xff] %vm1191, %v6959
      %6992 = vst.msk [vmem:[%s224 + $0x28] sm:$0xff] %vm1191, %v6960
      %6993 = vst.msk [vmem:[%s224 + $0x30] sm:$0xff] %vm1191, %v6961
      %6994 = vst.msk [vmem:[%s224 + $0x38] sm:$0xff] %vm1191, %v6962
      %6995 = vst.msk [vmem:[%s224 + $0x40] sm:$0xff] %vm1191, %v6963
      %6996 = vst.msk [vmem:[%s224 + $0x48] sm:$0xff] %vm1191, %v6964
      %6997 = vst.msk [vmem:[%s224 + $0x50] sm:$0xff] %vm1191, %v6965
      %6998 = vst.msk [vmem:[%s224 + $0x58] sm:$0xff] %vm1191, %v6966
      %6999 = vst.msk [vmem:[%s224 + $0x60] sm:$0xff] %vm1191, %v6967
      %7000 = vst.msk [vmem:[%s224 + $0x68] sm:$0xff] %vm1191, %v6968
      %7001 = vst.msk [vmem:[%s224 + $0x70] sm:$0xff] %vm1191, %v6969
      %7002 = vst.msk [vmem:[%s224 + $0x78] sm:$0xff] %vm1191, %v6970
      %7003 = vst.msk [vmem:[%s224 + $0x80] sm:$0xff] %vm1191, %v6971
      %7004 = vst.msk [vmem:[%s224 + $0x88] sm:$0xff] %vm1191, %v6972
      %7005 = vst.msk [vmem:[%s224 + $0x90] sm:$0xff] %vm1191, %v6973
      %7006 = vst.msk [vmem:[%s224 + $0x98] sm:$0xff] %vm1191, %v6974
      %7007 = vst.msk [vmem:[%s224 + $0xa0] sm:$0xff] %vm1191, %v6975
      %7008 = vst.msk [vmem:[%s224 + $0xa8] sm:$0xff] %vm1191, %v6976
      %7009 = vst.msk [vmem:[%s224 + $0xb0] sm:$0xff] %vm1191, %v6977
      %7010 = vst.msk [vmem:[%s224 + $0xb8] sm:$0xff] %vm1191, %v6978
      %7011 = vst.msk [vmem:[%s224 + $0xc0] sm:$0xff] %vm1191, %v6979
      %7012 = vst.msk [vmem:[%s224 + $0xc8] sm:$0xff] %vm1191, %v6980
      %7013 = vst.msk [vmem:[%s224 + $0xd0] sm:$0xff] %vm1191, %v6981
      %7014 = vst.msk [vmem:[%s224 + $0xd8] sm:$0xff] %vm1191, %v6982
      %7015 = vst.msk [vmem:[%s224 + $0xe0] sm:$0xff] %vm1191, %v6983
      %7016 = vst.msk [vmem:[%s224 + $0xe8] sm:$0xff] %vm1191, %v6984
      %7017 = vst.msk [vmem:[%s224 + $0xf0] sm:$0xff] %vm1191, %v6985
      %7018 = vst.msk [vmem:[%s224 + $0xf8] sm:$0xff] %vm1191, %v6986
      %p7019 = scmp.lt.s32.totalorder %s16, 1
      %s7020 = scalar_select %p7019, %s16, 1
      %s7021 = smul.addr %s7020, 32
      %s7022 = smul.addr %s7021, 8
      %s7023 = scalar_lea.vmem %s5, %s7022
      // Predicated region
      $region41: #{residual_block_forward_nhwc.1} parent=39 // pred_check
        %p7024 = pneg %p144
      $region42: #{residual_block_forward_nhwc.1} parent=39 // pred_check_branch
        %7026 = sbr.rel (%p7024) target = $region44
      $region43: #{residual_block_forward_nhwc.1} parent=39 // pred_region
        _
      $region44: #{residual_block_forward_nhwc.1} parent=39 // pred_fallthru
        _
    $region40: #{residual_block_forward_nhwc.1} parent=5 // pred_fallthru
      _
    %p7027 = scmp.le.s32.totalorder 2, %s11
    // Predicated region
    $region45: #{residual_block_forward_nhwc.1} parent=5 // pred_check
      %p7028 = pneg %p7027
    $region46: #{residual_block_forward_nhwc.1} parent=5 // pred_check_branch
      %7030 = sbr.rel (%p7028) target = $region48
    $region47: #{residual_block_forward_nhwc.1} parent=5 // pred_region
      %s7031 = ssub.s32 %s11, 2
      // Predicated region
      $region49: #{residual_block_forward_nhwc.1} parent=47 // pred_check
        %p7032 = pneg %p150
      $region50: #{residual_block_forward_nhwc.1} parent=47 // pred_check_branch
        %7034 = sbr.rel (%p7032) target = $region52
      $region51: #{residual_block_forward_nhwc.1} parent=47 // pred_region
        %p7035 = scmp.lt.s32.totalorder %s17, 1
        %s7036 = scalar_select %p7035, %s17, 1
        %s7037 = smul.addr %s7036, 32
        %s7038 = smul.addr %s7037, 8
        %s7039 = scalar_lea.vmem %s5, %s7038
      $region52: #{residual_block_forward_nhwc.1} parent=47 // pred_fallthru
        _
    $region48: #{residual_block_forward_nhwc.1} parent=5 // pred_fallthru
      _
  $region6: #{residual_block_forward_nhwc.1} parent=0 // loop_footer
    %s15 = sadd.s32 1, %s11
  $region7: #{residual_block_forward_nhwc.1} parent=0 // loop_footer_branch
    %10 = sbr.rel target = $region3
  $region8: #{residual_block_forward_nhwc.1} parent=0 // loop_exit
    _

</llo_original>
